<compile_context>
chip_gen: v5e
topology: v5e:2x2
jax: 0.10.0
libtpu: 0.0.40
codegen_flags: <defaults>
</compile_context>

<pallas_src>
import math

import jax
import jax.numpy as jnp
from jax.experimental import pallas as pl
from jax.experimental.pallas import tpu as pltpu

F32 = jnp.float32
# MXU operand dtype.  float32 keeps exact parity with the PyTorch reference; set to
# jnp.bfloat16 on v6e/v7x to halve operand bytes (accumulation stays f32 via
# preferred_element_type).  Elementwise / EUP math stays f32 regardless (v5e-safe).
MXU_DTYPE = jnp.float32


# ----------------------------------------------------------------------------
# In-kernel helpers
# ----------------------------------------------------------------------------
def _dot(a, b):
    return jnp.dot(a.astype(MXU_DTYPE), b.astype(MXU_DTYPE),
                   preferred_element_type=jnp.float32)


def _sigmoid(y):
    # numerically stable sigmoid from exp/where (no inf intermediates, EUP-friendly)
    e = jnp.exp(-jnp.abs(y))
    return jnp.where(y >= 0, 1.0 / (1.0 + e), e / (1.0 + e))


def _act(y, act):
    if act == "relu":
        return jnp.maximum(y, 0.0)
    if act == "sigmoid":
        return _sigmoid(y)
    return y


# ----------------------------------------------------------------------------
# Pallas kernels (all outputs are (C, Mt) with Mt on lanes)
# ----------------------------------------------------------------------------
def _matmul_kernel(act):
    def kernel(x_ref, w_ref, b_ref, o_ref):
        o_ref[...] = _act(_dot(w_ref[...], x_ref[...]) + b_ref[...], act)
    return kernel


def _sanl_kernel(p_ref, x_ref, we_ref, be_ref, wq_ref, wk_ref, wv_ref,
                 wo_ref, bo_ref, o_ref):
    # Fused SANL tail: second embedding conv (matmul over 3x3 patches), q/k/v
    # projections, per-pixel L2 normalize, per-pixel CxC softmax attention, output
    # projection + bias, residual with the embedded features, minus the block input x
    # (DDP only ever consumes spex - x).
    eps = 1e-12
    e = _dot(we_ref[...], p_ref[...]) + be_ref[...]                     # (C, Mt)
    q = _dot(wq_ref[...], e)
    k = _dot(wk_ref[...], e)
    v = _dot(wv_ref[...], e)
    qn = q / jnp.maximum(jnp.sqrt(jnp.sum(q * q, axis=0, keepdims=True)), eps)
    kn = k / jnp.maximum(jnp.sqrt(jnp.sum(k * k, axis=0, keepdims=True)), eps)
    s = qn[:, None, :] * kn[None, :, :]                                 # (C, C, Mt)
    s = s - jnp.max(s, axis=1, keepdims=True)                           # softmax over k-axis
    p = jnp.exp(s)
    p = p / jnp.sum(p, axis=1, keepdims=True)
    att = jnp.sum(p * v[None, :, :], axis=1)                            # (C, Mt)
    out = _dot(wo_ref[...], att) + bo_ref[...]
    o_ref[...] = out + e - x_ref[...]                                   # spex - x


def _esa_tail_kernel(c1_ref, c3_ref, x_ref, wf_ref, bf_ref, w4_ref, b4_ref, o_ref):
    # cf = conv_f(c1_); m = sigmoid(conv4(c3_up + cf)); output spax - x = x * (m - 1)
    cf = _dot(wf_ref[...], c1_ref[...]) + bf_ref[...]
    m = _sigmoid(_dot(w4_ref[...], c3_ref[...] + cf) + b4_ref[...])
    o_ref[...] = x_ref[...] * (m - 1.0)


def _ddp_kernel(x_ref, dspex_ref, pat_ref, wp_ref, bp_ref, wdw_ref, bdw_ref, o_ref):
    # out = x + pointconv(spex - x) + depthwise3x3(spax - x)
    diffspex = _dot(wp_ref[...], dspex_ref[...]) + bp_ref[...]
    diffspax = jnp.sum(pat_ref[...] * wdw_ref[...], axis=0) + bdw_ref[...]
    o_ref[...] = x_ref[...] + diffspex + diffspax


# ----------------------------------------------------------------------------
# Pallas wrappers
# ----------------------------------------------------------------------------
def _m_tile(M):
    # Lane-dense tile over the flattened-spatial axis; prefer >=2 grid steps so every
    # kernel has a "parallel" axis for v7x's two TensorCores, with tiles big enough to
    # amortize per-step overhead.  Tiny / non-128-multiple tensors fall back to one
    # whole-array block (correct, just unpipelined).
    for t in (1024, 512, 256, 128):
        if M % t == 0 and M // t >= 2:
            return t
    return M


def _parallel_params():
    return pltpu.CompilerParams(dimension_semantics=("parallel",))


def matmul_cm(x, w, b, act="none"):
    # x: (K, M); w: (Cout, K); b: (Cout,)  ->  act(w @ x + b): (Cout, M), M on lanes.
    K, M = x.shape
    cout = w.shape[0]
    mt = _m_tile(M)
    return pl.pallas_call(
        _matmul_kernel(act),
        out_shape=jax.ShapeDtypeStruct((cout, M), F32),
        grid=(M // mt,),
        in_specs=[
            pl.BlockSpec((K, mt), lambda i: (0, i)),
            pl.BlockSpec((cout, K), lambda i: (0, 0)),
            pl.BlockSpec((cout, 1), lambda i: (0, 0)),
        ],
        out_specs=pl.BlockSpec((cout, mt), lambda i: (0, i)),
        compiler_params=_parallel_params(),
    )(x.astype(F32), w.astype(F32), b.reshape(cout, 1).astype(F32))


# ----------------------------------------------------------------------------
# Plain-JAX layout glue (no compute beyond gathers/pads/reshapes)
# ----------------------------------------------------------------------------
def nchw_to_cm(x):
    B, C, H, W = x.shape
    return jnp.transpose(x, (1, 0, 2, 3)).reshape(C, B * H * W).astype(F32)


def cm_to_nchw(x_cm, B, H, W):
    C = x_cm.shape[0]
    return jnp.transpose(x_cm.reshape(C, B, H, W), (1, 0, 2, 3))


def patches_cm(x_cm, B, H, W, k, stride=1, padding=0):
    # TODO(synk): patch extraction stays as plain-JAX layout glue (pad/slice/stack);
    # the matmul+bias+act it feeds is a single fused Pallas kernel (no HBM im2col in NHWC).
    C = x_cm.shape[0]
    x4 = x_cm.reshape(C, B, H, W)
    if padding > 0:
        x4 = jnp.pad(x4, ((0, 0), (0, 0), (padding, padding), (padding, padding)))
    Hp, Wp = H + 2 * padding, W + 2 * padding
    Ho = (Hp - k) // stride + 1
    Wo = (Wp - k) // stride + 1
    taps = []
    for di in range(k):
        for dj in range(k):
            taps.append(x4[:, :, di:di + stride * Ho:stride, dj:dj + stride * Wo:stride])
    p = jnp.stack(taps, axis=0)                      # (k*k, C, B, Ho, Wo)
    return p.reshape(k * k, C, B * Ho * Wo), Ho, Wo


def conv_cm(x_cm, B, H, W, p, k, stride=1, padding=0, act="none"):
    # k x k conv as one lane-dense (Cout, k*k*Cin) @ (k*k*Cin, M) Pallas matmul.
    if k == 1:
        return matmul_cm(x_cm, p["w"], p["b"], act), H, W
    pat, Ho, Wo = patches_cm(x_cm, B, H, W, k, stride, padding)
    kk, C, M = pat.shape
    return matmul_cm(pat.reshape(kk * C, M), p["w"], p["b"], act), Ho, Wo


def maxpool_cm(x_cm, B, H, W, k, s):
    # TODO(synk): F.max_pool2d left as lax.reduce_window glue (windowed reduce).
    C = x_cm.shape[0]
    x4 = x_cm.reshape(C, B, H, W)
    y = jax.lax.reduce_window(x4, jnp.array(-jnp.inf, x4.dtype), jax.lax.max,
                              (1, 1, k, k), (1, 1, s, s), "VALID")
    Ho, Wo = y.shape[2], y.shape[3]
    return y.reshape(C, B * Ho * Wo), Ho, Wo


def bilinear_cm(x_cm, B, Hi, Wi, Ho, Wo):
    # TODO(synk): F.interpolate(bilinear, align_corners=False) left as JAX gather glue.
    C = x_cm.shape[0]
    x4 = x_cm.reshape(C, B, Hi, Wi)

    def coords(out_size, in_size):
        o = jnp.arange(out_size, dtype=F32)
        real = jnp.maximum((o + 0.5) * (in_size / out_size) - 0.5, 0.0)
        i0 = jnp.minimum(jnp.floor(real).astype(jnp.int32), in_size - 1)
        i1 = jnp.minimum(i0 + 1, in_size - 1)
        l1 = real - i0.astype(F32)
        return i0, i1, 1.0 - l1, l1

    h0, h1, lh0, lh1 = coords(Ho, Hi)
    w0, w1, lw0, lw1 = coords(Wo, Wi)
    top = (x4[:, :, h0, :] * lh0[None, None, :, None]
           + x4[:, :, h1, :] * lh1[None, None, :, None])
    out = (top[:, :, :, w0] * lw0[None, None, None, :]
           + top[:, :, :, w1] * lw1[None, None, None, :])
    return out.reshape(C, B * Ho * Wo)


# ----------------------------------------------------------------------------
# Module forward functions
# ----------------------------------------------------------------------------
def sanl_forward(p, x_cm, B, H, W):
    # SANL: embedding conv0 (+relu), then ONE fused kernel for emb1/q/k/v/normalize/
    # softmax-attention/to_out/residual; returns spex - x.
    C, M = x_cm.shape
    e0, _, _ = conv_cm(x_cm, B, H, W, p["emb0"], k=3, padding=1, act="relu")
    pat, _, _ = patches_cm(e0, B, H, W, 3, 1, 1)
    pat = pat.reshape(9 * C, M)
    mt = _m_tile(M)
    return pl.pallas_call(
        _sanl_kernel,
        out_shape=jax.ShapeDtypeStruct((C, M), F32),
        grid=(M // mt,),
        in_specs=[
            pl.BlockSpec((9 * C, mt), lambda i: (0, i)),
            pl.BlockSpec((C, mt), lambda i: (0, i)),
            pl.BlockSpec((C, 9 * C), lambda i: (0, 0)),
            pl.BlockSpec((C, 1), lambda i: (0, 0)),
            pl.BlockSpec((C, C), lambda i: (0, 0)),
            pl.BlockSpec((C, C), lambda i: (0, 0)),
            pl.BlockSpec((C, C), lambda i: (0, 0)),
            pl.BlockSpec((C, C), lambda i: (0, 0)),
            pl.BlockSpec((C, 1), lambda i: (0, 0)),
        ],
        out_specs=pl.BlockSpec((C, mt), lambda i: (0, i)),
        compiler_params=_parallel_params(),
    )(pat, x_cm, p["emb1"]["w"], p["emb1"]["b"].reshape(C, 1),
      p["wq"]["w"], p["wk"]["w"], p["wv"]["w"],
      p["wo"]["w"], p["wo"]["b"].reshape(C, 1))


def esa_forward(p, x_cm, B, H, W):
    # ESA: returns spax - x = x * (sigmoid(conv4(c3_up + conv_f(c1_))) - 1).
    C, M = x_cm.shape
    c1_, _, _ = conv_cm(x_cm, B, H, W, p["conv1"], k=1)
    c1, H2, W2 = conv_cm(c1_, B, H, W, p["conv2"], k=3, stride=2, padding=0)
    vmax, H3, W3 = maxpool_cm(c1, B, H2, W2, 7, 3)
    vr, _, _ = conv_cm(vmax, B, H3, W3, p["conv_max"], k=3, padding=1, act="relu")
    c3, _, _ = conv_cm(vr, B, H3, W3, p["conv3"], k=3, padding=1, act="relu")
    c3, _, _ = conv_cm(c3, B, H3, W3, p["conv3_"], k=3, padding=1)
    c3u = bilinear_cm(c3, B, H3, W3, H, W)
    f = c1_.shape[0]
    mt = _m_tile(M)
    return pl.pallas_call(
        _esa_tail_kernel,
        out_shape=jax.ShapeDtypeStruct((C, M), F32),
        grid=(M // mt,),
        in_specs=[
            pl.BlockSpec((f, mt), lambda i: (0, i)),
            pl.BlockSpec((f, mt), lambda i: (0, i)),
            pl.BlockSpec((C, mt), lambda i: (0, i)),
            pl.BlockSpec((f, f), lambda i: (0, 0)),
            pl.BlockSpec((f, 1), lambda i: (0, 0)),
            pl.BlockSpec((C, f), lambda i: (0, 0)),
            pl.BlockSpec((C, 1), lambda i: (0, 0)),
        ],
        out_specs=pl.BlockSpec((C, mt), lambda i: (0, i)),
        compiler_params=_parallel_params(),
    )(c1_, c3u, x_cm, p["conv_f"]["w"], p["conv_f"]["b"].reshape(f, 1),
      p["conv4"]["w"], p["conv4"]["b"].reshape(C, 1))


def ddp_forward(p, x_cm, dspex, dspax, B, H, W):
    # out = x + pointconv(spex - x) + depthwise3x3(spax - x), all in one fused kernel.
    C, M = x_cm.shape
    pat, _, _ = patches_cm(dspax, B, H, W, 3, 1, 1)          # (9, C, M)
    mt = _m_tile(M)
    return pl.pallas_call(
        _ddp_kernel,
        out_shape=jax.ShapeDtypeStruct((C, M), F32),
        grid=(M // mt,),
        in_specs=[
            pl.BlockSpec((C, mt), lambda i: (0, i)),
            pl.BlockSpec((C, mt), lambda i: (0, i)),
            pl.BlockSpec((9, C, mt), lambda i: (0, 0, i)),
            pl.BlockSpec((C, C), lambda i: (0, 0)),
            pl.BlockSpec((C, 1), lambda i: (0, 0)),
            pl.BlockSpec((9, C, 1), lambda i: (0, 0, 0)),
            pl.BlockSpec((C, 1), lambda i: (0, 0)),
        ],
        out_specs=pl.BlockSpec((C, mt), lambda i: (0, i)),
        compiler_params=_parallel_params(),
    )(x_cm, dspex, pat, p["point"]["w"], p["point"]["b"].reshape(C, 1),
      p["dw"]["w"].reshape(9, C, 1), p["dw"]["b"].reshape(C, 1))


def ssam_forward(params, x):
    # x: NCHW (PyTorch convention).  Internally (C, B*H*W) with spatial on lanes.
    B, _, H, W = x.shape
    x_cm = nchw_to_cm(x)
    if "botnek" in params:                 # head == 0
        x_cm = matmul_cm(x_cm, params["botnek"]["w"], params["botnek"]["b"])
    dspex = sanl_forward(params["nl"], x_cm, B, H, W)        # spex - x
    dspax = esa_forward(params["esa"], x_cm, B, H, W)        # spax - x
    out_cm = ddp_forward(params["ddp"], x_cm, dspex, dspax, B, H, W)
    return cm_to_nchw(out_cm, B, H, W)


# ----------------------------------------------------------------------------
# Deterministic parameter initialization (synthetic — no checkpoint loading)
# ----------------------------------------------------------------------------
class KeyGen:
    def __init__(self, seed):
        self._key = jax.random.PRNGKey(seed)

    def __call__(self):
        self._key, sub = jax.random.split(self._key)
        return sub


def init_conv(kg, k, cin, cout, bias=True):
    # Weight layout (Cout, k*k*Cin) with K ordered (tap, cin) to match patches_cm.
    w = jax.random.normal(kg(), (cout, k * k * cin), F32) * (1.0 / math.sqrt(k * k * cin))
    b = jax.random.normal(kg(), (cout,), F32) * 0.01 if bias else jnp.zeros((cout,), F32)
    return {"w": w, "b": b}


def init_linear(kg, cin, cout, bias=True):
    w = jax.random.normal(kg(), (cout, cin), F32) * (1.0 / math.sqrt(cin))
    b = jax.random.normal(kg(), (cout,), F32) * 0.01 if bias else jnp.zeros((cout,), F32)
    return {"w": w, "b": b}


def init_ssam_params(kg, n_feats, head, num):
    assert n_feats % 4 == 0
    f = n_feats // 4
    p = {}
    if head == 0:
        p["botnek"] = init_conv(kg, 1, n_feats * num, n_feats)
    p["nl"] = {
        "emb0": init_conv(kg, 3, n_feats, n_feats),
        "emb1": init_conv(kg, 3, n_feats, n_feats),
        "wq": init_linear(kg, n_feats, n_feats, bias=False),
        "wk": init_linear(kg, n_feats, n_feats, bias=False),
        "wv": init_linear(kg, n_feats, n_feats, bias=False),
        "wo": init_linear(kg, n_feats, n_feats, bias=True),
    }
    p["esa"] = {
        "conv1": init_conv(kg, 1, n_feats, f),
        "conv_f": init_conv(kg, 1, f, f),
        "conv_max": init_conv(kg, 3, f, f),
        "conv2": init_conv(kg, 3, f, f),
        "conv3": init_conv(kg, 3, f, f),
        "conv3_": init_conv(kg, 3, f, f),
        "conv4": init_conv(kg, 1, f, n_feats),
    }
    p["ddp"] = {
        "point": init_conv(kg, 1, n_feats, n_feats),
        "dw": {"w": jax.random.normal(kg(), (9, n_feats), F32) * (1.0 / 3.0),
               "b": jax.random.normal(kg(), (n_feats,), F32) * 0.01},
    }
    return p


# ----------------------------------------------------------------------------
# Main
# ----------------------------------------------------------------------------
if __name__ == "__main__":
    # SSAM(n_feats=32, head=0, num=2): exercises the botnek path plus SANL/ESA/DDP.
    n_feats, head, num = 32, 0, 2
    B, H, W = 2, 16, 16
    cin = n_feats * num if head == 0 else n_feats

    params = init_ssam_params(KeyGen(1234), n_feats, head, num)
    x = jax.random.uniform(jax.random.PRNGKey(0), (B, cin, H, W), F32)

    fwd = jax.jit(ssam_forward)
    out = fwd(params, x)
    jax.block_until_ready(out)

    assert out.shape == (B, n_feats, H, W), out.shape
    assert bool(jnp.all(jnp.isfinite(out)))
    print("KERNEL_OK")
</pallas_src>

<mosaic_0001>
module attributes {stable_mosaic.version = 11 : i64} {
  func.func @kernel(%arg0: i32, %arg1: memref<64x256xf32, #tpu.memory_space<vmem>>, %arg2: memref<32x64xf32, #tpu.memory_space<vmem>>, %arg3: memref<32x1xf32, #tpu.memory_space<vmem>>, %arg4: memref<32x256xf32, #tpu.memory_space<vmem>>) attributes {dimension_semantics = [#tpu.dimension_semantics<parallel>], iteration_bounds = array<i64: 2>, scalar_prefetch = 0 : i64, scratch_operands = 0 : i64, tpu.core_type = #tpu.core_type<tc>, window_params = [{transform_indices = @transform_0, window_bounds = array<i64: 64, 256>}, {pipeline_mode = #tpu.pipeline_mode<synchronous>, transform_indices = @transform_1, window_bounds = array<i64: 32, 64>}, {pipeline_mode = #tpu.pipeline_mode<synchronous>, transform_indices = @transform_2, window_bounds = array<i64: 32, 1>}, {transform_indices = @transform_3, window_bounds = array<i64: 32, 256>}]} {
    %c0 = arith.constant 0 : index
    %c0_0 = arith.constant 0 : index
    %0 = vector.load %arg2[%c0, %c0_0] : memref<32x64xf32, #tpu.memory_space<vmem>>, vector<32x64xf32>
    %c0_1 = arith.constant 0 : index
    %c0_2 = arith.constant 0 : index
    %1 = vector.load %arg1[%c0_1, %c0_2] : memref<64x256xf32, #tpu.memory_space<vmem>>, vector<64x256xf32>
    %cst = arith.constant dense<0.000000e+00> : vector<32x256xf32>
    %2 = tpu.matmul %0, %1, %cst {dimension_numbers = #tpu.dot_dimension_numbers<[1], [0], [0], [1], [0, 0, 1, 1], [], []>} : vector<32x64xf32>, vector<64x256xf32>, vector<32x256xf32> -> vector<32x256xf32>
    %c0_3 = arith.constant 0 : index
    %c0_4 = arith.constant 0 : index
    %3 = vector.load %arg3[%c0_3, %c0_4] : memref<32x1xf32, #tpu.memory_space<vmem>>, vector<32x1xf32>
    %4 = vector.broadcast %3 : vector<32x1xf32> to vector<32x256xf32>
    %5 = arith.addf %2, %4 : vector<32x256xf32>
    %c0_5 = arith.constant 0 : index
    %c0_6 = arith.constant 0 : index
    %6 = vector.load %arg4[%c0_5, %c0_6] : memref<32x256xf32, #tpu.memory_space<vmem>>, vector<32x256xf32>
    tpu.vector_store %arg4[%c0_5, %c0_6], %5 {strides = array<i32>} : memref<32x256xf32, #tpu.memory_space<vmem>>, vector<32x256xf32>,
    return
  }
  func.func @transform_0(%arg0: i32) -> (i32, i32) {
    %c0_i32 = arith.constant 0 : i32
    %c0_i32_0 = arith.constant 0 : i32
    return %c0_i32, %arg0 : i32, i32
  }
  func.func @transform_1(%arg0: i32) -> (i32, i32) {
    %c0_i32 = arith.constant 0 : i32
    %c0_i32_0 = arith.constant 0 : i32
    %c0_i32_1 = arith.constant 0 : i32
    return %c0_i32, %c0_i32_0 : i32, i32
  }
  func.func @transform_2(%arg0: i32) -> (i32, i32) {
    %c0_i32 = arith.constant 0 : i32
    %c0_i32_0 = arith.constant 0 : i32
    %c0_i32_1 = arith.constant 0 : i32
    return %c0_i32, %c0_i32_0 : i32, i32
  }
  func.func @transform_3(%arg0: i32) -> (i32, i32) {
    %c0_i32 = arith.constant 0 : i32
    %c0_i32_0 = arith.constant 0 : i32
    return %c0_i32, %arg0 : i32, i32
  }
}

module attributes {stable_mosaic.version = 11 : i64} {
  func.func @kernel(%arg0: i32, %arg1: memref<288x256xf32, #tpu.memory_space<vmem>>, %arg2: memref<32x288xf32, #tpu.memory_space<vmem>>, %arg3: memref<32x1xf32, #tpu.memory_space<vmem>>, %arg4: memref<32x256xf32, #tpu.memory_space<vmem>>) attributes {dimension_semantics = [#tpu.dimension_semantics<parallel>], iteration_bounds = array<i64: 2>, scalar_prefetch = 0 : i64, scratch_operands = 0 : i64, tpu.core_type = #tpu.core_type<tc>, window_params = [{transform_indices = @transform_0, window_bounds = array<i64: 288, 256>}, {pipeline_mode = #tpu.pipeline_mode<synchronous>, transform_indices = @transform_1, window_bounds = array<i64: 32, 288>}, {pipeline_mode = #tpu.pipeline_mode<synchronous>, transform_indices = @transform_2, window_bounds = array<i64: 32, 1>}, {transform_indices = @transform_3, window_bounds = array<i64: 32, 256>}]} {
    %c0 = arith.constant 0 : index
    %c0_0 = arith.constant 0 : index
    %0 = vector.load %arg2[%c0, %c0_0] : memref<32x288xf32, #tpu.memory_space<vmem>>, vector<32x288xf32>
    %c0_1 = arith.constant 0 : index
    %c0_2 = arith.constant 0 : index
    %1 = vector.load %arg1[%c0_1, %c0_2] : memref<288x256xf32, #tpu.memory_space<vmem>>, vector<288x256xf32>
    %cst = arith.constant dense<0.000000e+00> : vector<32x256xf32>
    %2 = tpu.matmul %0, %1, %cst {dimension_numbers = #tpu.dot_dimension_numbers<[1], [0], [0], [1], [0, 0, 1, 1], [], []>} : vector<32x288xf32>, vector<288x256xf32>, vector<32x256xf32> -> vector<32x256xf32>
    %c0_3 = arith.constant 0 : index
    %c0_4 = arith.constant 0 : index
    %3 = vector.load %arg3[%c0_3, %c0_4] : memref<32x1xf32, #tpu.memory_space<vmem>>, vector<32x1xf32>
    %4 = vector.broadcast %3 : vector<32x1xf32> to vector<32x256xf32>
    %5 = arith.addf %2, %4 : vector<32x256xf32>
    %cst_5 = arith.constant 0.000000e+00 : f32
    %6 = vector.broadcast %cst_5 : f32 to vector<32x256xf32>
    %7 = arith.maximumf %5, %6 : vector<32x256xf32>
    %c0_6 = arith.constant 0 : index
    %c0_7 = arith.constant 0 : index
    %8 = vector.load %arg4[%c0_6, %c0_7] : memref<32x256xf32, #tpu.memory_space<vmem>>, vector<32x256xf32>
    tpu.vector_store %arg4[%c0_6, %c0_7], %7 {strides = array<i32>} : memref<32x256xf32, #tpu.memory_space<vmem>>, vector<32x256xf32>,
    return
  }
  func.func @transform_0(%arg0: i32) -> (i32, i32) {
    %c0_i32 = arith.constant 0 : i32
    %c0_i32_0 = arith.constant 0 : i32
    return %c0_i32, %arg0 : i32, i32
  }
  func.func @transform_1(%arg0: i32) -> (i32, i32) {
    %c0_i32 = arith.constant 0 : i32
    %c0_i32_0 = arith.constant 0 : i32
    %c0_i32_1 = arith.constant 0 : i32
    return %c0_i32, %c0_i32_0 : i32, i32
  }
  func.func @transform_2(%arg0: i32) -> (i32, i32) {
    %c0_i32 = arith.constant 0 : i32
    %c0_i32_0 = arith.constant 0 : i32
    %c0_i32_1 = arith.constant 0 : i32
    return %c0_i32, %c0_i32_0 : i32, i32
  }
  func.func @transform_3(%arg0: i32) -> (i32, i32) {
    %c0_i32 = arith.constant 0 : i32
    %c0_i32_0 = arith.constant 0 : i32
    return %c0_i32, %arg0 : i32, i32
  }
}

module attributes {stable_mosaic.version = 11 : i64} {
  func.func @_sanl_kernel(%arg0: i32, %arg1: memref<288x256xf32, #tpu.memory_space<vmem>>, %arg2: memref<32x256xf32, #tpu.memory_space<vmem>>, %arg3: memref<32x288xf32, #tpu.memory_space<vmem>>, %arg4: memref<32x1xf32, #tpu.memory_space<vmem>>, %arg5: memref<32x32xf32, #tpu.memory_space<vmem>>, %arg6: memref<32x32xf32, #tpu.memory_space<vmem>>, %arg7: memref<32x32xf32, #tpu.memory_space<vmem>>, %arg8: memref<32x32xf32, #tpu.memory_space<vmem>>, %arg9: memref<32x1xf32, #tpu.memory_space<vmem>>, %arg10: memref<32x256xf32, #tpu.memory_space<vmem>>) attributes {dimension_semantics = [#tpu.dimension_semantics<parallel>], iteration_bounds = array<i64: 2>, scalar_prefetch = 0 : i64, scratch_operands = 0 : i64, tpu.core_type = #tpu.core_type<tc>, window_params = [{transform_indices = @transform_0, window_bounds = array<i64: 288, 256>}, {transform_indices = @transform_1, window_bounds = array<i64: 32, 256>}, {pipeline_mode = #tpu.pipeline_mode<synchronous>, transform_indices = @transform_2, window_bounds = array<i64: 32, 288>}, {pipeline_mode = #tpu.pipeline_mode<synchronous>, transform_indices = @transform_3, window_bounds = array<i64: 32, 1>}, {pipeline_mode = #tpu.pipeline_mode<synchronous>, transform_indices = @transform_4, window_bounds = array<i64: 32, 32>}, {pipeline_mode = #tpu.pipeline_mode<synchronous>, transform_indices = @transform_5, window_bounds = array<i64: 32, 32>}, {pipeline_mode = #tpu.pipeline_mode<synchronous>, transform_indices = @transform_6, window_bounds = array<i64: 32, 32>}, {pipeline_mode = #tpu.pipeline_mode<synchronous>, transform_indices = @transform_7, window_bounds = array<i64: 32, 32>}, {pipeline_mode = #tpu.pipeline_mode<synchronous>, transform_indices = @transform_8, window_bounds = array<i64: 32, 1>}, {transform_indices = @transform_9, window_bounds = array<i64: 32, 256>}]} {
    %c0 = arith.constant 0 : index
    %c0_0 = arith.constant 0 : index
    %0 = vector.load %arg3[%c0, %c0_0] : memref<32x288xf32, #tpu.memory_space<vmem>>, vector<32x288xf32>
    %c0_1 = arith.constant 0 : index
    %c0_2 = arith.constant 0 : index
    %1 = vector.load %arg1[%c0_1, %c0_2] : memref<288x256xf32, #tpu.memory_space<vmem>>, vector<288x256xf32>
    %cst = arith.constant dense<0.000000e+00> : vector<32x256xf32>
    %2 = tpu.matmul %0, %1, %cst {dimension_numbers = #tpu.dot_dimension_numbers<[1], [0], [0], [1], [0, 0, 1, 1], [], []>} : vector<32x288xf32>, vector<288x256xf32>, vector<32x256xf32> -> vector<32x256xf32>
    %c0_3 = arith.constant 0 : index
    %c0_4 = arith.constant 0 : index
    %3 = vector.load %arg4[%c0_3, %c0_4] : memref<32x1xf32, #tpu.memory_space<vmem>>, vector<32x1xf32>
    %4 = vector.broadcast %3 : vector<32x1xf32> to vector<32x256xf32>
    %5 = arith.addf %2, %4 : vector<32x256xf32>
    %c0_5 = arith.constant 0 : index
    %c0_6 = arith.constant 0 : index
    %6 = vector.load %arg5[%c0_5, %c0_6] : memref<32x32xf32, #tpu.memory_space<vmem>>, vector<32x32xf32>
    %cst_7 = arith.constant dense<0.000000e+00> : vector<32x256xf32>
    %7 = tpu.matmul %6, %5, %cst_7 {dimension_numbers = #tpu.dot_dimension_numbers<[1], [0], [0], [1], [0, 0, 1, 1], [], []>} : vector<32x32xf32>, vector<32x256xf32>, vector<32x256xf32> -> vector<32x256xf32>
    %c0_8 = arith.constant 0 : index
    %c0_9 = arith.constant 0 : index
    %8 = vector.load %arg6[%c0_8, %c0_9] : memref<32x32xf32, #tpu.memory_space<vmem>>, vector<32x32xf32>
    %cst_10 = arith.constant dense<0.000000e+00> : vector<32x256xf32>
    %9 = tpu.matmul %8, %5, %cst_10 {dimension_numbers = #tpu.dot_dimension_numbers<[1], [0], [0], [1], [0, 0, 1, 1], [], []>} : vector<32x32xf32>, vector<32x256xf32>, vector<32x256xf32> -> vector<32x256xf32>
    %c0_11 = arith.constant 0 : index
    %c0_12 = arith.constant 0 : index
    %10 = vector.load %arg7[%c0_11, %c0_12] : memref<32x32xf32, #tpu.memory_space<vmem>>, vector<32x32xf32>
    %cst_13 = arith.constant dense<0.000000e+00> : vector<32x256xf32>
    %11 = tpu.matmul %10, %5, %cst_13 {dimension_numbers = #tpu.dot_dimension_numbers<[1], [0], [0], [1], [0, 0, 1, 1], [], []>} : vector<32x32xf32>, vector<32x256xf32>, vector<32x256xf32> -> vector<32x256xf32>
    %12 = arith.mulf %7, %7 : vector<32x256xf32>
    %cst_14 = arith.constant dense<0.000000e+00> : vector<256xf32>
    %13 = vector.multi_reduction <add>, %12, %cst_14 [0] : vector<32x256xf32> to vector<256xf32>
    %14 = vector.shape_cast %13 : vector<256xf32> to vector<1x256xf32>
    %15 = math.sqrt %14 : vector<1x256xf32>
    %cst_15 = arith.constant 9.99999996E-13 : f32
    %16 = vector.broadcast %cst_15 : f32 to vector<1x256xf32>
    %17 = arith.maximumf %15, %16 : vector<1x256xf32>
    %18 = vector.broadcast %17 : vector<1x256xf32> to vector<32x256xf32>
    %19 = arith.divf %7, %18 : vector<32x256xf32>
    %20 = arith.mulf %9, %9 : vector<32x256xf32>
    %cst_16 = arith.constant dense<0.000000e+00> : vector<256xf32>
    %21 = vector.multi_reduction <add>, %20, %cst_16 [0] : vector<32x256xf32> to vector<256xf32>
    %22 = vector.shape_cast %21 : vector<256xf32> to vector<1x256xf32>
    %23 = math.sqrt %22 : vector<1x256xf32>
    %cst_17 = arith.constant 9.99999996E-13 : f32
    %24 = vector.broadcast %cst_17 : f32 to vector<1x256xf32>
    %25 = arith.maximumf %23, %24 : vector<1x256xf32>
    %26 = vector.broadcast %25 : vector<1x256xf32> to vector<32x256xf32>
    %27 = arith.divf %9, %26 : vector<32x256xf32>
    %28 = vector.shape_cast %19 : vector<32x256xf32> to vector<32x1x256xf32>
    %29 = vector.shape_cast %27 : vector<32x256xf32> to vector<1x32x256xf32>
    %30 = vector.broadcast %28 : vector<32x1x256xf32> to vector<32x32x256xf32>
    %31 = vector.broadcast %29 : vector<1x32x256xf32> to vector<32x32x256xf32>
    %32 = arith.mulf %30, %31 : vector<32x32x256xf32>
    %cst_18 = arith.constant dense<0xFF800000> : vector<32x256xf32>
    %33 = vector.multi_reduction <maximumf>, %32, %cst_18 [1] : vector<32x32x256xf32> to vector<32x256xf32>
    %34 = vector.shape_cast %33 : vector<32x256xf32> to vector<32x1x256xf32>
    %35 = vector.broadcast %34 : vector<32x1x256xf32> to vector<32x32x256xf32>
    %36 = arith.subf %32, %35 : vector<32x32x256xf32>
    %37 = math.exp %36 : vector<32x32x256xf32>
    %cst_19 = arith.constant dense<0.000000e+00> : vector<32x256xf32>
    %38 = vector.multi_reduction <add>, %37, %cst_19 [1] : vector<32x32x256xf32> to vector<32x256xf32>
    %39 = vector.shape_cast %38 : vector<32x256xf32> to vector<32x1x256xf32>
    %40 = vector.broadcast %39 : vector<32x1x256xf32> to vector<32x32x256xf32>
    %41 = arith.divf %37, %40 : vector<32x32x256xf32>
    %42 = vector.shape_cast %11 : vector<32x256xf32> to vector<1x32x256xf32>
    %43 = vector.broadcast %42 : vector<1x32x256xf32> to vector<32x32x256xf32>
    %44 = arith.mulf %41, %43 : vector<32x32x256xf32>
    %cst_20 = arith.constant dense<0.000000e+00> : vector<32x256xf32>
    %45 = vector.multi_reduction <add>, %44, %cst_20 [1] : vector<32x32x256xf32> to vector<32x256xf32>
    %c0_21 = arith.constant 0 : index
    %c0_22 = arith.constant 0 : index
    %46 = vector.load %arg8[%c0_21, %c0_22] : memref<32x32xf32, #tpu.memory_space<vmem>>, vector<32x32xf32>
    %cst_23 = arith.constant dense<0.000000e+00> : vector<32x256xf32>
    %47 = tpu.matmul %46, %45, %cst_23 {dimension_numbers = #tpu.dot_dimension_numbers<[1], [0], [0], [1], [0, 0, 1, 1], [], []>} : vector<32x32xf32>, vector<32x256xf32>, vector<32x256xf32> -> vector<32x256xf32>
    %c0_24 = arith.constant 0 : index
    %c0_25 = arith.constant 0 : index
    %48 = vector.load %arg9[%c0_24, %c0_25] : memref<32x1xf32, #tpu.memory_space<vmem>>, vector<32x1xf32>
    %49 = vector.broadcast %48 : vector<32x1xf32> to vector<32x256xf32>
    %50 = arith.addf %47, %49 : vector<32x256xf32>
    %51 = arith.addf %50, %5 : vector<32x256xf32>
    %c0_26 = arith.constant 0 : index
    %c0_27 = arith.constant 0 : index
    %52 = vector.load %arg2[%c0_26, %c0_27] : memref<32x256xf32, #tpu.memory_space<vmem>>, vector<32x256xf32>
    %53 = arith.subf %51, %52 : vector<32x256xf32>
    %c0_28 = arith.constant 0 : index
    %c0_29 = arith.constant 0 : index
    %54 = vector.load %arg10[%c0_28, %c0_29] : memref<32x256xf32, #tpu.memory_space<vmem>>, vector<32x256xf32>
    tpu.vector_store %arg10[%c0_28, %c0_29], %53 {strides = array<i32>} : memref<32x256xf32, #tpu.memory_space<vmem>>, vector<32x256xf32>,
    return
  }
  func.func @transform_0(%arg0: i32) -> (i32, i32) {
    %c0_i32 = arith.constant 0 : i32
    %c0_i32_0 = arith.constant 0 : i32
    return %c0_i32, %arg0 : i32, i32
  }
  func.func @transform_1(%arg0: i32) -> (i32, i32) {
    %c0_i32 = arith.constant 0 : i32
    %c0_i32_0 = arith.constant 0 : i32
    return %c0_i32, %arg0 : i32, i32
  }
  func.func @transform_2(%arg0: i32) -> (i32, i32) {
    %c0_i32 = arith.constant 0 : i32
    %c0_i32_0 = arith.constant 0 : i32
    %c0_i32_1 = arith.constant 0 : i32
    return %c0_i32, %c0_i32_0 : i32, i32
  }
  func.func @transform_3(%arg0: i32) -> (i32, i32) {
    %c0_i32 = arith.constant 0 : i32
    %c0_i32_0 = arith.constant 0 : i32
    %c0_i32_1 = arith.constant 0 : i32
    return %c0_i32, %c0_i32_0 : i32, i32
  }
  func.func @transform_4(%arg0: i32) -> (i32, i32) {
    %c0_i32 = arith.constant 0 : i32
    %c0_i32_0 = arith.constant 0 : i32
    %c0_i32_1 = arith.constant 0 : i32
    return %c0_i32, %c0_i32_0 : i32, i32
  }
  func.func @transform_5(%arg0: i32) -> (i32, i32) {
    %c0_i32 = arith.constant 0 : i32
    %c0_i32_0 = arith.constant 0 : i32
    %c0_i32_1 = arith.constant 0 : i32
    return %c0_i32, %c0_i32_0 : i32, i32
  }
  func.func @transform_6(%arg0: i32) -> (i32, i32) {
    %c0_i32 = arith.constant 0 : i32
    %c0_i32_0 = arith.constant 0 : i32
    %c0_i32_1 = arith.constant 0 : i32
    return %c0_i32, %c0_i32_0 : i32, i32
  }
  func.func @transform_7(%arg0: i32) -> (i32, i32) {
    %c0_i32 = arith.constant 0 : i32
    %c0_i32_0 = arith.constant 0 : i32
    %c0_i32_1 = arith.constant 0 : i32
    return %c0_i32, %c0_i32_0 : i32, i32
  }
  func.func @transform_8(%arg0: i32) -> (i32, i32) {
    %c0_i32 = arith.constant 0 : i32
    %c0_i32_0 = arith.constant 0 : i32
    %c0_i32_1 = arith.constant 0 : i32
    return %c0_i32, %c0_i32_0 : i32, i32
  }
  func.func @transform_9(%arg0: i32) -> (i32, i32) {
    %c0_i32 = arith.constant 0 : i32
    %c0_i32_0 = arith.constant 0 : i32
    return %c0_i32, %arg0 : i32, i32
  }
}

module attributes {stable_mosaic.version = 11 : i64} {
  func.func @kernel(%arg0: i32, %arg1: memref<32x256xf32, #tpu.memory_space<vmem>>, %arg2: memref<8x32xf32, #tpu.memory_space<vmem>>, %arg3: memref<8x1xf32, #tpu.memory_space<vmem>>, %arg4: memref<8x256xf32, #tpu.memory_space<vmem>>) attributes {dimension_semantics = [#tpu.dimension_semantics<parallel>], iteration_bounds = array<i64: 2>, scalar_prefetch = 0 : i64, scratch_operands = 0 : i64, tpu.core_type = #tpu.core_type<tc>, window_params = [{transform_indices = @transform_0, window_bounds = array<i64: 32, 256>}, {pipeline_mode = #tpu.pipeline_mode<synchronous>, transform_indices = @transform_1, window_bounds = array<i64: 8, 32>}, {pipeline_mode = #tpu.pipeline_mode<synchronous>, transform_indices = @transform_2, window_bounds = array<i64: 8, 1>}, {transform_indices = @transform_3, window_bounds = array<i64: 8, 256>}]} {
    %c0 = arith.constant 0 : index
    %c0_0 = arith.constant 0 : index
    %0 = vector.load %arg2[%c0, %c0_0] : memref<8x32xf32, #tpu.memory_space<vmem>>, vector<8x32xf32>
    %c0_1 = arith.constant 0 : index
    %c0_2 = arith.constant 0 : index
    %1 = vector.load %arg1[%c0_1, %c0_2] : memref<32x256xf32, #tpu.memory_space<vmem>>, vector<32x256xf32>
    %cst = arith.constant dense<0.000000e+00> : vector<8x256xf32>
    %2 = tpu.matmul %0, %1, %cst {dimension_numbers = #tpu.dot_dimension_numbers<[1], [0], [0], [1], [0, 0, 1, 1], [], []>} : vector<8x32xf32>, vector<32x256xf32>, vector<8x256xf32> -> vector<8x256xf32>
    %c0_3 = arith.constant 0 : index
    %c0_4 = arith.constant 0 : index
    %3 = vector.load %arg3[%c0_3, %c0_4] : memref<8x1xf32, #tpu.memory_space<vmem>>, vector<8x1xf32>
    %4 = vector.broadcast %3 : vector<8x1xf32> to vector<8x256xf32>
    %5 = arith.addf %2, %4 : vector<8x256xf32>
    %c0_5 = arith.constant 0 : index
    %c0_6 = arith.constant 0 : index
    %6 = vector.load %arg4[%c0_5, %c0_6] : memref<8x256xf32, #tpu.memory_space<vmem>>, vector<8x256xf32>
    tpu.vector_store %arg4[%c0_5, %c0_6], %5 {strides = array<i32>} : memref<8x256xf32, #tpu.memory_space<vmem>>, vector<8x256xf32>,
    return
  }
  func.func @transform_0(%arg0: i32) -> (i32, i32) {
    %c0_i32 = arith.constant 0 : i32
    %c0_i32_0 = arith.constant 0 : i32
    return %c0_i32, %arg0 : i32, i32
  }
  func.func @transform_1(%arg0: i32) -> (i32, i32) {
    %c0_i32 = arith.constant 0 : i32
    %c0_i32_0 = arith.constant 0 : i32
    %c0_i32_1 = arith.constant 0 : i32
    return %c0_i32, %c0_i32_0 : i32, i32
  }
  func.func @transform_2(%arg0: i32) -> (i32, i32) {
    %c0_i32 = arith.constant 0 : i32
    %c0_i32_0 = arith.constant 0 : i32
    %c0_i32_1 = arith.constant 0 : i32
    return %c0_i32, %c0_i32_0 : i32, i32
  }
  func.func @transform_3(%arg0: i32) -> (i32, i32) {
    %c0_i32 = arith.constant 0 : i32
    %c0_i32_0 = arith.constant 0 : i32
    return %c0_i32, %arg0 : i32, i32
  }
}

module attributes {stable_mosaic.version = 11 : i64} {
  func.func @kernel(%arg0: i32, %arg1: memref<72x98xf32, #tpu.memory_space<vmem>>, %arg2: memref<8x72xf32, #tpu.memory_space<vmem>>, %arg3: memref<8x1xf32, #tpu.memory_space<vmem>>, %arg4: memref<8x98xf32, #tpu.memory_space<vmem>>) attributes {dimension_semantics = [#tpu.dimension_semantics<parallel>], iteration_bounds = array<i64: 1>, scalar_prefetch = 0 : i64, scratch_operands = 0 : i64, tpu.core_type = #tpu.core_type<tc>, window_params = [{transform_indices = @transform_0, window_bounds = array<i64: 72, 98>}, {pipeline_mode = #tpu.pipeline_mode<synchronous>, transform_indices = @transform_1, window_bounds = array<i64: 8, 72>}, {pipeline_mode = #tpu.pipeline_mode<synchronous>, transform_indices = @transform_2, window_bounds = array<i64: 8, 1>}, {transform_indices = @transform_3, window_bounds = array<i64: 8, 98>}]} {
    %c0 = arith.constant 0 : index
    %c0_0 = arith.constant 0 : index
    %0 = vector.load %arg2[%c0, %c0_0] : memref<8x72xf32, #tpu.memory_space<vmem>>, vector<8x72xf32>
    %c0_1 = arith.constant 0 : index
    %c0_2 = arith.constant 0 : index
    %1 = vector.load %arg1[%c0_1, %c0_2] : memref<72x98xf32, #tpu.memory_space<vmem>>, vector<72x98xf32>
    %cst = arith.constant dense<0.000000e+00> : vector<8x98xf32>
    %2 = tpu.matmul %0, %1, %cst {dimension_numbers = #tpu.dot_dimension_numbers<[1], [0], [0], [1], [0, 0, 1, 1], [], []>} : vector<8x72xf32>, vector<72x98xf32>, vector<8x98xf32> -> vector<8x98xf32>
    %c0_3 = arith.constant 0 : index
    %c0_4 = arith.constant 0 : index
    %3 = vector.load %arg3[%c0_3, %c0_4] : memref<8x1xf32, #tpu.memory_space<vmem>>, vector<8x1xf32>
    %4 = vector.broadcast %3 : vector<8x1xf32> to vector<8x98xf32>
    %5 = arith.addf %2, %4 : vector<8x98xf32>
    %c0_5 = arith.constant 0 : index
    %c0_6 = arith.constant 0 : index
    %6 = vector.load %arg4[%c0_5, %c0_6] : memref<8x98xf32, #tpu.memory_space<vmem>>, vector<8x98xf32>
    tpu.vector_store %arg4[%c0_5, %c0_6], %5 {strides = array<i32>} : memref<8x98xf32, #tpu.memory_space<vmem>>, vector<8x98xf32>,
    return
  }
  func.func @transform_0(%arg0: i32) -> (i32, i32) {
    %c0_i32 = arith.constant 0 : i32
    %c0_i32_0 = arith.constant 0 : i32
    return %c0_i32, %arg0 : i32, i32
  }
  func.func @transform_1(%arg0: i32) -> (i32, i32) {
    %c0_i32 = arith.constant 0 : i32
    %c0_i32_0 = arith.constant 0 : i32
    %c0_i32_1 = arith.constant 0 : i32
    return %c0_i32, %c0_i32_0 : i32, i32
  }
  func.func @transform_2(%arg0: i32) -> (i32, i32) {
    %c0_i32 = arith.constant 0 : i32
    %c0_i32_0 = arith.constant 0 : i32
    %c0_i32_1 = arith.constant 0 : i32
    return %c0_i32, %c0_i32_0 : i32, i32
  }
  func.func @transform_3(%arg0: i32) -> (i32, i32) {
    %c0_i32 = arith.constant 0 : i32
    %c0_i32_0 = arith.constant 0 : i32
    return %c0_i32, %arg0 : i32, i32
  }
}

module attributes {stable_mosaic.version = 11 : i64} {
  func.func @kernel(%arg0: i32, %arg1: memref<72x2xf32, #tpu.memory_space<vmem>>, %arg2: memref<8x72xf32, #tpu.memory_space<vmem>>, %arg3: memref<8x1xf32, #tpu.memory_space<vmem>>, %arg4: memref<8x2xf32, #tpu.memory_space<vmem>>) attributes {dimension_semantics = [#tpu.dimension_semantics<parallel>], iteration_bounds = array<i64: 1>, scalar_prefetch = 0 : i64, scratch_operands = 0 : i64, tpu.core_type = #tpu.core_type<tc>, window_params = [{transform_indices = @transform_0, window_bounds = array<i64: 72, 2>}, {pipeline_mode = #tpu.pipeline_mode<synchronous>, transform_indices = @transform_1, window_bounds = array<i64: 8, 72>}, {pipeline_mode = #tpu.pipeline_mode<synchronous>, transform_indices = @transform_2, window_bounds = array<i64: 8, 1>}, {transform_indices = @transform_3, window_bounds = array<i64: 8, 2>}]} {
    %c0 = arith.constant 0 : index
    %c0_0 = arith.constant 0 : index
    %0 = vector.load %arg2[%c0, %c0_0] : memref<8x72xf32, #tpu.memory_space<vmem>>, vector<8x72xf32>
    %c0_1 = arith.constant 0 : index
    %c0_2 = arith.constant 0 : index
    %1 = vector.load %arg1[%c0_1, %c0_2] : memref<72x2xf32, #tpu.memory_space<vmem>>, vector<72x2xf32>
    %cst = arith.constant dense<0.000000e+00> : vector<8x2xf32>
    %2 = tpu.matmul %0, %1, %cst {dimension_numbers = #tpu.dot_dimension_numbers<[1], [0], [0], [1], [0, 0, 1, 1], [], []>} : vector<8x72xf32>, vector<72x2xf32>, vector<8x2xf32> -> vector<8x2xf32>
    %c0_3 = arith.constant 0 : index
    %c0_4 = arith.constant 0 : index
    %3 = vector.load %arg3[%c0_3, %c0_4] : memref<8x1xf32, #tpu.memory_space<vmem>>, vector<8x1xf32>
    %4 = vector.broadcast %3 : vector<8x1xf32> to vector<8x2xf32>
    %5 = arith.addf %2, %4 : vector<8x2xf32>
    %c0_5 = arith.constant 0 : index
    %c0_6 = arith.constant 0 : index
    %6 = vector.load %arg4[%c0_5, %c0_6] : memref<8x2xf32, #tpu.memory_space<vmem>>, vector<8x2xf32>
    tpu.vector_store %arg4[%c0_5, %c0_6], %5 {strides = array<i32>} : memref<8x2xf32, #tpu.memory_space<vmem>>, vector<8x2xf32>,
    return
  }
  func.func @transform_0(%arg0: i32) -> (i32, i32) {
    %c0_i32 = arith.constant 0 : i32
    %c0_i32_0 = arith.constant 0 : i32
    return %c0_i32, %arg0 : i32, i32
  }
  func.func @transform_1(%arg0: i32) -> (i32, i32) {
    %c0_i32 = arith.constant 0 : i32
    %c0_i32_0 = arith.constant 0 : i32
    %c0_i32_1 = arith.constant 0 : i32
    return %c0_i32, %c0_i32_0 : i32, i32
  }
  func.func @transform_2(%arg0: i32) -> (i32, i32) {
    %c0_i32 = arith.constant 0 : i32
    %c0_i32_0 = arith.constant 0 : i32
    %c0_i32_1 = arith.constant 0 : i32
    return %c0_i32, %c0_i32_0 : i32, i32
  }
  func.func @transform_3(%arg0: i32) -> (i32, i32) {
    %c0_i32 = arith.constant 0 : i32
    %c0_i32_0 = arith.constant 0 : i32
    return %c0_i32, %arg0 : i32, i32
  }
}

module attributes {stable_mosaic.version = 11 : i64} {
  func.func @kernel(%arg0: i32, %arg1: memref<72x2xf32, #tpu.memory_space<vmem>>, %arg2: memref<8x72xf32, #tpu.memory_space<vmem>>, %arg3: memref<8x1xf32, #tpu.memory_space<vmem>>, %arg4: memref<8x2xf32, #tpu.memory_space<vmem>>) attributes {dimension_semantics = [#tpu.dimension_semantics<parallel>], iteration_bounds = array<i64: 1>, scalar_prefetch = 0 : i64, scratch_operands = 0 : i64, tpu.core_type = #tpu.core_type<tc>, window_params = [{transform_indices = @transform_0, window_bounds = array<i64: 72, 2>}, {pipeline_mode = #tpu.pipeline_mode<synchronous>, transform_indices = @transform_1, window_bounds = array<i64: 8, 72>}, {pipeline_mode = #tpu.pipeline_mode<synchronous>, transform_indices = @transform_2, window_bounds = array<i64: 8, 1>}, {transform_indices = @transform_3, window_bounds = array<i64: 8, 2>}]} {
    %c0 = arith.constant 0 : index
    %c0_0 = arith.constant 0 : index
    %0 = vector.load %arg2[%c0, %c0_0] : memref<8x72xf32, #tpu.memory_space<vmem>>, vector<8x72xf32>
    %c0_1 = arith.constant 0 : index
    %c0_2 = arith.constant 0 : index
    %1 = vector.load %arg1[%c0_1, %c0_2] : memref<72x2xf32, #tpu.memory_space<vmem>>, vector<72x2xf32>
    %cst = arith.constant dense<0.000000e+00> : vector<8x2xf32>
    %2 = tpu.matmul %0, %1, %cst {dimension_numbers = #tpu.dot_dimension_numbers<[1], [0], [0], [1], [0, 0, 1, 1], [], []>} : vector<8x72xf32>, vector<72x2xf32>, vector<8x2xf32> -> vector<8x2xf32>
    %c0_3 = arith.constant 0 : index
    %c0_4 = arith.constant 0 : index
    %3 = vector.load %arg3[%c0_3, %c0_4] : memref<8x1xf32, #tpu.memory_space<vmem>>, vector<8x1xf32>
    %4 = vector.broadcast %3 : vector<8x1xf32> to vector<8x2xf32>
    %5 = arith.addf %2, %4 : vector<8x2xf32>
    %cst_5 = arith.constant 0.000000e+00 : f32
    %6 = vector.broadcast %cst_5 : f32 to vector<8x2xf32>
    %7 = arith.maximumf %5, %6 : vector<8x2xf32>
    %c0_6 = arith.constant 0 : index
    %c0_7 = arith.constant 0 : index
    %8 = vector.load %arg4[%c0_6, %c0_7] : memref<8x2xf32, #tpu.memory_space<vmem>>, vector<8x2xf32>
    tpu.vector_store %arg4[%c0_6, %c0_7], %7 {strides = array<i32>} : memref<8x2xf32, #tpu.memory_space<vmem>>, vector<8x2xf32>,
    return
  }
  func.func @transform_0(%arg0: i32) -> (i32, i32) {
    %c0_i32 = arith.constant 0 : i32
    %c0_i32_0 = arith.constant 0 : i32
    return %c0_i32, %arg0 : i32, i32
  }
  func.func @transform_1(%arg0: i32) -> (i32, i32) {
    %c0_i32 = arith.constant 0 : i32
    %c0_i32_0 = arith.constant 0 : i32
    %c0_i32_1 = arith.constant 0 : i32
    return %c0_i32, %c0_i32_0 : i32, i32
  }
  func.func @transform_2(%arg0: i32) -> (i32, i32) {
    %c0_i32 = arith.constant 0 : i32
    %c0_i32_0 = arith.constant 0 : i32
    %c0_i32_1 = arith.constant 0 : i32
    return %c0_i32, %c0_i32_0 : i32, i32
  }
  func.func @transform_3(%arg0: i32) -> (i32, i32) {
    %c0_i32 = arith.constant 0 : i32
    %c0_i32_0 = arith.constant 0 : i32
    return %c0_i32, %arg0 : i32, i32
  }
}

module attributes {stable_mosaic.version = 11 : i64} {
  func.func @_esa_tail_kernel(%arg0: i32, %arg1: memref<8x256xf32, #tpu.memory_space<vmem>>, %arg2: memref<8x256xf32, #tpu.memory_space<vmem>>, %arg3: memref<32x256xf32, #tpu.memory_space<vmem>>, %arg4: memref<8x8xf32, #tpu.memory_space<vmem>>, %arg5: memref<8x1xf32, #tpu.memory_space<vmem>>, %arg6: memref<32x8xf32, #tpu.memory_space<vmem>>, %arg7: memref<32x1xf32, #tpu.memory_space<vmem>>, %arg8: memref<32x256xf32, #tpu.memory_space<vmem>>) attributes {dimension_semantics = [#tpu.dimension_semantics<parallel>], iteration_bounds = array<i64: 2>, scalar_prefetch = 0 : i64, scratch_operands = 0 : i64, tpu.core_type = #tpu.core_type<tc>, window_params = [{transform_indices = @transform_0, window_bounds = array<i64: 8, 256>}, {transform_indices = @transform_1, window_bounds = array<i64: 8, 256>}, {transform_indices = @transform_2, window_bounds = array<i64: 32, 256>}, {pipeline_mode = #tpu.pipeline_mode<synchronous>, transform_indices = @transform_3, window_bounds = array<i64: 8, 8>}, {pipeline_mode = #tpu.pipeline_mode<synchronous>, transform_indices = @transform_4, window_bounds = array<i64: 8, 1>}, {pipeline_mode = #tpu.pipeline_mode<synchronous>, transform_indices = @transform_5, window_bounds = array<i64: 32, 8>}, {pipeline_mode = #tpu.pipeline_mode<synchronous>, transform_indices = @transform_6, window_bounds = array<i64: 32, 1>}, {transform_indices = @transform_7, window_bounds = array<i64: 32, 256>}]} {
    %c0 = arith.constant 0 : index
    %c0_0 = arith.constant 0 : index
    %0 = vector.load %arg4[%c0, %c0_0] : memref<8x8xf32, #tpu.memory_space<vmem>>, vector<8x8xf32>
    %c0_1 = arith.constant 0 : index
    %c0_2 = arith.constant 0 : index
    %1 = vector.load %arg1[%c0_1, %c0_2] : memref<8x256xf32, #tpu.memory_space<vmem>>, vector<8x256xf32>
    %cst = arith.constant dense<0.000000e+00> : vector<8x256xf32>
    %2 = tpu.matmul %0, %1, %cst {dimension_numbers = #tpu.dot_dimension_numbers<[1], [0], [0], [1], [0, 0, 1, 1], [], []>} : vector<8x8xf32>, vector<8x256xf32>, vector<8x256xf32> -> vector<8x256xf32>
    %c0_3 = arith.constant 0 : index
    %c0_4 = arith.constant 0 : index
    %3 = vector.load %arg5[%c0_3, %c0_4] : memref<8x1xf32, #tpu.memory_space<vmem>>, vector<8x1xf32>
    %4 = vector.broadcast %3 : vector<8x1xf32> to vector<8x256xf32>
    %5 = arith.addf %2, %4 : vector<8x256xf32>
    %c0_5 = arith.constant 0 : index
    %c0_6 = arith.constant 0 : index
    %6 = vector.load %arg6[%c0_5, %c0_6] : memref<32x8xf32, #tpu.memory_space<vmem>>, vector<32x8xf32>
    %c0_7 = arith.constant 0 : index
    %c0_8 = arith.constant 0 : index
    %7 = vector.load %arg2[%c0_7, %c0_8] : memref<8x256xf32, #tpu.memory_space<vmem>>, vector<8x256xf32>
    %8 = arith.addf %7, %5 : vector<8x256xf32>
    %cst_9 = arith.constant dense<0.000000e+00> : vector<32x256xf32>
    %9 = tpu.matmul %6, %8, %cst_9 {dimension_numbers = #tpu.dot_dimension_numbers<[1], [0], [0], [1], [0, 0, 1, 1], [], []>} : vector<32x8xf32>, vector<8x256xf32>, vector<32x256xf32> -> vector<32x256xf32>
    %c0_10 = arith.constant 0 : index
    %c0_11 = arith.constant 0 : index
    %10 = vector.load %arg7[%c0_10, %c0_11] : memref<32x1xf32, #tpu.memory_space<vmem>>, vector<32x1xf32>
    %11 = vector.broadcast %10 : vector<32x1xf32> to vector<32x256xf32>
    %12 = arith.addf %9, %11 : vector<32x256xf32>
    %13 = math.absf %12 : vector<32x256xf32>
    %cst_12 = arith.constant 0.000000e+00 : f32
    %14 = vector.broadcast %cst_12 : f32 to vector<32x256xf32>
    %15 = arith.subf %14, %13 : vector<32x256xf32>
    %16 = math.exp %15 : vector<32x256xf32>
    %cst_13 = arith.constant 0.000000e+00 : f32
    %17 = vector.broadcast %cst_13 : f32 to vector<32x256xf32>
    %18 = arith.cmpf oge, %12, %17 : vector<32x256xf32>
    %cst_14 = arith.constant 1.000000e+00 : f32
    %19 = vector.broadcast %cst_14 : f32 to vector<32x256xf32>
    %20 = arith.addf %19, %16 : vector<32x256xf32>
    %cst_15 = arith.constant 1.000000e+00 : f32
    %21 = vector.broadcast %cst_15 : f32 to vector<32x256xf32>
    %22 = arith.divf %21, %20 : vector<32x256xf32>
    %cst_16 = arith.constant 1.000000e+00 : f32
    %23 = vector.broadcast %cst_16 : f32 to vector<32x256xf32>
    %24 = arith.addf %23, %16 : vector<32x256xf32>
    %25 = arith.divf %16, %24 : vector<32x256xf32>
    %26 = arith.select %18, %22, %25 : vector<32x256xi1>, vector<32x256xf32>
    %c0_17 = arith.constant 0 : index
    %c0_18 = arith.constant 0 : index
    %27 = vector.load %arg3[%c0_17, %c0_18] : memref<32x256xf32, #tpu.memory_space<vmem>>, vector<32x256xf32>
    %cst_19 = arith.constant 1.000000e+00 : f32
    %28 = vector.broadcast %cst_19 : f32 to vector<32x256xf32>
    %29 = arith.subf %26, %28 : vector<32x256xf32>
    %30 = arith.mulf %27, %29 : vector<32x256xf32>
    %c0_20 = arith.constant 0 : index
    %c0_21 = arith.constant 0 : index
    %31 = vector.load %arg8[%c0_20, %c0_21] : memref<32x256xf32, #tpu.memory_space<vmem>>, vector<32x256xf32>
    tpu.vector_store %arg8[%c0_20, %c0_21], %30 {strides = array<i32>} : memref<32x256xf32, #tpu.memory_space<vmem>>, vector<32x256xf32>,
    return
  }
  func.func @transform_0(%arg0: i32) -> (i32, i32) {
    %c0_i32 = arith.constant 0 : i32
    %c0_i32_0 = arith.constant 0 : i32
    return %c0_i32, %arg0 : i32, i32
  }
  func.func @transform_1(%arg0: i32) -> (i32, i32) {
    %c0_i32 = arith.constant 0 : i32
    %c0_i32_0 = arith.constant 0 : i32
    return %c0_i32, %arg0 : i32, i32
  }
  func.func @transform_2(%arg0: i32) -> (i32, i32) {
    %c0_i32 = arith.constant 0 : i32
    %c0_i32_0 = arith.constant 0 : i32
    return %c0_i32, %arg0 : i32, i32
  }
  func.func @transform_3(%arg0: i32) -> (i32, i32) {
    %c0_i32 = arith.constant 0 : i32
    %c0_i32_0 = arith.constant 0 : i32
    %c0_i32_1 = arith.constant 0 : i32
    return %c0_i32, %c0_i32_0 : i32, i32
  }
  func.func @transform_4(%arg0: i32) -> (i32, i32) {
    %c0_i32 = arith.constant 0 : i32
    %c0_i32_0 = arith.constant 0 : i32
    %c0_i32_1 = arith.constant 0 : i32
    return %c0_i32, %c0_i32_0 : i32, i32
  }
  func.func @transform_5(%arg0: i32) -> (i32, i32) {
    %c0_i32 = arith.constant 0 : i32
    %c0_i32_0 = arith.constant 0 : i32
    %c0_i32_1 = arith.constant 0 : i32
    return %c0_i32, %c0_i32_0 : i32, i32
  }
  func.func @transform_6(%arg0: i32) -> (i32, i32) {
    %c0_i32 = arith.constant 0 : i32
    %c0_i32_0 = arith.constant 0 : i32
    %c0_i32_1 = arith.constant 0 : i32
    return %c0_i32, %c0_i32_0 : i32, i32
  }
  func.func @transform_7(%arg0: i32) -> (i32, i32) {
    %c0_i32 = arith.constant 0 : i32
    %c0_i32_0 = arith.constant 0 : i32
    return %c0_i32, %arg0 : i32, i32
  }
}

module attributes {stable_mosaic.version = 11 : i64} {
  func.func @_ddp_kernel(%arg0: i32, %arg1: memref<32x256xf32, #tpu.memory_space<vmem>>, %arg2: memref<32x256xf32, #tpu.memory_space<vmem>>, %arg3: memref<9x32x256xf32, #tpu.memory_space<vmem>>, %arg4: memref<32x32xf32, #tpu.memory_space<vmem>>, %arg5: memref<32x1xf32, #tpu.memory_space<vmem>>, %arg6: memref<9x32x1xf32, #tpu.memory_space<vmem>>, %arg7: memref<32x1xf32, #tpu.memory_space<vmem>>, %arg8: memref<32x256xf32, #tpu.memory_space<vmem>>) attributes {dimension_semantics = [#tpu.dimension_semantics<parallel>], iteration_bounds = array<i64: 2>, scalar_prefetch = 0 : i64, scratch_operands = 0 : i64, tpu.core_type = #tpu.core_type<tc>, window_params = [{transform_indices = @transform_0, window_bounds = array<i64: 32, 256>}, {transform_indices = @transform_1, window_bounds = array<i64: 32, 256>}, {transform_indices = @transform_2, window_bounds = array<i64: 9, 32, 256>}, {pipeline_mode = #tpu.pipeline_mode<synchronous>, transform_indices = @transform_3, window_bounds = array<i64: 32, 32>}, {pipeline_mode = #tpu.pipeline_mode<synchronous>, transform_indices = @transform_4, window_bounds = array<i64: 32, 1>}, {pipeline_mode = #tpu.pipeline_mode<synchronous>, transform_indices = @transform_5, window_bounds = array<i64: 9, 32, 1>}, {pipeline_mode = #tpu.pipeline_mode<synchronous>, transform_indices = @transform_6, window_bounds = array<i64: 32, 1>}, {transform_indices = @transform_7, window_bounds = array<i64: 32, 256>}]} {
    %c0 = arith.constant 0 : index
    %c0_0 = arith.constant 0 : index
    %0 = vector.load %arg4[%c0, %c0_0] : memref<32x32xf32, #tpu.memory_space<vmem>>, vector<32x32xf32>
    %c0_1 = arith.constant 0 : index
    %c0_2 = arith.constant 0 : index
    %1 = vector.load %arg2[%c0_1, %c0_2] : memref<32x256xf32, #tpu.memory_space<vmem>>, vector<32x256xf32>
    %cst = arith.constant dense<0.000000e+00> : vector<32x256xf32>
    %2 = tpu.matmul %0, %1, %cst {dimension_numbers = #tpu.dot_dimension_numbers<[1], [0], [0], [1], [0, 0, 1, 1], [], []>} : vector<32x32xf32>, vector<32x256xf32>, vector<32x256xf32> -> vector<32x256xf32>
    %c0_3 = arith.constant 0 : index
    %c0_4 = arith.constant 0 : index
    %3 = vector.load %arg5[%c0_3, %c0_4] : memref<32x1xf32, #tpu.memory_space<vmem>>, vector<32x1xf32>
    %4 = vector.broadcast %3 : vector<32x1xf32> to vector<32x256xf32>
    %5 = arith.addf %2, %4 : vector<32x256xf32>
    %c0_5 = arith.constant 0 : index
    %c0_6 = arith.constant 0 : index
    %c0_7 = arith.constant 0 : index
    %6 = vector.load %arg3[%c0_5, %c0_6, %c0_7] : memref<9x32x256xf32, #tpu.memory_space<vmem>>, vector<9x32x256xf32>
    %c0_8 = arith.constant 0 : index
    %c0_9 = arith.constant 0 : index
    %c0_10 = arith.constant 0 : index
    %7 = vector.load %arg6[%c0_8, %c0_9, %c0_10] : memref<9x32x1xf32, #tpu.memory_space<vmem>>, vector<9x32x1xf32>
    %8 = vector.broadcast %7 : vector<9x32x1xf32> to vector<9x32x256xf32>
    %9 = arith.mulf %6, %8 : vector<9x32x256xf32>
    %cst_11 = arith.constant dense<0.000000e+00> : vector<32x256xf32>
    %10 = vector.multi_reduction <add>, %9, %cst_11 [0] : vector<9x32x256xf32> to vector<32x256xf32>
    %c0_12 = arith.constant 0 : index
    %c0_13 = arith.constant 0 : index
    %11 = vector.load %arg7[%c0_12, %c0_13] : memref<32x1xf32, #tpu.memory_space<vmem>>, vector<32x1xf32>
    %12 = vector.broadcast %11 : vector<32x1xf32> to vector<32x256xf32>
    %13 = arith.addf %10, %12 : vector<32x256xf32>
    %c0_14 = arith.constant 0 : index
    %c0_15 = arith.constant 0 : index
    %14 = vector.load %arg1[%c0_14, %c0_15] : memref<32x256xf32, #tpu.memory_space<vmem>>, vector<32x256xf32>
    %15 = arith.addf %14, %5 : vector<32x256xf32>
    %16 = arith.addf %15, %13 : vector<32x256xf32>
    %c0_16 = arith.constant 0 : index
    %c0_17 = arith.constant 0 : index
    %17 = vector.load %arg8[%c0_16, %c0_17] : memref<32x256xf32, #tpu.memory_space<vmem>>, vector<32x256xf32>
    tpu.vector_store %arg8[%c0_16, %c0_17], %16 {strides = array<i32>} : memref<32x256xf32, #tpu.memory_space<vmem>>, vector<32x256xf32>,
    return
  }
  func.func @transform_0(%arg0: i32) -> (i32, i32) {
    %c0_i32 = arith.constant 0 : i32
    %c0_i32_0 = arith.constant 0 : i32
    return %c0_i32, %arg0 : i32, i32
  }
  func.func @transform_1(%arg0: i32) -> (i32, i32) {
    %c0_i32 = arith.constant 0 : i32
    %c0_i32_0 = arith.constant 0 : i32
    return %c0_i32, %arg0 : i32, i32
  }
  func.func @transform_2(%arg0: i32) -> (i32, i32, i32) {
    %c0_i32 = arith.constant 0 : i32
    %c0_i32_0 = arith.constant 0 : i32
    %c0_i32_1 = arith.constant 0 : i32
    return %c0_i32, %c0_i32_0, %arg0 : i32, i32, i32
  }
  func.func @transform_3(%arg0: i32) -> (i32, i32) {
    %c0_i32 = arith.constant 0 : i32
    %c0_i32_0 = arith.constant 0 : i32
    %c0_i32_1 = arith.constant 0 : i32
    return %c0_i32, %c0_i32_0 : i32, i32
  }
  func.func @transform_4(%arg0: i32) -> (i32, i32) {
    %c0_i32 = arith.constant 0 : i32
    %c0_i32_0 = arith.constant 0 : i32
    %c0_i32_1 = arith.constant 0 : i32
    return %c0_i32, %c0_i32_0 : i32, i32
  }
  func.func @transform_5(%arg0: i32) -> (i32, i32, i32) {
    %c0_i32 = arith.constant 0 : i32
    %c0_i32_0 = arith.constant 0 : i32
    %c0_i32_1 = arith.constant 0 : i32
    %c0_i32_2 = arith.constant 0 : i32
    return %c0_i32, %c0_i32_0, %c0_i32_1 : i32, i32, i32
  }
  func.func @transform_6(%arg0: i32) -> (i32, i32) {
    %c0_i32 = arith.constant 0 : i32
    %c0_i32_0 = arith.constant 0 : i32
    %c0_i32_1 = arith.constant 0 : i32
    return %c0_i32, %c0_i32_0 : i32, i32
  }
  func.func @transform_7(%arg0: i32) -> (i32, i32) {
    %c0_i32 = arith.constant 0 : i32
    %c0_i32_0 = arith.constant 0 : i32
    return %c0_i32, %arg0 : i32, i32
  }
}

</mosaic_0001>

<llo_original>
// kernel: ssam_forward.10
$region0: #{ssam_forward.10}
  #allocation0 [shape = 'u32[]', space=smem, size = 0x4, offset = 0x4, fixed_abs, tag = 'smem constant byte address 0x4 - core index']
  #allocation1 [shape = 'u32[72,128]{1,0:T(1,128)}', space=vmem, size = 0x9000, scoped, tag = 'internal scratch']
  %s0 = inlined_call_operand.vmem [shape: f32[64,512], index: 0, kind: input, shape index: {}]
  %s1 = inlined_call_operand.hbm [shape: f32[32,64], index: 1, kind: input, shape index: {}]
  %s2 = inlined_call_operand.vmem [shape: f32[32,1], index: 2, kind: input, shape index: {}]
  %s3 = inlined_call_operand.vmem [shape: f32[32,512], index: 3, kind: output, shape index: {}]
  %s4 = sld [smem:[#allocation0]]
  $region91: #{ssam_forward.10} parent=0
    _
  %s6 = ssub.s32 1, %s4
  %s7 = scalar_select 0, %s6, %s4
  $region1: #{ssam_forward.10} parent=0
    #allocation2 [shape = 'u8[131072]{0}', space=vmem, size = 0x20000, scoped, tag = 'input window, operand 0']
    #allocation3 [shape = 'u8[16384]{0}', space=vmem, size = 0x4000, scoped, tag = 'input window, operand 1, single buffered']
    #allocation4 [shape = 's32[2]{0}', space=sflag, size = 0x8, scoped, tag = 'scoped memory for ssam_forward.10']
    #allocation5 [shape = 'u8[65536]{0}', space=vmem, size = 0x10000, scoped, tag = 'output window, operand 0']
    %8 = vsyncpa [#allocation4], 0
    loop: start=0, step=1, limit=4
    $region2: #{ssam_forward.10} parent=1 // loop_pre_header
      _
    $region3: #{ssam_forward.10} parent=1 // loop_header
      %s10 = sphi 0, %s14
      %p11 = scmp.ge.s32.totalorder %s10, 4
      %s20 = sphi 0, %s22
      %s23 = sphi 0, %s20
      %s24 = sphi 0, %s23
      %s40 = sphi 0, %s24
      %s44 = sphi 0, %s44
      %s46 = sphi 0, %s44
      %s47 = sphi 0, %s46
      %s61 = sphi 0, %s47
      %s65 = sphi 0, %s65
      %s67 = sphi 0, %s65
      %s68 = sphi 0, %s67
      %s82 = sphi 0, %s68
      %s88 = sphi 0, %s90
      %s91 = sphi 0, %s88
      %s92 = sphi 0, %s91
      %s108 = sphi 0, %s92
    $region4: #{ssam_forward.10} parent=1 // loop_header_branch
      %13 = sbr.rel (%p11) target = $region8
    $region5: #{ssam_forward.10} parent=1 // loop_body
      %s15 = ssub.s32 %s10, 1
      %s16 = ssub.s32 %s10, 2
      %s17 = sadd.s32 %s10, 1
      %s18 = ssub.s32 %s10, %s17
      %p19 = scmp.eq.s32.totalorder %s18, 0
      %s21 = sadd.s32 %s20, 1
      %s22 = scalar_select %p19, %s20, %s21
      %p25 = pneg %p19
      %p26 = scmp.eq.s32.totalorder %s10, 1
      %p27 = por %p25, %p26
      %p28 = scmp.ne.s32.totalorder %s20, %s23
      %p29 = scmp.eq.s32.totalorder %s10, 0
      %p30 = por %p28, %p29
      %p31 = scmp.ne.s32.totalorder %s20, %s23
      %p32 = scmp.eq.s32.totalorder %s15, 1
      %p33 = por %p31, %p32
      %p34 = scmp.ne.s32.totalorder %s23, %s24
      %p35 = scmp.eq.s32.totalorder %s15, 0
      %p36 = por %p34, %p35
      %p37 = scmp.ne.s32.totalorder %s23, %s24
      %p38 = scmp.eq.s32.totalorder %s16, 1
      %p39 = por %p37, %p38
      %p41 = scmp.ne.s32.totalorder %s24, %s40
      %p42 = scmp.eq.s32.totalorder %s16, 0
      %p43 = por %p41, %p42
      %s45 = sadd.s32 %s44, 1
      %p48 = scmp.eq.s32.totalorder %s10, 1
      %p49 = scmp.ne.s32.totalorder %s44, %s46
      %p50 = scmp.eq.s32.totalorder %s10, 0
      %p51 = por %p49, %p50
      %p52 = scmp.ne.s32.totalorder %s44, %s46
      %p53 = scmp.eq.s32.totalorder %s15, 1
      %p54 = por %p52, %p53
      %p55 = scmp.ne.s32.totalorder %s46, %s47
      %p56 = scmp.eq.s32.totalorder %s15, 0
      %p57 = por %p55, %p56
      %p58 = scmp.ne.s32.totalorder %s46, %s47
      %p59 = scmp.eq.s32.totalorder %s16, 1
      %p60 = por %p58, %p59
      %p62 = scmp.ne.s32.totalorder %s47, %s61
      %p63 = scmp.eq.s32.totalorder %s16, 0
      %p64 = por %p62, %p63
      %s66 = sadd.s32 %s65, 1
      %p69 = scmp.eq.s32.totalorder %s10, 1
      %p70 = scmp.ne.s32.totalorder %s65, %s67
      %p71 = scmp.eq.s32.totalorder %s10, 0
      %p72 = por %p70, %p71
      %p73 = scmp.ne.s32.totalorder %s65, %s67
      %p74 = scmp.eq.s32.totalorder %s15, 1
      %p75 = por %p73, %p74
      %p76 = scmp.ne.s32.totalorder %s67, %s68
      %p77 = scmp.eq.s32.totalorder %s15, 0
      %p78 = por %p76, %p77
      %p79 = scmp.ne.s32.totalorder %s67, %s68
      %p80 = scmp.eq.s32.totalorder %s16, 1
      %p81 = por %p79, %p80
      %p83 = scmp.ne.s32.totalorder %s68, %s82
      %p84 = scmp.eq.s32.totalorder %s16, 0
      %p85 = por %p83, %p84
      %s86 = ssub.s32 %s10, %s17
      %p87 = scmp.eq.s32.totalorder %s86, 0
      %s89 = sadd.s32 %s88, 1
      %s90 = scalar_select %p87, %s88, %s89
      %p93 = pneg %p87
      %p94 = scmp.eq.s32.totalorder %s10, 1
      %p95 = por %p93, %p94
      %p96 = scmp.ne.s32.totalorder %s88, %s91
      %p97 = scmp.eq.s32.totalorder %s10, 0
      %p98 = por %p96, %p97
      %p99 = scmp.ne.s32.totalorder %s88, %s91
      %p100 = scmp.eq.s32.totalorder %s15, 1
      %p101 = por %p99, %p100
      %p102 = scmp.ne.s32.totalorder %s91, %s92
      %p103 = scmp.eq.s32.totalorder %s15, 0
      %p104 = por %p102, %p103
      %p105 = scmp.ne.s32.totalorder %s91, %s92
      %p106 = scmp.eq.s32.totalorder %s16, 1
      %p107 = por %p105, %p106
      %p109 = scmp.ne.s32.totalorder %s92, %s108
      %p110 = scmp.eq.s32.totalorder %s16, 0
      %p111 = por %p109, %p110
      %p112 = scmp.le.s32.totalorder 1, %s10
      %p113 = scmp.lt.s32.totalorder %s10, 3
      %p114 = pnand %p112, %p113
      %p115 = pneg %p114
      // Predicated region
      $region9: #{ssam_forward.10} parent=5 // pred_check
        _
      $region10: #{ssam_forward.10} parent=5 // pred_check_branch
        %117 = sbr.rel (%p114) target = $region12
      $region11: #{ssam_forward.10} parent=5 // pred_region
        %s118 = ssub.s32 %s10, 1
        // Predicated region
        $region13: #{ssam_forward.10} parent=11 // pred_check
          %p119 = pneg %p57
        $region14: #{ssam_forward.10} parent=11 // pred_check_branch
          %121 = sbr.rel (%p119) target = $region16
        $region15: #{ssam_forward.10} parent=11 // pred_region
          %123 = vsyncadd [#allocation4], 0
          %s124 = sshll.u32 %s1, 4
          %s125 = int_to_ptr.hbm [resolvable:$true] %s124
          %s126 = sshll.u32 [#allocation3], 4
          %s127 = int_to_ptr.vmem [resolvable:$true] %s126
          %132 = dma.hbm_to_vmem [thread:$0]  %s125, 512, %s127, [#allocation4], 128, 128, 8
        $region16: #{ssam_forward.10} parent=11 // pred_fallthru
          _
        // Predicated region
        $region17: #{ssam_forward.10} parent=11 // pred_check
          %p133 = pneg %p78
        $region18: #{ssam_forward.10} parent=11 // pred_check_branch
          %135 = sbr.rel (%p133) target = $region20
        $region19: #{ssam_forward.10} parent=11 // pred_region
          _
        $region20: #{ssam_forward.10} parent=11 // pred_fallthru
          _
      $region12: #{ssam_forward.10} parent=5 // pred_fallthru
        _
      %p136 = scmp.lt.s32.totalorder %s10, 2
      // Predicated region
      $region21: #{ssam_forward.10} parent=5 // pred_check
        %p137 = pneg %p136
      $region22: #{ssam_forward.10} parent=5 // pred_check_branch
        %139 = sbr.rel (%p137) target = $region24
      $region23: #{ssam_forward.10} parent=5 // pred_region
        // Predicated region
        $region25: #{ssam_forward.10} parent=23 // pred_check
          %p140 = pneg %p30
        $region26: #{ssam_forward.10} parent=23 // pred_check_branch
          %142 = sbr.rel (%p140) target = $region28
        $region27: #{ssam_forward.10} parent=23 // pred_region
          %s143 = sand.u32 %s20, 1
          %s144 = sand.u32 %s20, 1
          %s145 = smul.addr %s144, 128
          %s146 = scalar_lea.vmem [#allocation2], %s145
          %s147 = smul.u32 2, %s10
          %s148 = smul.addr %s147, 8
          %s149 = scalar_lea.vmem %s0, %s148
          // Predicated region
          $region29: #{ssam_forward.10} parent=27 // pred_check
            _
          $region30: #{ssam_forward.10} parent=27 // pred_check_branch
            %151 = sbr.rel (0) target = $region32
          $region31: #{ssam_forward.10} parent=27 // pred_region
            // Predicated region
            $region33: #{ssam_forward.10} parent=31 // pred_check
              _
            $region34: #{ssam_forward.10} parent=31 // pred_check_branch
              %153 = sbr.rel (0) target = $region36
            $region35: #{ssam_forward.10} parent=31 // pred_region
              loop: start=0, step=1, limit=1
              $region37: #{ssam_forward.10} parent=35 // loop_pre_header
                _
              $region38: #{ssam_forward.10} parent=35 // loop_header
                %s155 = sphi 0, %s159
                %p156 = scmp.ge.s32.totalorder %s155, 1
                %s160 = sphi %s149, %s149
                %s161 = sphi %s146, %s146
              $region39: #{ssam_forward.10} parent=35 // loop_header_branch
                %158 = sbr.rel (%p156) target = $region43
              $region40: #{ssam_forward.10} parent=35 // loop_body
                %v162 = vld [vmem:[%s160] sm:$0xff]
                %163 = vst [vmem:[%s161] sm:$0xff] %v162
                %v164 = vld [vmem:[%s160 + $0x8] sm:$0xff]
                %165 = vst [vmem:[%s161 + $0x8] sm:$0xff] %v164
                %v166 = vld [vmem:[%s160 + $0x20] sm:$0xff]
                %167 = vst [vmem:[%s161 + $0x10] sm:$0xff] %v166
                %v168 = vld [vmem:[%s160 + $0x28] sm:$0xff]
                %169 = vst [vmem:[%s161 + $0x18] sm:$0xff] %v168
                %v170 = vld [vmem:[%s160 + $0x40] sm:$0xff]
                %171 = vst [vmem:[%s161 + $0x20] sm:$0xff] %v170
                %v172 = vld [vmem:[%s160 + $0x48] sm:$0xff]
                %173 = vst [vmem:[%s161 + $0x28] sm:$0xff] %v172
                %v174 = vld [vmem:[%s160 + $0x60] sm:$0xff]
                %175 = vst [vmem:[%s161 + $0x30] sm:$0xff] %v174
                %v176 = vld [vmem:[%s160 + $0x68] sm:$0xff]
                %177 = vst [vmem:[%s161 + $0x38] sm:$0xff] %v176
                %v178 = vld [vmem:[%s160 + $0x80] sm:$0xff]
                %179 = vst [vmem:[%s161 + $0x40] sm:$0xff] %v178
                %v180 = vld [vmem:[%s160 + $0x88] sm:$0xff]
                %181 = vst [vmem:[%s161 + $0x48] sm:$0xff] %v180
                %v182 = vld [vmem:[%s160 + $0xa0] sm:$0xff]
                %183 = vst [vmem:[%s161 + $0x50] sm:$0xff] %v182
                %v184 = vld [vmem:[%s160 + $0xa8] sm:$0xff]
                %185 = vst [vmem:[%s161 + $0x58] sm:$0xff] %v184
                %v186 = vld [vmem:[%s160 + $0xc0] sm:$0xff]
                %187 = vst [vmem:[%s161 + $0x60] sm:$0xff] %v186
                %v188 = vld [vmem:[%s160 + $0xc8] sm:$0xff]
                %189 = vst [vmem:[%s161 + $0x68] sm:$0xff] %v188
                %v190 = vld [vmem:[%s160 + $0xe0] sm:$0xff]
                %191 = vst [vmem:[%s161 + $0x70] sm:$0xff] %v190
                %v192 = vld [vmem:[%s160 + $0xe8] sm:$0xff]
                %193 = vst [vmem:[%s161 + $0x78] sm:$0xff] %v192
              $region41: #{ssam_forward.10} parent=35 // loop_footer
                %s159 = sadd.s32 1, %s155
              $region42: #{ssam_forward.10} parent=35 // loop_footer_branch
                %154 = sbr.rel target = $region38
              $region43: #{ssam_forward.10} parent=35 // loop_exit
                _
            $region36: #{ssam_forward.10} parent=31 // pred_fallthru
              _
            // Predicated region
            $region44: #{ssam_forward.10} parent=31 // pred_check
              _
            $region45: #{ssam_forward.10} parent=31 // pred_check_branch
              %195 = sbr.rel target = $region47
            $region46: #{ssam_forward.10} parent=31 // pred_region
              _
            $region47: #{ssam_forward.10} parent=31 // pred_fallthru
              _
          $region32: #{ssam_forward.10} parent=27 // pred_fallthru
            _
          %196 = vnop
        $region28: #{ssam_forward.10} parent=23 // pred_fallthru
          _
      $region24: #{ssam_forward.10} parent=5 // pred_fallthru
        _
      %p197 = scmp.le.s32.totalorder 1, %s10
      %p198 = scmp.lt.s32.totalorder %s10, 3
      %p199 = pnand %p197, %p198
      %p200 = pneg %p199
      // Predicated region
      $region48: #{ssam_forward.10} parent=5 // pred_check
        _
      $region49: #{ssam_forward.10} parent=5 // pred_check_branch
        %202 = sbr.rel (%p199) target = $region51
      $region50: #{ssam_forward.10} parent=5 // pred_region
        %s203 = ssub.s32 %s10, 1
        %s204 = sand.u32 %s23, 1
        %s205 = sand.u32 %s23, 1
        %s206 = smul.addr %s205, 128
        %s207 = scalar_lea.vmem [#allocation2], %s206
        // Predicated region
        $region52: #{ssam_forward.10} parent=50 // pred_check
          %p208 = pneg %p36
        $region53: #{ssam_forward.10} parent=50 // pred_check_branch
          %210 = sbr.rel (%p208) target = $region55
        $region54: #{ssam_forward.10} parent=50 // pred_region
          _
        $region55: #{ssam_forward.10} parent=50 // pred_fallthru
          _
        // Predicated region
        $region56: #{ssam_forward.10} parent=50 // pred_check
          %p211 = pneg %p57
        $region57: #{ssam_forward.10} parent=50 // pred_check_branch
          %213 = sbr.rel (%p211) target = $region59
        $region58: #{ssam_forward.10} parent=50 // pred_region
          %215 = dma.done [#allocation4], 512
        $region59: #{ssam_forward.10} parent=50 // pred_fallthru
          _
        %s216 = sand.u32 %s23, 1
        %s217 = sand.u32 %s23, 1
        %s218 = smul.addr %s217, 128
        %s219 = scalar_lea.vmem [#allocation2], %s218
        %p220 = pneg %p36
        %p221 = pneg %p33
        %p222 = pneg %p57
        %p223 = pneg %p54
        %p224 = pneg %p78
        %p225 = pneg %p75
        %p226 = pneg %p104
        %p227 = pneg %p101
        %s228 = sand.u32 %s91, 1
        %s229 = sand.u32 %s91, 1
        %s230 = smul.addr %s229, 64
        %s231 = scalar_lea.vmem [#allocation5], %s230
        %s232 = smul.u32 2, %s15
        %s233 = smul.u32 2, %s15
        %v234 = vld [vmem:[#allocation3] sm:$0xff]
        %v235 = vld [vmem:[#allocation3 + $0x8] sm:$0xff]
        %v236 = vld [vmem:[#allocation3 + $0x10] sm:$0xff]
        %v237 = vld [vmem:[#allocation3 + $0x18] sm:$0xff]
        %v238 = vld [vmem:[%s207] sm:$0xff]
        %v239 = vld [vmem:[%s207 + $0x8] sm:$0xff]
        %v240 = vld [vmem:[%s207 + $0x10] sm:$0xff]
        %v241 = vld [vmem:[%s207 + $0x18] sm:$0xff]
        %v242 = vld [vmem:[%s207 + $0x20] sm:$0xff]
        %v243 = vld [vmem:[%s207 + $0x28] sm:$0xff]
        %v244 = vld [vmem:[%s207 + $0x30] sm:$0xff]
        %v245 = vld [vmem:[%s207 + $0x38] sm:$0xff]
        %v246 = vld [vmem:[%s207 + $0x40] sm:$0xff]
        %v247 = vld [vmem:[%s207 + $0x48] sm:$0xff]
        %v248 = vld [vmem:[%s207 + $0x50] sm:$0xff]
        %v249 = vld [vmem:[%s207 + $0x58] sm:$0xff]
        %v250 = vld [vmem:[%s207 + $0x60] sm:$0xff]
        %v251 = vld [vmem:[%s207 + $0x68] sm:$0xff]
        %v252 = vld [vmem:[%s207 + $0x70] sm:$0xff]
        %v253 = vld [vmem:[%s207 + $0x78] sm:$0xff]
        %v254 = vld [vmem:[%s2] sm:$0xff]
        %v255 = vld [vmem:[%s2 + $0x8] sm:$0xff]
        %v256 = vld [vmem:[%s2 + $0x10] sm:$0xff]
        %v257 = vld [vmem:[%s2 + $0x18] sm:$0xff]
        %259 = vset.pattern.permute.xlu0 0
        %260 = vperm.xlu0 %259, %v254
        %v261 = vpop.permute.xlu0 %260
        %264 = vset.pattern.permute.xlu0 0
        %265 = vperm.xlu0 %264, %v255
        %v266 = vpop.permute.xlu0 %265
        %269 = vset.pattern.permute.xlu0 0
        %270 = vperm.xlu0 %269, %v256
        %v271 = vpop.permute.xlu0 %270
        %274 = vset.pattern.permute.xlu0 0
        %275 = vperm.xlu0 %274, %v257
        %v276 = vpop.permute.xlu0 %275
        %vm278 = vcmask 523264
        %v280 = vsel %vm278, %v234, 0
        %v283 = vsel %vm278, %v235, 0
        %v286 = vsel %vm278, %v236, 0
        %v289 = vsel %vm278, %v237, 0
        %291 = vmatpush.msra.mxu0 0.0
        %292 = vmatpush.msra.mxu0 0.0
        %293 = vmatpush.msra.mxu0 0.0
        %294 = vmatpush.msra.mxu0 0.0
        %295 = vmatpush.msra.mxu0 0.0
        %296 = vmatpush.msra.mxu0 0.0
        %297 = vmatpush.msra.mxu0 0.0
        %298 = vmatpush.msra.mxu0 0.0
        %299 = vmatpush.msra.mxu0 %v252
        %300 = vmatpush.msra.mxu0 %v250
        %301 = vmatpush.msra.mxu0 %v248
        %302 = vmatpush.msra.mxu0 %v246
        %303 = vmatpush.msra.mxu0 %v244
        %304 = vmatpush.msra.mxu0 %v242
        %305 = vmatpush.msra.mxu0 %v240
        %306 = vmatpush.msra.mxu0 %v238
        %307 = vmatmul.f32.gmra.mxu0 %v280
        %v308 = vpop.f32.mrf.mxu0
        %v309 = vadd.f32 %v261, %v308
        %310 = vmatmul.f32.gmra.mxu0 %v283
        %v311 = vpop.f32.mrf.mxu0
        %v312 = vadd.f32 %v266, %v311
        %313 = vmatmul.f32.gmra.mxu0 %v286
        %v314 = vpop.f32.mrf.mxu0
        %v315 = vadd.f32 %v271, %v314
        %316 = vmatmul.f32.gmra.mxu0 %v289
        %v317 = vpop.f32.mrf.mxu0
        %v318 = vadd.f32 %v276, %v317
        %319 = vdwg.mxu0
        %320 = vmatpush.msra.mxu0 0.0
        %321 = vmatpush.msra.mxu0 0.0
        %322 = vmatpush.msra.mxu0 0.0
        %323 = vmatpush.msra.mxu0 0.0
        %324 = vmatpush.msra.mxu0 0.0
        %325 = vmatpush.msra.mxu0 0.0
        %326 = vmatpush.msra.mxu0 0.0
        %327 = vmatpush.msra.mxu0 0.0
        %328 = vmatpush.msra.mxu0 %v253
        %329 = vmatpush.msra.mxu0 %v251
        %330 = vmatpush.msra.mxu0 %v249
        %331 = vmatpush.msra.mxu0 %v247
        %332 = vmatpush.msra.mxu0 %v245
        %333 = vmatpush.msra.mxu0 %v243
        %334 = vmatpush.msra.mxu0 %v241
        %335 = vmatpush.msra.mxu0 %v239
        %336 = vmatmul.f32.gmra.mxu0 %v280
        %v337 = vpop.f32.mrf.mxu0
        %v338 = vadd.f32 %v261, %v337
        %339 = vmatmul.f32.gmra.mxu0 %v283
        %v340 = vpop.f32.mrf.mxu0
        %v341 = vadd.f32 %v266, %v340
        %342 = vmatmul.f32.gmra.mxu0 %v286
        %v343 = vpop.f32.mrf.mxu0
        %v344 = vadd.f32 %v271, %v343
        %345 = vmatmul.f32.gmra.mxu0 %v289
        %v346 = vpop.f32.mrf.mxu0
        %v347 = vadd.f32 %v276, %v346
        %348 = vdwg.mxu0
        %349 = vst [vmem:[%s231] sm:$0xff] %v309
        %350 = vst [vmem:[%s231 + $0x8] sm:$0xff] %v338
        %351 = vst [vmem:[%s231 + $0x10] sm:$0xff] %v312
        %352 = vst [vmem:[%s231 + $0x18] sm:$0xff] %v341
        %353 = vst [vmem:[%s231 + $0x20] sm:$0xff] %v315
        %354 = vst [vmem:[%s231 + $0x28] sm:$0xff] %v344
        %355 = vst [vmem:[%s231 + $0x30] sm:$0xff] %v318
        %356 = vst [vmem:[%s231 + $0x38] sm:$0xff] %v347
        %s357 = sand.u32 %s91, 1
        %s358 = sand.u32 %s91, 1
        %s359 = smul.addr %s358, 64
        %s360 = scalar_lea.vmem [#allocation5], %s359
        // Predicated region
        $region60: #{ssam_forward.10} parent=50 // pred_check
          %p361 = pneg %p101
        $region61: #{ssam_forward.10} parent=50 // pred_check_branch
          %363 = sbr.rel (%p361) target = $region63
        $region62: #{ssam_forward.10} parent=50 // pred_region
          %s364 = smul.u32 2, %s15
          %s365 = smul.addr %s364, 8
          %s366 = scalar_lea.vmem %s3, %s365
          // Predicated region
          $region64: #{ssam_forward.10} parent=62 // pred_check
            _
          $region65: #{ssam_forward.10} parent=62 // pred_check_branch
            %368 = sbr.rel (0) target = $region67
          $region66: #{ssam_forward.10} parent=62 // pred_region
            // Predicated region
            $region68: #{ssam_forward.10} parent=66 // pred_check
              _
            $region69: #{ssam_forward.10} parent=66 // pred_check_branch
              %370 = sbr.rel (0) target = $region71
            $region70: #{ssam_forward.10} parent=66 // pred_region
              loop: start=0, step=1, limit=1
              $region72: #{ssam_forward.10} parent=70 // loop_pre_header
                _
              $region73: #{ssam_forward.10} parent=70 // loop_header
                %s372 = sphi 0, %s376
                %p373 = scmp.ge.s32.totalorder %s372, 1
                %s377 = sphi %s360, %s360
                %s378 = sphi %s366, %s366
              $region74: #{ssam_forward.10} parent=70 // loop_header_branch
                %375 = sbr.rel (%p373) target = $region78
              $region75: #{ssam_forward.10} parent=70 // loop_body
                %v379 = vld [vmem:[%s377] sm:$0xff]
                %380 = vst [vmem:[%s378] sm:$0xff] %v379
                %v381 = vld [vmem:[%s377 + $0x8] sm:$0xff]
                %382 = vst [vmem:[%s378 + $0x8] sm:$0xff] %v381
                %v383 = vld [vmem:[%s377 + $0x10] sm:$0xff]
                %384 = vst [vmem:[%s378 + $0x20] sm:$0xff] %v383
                %v385 = vld [vmem:[%s377 + $0x18] sm:$0xff]
                %386 = vst [vmem:[%s378 + $0x28] sm:$0xff] %v385
                %v387 = vld [vmem:[%s377 + $0x20] sm:$0xff]
                %388 = vst [vmem:[%s378 + $0x40] sm:$0xff] %v387
                %v389 = vld [vmem:[%s377 + $0x28] sm:$0xff]
                %390 = vst [vmem:[%s378 + $0x48] sm:$0xff] %v389
                %v391 = vld [vmem:[%s377 + $0x30] sm:$0xff]
                %392 = vst [vmem:[%s378 + $0x60] sm:$0xff] %v391
                %v393 = vld [vmem:[%s377 + $0x38] sm:$0xff]
                %394 = vst [vmem:[%s378 + $0x68] sm:$0xff] %v393
              $region76: #{ssam_forward.10} parent=70 // loop_footer
                %s376 = sadd.s32 1, %s372
              $region77: #{ssam_forward.10} parent=70 // loop_footer_branch
                %371 = sbr.rel target = $region73
              $region78: #{ssam_forward.10} parent=70 // loop_exit
                _
            $region71: #{ssam_forward.10} parent=66 // pred_fallthru
              _
            // Predicated region
            $region79: #{ssam_forward.10} parent=66 // pred_check
              _
            $region80: #{ssam_forward.10} parent=66 // pred_check_branch
              %396 = sbr.rel target = $region82
            $region81: #{ssam_forward.10} parent=66 // pred_region
              _
            $region82: #{ssam_forward.10} parent=66 // pred_fallthru
              _
          $region67: #{ssam_forward.10} parent=62 // pred_fallthru
            _
          %397 = vnop
        $region63: #{ssam_forward.10} parent=50 // pred_fallthru
          _
      $region51: #{ssam_forward.10} parent=5 // pred_fallthru
        _
      %p398 = scmp.le.s32.totalorder 2, %s10
      // Predicated region
      $region83: #{ssam_forward.10} parent=5 // pred_check
        %p399 = pneg %p398
      $region84: #{ssam_forward.10} parent=5 // pred_check_branch
        %401 = sbr.rel (%p399) target = $region86
      $region85: #{ssam_forward.10} parent=5 // pred_region
        %s402 = ssub.s32 %s10, 2
        // Predicated region
        $region87: #{ssam_forward.10} parent=85 // pred_check
          %p403 = pneg %p107
        $region88: #{ssam_forward.10} parent=85 // pred_check_branch
          %405 = sbr.rel (%p403) target = $region90
        $region89: #{ssam_forward.10} parent=85 // pred_region
          %s406 = sand.u32 %s92, 1
          %s407 = sand.u32 %s92, 1
          %s408 = smul.addr %s407, 64
          %s409 = scalar_lea.vmem [#allocation5], %s408
        $region90: #{ssam_forward.10} parent=85 // pred_fallthru
          _
      $region86: #{ssam_forward.10} parent=5 // pred_fallthru
        _
    $region6: #{ssam_forward.10} parent=1 // loop_footer
      %s14 = sadd.s32 1, %s10
    $region7: #{ssam_forward.10} parent=1 // loop_footer_branch
      %9 = sbr.rel target = $region3
    $region8: #{ssam_forward.10} parent=1 // loop_exit
      _
    %410 = vsyncpa [#allocation4], 1
    %s411 = scalar_lea.sflag [#allocation4], 1
    %412 = vsyncpa %s411, 1

// kernel: ssam_forward.11
$region0: #{ssam_forward.11}
  #allocation0 [shape = 'u32[]', space=smem, size = 0x4, offset = 0x4, fixed_abs, tag = 'smem constant byte address 0x4 - core index']
  #allocation1 [shape = 'u32[72,128]{1,0:T(1,128)}', space=vmem, size = 0x9000, scoped, tag = 'internal scratch']
  %s0 = inlined_call_operand.vmem [shape: f32[288,512], index: 0, kind: input, shape index: {}]
  %s1 = inlined_call_operand.vmem [shape: f32[32,288], index: 1, kind: input, shape index: {}]
  %s2 = inlined_call_operand.vmem [shape: f32[32,1], index: 2, kind: input, shape index: {}]
  %s3 = inlined_call_operand.vmem [shape: f32[32,512], index: 3, kind: output, shape index: {}]
  %s4 = sld [smem:[#allocation0]]
  $region87: #{ssam_forward.11} parent=0
    _
  %s6 = ssub.s32 1, %s4
  %s7 = scalar_select 0, %s6, %s4
  $region1: #{ssam_forward.11} parent=0
    #allocation2 [shape = 'u8[589824]{0}', space=vmem, size = 0x90000, scoped, tag = 'input window, operand 0']
    #allocation3 [shape = 'u8[65536]{0}', space=vmem, size = 0x10000, scoped, tag = 'output window, operand 0']
    loop: start=0, step=1, limit=4
    $region2: #{ssam_forward.11} parent=1 // loop_pre_header
      _
    $region3: #{ssam_forward.11} parent=1 // loop_header
      %s9 = sphi 0, %s13
      %p10 = scmp.ge.s32.totalorder %s9, 4
      %s19 = sphi 0, %s21
      %s22 = sphi 0, %s19
      %s23 = sphi 0, %s22
      %s39 = sphi 0, %s23
      %s43 = sphi 0, %s43
      %s45 = sphi 0, %s43
      %s46 = sphi 0, %s45
      %s60 = sphi 0, %s46
      %s64 = sphi 0, %s64
      %s66 = sphi 0, %s64
      %s67 = sphi 0, %s66
      %s81 = sphi 0, %s67
      %s87 = sphi 0, %s89
      %s90 = sphi 0, %s87
      %s91 = sphi 0, %s90
      %s107 = sphi 0, %s91
    $region4: #{ssam_forward.11} parent=1 // loop_header_branch
      %12 = sbr.rel (%p10) target = $region8
    $region5: #{ssam_forward.11} parent=1 // loop_body
      %s14 = ssub.s32 %s9, 1
      %s15 = ssub.s32 %s9, 2
      %s16 = sadd.s32 %s9, 1
      %s17 = ssub.s32 %s9, %s16
      %p18 = scmp.eq.s32.totalorder %s17, 0
      %s20 = sadd.s32 %s19, 1
      %s21 = scalar_select %p18, %s19, %s20
      %p24 = pneg %p18
      %p25 = scmp.eq.s32.totalorder %s9, 1
      %p26 = por %p24, %p25
      %p27 = scmp.ne.s32.totalorder %s19, %s22
      %p28 = scmp.eq.s32.totalorder %s9, 0
      %p29 = por %p27, %p28
      %p30 = scmp.ne.s32.totalorder %s19, %s22
      %p31 = scmp.eq.s32.totalorder %s14, 1
      %p32 = por %p30, %p31
      %p33 = scmp.ne.s32.totalorder %s22, %s23
      %p34 = scmp.eq.s32.totalorder %s14, 0
      %p35 = por %p33, %p34
      %p36 = scmp.ne.s32.totalorder %s22, %s23
      %p37 = scmp.eq.s32.totalorder %s15, 1
      %p38 = por %p36, %p37
      %p40 = scmp.ne.s32.totalorder %s23, %s39
      %p41 = scmp.eq.s32.totalorder %s15, 0
      %p42 = por %p40, %p41
      %s44 = sadd.s32 %s43, 1
      %p47 = scmp.eq.s32.totalorder %s9, 1
      %p48 = scmp.ne.s32.totalorder %s43, %s45
      %p49 = scmp.eq.s32.totalorder %s9, 0
      %p50 = por %p48, %p49
      %p51 = scmp.ne.s32.totalorder %s43, %s45
      %p52 = scmp.eq.s32.totalorder %s14, 1
      %p53 = por %p51, %p52
      %p54 = scmp.ne.s32.totalorder %s45, %s46
      %p55 = scmp.eq.s32.totalorder %s14, 0
      %p56 = por %p54, %p55
      %p57 = scmp.ne.s32.totalorder %s45, %s46
      %p58 = scmp.eq.s32.totalorder %s15, 1
      %p59 = por %p57, %p58
      %p61 = scmp.ne.s32.totalorder %s46, %s60
      %p62 = scmp.eq.s32.totalorder %s15, 0
      %p63 = por %p61, %p62
      %s65 = sadd.s32 %s64, 1
      %p68 = scmp.eq.s32.totalorder %s9, 1
      %p69 = scmp.ne.s32.totalorder %s64, %s66
      %p70 = scmp.eq.s32.totalorder %s9, 0
      %p71 = por %p69, %p70
      %p72 = scmp.ne.s32.totalorder %s64, %s66
      %p73 = scmp.eq.s32.totalorder %s14, 1
      %p74 = por %p72, %p73
      %p75 = scmp.ne.s32.totalorder %s66, %s67
      %p76 = scmp.eq.s32.totalorder %s14, 0
      %p77 = por %p75, %p76
      %p78 = scmp.ne.s32.totalorder %s66, %s67
      %p79 = scmp.eq.s32.totalorder %s15, 1
      %p80 = por %p78, %p79
      %p82 = scmp.ne.s32.totalorder %s67, %s81
      %p83 = scmp.eq.s32.totalorder %s15, 0
      %p84 = por %p82, %p83
      %s85 = ssub.s32 %s9, %s16
      %p86 = scmp.eq.s32.totalorder %s85, 0
      %s88 = sadd.s32 %s87, 1
      %s89 = scalar_select %p86, %s87, %s88
      %p92 = pneg %p86
      %p93 = scmp.eq.s32.totalorder %s9, 1
      %p94 = por %p92, %p93
      %p95 = scmp.ne.s32.totalorder %s87, %s90
      %p96 = scmp.eq.s32.totalorder %s9, 0
      %p97 = por %p95, %p96
      %p98 = scmp.ne.s32.totalorder %s87, %s90
      %p99 = scmp.eq.s32.totalorder %s14, 1
      %p100 = por %p98, %p99
      %p101 = scmp.ne.s32.totalorder %s90, %s91
      %p102 = scmp.eq.s32.totalorder %s14, 0
      %p103 = por %p101, %p102
      %p104 = scmp.ne.s32.totalorder %s90, %s91
      %p105 = scmp.eq.s32.totalorder %s15, 1
      %p106 = por %p104, %p105
      %p108 = scmp.ne.s32.totalorder %s91, %s107
      %p109 = scmp.eq.s32.totalorder %s15, 0
      %p110 = por %p108, %p109
      %p111 = scmp.le.s32.totalorder 1, %s9
      %p112 = scmp.lt.s32.totalorder %s9, 3
      %p113 = pnand %p111, %p112
      %p114 = pneg %p113
      // Predicated region
      $region9: #{ssam_forward.11} parent=5 // pred_check
        _
      $region10: #{ssam_forward.11} parent=5 // pred_check_branch
        %116 = sbr.rel (%p113) target = $region12
      $region11: #{ssam_forward.11} parent=5 // pred_region
        %s117 = ssub.s32 %s9, 1
        // Predicated region
        $region13: #{ssam_forward.11} parent=11 // pred_check
          %p118 = pneg %p56
        $region14: #{ssam_forward.11} parent=11 // pred_check_branch
          %120 = sbr.rel (%p118) target = $region16
        $region15: #{ssam_forward.11} parent=11 // pred_region
          _
        $region16: #{ssam_forward.11} parent=11 // pred_fallthru
          _
        // Predicated region
        $region17: #{ssam_forward.11} parent=11 // pred_check
          %p121 = pneg %p77
        $region18: #{ssam_forward.11} parent=11 // pred_check_branch
          %123 = sbr.rel (%p121) target = $region20
        $region19: #{ssam_forward.11} parent=11 // pred_region
          _
        $region20: #{ssam_forward.11} parent=11 // pred_fallthru
          _
      $region12: #{ssam_forward.11} parent=5 // pred_fallthru
        _
      %p124 = scmp.lt.s32.totalorder %s9, 2
      // Predicated region
      $region21: #{ssam_forward.11} parent=5 // pred_check
        %p125 = pneg %p124
      $region22: #{ssam_forward.11} parent=5 // pred_check_branch
        %127 = sbr.rel (%p125) target = $region24
      $region23: #{ssam_forward.11} parent=5 // pred_region
        // Predicated region
        $region25: #{ssam_forward.11} parent=23 // pred_check
          %p128 = pneg %p29
        $region26: #{ssam_forward.11} parent=23 // pred_check_branch
          %130 = sbr.rel (%p128) target = $region28
        $region27: #{ssam_forward.11} parent=23 // pred_region
          %s131 = sand.u32 %s19, 1
          %s132 = sand.u32 %s19, 1
          %s133 = smul.addr %s132, 576
          %s134 = scalar_lea.vmem [#allocation2], %s133
          %s135 = smul.u32 2, %s9
          %s136 = smul.addr %s135, 8
          %s137 = scalar_lea.vmem %s0, %s136
          // Predicated region
          $region29: #{ssam_forward.11} parent=27 // pred_check
            _
          $region30: #{ssam_forward.11} parent=27 // pred_check_branch
            %139 = sbr.rel (0) target = $region32
          $region31: #{ssam_forward.11} parent=27 // pred_region
            // Predicated region
            $region33: #{ssam_forward.11} parent=31 // pred_check
              _
            $region34: #{ssam_forward.11} parent=31 // pred_check_branch
              %141 = sbr.rel (0) target = $region36
            $region35: #{ssam_forward.11} parent=31 // pred_region
              loop: start=0, step=1, limit=1
              $region37: #{ssam_forward.11} parent=35 // loop_pre_header
                _
              $region38: #{ssam_forward.11} parent=35 // loop_header
                %s143 = sphi 0, %s147
                %p144 = scmp.ge.s32.totalorder %s143, 1
                %s148 = sphi %s137, %s137
                %s149 = sphi %s134, %s134
              $region39: #{ssam_forward.11} parent=35 // loop_header_branch
                %146 = sbr.rel (%p144) target = $region43
              $region40: #{ssam_forward.11} parent=35 // loop_body
                %v150 = vld [vmem:[%s148] sm:$0xff]
                %151 = vst [vmem:[%s149] sm:$0xff] %v150
                %v152 = vld [vmem:[%s148 + $0x8] sm:$0xff]
                %153 = vst [vmem:[%s149 + $0x8] sm:$0xff] %v152
                %v154 = vld [vmem:[%s148 + $0x20] sm:$0xff]
                %155 = vst [vmem:[%s149 + $0x10] sm:$0xff] %v154
                %v156 = vld [vmem:[%s148 + $0x28] sm:$0xff]
                %157 = vst [vmem:[%s149 + $0x18] sm:$0xff] %v156
                %v158 = vld [vmem:[%s148 + $0x40] sm:$0xff]
                %159 = vst [vmem:[%s149 + $0x20] sm:$0xff] %v158
                %v160 = vld [vmem:[%s148 + $0x48] sm:$0xff]
                %161 = vst [vmem:[%s149 + $0x28] sm:$0xff] %v160
                %v162 = vld [vmem:[%s148 + $0x60] sm:$0xff]
                %163 = vst [vmem:[%s149 + $0x30] sm:$0xff] %v162
                %v164 = vld [vmem:[%s148 + $0x68] sm:$0xff]
                %165 = vst [vmem:[%s149 + $0x38] sm:$0xff] %v164
                %v166 = vld [vmem:[%s148 + $0x80] sm:$0xff]
                %167 = vst [vmem:[%s149 + $0x40] sm:$0xff] %v166
                %v168 = vld [vmem:[%s148 + $0x88] sm:$0xff]
                %169 = vst [vmem:[%s149 + $0x48] sm:$0xff] %v168
                %v170 = vld [vmem:[%s148 + $0xa0] sm:$0xff]
                %171 = vst [vmem:[%s149 + $0x50] sm:$0xff] %v170
                %v172 = vld [vmem:[%s148 + $0xa8] sm:$0xff]
                %173 = vst [vmem:[%s149 + $0x58] sm:$0xff] %v172
                %v174 = vld [vmem:[%s148 + $0xc0] sm:$0xff]
                %175 = vst [vmem:[%s149 + $0x60] sm:$0xff] %v174
                %v176 = vld [vmem:[%s148 + $0xc8] sm:$0xff]
                %177 = vst [vmem:[%s149 + $0x68] sm:$0xff] %v176
                %v178 = vld [vmem:[%s148 + $0xe0] sm:$0xff]
                %179 = vst [vmem:[%s149 + $0x70] sm:$0xff] %v178
                %v180 = vld [vmem:[%s148 + $0xe8] sm:$0xff]
                %181 = vst [vmem:[%s149 + $0x78] sm:$0xff] %v180
                %v182 = vld [vmem:[%s148 + $0x100] sm:$0xff]
                %183 = vst [vmem:[%s149 + $0x80] sm:$0xff] %v182
                %v184 = vld [vmem:[%s148 + $0x108] sm:$0xff]
                %185 = vst [vmem:[%s149 + $0x88] sm:$0xff] %v184
                %v186 = vld [vmem:[%s148 + $0x120] sm:$0xff]
                %187 = vst [vmem:[%s149 + $0x90] sm:$0xff] %v186
                %v188 = vld [vmem:[%s148 + $0x128] sm:$0xff]
                %189 = vst [vmem:[%s149 + $0x98] sm:$0xff] %v188
                %v190 = vld [vmem:[%s148 + $0x140] sm:$0xff]
                %191 = vst [vmem:[%s149 + $0xa0] sm:$0xff] %v190
                %v192 = vld [vmem:[%s148 + $0x148] sm:$0xff]
                %193 = vst [vmem:[%s149 + $0xa8] sm:$0xff] %v192
                %v194 = vld [vmem:[%s148 + $0x160] sm:$0xff]
                %195 = vst [vmem:[%s149 + $0xb0] sm:$0xff] %v194
                %v196 = vld [vmem:[%s148 + $0x168] sm:$0xff]
                %197 = vst [vmem:[%s149 + $0xb8] sm:$0xff] %v196
                %v198 = vld [vmem:[%s148 + $0x180] sm:$0xff]
                %199 = vst [vmem:[%s149 + $0xc0] sm:$0xff] %v198
                %v200 = vld [vmem:[%s148 + $0x188] sm:$0xff]
                %201 = vst [vmem:[%s149 + $0xc8] sm:$0xff] %v200
                %v202 = vld [vmem:[%s148 + $0x1a0] sm:$0xff]
                %203 = vst [vmem:[%s149 + $0xd0] sm:$0xff] %v202
                %v204 = vld [vmem:[%s148 + $0x1a8] sm:$0xff]
                %205 = vst [vmem:[%s149 + $0xd8] sm:$0xff] %v204
                %v206 = vld [vmem:[%s148 + $0x1c0] sm:$0xff]
                %207 = vst [vmem:[%s149 + $0xe0] sm:$0xff] %v206
                %v208 = vld [vmem:[%s148 + $0x1c8] sm:$0xff]
                %209 = vst [vmem:[%s149 + $0xe8] sm:$0xff] %v208
                %v210 = vld [vmem:[%s148 + $0x1e0] sm:$0xff]
                %211 = vst [vmem:[%s149 + $0xf0] sm:$0xff] %v210
                %v212 = vld [vmem:[%s148 + $0x1e8] sm:$0xff]
                %213 = vst [vmem:[%s149 + $0xf8] sm:$0xff] %v212
                %v214 = vld [vmem:[%s148 + $0x200] sm:$0xff]
                %215 = vst [vmem:[%s149 + $0x100] sm:$0xff] %v214
                %v216 = vld [vmem:[%s148 + $0x208] sm:$0xff]
                %217 = vst [vmem:[%s149 + $0x108] sm:$0xff] %v216
                %v218 = vld [vmem:[%s148 + $0x220] sm:$0xff]
                %219 = vst [vmem:[%s149 + $0x110] sm:$0xff] %v218
                %v220 = vld [vmem:[%s148 + $0x228] sm:$0xff]
                %221 = vst [vmem:[%s149 + $0x118] sm:$0xff] %v220
                %v222 = vld [vmem:[%s148 + $0x240] sm:$0xff]
                %223 = vst [vmem:[%s149 + $0x120] sm:$0xff] %v222
                %v224 = vld [vmem:[%s148 + $0x248] sm:$0xff]
                %225 = vst [vmem:[%s149 + $0x128] sm:$0xff] %v224
                %v226 = vld [vmem:[%s148 + $0x260] sm:$0xff]
                %227 = vst [vmem:[%s149 + $0x130] sm:$0xff] %v226
                %v228 = vld [vmem:[%s148 + $0x268] sm:$0xff]
                %229 = vst [vmem:[%s149 + $0x138] sm:$0xff] %v228
                %v230 = vld [vmem:[%s148 + $0x280] sm:$0xff]
                %231 = vst [vmem:[%s149 + $0x140] sm:$0xff] %v230
                %v232 = vld [vmem:[%s148 + $0x288] sm:$0xff]
                %233 = vst [vmem:[%s149 + $0x148] sm:$0xff] %v232
                %v234 = vld [vmem:[%s148 + $0x2a0] sm:$0xff]
                %235 = vst [vmem:[%s149 + $0x150] sm:$0xff] %v234
                %v236 = vld [vmem:[%s148 + $0x2a8] sm:$0xff]
                %237 = vst [vmem:[%s149 + $0x158] sm:$0xff] %v236
                %v238 = vld [vmem:[%s148 + $0x2c0] sm:$0xff]
                %239 = vst [vmem:[%s149 + $0x160] sm:$0xff] %v238
                %v240 = vld [vmem:[%s148 + $0x2c8] sm:$0xff]
                %241 = vst [vmem:[%s149 + $0x168] sm:$0xff] %v240
                %v242 = vld [vmem:[%s148 + $0x2e0] sm:$0xff]
                %243 = vst [vmem:[%s149 + $0x170] sm:$0xff] %v242
                %v244 = vld [vmem:[%s148 + $0x2e8] sm:$0xff]
                %245 = vst [vmem:[%s149 + $0x178] sm:$0xff] %v244
                %v246 = vld [vmem:[%s148 + $0x300] sm:$0xff]
                %247 = vst [vmem:[%s149 + $0x180] sm:$0xff] %v246
                %v248 = vld [vmem:[%s148 + $0x308] sm:$0xff]
                %249 = vst [vmem:[%s149 + $0x188] sm:$0xff] %v248
                %v250 = vld [vmem:[%s148 + $0x320] sm:$0xff]
                %251 = vst [vmem:[%s149 + $0x190] sm:$0xff] %v250
                %v252 = vld [vmem:[%s148 + $0x328] sm:$0xff]
                %253 = vst [vmem:[%s149 + $0x198] sm:$0xff] %v252
                %v254 = vld [vmem:[%s148 + $0x340] sm:$0xff]
                %255 = vst [vmem:[%s149 + $0x1a0] sm:$0xff] %v254
                %v256 = vld [vmem:[%s148 + $0x348] sm:$0xff]
                %257 = vst [vmem:[%s149 + $0x1a8] sm:$0xff] %v256
                %v258 = vld [vmem:[%s148 + $0x360] sm:$0xff]
                %259 = vst [vmem:[%s149 + $0x1b0] sm:$0xff] %v258
                %v260 = vld [vmem:[%s148 + $0x368] sm:$0xff]
                %261 = vst [vmem:[%s149 + $0x1b8] sm:$0xff] %v260
                %v262 = vld [vmem:[%s148 + $0x380] sm:$0xff]
                %263 = vst [vmem:[%s149 + $0x1c0] sm:$0xff] %v262
                %v264 = vld [vmem:[%s148 + $0x388] sm:$0xff]
                %265 = vst [vmem:[%s149 + $0x1c8] sm:$0xff] %v264
                %v266 = vld [vmem:[%s148 + $0x3a0] sm:$0xff]
                %267 = vst [vmem:[%s149 + $0x1d0] sm:$0xff] %v266
                %v268 = vld [vmem:[%s148 + $0x3a8] sm:$0xff]
                %269 = vst [vmem:[%s149 + $0x1d8] sm:$0xff] %v268
                %v270 = vld [vmem:[%s148 + $0x3c0] sm:$0xff]
                %271 = vst [vmem:[%s149 + $0x1e0] sm:$0xff] %v270
                %v272 = vld [vmem:[%s148 + $0x3c8] sm:$0xff]
                %273 = vst [vmem:[%s149 + $0x1e8] sm:$0xff] %v272
                %v274 = vld [vmem:[%s148 + $0x3e0] sm:$0xff]
                %275 = vst [vmem:[%s149 + $0x1f0] sm:$0xff] %v274
                %v276 = vld [vmem:[%s148 + $0x3e8] sm:$0xff]
                %277 = vst [vmem:[%s149 + $0x1f8] sm:$0xff] %v276
                %v278 = vld [vmem:[%s148 + $0x400] sm:$0xff]
                %279 = vst [vmem:[%s149 + $0x200] sm:$0xff] %v278
                %v280 = vld [vmem:[%s148 + $0x408] sm:$0xff]
                %281 = vst [vmem:[%s149 + $0x208] sm:$0xff] %v280
                %v282 = vld [vmem:[%s148 + $0x420] sm:$0xff]
                %283 = vst [vmem:[%s149 + $0x210] sm:$0xff] %v282
                %v284 = vld [vmem:[%s148 + $0x428] sm:$0xff]
                %285 = vst [vmem:[%s149 + $0x218] sm:$0xff] %v284
                %v286 = vld [vmem:[%s148 + $0x440] sm:$0xff]
                %287 = vst [vmem:[%s149 + $0x220] sm:$0xff] %v286
                %v288 = vld [vmem:[%s148 + $0x448] sm:$0xff]
                %289 = vst [vmem:[%s149 + $0x228] sm:$0xff] %v288
                %v290 = vld [vmem:[%s148 + $0x460] sm:$0xff]
                %291 = vst [vmem:[%s149 + $0x230] sm:$0xff] %v290
                %v292 = vld [vmem:[%s148 + $0x468] sm:$0xff]
                %293 = vst [vmem:[%s149 + $0x238] sm:$0xff] %v292
              $region41: #{ssam_forward.11} parent=35 // loop_footer
                %s147 = sadd.s32 1, %s143
              $region42: #{ssam_forward.11} parent=35 // loop_footer_branch
                %142 = sbr.rel target = $region38
              $region43: #{ssam_forward.11} parent=35 // loop_exit
                _
            $region36: #{ssam_forward.11} parent=31 // pred_fallthru
              _
            // Predicated region
            $region44: #{ssam_forward.11} parent=31 // pred_check
              _
            $region45: #{ssam_forward.11} parent=31 // pred_check_branch
              %295 = sbr.rel target = $region47
            $region46: #{ssam_forward.11} parent=31 // pred_region
              _
            $region47: #{ssam_forward.11} parent=31 // pred_fallthru
              _
          $region32: #{ssam_forward.11} parent=27 // pred_fallthru
            _
          %296 = vnop
        $region28: #{ssam_forward.11} parent=23 // pred_fallthru
          _
      $region24: #{ssam_forward.11} parent=5 // pred_fallthru
        _
      %p297 = scmp.le.s32.totalorder 1, %s9
      %p298 = scmp.lt.s32.totalorder %s9, 3
      %p299 = pnand %p297, %p298
      %p300 = pneg %p299
      // Predicated region
      $region48: #{ssam_forward.11} parent=5 // pred_check
        _
      $region49: #{ssam_forward.11} parent=5 // pred_check_branch
        %302 = sbr.rel (%p299) target = $region51
      $region50: #{ssam_forward.11} parent=5 // pred_region
        %s303 = ssub.s32 %s9, 1
        %s304 = sand.u32 %s22, 1
        %s305 = sand.u32 %s22, 1
        %s306 = smul.addr %s305, 576
        %s307 = scalar_lea.vmem [#allocation2], %s306
        // Predicated region
        $region52: #{ssam_forward.11} parent=50 // pred_check
          %p308 = pneg %p35
        $region53: #{ssam_forward.11} parent=50 // pred_check_branch
          %310 = sbr.rel (%p308) target = $region55
        $region54: #{ssam_forward.11} parent=50 // pred_region
          _
        $region55: #{ssam_forward.11} parent=50 // pred_fallthru
          _
        %s311 = sand.u32 %s22, 1
        %s312 = sand.u32 %s22, 1
        %s313 = smul.addr %s312, 576
        %s314 = scalar_lea.vmem [#allocation2], %s313
        %p315 = pneg %p35
        %p316 = pneg %p32
        %p317 = pneg %p56
        %p318 = pneg %p53
        %p319 = pneg %p77
        %p320 = pneg %p74
        %p321 = pneg %p103
        %p322 = pneg %p100
        %s323 = sand.u32 %s90, 1
        %s324 = sand.u32 %s90, 1
        %s325 = smul.addr %s324, 64
        %s326 = scalar_lea.vmem [#allocation3], %s325
        %s327 = smul.u32 2, %s14
        %s328 = smul.u32 2, %s14
        %v329 = vld [vmem:[%s1] sm:$0xff]
        %v330 = vld [vmem:[%s1 + $0x8] sm:$0xff]
        %v331 = vld [vmem:[%s1 + $0x10] sm:$0xff]
        %v332 = vld [vmem:[%s1 + $0x18] sm:$0xff]
        %v333 = vld [vmem:[%s1 + $0x20] sm:$0xff]
        %v334 = vld [vmem:[%s1 + $0x28] sm:$0xff]
        %v335 = vld [vmem:[%s1 + $0x30] sm:$0xff]
        %v336 = vld [vmem:[%s1 + $0x38] sm:$0xff]
        %v337 = vld [vmem:[%s1 + $0x40] sm:$0xff]
        %v338 = vld [vmem:[%s1 + $0x48] sm:$0xff]
        %v339 = vld [vmem:[%s1 + $0x50] sm:$0xff]
        %v340 = vld [vmem:[%s1 + $0x58] sm:$0xff]
        %v341 = vld [vmem:[%s307] sm:$0xff]
        %v342 = vld [vmem:[%s307 + $0x8] sm:$0xff]
        %v343 = vld [vmem:[%s307 + $0x10] sm:$0xff]
        %v344 = vld [vmem:[%s307 + $0x18] sm:$0xff]
        %v345 = vld [vmem:[%s307 + $0x20] sm:$0xff]
        %v346 = vld [vmem:[%s307 + $0x28] sm:$0xff]
        %v347 = vld [vmem:[%s307 + $0x30] sm:$0xff]
        %v348 = vld [vmem:[%s307 + $0x38] sm:$0xff]
        %v349 = vld [vmem:[%s307 + $0x40] sm:$0xff]
        %v350 = vld [vmem:[%s307 + $0x48] sm:$0xff]
        %v351 = vld [vmem:[%s307 + $0x50] sm:$0xff]
        %v352 = vld [vmem:[%s307 + $0x58] sm:$0xff]
        %v353 = vld [vmem:[%s307 + $0x60] sm:$0xff]
        %v354 = vld [vmem:[%s307 + $0x68] sm:$0xff]
        %v355 = vld [vmem:[%s307 + $0x70] sm:$0xff]
        %v356 = vld [vmem:[%s307 + $0x78] sm:$0xff]
        %v357 = vld [vmem:[%s307 + $0x80] sm:$0xff]
        %v358 = vld [vmem:[%s307 + $0x88] sm:$0xff]
        %v359 = vld [vmem:[%s307 + $0x90] sm:$0xff]
        %v360 = vld [vmem:[%s307 + $0x98] sm:$0xff]
        %v361 = vld [vmem:[%s307 + $0xa0] sm:$0xff]
        %v362 = vld [vmem:[%s307 + $0xa8] sm:$0xff]
        %v363 = vld [vmem:[%s307 + $0xb0] sm:$0xff]
        %v364 = vld [vmem:[%s307 + $0xb8] sm:$0xff]
        %v365 = vld [vmem:[%s307 + $0xc0] sm:$0xff]
        %v366 = vld [vmem:[%s307 + $0xc8] sm:$0xff]
        %v367 = vld [vmem:[%s307 + $0xd0] sm:$0xff]
        %v368 = vld [vmem:[%s307 + $0xd8] sm:$0xff]
        %v369 = vld [vmem:[%s307 + $0xe0] sm:$0xff]
        %v370 = vld [vmem:[%s307 + $0xe8] sm:$0xff]
        %v371 = vld [vmem:[%s307 + $0xf0] sm:$0xff]
        %v372 = vld [vmem:[%s307 + $0xf8] sm:$0xff]
        %v373 = vld [vmem:[%s307 + $0x100] sm:$0xff]
        %v374 = vld [vmem:[%s307 + $0x108] sm:$0xff]
        %v375 = vld [vmem:[%s307 + $0x110] sm:$0xff]
        %v376 = vld [vmem:[%s307 + $0x118] sm:$0xff]
        %v377 = vld [vmem:[%s307 + $0x120] sm:$0xff]
        %v378 = vld [vmem:[%s307 + $0x128] sm:$0xff]
        %v379 = vld [vmem:[%s307 + $0x130] sm:$0xff]
        %v380 = vld [vmem:[%s307 + $0x138] sm:$0xff]
        %v381 = vld [vmem:[%s307 + $0x140] sm:$0xff]
        %v382 = vld [vmem:[%s307 + $0x148] sm:$0xff]
        %v383 = vld [vmem:[%s307 + $0x150] sm:$0xff]
        %v384 = vld [vmem:[%s307 + $0x158] sm:$0xff]
        %v385 = vld [vmem:[%s307 + $0x160] sm:$0xff]
        %v386 = vld [vmem:[%s307 + $0x168] sm:$0xff]
        %v387 = vld [vmem:[%s307 + $0x170] sm:$0xff]
        %v388 = vld [vmem:[%s307 + $0x178] sm:$0xff]
        %v389 = vld [vmem:[%s307 + $0x180] sm:$0xff]
        %v390 = vld [vmem:[%s307 + $0x188] sm:$0xff]
        %v391 = vld [vmem:[%s307 + $0x190] sm:$0xff]
        %v392 = vld [vmem:[%s307 + $0x198] sm:$0xff]
        %v393 = vld [vmem:[%s307 + $0x1a0] sm:$0xff]
        %v394 = vld [vmem:[%s307 + $0x1a8] sm:$0xff]
        %v395 = vld [vmem:[%s307 + $0x1b0] sm:$0xff]
        %v396 = vld [vmem:[%s307 + $0x1b8] sm:$0xff]
        %v397 = vld [vmem:[%s307 + $0x1c0] sm:$0xff]
        %v398 = vld [vmem:[%s307 + $0x1c8] sm:$0xff]
        %v399 = vld [vmem:[%s307 + $0x1d0] sm:$0xff]
        %v400 = vld [vmem:[%s307 + $0x1d8] sm:$0xff]
        %v401 = vld [vmem:[%s307 + $0x1e0] sm:$0xff]
        %v402 = vld [vmem:[%s307 + $0x1e8] sm:$0xff]
        %v403 = vld [vmem:[%s307 + $0x1f0] sm:$0xff]
        %v404 = vld [vmem:[%s307 + $0x1f8] sm:$0xff]
        %v405 = vld [vmem:[%s307 + $0x200] sm:$0xff]
        %v406 = vld [vmem:[%s307 + $0x208] sm:$0xff]
        %v407 = vld [vmem:[%s307 + $0x210] sm:$0xff]
        %v408 = vld [vmem:[%s307 + $0x218] sm:$0xff]
        %v409 = vld [vmem:[%s307 + $0x220] sm:$0xff]
        %v410 = vld [vmem:[%s307 + $0x228] sm:$0xff]
        %v411 = vld [vmem:[%s307 + $0x230] sm:$0xff]
        %v412 = vld [vmem:[%s307 + $0x238] sm:$0xff]
        %v413 = vld [vmem:[%s2] sm:$0xff]
        %v414 = vld [vmem:[%s2 + $0x8] sm:$0xff]
        %v415 = vld [vmem:[%s2 + $0x10] sm:$0xff]
        %v416 = vld [vmem:[%s2 + $0x18] sm:$0xff]
        %418 = vset.pattern.permute.xlu0 0
        %419 = vperm.xlu0 %418, %v413
        %v420 = vpop.permute.xlu0 %419
        %423 = vset.pattern.permute.xlu0 0
        %424 = vperm.xlu0 %423, %v414
        %v425 = vpop.permute.xlu0 %424
        %428 = vset.pattern.permute.xlu0 0
        %429 = vperm.xlu0 %428, %v415
        %v430 = vpop.permute.xlu0 %429
        %433 = vset.pattern.permute.xlu0 0
        %434 = vperm.xlu0 %433, %v416
        %v435 = vpop.permute.xlu0 %434
        %vm437 = vcmask 261120
        %v439 = vsel %vm437, %v331, 0
        %v442 = vsel %vm437, %v334, 0
        %v445 = vsel %vm437, %v337, 0
        %v448 = vsel %vm437, %v340, 0
        %450 = vmatpush.msra.mxu0 %v371
        %451 = vmatpush.msra.mxu0 %v369
        %452 = vmatpush.msra.mxu0 %v367
        %453 = vmatpush.msra.mxu0 %v365
        %454 = vmatpush.msra.mxu0 %v363
        %455 = vmatpush.msra.mxu0 %v361
        %456 = vmatpush.msra.mxu0 %v359
        %457 = vmatpush.msra.mxu0 %v357
        %458 = vmatpush.msra.mxu0 %v355
        %459 = vmatpush.msra.mxu0 %v353
        %460 = vmatpush.msra.mxu0 %v351
        %461 = vmatpush.msra.mxu0 %v349
        %462 = vmatpush.msra.mxu0 %v347
        %463 = vmatpush.msra.mxu0 %v345
        %464 = vmatpush.msra.mxu0 %v343
        %465 = vmatpush.msra.mxu0 %v341
        %466 = vmatmul.f32.gmra.mxu0 %v329
        %v467 = vpop.f32.mrf.mxu0
        %v468 = vadd.f32 %v420, %v467
        %469 = vmatmul.f32.gmra.mxu0 %v332
        %v470 = vpop.f32.mrf.mxu0
        %v471 = vadd.f32 %v425, %v470
        %472 = vmatmul.f32.gmra.mxu0 %v335
        %v473 = vpop.f32.mrf.mxu0
        %v474 = vadd.f32 %v430, %v473
        %475 = vmatmul.f32.gmra.mxu0 %v338
        %v476 = vpop.f32.mrf.mxu0
        %v477 = vadd.f32 %v435, %v476
        %478 = vdwg.mxu0
        %479 = vmatpush.msra.mxu0 %v403
        %480 = vmatpush.msra.mxu0 %v401
        %481 = vmatpush.msra.mxu0 %v399
        %482 = vmatpush.msra.mxu0 %v397
        %483 = vmatpush.msra.mxu0 %v395
        %484 = vmatpush.msra.mxu0 %v393
        %485 = vmatpush.msra.mxu0 %v391
        %486 = vmatpush.msra.mxu0 %v389
        %487 = vmatpush.msra.mxu0 %v387
        %488 = vmatpush.msra.mxu0 %v385
        %489 = vmatpush.msra.mxu0 %v383
        %490 = vmatpush.msra.mxu0 %v381
        %491 = vmatpush.msra.mxu0 %v379
        %492 = vmatpush.msra.mxu0 %v377
        %493 = vmatpush.msra.mxu0 %v375
        %494 = vmatpush.msra.mxu0 %v373
        %495 = vmatmul.f32.gmra.mxu0 %v330
        %v496 = vpop.f32.mrf.mxu0
        %v497 = vadd.f32 %v468, %v496
        %498 = vmatmul.f32.gmra.mxu0 %v333
        %v499 = vpop.f32.mrf.mxu0
        %v500 = vadd.f32 %v471, %v499
        %501 = vmatmul.f32.gmra.mxu0 %v336
        %v502 = vpop.f32.mrf.mxu0
        %v503 = vadd.f32 %v474, %v502
        %504 = vmatmul.f32.gmra.mxu0 %v339
        %v505 = vpop.f32.mrf.mxu0
        %v506 = vadd.f32 %v477, %v505
        %507 = vdwg.mxu0
        %508 = vmatpush.msra.mxu0 0.0
        %509 = vmatpush.msra.mxu0 0.0
        %510 = vmatpush.msra.mxu0 0.0
        %511 = vmatpush.msra.mxu0 0.0
        %512 = vmatpush.msra.mxu0 0.0
        %513 = vmatpush.msra.mxu0 0.0
        %514 = vmatpush.msra.mxu0 0.0
        %515 = vmatpush.msra.mxu0 0.0
        %516 = vmatpush.msra.mxu0 0.0
        %517 = vmatpush.msra.mxu0 0.0
        %518 = vmatpush.msra.mxu0 0.0
        %519 = vmatpush.msra.mxu0 0.0
        %520 = vmatpush.msra.mxu0 %v411
        %521 = vmatpush.msra.mxu0 %v409
        %522 = vmatpush.msra.mxu0 %v407
        %523 = vmatpush.msra.mxu0 %v405
        %524 = vmatmul.f32.gmra.mxu0 %v439
        %v525 = vpop.f32.mrf.mxu0
        %v526 = vadd.f32 %v497, %v525
        %527 = vmatmul.f32.gmra.mxu0 %v442
        %v528 = vpop.f32.mrf.mxu0
        %v529 = vadd.f32 %v500, %v528
        %530 = vmatmul.f32.gmra.mxu0 %v445
        %v531 = vpop.f32.mrf.mxu0
        %v532 = vadd.f32 %v503, %v531
        %533 = vmatmul.f32.gmra.mxu0 %v448
        %v534 = vpop.f32.mrf.mxu0
        %v535 = vadd.f32 %v506, %v534
        %536 = vdwg.mxu0
        %537 = vmatpush.msra.mxu0 %v372
        %538 = vmatpush.msra.mxu0 %v370
        %539 = vmatpush.msra.mxu0 %v368
        %540 = vmatpush.msra.mxu0 %v366
        %541 = vmatpush.msra.mxu0 %v364
        %542 = vmatpush.msra.mxu0 %v362
        %543 = vmatpush.msra.mxu0 %v360
        %544 = vmatpush.msra.mxu0 %v358
        %545 = vmatpush.msra.mxu0 %v356
        %546 = vmatpush.msra.mxu0 %v354
        %547 = vmatpush.msra.mxu0 %v352
        %548 = vmatpush.msra.mxu0 %v350
        %549 = vmatpush.msra.mxu0 %v348
        %550 = vmatpush.msra.mxu0 %v346
        %551 = vmatpush.msra.mxu0 %v344
        %552 = vmatpush.msra.mxu0 %v342
        %553 = vmatmul.f32.gmra.mxu0 %v329
        %v554 = vpop.f32.mrf.mxu0
        %v555 = vadd.f32 %v420, %v554
        %556 = vmatmul.f32.gmra.mxu0 %v332
        %v557 = vpop.f32.mrf.mxu0
        %v558 = vadd.f32 %v425, %v557
        %559 = vmatmul.f32.gmra.mxu0 %v335
        %v560 = vpop.f32.mrf.mxu0
        %v561 = vadd.f32 %v430, %v560
        %562 = vmatmul.f32.gmra.mxu0 %v338
        %v563 = vpop.f32.mrf.mxu0
        %v564 = vadd.f32 %v435, %v563
        %565 = vdwg.mxu0
        %566 = vmatpush.msra.mxu0 %v404
        %567 = vmatpush.msra.mxu0 %v402
        %568 = vmatpush.msra.mxu0 %v400
        %569 = vmatpush.msra.mxu0 %v398
        %570 = vmatpush.msra.mxu0 %v396
        %571 = vmatpush.msra.mxu0 %v394
        %572 = vmatpush.msra.mxu0 %v392
        %573 = vmatpush.msra.mxu0 %v390
        %574 = vmatpush.msra.mxu0 %v388
        %575 = vmatpush.msra.mxu0 %v386
        %576 = vmatpush.msra.mxu0 %v384
        %577 = vmatpush.msra.mxu0 %v382
        %578 = vmatpush.msra.mxu0 %v380
        %579 = vmatpush.msra.mxu0 %v378
        %580 = vmatpush.msra.mxu0 %v376
        %581 = vmatpush.msra.mxu0 %v374
        %582 = vmatmul.f32.gmra.mxu0 %v330
        %v583 = vpop.f32.mrf.mxu0
        %v584 = vadd.f32 %v555, %v583
        %585 = vmatmul.f32.gmra.mxu0 %v333
        %v586 = vpop.f32.mrf.mxu0
        %v587 = vadd.f32 %v558, %v586
        %588 = vmatmul.f32.gmra.mxu0 %v336
        %v589 = vpop.f32.mrf.mxu0
        %v590 = vadd.f32 %v561, %v589
        %591 = vmatmul.f32.gmra.mxu0 %v339
        %v592 = vpop.f32.mrf.mxu0
        %v593 = vadd.f32 %v564, %v592
        %594 = vdwg.mxu0
        %595 = vmatpush.msra.mxu0 0.0
        %596 = vmatpush.msra.mxu0 0.0
        %597 = vmatpush.msra.mxu0 0.0
        %598 = vmatpush.msra.mxu0 0.0
        %599 = vmatpush.msra.mxu0 0.0
        %600 = vmatpush.msra.mxu0 0.0
        %601 = vmatpush.msra.mxu0 0.0
        %602 = vmatpush.msra.mxu0 0.0
        %603 = vmatpush.msra.mxu0 0.0
        %604 = vmatpush.msra.mxu0 0.0
        %605 = vmatpush.msra.mxu0 0.0
        %606 = vmatpush.msra.mxu0 0.0
        %607 = vmatpush.msra.mxu0 %v412
        %608 = vmatpush.msra.mxu0 %v410
        %609 = vmatpush.msra.mxu0 %v408
        %610 = vmatpush.msra.mxu0 %v406
        %611 = vmatmul.f32.gmra.mxu0 %v439
        %v612 = vpop.f32.mrf.mxu0
        %v613 = vadd.f32 %v584, %v612
        %614 = vmatmul.f32.gmra.mxu0 %v442
        %v615 = vpop.f32.mrf.mxu0
        %v616 = vadd.f32 %v587, %v615
        %617 = vmatmul.f32.gmra.mxu0 %v445
        %v618 = vpop.f32.mrf.mxu0
        %v619 = vadd.f32 %v590, %v618
        %620 = vmatmul.f32.gmra.mxu0 %v448
        %v621 = vpop.f32.mrf.mxu0
        %v622 = vadd.f32 %v593, %v621
        %623 = vdwg.mxu0
        %v624 = vmax.f32 %v526, 0.0
        %v625 = vmax.f32 %v613, 0.0
        %v626 = vmax.f32 %v529, 0.0
        %v627 = vmax.f32 %v616, 0.0
        %v628 = vmax.f32 %v532, 0.0
        %v629 = vmax.f32 %v619, 0.0
        %v630 = vmax.f32 %v535, 0.0
        %v631 = vmax.f32 %v622, 0.0
        %632 = vst [vmem:[%s326] sm:$0xff] %v624
        %633 = vst [vmem:[%s326 + $0x8] sm:$0xff] %v625
        %634 = vst [vmem:[%s326 + $0x10] sm:$0xff] %v626
        %635 = vst [vmem:[%s326 + $0x18] sm:$0xff] %v627
        %636 = vst [vmem:[%s326 + $0x20] sm:$0xff] %v628
        %637 = vst [vmem:[%s326 + $0x28] sm:$0xff] %v629
        %638 = vst [vmem:[%s326 + $0x30] sm:$0xff] %v630
        %639 = vst [vmem:[%s326 + $0x38] sm:$0xff] %v631
        %s640 = sand.u32 %s90, 1
        %s641 = sand.u32 %s90, 1
        %s642 = smul.addr %s641, 64
        %s643 = scalar_lea.vmem [#allocation3], %s642
        // Predicated region
        $region56: #{ssam_forward.11} parent=50 // pred_check
          %p644 = pneg %p100
        $region57: #{ssam_forward.11} parent=50 // pred_check_branch
          %646 = sbr.rel (%p644) target = $region59
        $region58: #{ssam_forward.11} parent=50 // pred_region
          %s647 = smul.u32 2, %s14
          %s648 = smul.addr %s647, 8
          %s649 = scalar_lea.vmem %s3, %s648
          // Predicated region
          $region60: #{ssam_forward.11} parent=58 // pred_check
            _
          $region61: #{ssam_forward.11} parent=58 // pred_check_branch
            %651 = sbr.rel (0) target = $region63
          $region62: #{ssam_forward.11} parent=58 // pred_region
            // Predicated region
            $region64: #{ssam_forward.11} parent=62 // pred_check
              _
            $region65: #{ssam_forward.11} parent=62 // pred_check_branch
              %653 = sbr.rel (0) target = $region67
            $region66: #{ssam_forward.11} parent=62 // pred_region
              loop: start=0, step=1, limit=1
              $region68: #{ssam_forward.11} parent=66 // loop_pre_header
                _
              $region69: #{ssam_forward.11} parent=66 // loop_header
                %s655 = sphi 0, %s659
                %p656 = scmp.ge.s32.totalorder %s655, 1
                %s660 = sphi %s643, %s643
                %s661 = sphi %s649, %s649
              $region70: #{ssam_forward.11} parent=66 // loop_header_branch
                %658 = sbr.rel (%p656) target = $region74
              $region71: #{ssam_forward.11} parent=66 // loop_body
                %v662 = vld [vmem:[%s660] sm:$0xff]
                %663 = vst [vmem:[%s661] sm:$0xff] %v662
                %v664 = vld [vmem:[%s660 + $0x8] sm:$0xff]
                %665 = vst [vmem:[%s661 + $0x8] sm:$0xff] %v664
                %v666 = vld [vmem:[%s660 + $0x10] sm:$0xff]
                %667 = vst [vmem:[%s661 + $0x20] sm:$0xff] %v666
                %v668 = vld [vmem:[%s660 + $0x18] sm:$0xff]
                %669 = vst [vmem:[%s661 + $0x28] sm:$0xff] %v668
                %v670 = vld [vmem:[%s660 + $0x20] sm:$0xff]
                %671 = vst [vmem:[%s661 + $0x40] sm:$0xff] %v670
                %v672 = vld [vmem:[%s660 + $0x28] sm:$0xff]
                %673 = vst [vmem:[%s661 + $0x48] sm:$0xff] %v672
                %v674 = vld [vmem:[%s660 + $0x30] sm:$0xff]
                %675 = vst [vmem:[%s661 + $0x60] sm:$0xff] %v674
                %v676 = vld [vmem:[%s660 + $0x38] sm:$0xff]
                %677 = vst [vmem:[%s661 + $0x68] sm:$0xff] %v676
              $region72: #{ssam_forward.11} parent=66 // loop_footer
                %s659 = sadd.s32 1, %s655
              $region73: #{ssam_forward.11} parent=66 // loop_footer_branch
                %654 = sbr.rel target = $region69
              $region74: #{ssam_forward.11} parent=66 // loop_exit
                _
            $region67: #{ssam_forward.11} parent=62 // pred_fallthru
              _
            // Predicated region
            $region75: #{ssam_forward.11} parent=62 // pred_check
              _
            $region76: #{ssam_forward.11} parent=62 // pred_check_branch
              %679 = sbr.rel target = $region78
            $region77: #{ssam_forward.11} parent=62 // pred_region
              _
            $region78: #{ssam_forward.11} parent=62 // pred_fallthru
              _
          $region63: #{ssam_forward.11} parent=58 // pred_fallthru
            _
          %680 = vnop
        $region59: #{ssam_forward.11} parent=50 // pred_fallthru
          _
      $region51: #{ssam_forward.11} parent=5 // pred_fallthru
        _
      %p681 = scmp.le.s32.totalorder 2, %s9
      // Predicated region
      $region79: #{ssam_forward.11} parent=5 // pred_check
        %p682 = pneg %p681
      $region80: #{ssam_forward.11} parent=5 // pred_check_branch
        %684 = sbr.rel (%p682) target = $region82
      $region81: #{ssam_forward.11} parent=5 // pred_region
        %s685 = ssub.s32 %s9, 2
        // Predicated region
        $region83: #{ssam_forward.11} parent=81 // pred_check
          %p686 = pneg %p106
        $region84: #{ssam_forward.11} parent=81 // pred_check_branch
          %688 = sbr.rel (%p686) target = $region86
        $region85: #{ssam_forward.11} parent=81 // pred_region
          %s689 = sand.u32 %s91, 1
          %s690 = sand.u32 %s91, 1
          %s691 = smul.addr %s690, 64
          %s692 = scalar_lea.vmem [#allocation3], %s691
        $region86: #{ssam_forward.11} parent=81 // pred_fallthru
          _
      $region82: #{ssam_forward.11} parent=5 // pred_fallthru
        _
    $region6: #{ssam_forward.11} parent=1 // loop_footer
      %s13 = sadd.s32 1, %s9
    $region7: #{ssam_forward.11} parent=1 // loop_footer_branch
      %8 = sbr.rel target = $region3
    $region8: #{ssam_forward.11} parent=1 // loop_exit
      _

// kernel: ssam_forward.13
$region0: #{ssam_forward.13}
  #allocation0 [shape = 'u32[]', space=smem, size = 0x4, offset = 0x4, fixed_abs, tag = 'smem constant byte address 0x4 - core index']
  #allocation1 [shape = 'u32[72,128]{1,0:T(1,128)}', space=vmem, size = 0x9000, scoped, tag = 'internal scratch']
  %s0 = inlined_call_operand.vmem [shape: f32[32,512], index: 0, kind: input, shape index: {}]
  %s1 = inlined_call_operand.vmem [shape: f32[8,32], index: 1, kind: input, shape index: {}]
  %s2 = inlined_call_operand.vmem [shape: f32[8,1], index: 2, kind: input, shape index: {}]
  %s3 = inlined_call_operand.vmem [shape: f32[8,512], index: 3, kind: output, shape index: {}]
  %s4 = sld [smem:[#allocation0]]
  $region68: #{ssam_forward.13} parent=0
    _
  %s6 = ssub.s32 1, %s4
  %s7 = scalar_select 0, %s6, %s4
  $region1: #{ssam_forward.13} parent=0
    #allocation2 [shape = 'u8[65536]{0}', space=vmem, size = 0x10000, scoped, tag = 'input window, operand 0']
    loop: start=0, step=1, limit=4
    $region2: #{ssam_forward.13} parent=1 // loop_pre_header
      _
    $region3: #{ssam_forward.13} parent=1 // loop_header
      %s9 = sphi 0, %s13
      %p10 = scmp.ge.s32.totalorder %s9, 4
      %s19 = sphi 0, %s21
      %s22 = sphi 0, %s19
      %s23 = sphi 0, %s22
      %s39 = sphi 0, %s23
      %s43 = sphi 0, %s43
      %s45 = sphi 0, %s43
      %s46 = sphi 0, %s45
      %s60 = sphi 0, %s46
      %s64 = sphi 0, %s64
      %s66 = sphi 0, %s64
      %s67 = sphi 0, %s66
      %s81 = sphi 0, %s67
      %s87 = sphi 0, %s89
      %s90 = sphi 0, %s87
      %s91 = sphi 0, %s90
      %s107 = sphi 0, %s91
    $region4: #{ssam_forward.13} parent=1 // loop_header_branch
      %12 = sbr.rel (%p10) target = $region8
    $region5: #{ssam_forward.13} parent=1 // loop_body
      %s14 = ssub.s32 %s9, 1
      %s15 = ssub.s32 %s9, 2
      %s16 = sadd.s32 %s9, 1
      %s17 = ssub.s32 %s9, %s16
      %p18 = scmp.eq.s32.totalorder %s17, 0
      %s20 = sadd.s32 %s19, 1
      %s21 = scalar_select %p18, %s19, %s20
      %p24 = pneg %p18
      %p25 = scmp.eq.s32.totalorder %s9, 1
      %p26 = por %p24, %p25
      %p27 = scmp.ne.s32.totalorder %s19, %s22
      %p28 = scmp.eq.s32.totalorder %s9, 0
      %p29 = por %p27, %p28
      %p30 = scmp.ne.s32.totalorder %s19, %s22
      %p31 = scmp.eq.s32.totalorder %s14, 1
      %p32 = por %p30, %p31
      %p33 = scmp.ne.s32.totalorder %s22, %s23
      %p34 = scmp.eq.s32.totalorder %s14, 0
      %p35 = por %p33, %p34
      %p36 = scmp.ne.s32.totalorder %s22, %s23
      %p37 = scmp.eq.s32.totalorder %s15, 1
      %p38 = por %p36, %p37
      %p40 = scmp.ne.s32.totalorder %s23, %s39
      %p41 = scmp.eq.s32.totalorder %s15, 0
      %p42 = por %p40, %p41
      %s44 = sadd.s32 %s43, 1
      %p47 = scmp.eq.s32.totalorder %s9, 1
      %p48 = scmp.ne.s32.totalorder %s43, %s45
      %p49 = scmp.eq.s32.totalorder %s9, 0
      %p50 = por %p48, %p49
      %p51 = scmp.ne.s32.totalorder %s43, %s45
      %p52 = scmp.eq.s32.totalorder %s14, 1
      %p53 = por %p51, %p52
      %p54 = scmp.ne.s32.totalorder %s45, %s46
      %p55 = scmp.eq.s32.totalorder %s14, 0
      %p56 = por %p54, %p55
      %p57 = scmp.ne.s32.totalorder %s45, %s46
      %p58 = scmp.eq.s32.totalorder %s15, 1
      %p59 = por %p57, %p58
      %p61 = scmp.ne.s32.totalorder %s46, %s60
      %p62 = scmp.eq.s32.totalorder %s15, 0
      %p63 = por %p61, %p62
      %s65 = sadd.s32 %s64, 1
      %p68 = scmp.eq.s32.totalorder %s9, 1
      %p69 = scmp.ne.s32.totalorder %s64, %s66
      %p70 = scmp.eq.s32.totalorder %s9, 0
      %p71 = por %p69, %p70
      %p72 = scmp.ne.s32.totalorder %s64, %s66
      %p73 = scmp.eq.s32.totalorder %s14, 1
      %p74 = por %p72, %p73
      %p75 = scmp.ne.s32.totalorder %s66, %s67
      %p76 = scmp.eq.s32.totalorder %s14, 0
      %p77 = por %p75, %p76
      %p78 = scmp.ne.s32.totalorder %s66, %s67
      %p79 = scmp.eq.s32.totalorder %s15, 1
      %p80 = por %p78, %p79
      %p82 = scmp.ne.s32.totalorder %s67, %s81
      %p83 = scmp.eq.s32.totalorder %s15, 0
      %p84 = por %p82, %p83
      %s85 = ssub.s32 %s9, %s16
      %p86 = scmp.eq.s32.totalorder %s85, 0
      %s88 = sadd.s32 %s87, 1
      %s89 = scalar_select %p86, %s87, %s88
      %p92 = pneg %p86
      %p93 = scmp.eq.s32.totalorder %s9, 1
      %p94 = por %p92, %p93
      %p95 = scmp.ne.s32.totalorder %s87, %s90
      %p96 = scmp.eq.s32.totalorder %s9, 0
      %p97 = por %p95, %p96
      %p98 = scmp.ne.s32.totalorder %s87, %s90
      %p99 = scmp.eq.s32.totalorder %s14, 1
      %p100 = por %p98, %p99
      %p101 = scmp.ne.s32.totalorder %s90, %s91
      %p102 = scmp.eq.s32.totalorder %s14, 0
      %p103 = por %p101, %p102
      %p104 = scmp.ne.s32.totalorder %s90, %s91
      %p105 = scmp.eq.s32.totalorder %s15, 1
      %p106 = por %p104, %p105
      %p108 = scmp.ne.s32.totalorder %s91, %s107
      %p109 = scmp.eq.s32.totalorder %s15, 0
      %p110 = por %p108, %p109
      %p111 = scmp.le.s32.totalorder 1, %s9
      %p112 = scmp.lt.s32.totalorder %s9, 3
      %p113 = pnand %p111, %p112
      %p114 = pneg %p113
      // Predicated region
      $region9: #{ssam_forward.13} parent=5 // pred_check
        _
      $region10: #{ssam_forward.13} parent=5 // pred_check_branch
        %116 = sbr.rel (%p113) target = $region12
      $region11: #{ssam_forward.13} parent=5 // pred_region
        %s117 = ssub.s32 %s9, 1
        // Predicated region
        $region13: #{ssam_forward.13} parent=11 // pred_check
          %p118 = pneg %p56
        $region14: #{ssam_forward.13} parent=11 // pred_check_branch
          %120 = sbr.rel (%p118) target = $region16
        $region15: #{ssam_forward.13} parent=11 // pred_region
          _
        $region16: #{ssam_forward.13} parent=11 // pred_fallthru
          _
        // Predicated region
        $region17: #{ssam_forward.13} parent=11 // pred_check
          %p121 = pneg %p77
        $region18: #{ssam_forward.13} parent=11 // pred_check_branch
          %123 = sbr.rel (%p121) target = $region20
        $region19: #{ssam_forward.13} parent=11 // pred_region
          _
        $region20: #{ssam_forward.13} parent=11 // pred_fallthru
          _
      $region12: #{ssam_forward.13} parent=5 // pred_fallthru
        _
      %p124 = scmp.lt.s32.totalorder %s9, 2
      // Predicated region
      $region21: #{ssam_forward.13} parent=5 // pred_check
        %p125 = pneg %p124
      $region22: #{ssam_forward.13} parent=5 // pred_check_branch
        %127 = sbr.rel (%p125) target = $region24
      $region23: #{ssam_forward.13} parent=5 // pred_region
        // Predicated region
        $region25: #{ssam_forward.13} parent=23 // pred_check
          %p128 = pneg %p29
        $region26: #{ssam_forward.13} parent=23 // pred_check_branch
          %130 = sbr.rel (%p128) target = $region28
        $region27: #{ssam_forward.13} parent=23 // pred_region
          %s131 = sand.u32 %s19, 1
          %s132 = sand.u32 %s19, 1
          %s133 = smul.addr %s132, 64
          %s134 = scalar_lea.vmem [#allocation2], %s133
          %s135 = smul.u32 2, %s9
          %s136 = smul.addr %s135, 8
          %s137 = scalar_lea.vmem %s0, %s136
          // Predicated region
          $region29: #{ssam_forward.13} parent=27 // pred_check
            _
          $region30: #{ssam_forward.13} parent=27 // pred_check_branch
            %139 = sbr.rel (0) target = $region32
          $region31: #{ssam_forward.13} parent=27 // pred_region
            // Predicated region
            $region33: #{ssam_forward.13} parent=31 // pred_check
              _
            $region34: #{ssam_forward.13} parent=31 // pred_check_branch
              %141 = sbr.rel (0) target = $region36
            $region35: #{ssam_forward.13} parent=31 // pred_region
              loop: start=0, step=1, limit=1
              $region37: #{ssam_forward.13} parent=35 // loop_pre_header
                _
              $region38: #{ssam_forward.13} parent=35 // loop_header
                %s143 = sphi 0, %s147
                %p144 = scmp.ge.s32.totalorder %s143, 1
                %s148 = sphi %s137, %s137
                %s149 = sphi %s134, %s134
              $region39: #{ssam_forward.13} parent=35 // loop_header_branch
                %146 = sbr.rel (%p144) target = $region43
              $region40: #{ssam_forward.13} parent=35 // loop_body
                %v150 = vld [vmem:[%s148] sm:$0xff]
                %151 = vst [vmem:[%s149] sm:$0xff] %v150
                %v152 = vld [vmem:[%s148 + $0x8] sm:$0xff]
                %153 = vst [vmem:[%s149 + $0x8] sm:$0xff] %v152
                %v154 = vld [vmem:[%s148 + $0x20] sm:$0xff]
                %155 = vst [vmem:[%s149 + $0x10] sm:$0xff] %v154
                %v156 = vld [vmem:[%s148 + $0x28] sm:$0xff]
                %157 = vst [vmem:[%s149 + $0x18] sm:$0xff] %v156
                %v158 = vld [vmem:[%s148 + $0x40] sm:$0xff]
                %159 = vst [vmem:[%s149 + $0x20] sm:$0xff] %v158
                %v160 = vld [vmem:[%s148 + $0x48] sm:$0xff]
                %161 = vst [vmem:[%s149 + $0x28] sm:$0xff] %v160
                %v162 = vld [vmem:[%s148 + $0x60] sm:$0xff]
                %163 = vst [vmem:[%s149 + $0x30] sm:$0xff] %v162
                %v164 = vld [vmem:[%s148 + $0x68] sm:$0xff]
                %165 = vst [vmem:[%s149 + $0x38] sm:$0xff] %v164
              $region41: #{ssam_forward.13} parent=35 // loop_footer
                %s147 = sadd.s32 1, %s143
              $region42: #{ssam_forward.13} parent=35 // loop_footer_branch
                %142 = sbr.rel target = $region38
              $region43: #{ssam_forward.13} parent=35 // loop_exit
                _
            $region36: #{ssam_forward.13} parent=31 // pred_fallthru
              _
            // Predicated region
            $region44: #{ssam_forward.13} parent=31 // pred_check
              _
            $region45: #{ssam_forward.13} parent=31 // pred_check_branch
              %167 = sbr.rel target = $region47
            $region46: #{ssam_forward.13} parent=31 // pred_region
              _
            $region47: #{ssam_forward.13} parent=31 // pred_fallthru
              _
          $region32: #{ssam_forward.13} parent=27 // pred_fallthru
            _
          %168 = vnop
        $region28: #{ssam_forward.13} parent=23 // pred_fallthru
          _
      $region24: #{ssam_forward.13} parent=5 // pred_fallthru
        _
      %p169 = scmp.le.s32.totalorder 1, %s9
      %p170 = scmp.lt.s32.totalorder %s9, 3
      %p171 = pnand %p169, %p170
      %p172 = pneg %p171
      // Predicated region
      $region48: #{ssam_forward.13} parent=5 // pred_check
        _
      $region49: #{ssam_forward.13} parent=5 // pred_check_branch
        %174 = sbr.rel (%p171) target = $region51
      $region50: #{ssam_forward.13} parent=5 // pred_region
        %s175 = ssub.s32 %s9, 1
        %s176 = sand.u32 %s22, 1
        %s177 = sand.u32 %s22, 1
        %s178 = smul.addr %s177, 64
        %s179 = scalar_lea.vmem [#allocation2], %s178
        // Predicated region
        $region52: #{ssam_forward.13} parent=50 // pred_check
          %p180 = pneg %p35
        $region53: #{ssam_forward.13} parent=50 // pred_check_branch
          %182 = sbr.rel (%p180) target = $region55
        $region54: #{ssam_forward.13} parent=50 // pred_region
          _
        $region55: #{ssam_forward.13} parent=50 // pred_fallthru
          _
        %s183 = sand.u32 %s22, 1
        %s184 = sand.u32 %s22, 1
        %s185 = smul.addr %s184, 64
        %s186 = scalar_lea.vmem [#allocation2], %s185
        %p187 = pneg %p35
        %p188 = pneg %p32
        %p189 = pneg %p56
        %p190 = pneg %p53
        %p191 = pneg %p77
        %p192 = pneg %p74
        %p193 = pneg %p103
        %p194 = pneg %p100
        %s195 = smul.u32 2, %s14
        %p196 = scmp.lt.s32.totalorder %s195, 3
        %s197 = scalar_select %p196, %s195, 3
        %s198 = smul.addr %s197, 8
        %s199 = scalar_lea.vmem %s3, %s198
        %s200 = smul.u32 2, %s14
        %s201 = smul.u32 2, %s14
        %p202 = scmp.lt.s32.totalorder %s201, 3
        %s203 = scalar_select %p202, %s201, 3
        %s204 = smul.addr %s203, 8
        %s205 = scalar_lea.vmem %s3, %s204
        %s206 = smul.u32 2, %s14
        %v207 = vld [vmem:[%s1] sm:$0xff]
        %v208 = vld [vmem:[%s179] sm:$0xff]
        %v209 = vld [vmem:[%s179 + $0x8] sm:$0xff]
        %v210 = vld [vmem:[%s179 + $0x10] sm:$0xff]
        %v211 = vld [vmem:[%s179 + $0x18] sm:$0xff]
        %v212 = vld [vmem:[%s179 + $0x20] sm:$0xff]
        %v213 = vld [vmem:[%s179 + $0x28] sm:$0xff]
        %v214 = vld [vmem:[%s179 + $0x30] sm:$0xff]
        %v215 = vld [vmem:[%s179 + $0x38] sm:$0xff]
        %v216 = vld [vmem:[%s2] sm:$0xff]
        %218 = vset.pattern.permute.xlu0 0
        %219 = vperm.xlu0 %218, %v216
        %v220 = vpop.permute.xlu0 %219
        %vm222 = vcmask 261120
        %v224 = vsel %vm222, %v207, 0
        %226 = vmatpush.msra.mxu0 0.0
        %227 = vmatpush.msra.mxu0 0.0
        %228 = vmatpush.msra.mxu0 0.0
        %229 = vmatpush.msra.mxu0 0.0
        %230 = vmatpush.msra.mxu0 0.0
        %231 = vmatpush.msra.mxu0 0.0
        %232 = vmatpush.msra.mxu0 0.0
        %233 = vmatpush.msra.mxu0 0.0
        %234 = vmatpush.msra.mxu0 0.0
        %235 = vmatpush.msra.mxu0 0.0
        %236 = vmatpush.msra.mxu0 0.0
        %237 = vmatpush.msra.mxu0 0.0
        %238 = vmatpush.msra.mxu0 %v214
        %239 = vmatpush.msra.mxu0 %v212
        %240 = vmatpush.msra.mxu0 %v210
        %241 = vmatpush.msra.mxu0 %v208
        %242 = vmatmul.f32.gmra.mxu0 %v224
        %v243 = vpop.f32.mrf.mxu0
        %v244 = vadd.f32 %v220, %v243
        %245 = vdwg.mxu0
        %246 = vmatpush.msra.mxu0 0.0
        %247 = vmatpush.msra.mxu0 0.0
        %248 = vmatpush.msra.mxu0 0.0
        %249 = vmatpush.msra.mxu0 0.0
        %250 = vmatpush.msra.mxu0 0.0
        %251 = vmatpush.msra.mxu0 0.0
        %252 = vmatpush.msra.mxu0 0.0
        %253 = vmatpush.msra.mxu0 0.0
        %254 = vmatpush.msra.mxu0 0.0
        %255 = vmatpush.msra.mxu0 0.0
        %256 = vmatpush.msra.mxu0 0.0
        %257 = vmatpush.msra.mxu0 0.0
        %258 = vmatpush.msra.mxu0 %v215
        %259 = vmatpush.msra.mxu0 %v213
        %260 = vmatpush.msra.mxu0 %v211
        %261 = vmatpush.msra.mxu0 %v209
        %262 = vmatmul.f32.gmra.mxu0 %v224
        %v263 = vpop.f32.mrf.mxu0
        %v264 = vadd.f32 %v220, %v263
        %265 = vdwg.mxu0
        %266 = vst [vmem:[%s205] sm:$0xff] %v244
        %267 = vst [vmem:[%s205 + $0x8] sm:$0xff] %v264
        %s268 = smul.u32 2, %s14
        %p269 = scmp.lt.s32.totalorder %s268, 3
        %s270 = scalar_select %p269, %s268, 3
        %s271 = smul.addr %s270, 8
        %s272 = scalar_lea.vmem %s3, %s271
        // Predicated region
        $region56: #{ssam_forward.13} parent=50 // pred_check
          %p273 = pneg %p100
        $region57: #{ssam_forward.13} parent=50 // pred_check_branch
          %275 = sbr.rel (%p273) target = $region59
        $region58: #{ssam_forward.13} parent=50 // pred_region
          %s276 = smul.u32 2, %s14
        $region59: #{ssam_forward.13} parent=50 // pred_fallthru
          _
      $region51: #{ssam_forward.13} parent=5 // pred_fallthru
        _
      %p277 = scmp.le.s32.totalorder 2, %s9
      // Predicated region
      $region60: #{ssam_forward.13} parent=5 // pred_check
        %p278 = pneg %p277
      $region61: #{ssam_forward.13} parent=5 // pred_check_branch
        %280 = sbr.rel (%p278) target = $region63
      $region62: #{ssam_forward.13} parent=5 // pred_region
        %s281 = ssub.s32 %s9, 2
        // Predicated region
        $region64: #{ssam_forward.13} parent=62 // pred_check
          %p282 = pneg %p106
        $region65: #{ssam_forward.13} parent=62 // pred_check_branch
          %284 = sbr.rel (%p282) target = $region67
        $region66: #{ssam_forward.13} parent=62 // pred_region
          %s285 = smul.u32 2, %s15
          %p286 = scmp.lt.s32.totalorder %s285, 3
          %s287 = scalar_select %p286, %s285, 3
          %s288 = smul.addr %s287, 8
          %s289 = scalar_lea.vmem %s3, %s288
        $region67: #{ssam_forward.13} parent=62 // pred_fallthru
          _
      $region63: #{ssam_forward.13} parent=5 // pred_fallthru
        _
    $region6: #{ssam_forward.13} parent=1 // loop_footer
      %s13 = sadd.s32 1, %s9
    $region7: #{ssam_forward.13} parent=1 // loop_footer_branch
      %8 = sbr.rel target = $region3
    $region8: #{ssam_forward.13} parent=1 // loop_exit
      _

// kernel: ssam_forward.12
$region0: #{ssam_forward.12}
  #allocation0 [shape = 'u32[]', space=smem, size = 0x4, offset = 0x4, fixed_abs, tag = 'smem constant byte address 0x4 - core index']
  #allocation1 [shape = 'u32[72,128]{1,0:T(1,128)}', space=vmem, size = 0x9000, scoped, tag = 'internal scratch']
  %s0 = inlined_call_operand.vmem [shape: f32[288,512], index: 0, kind: input, shape index: {}]
  %s1 = inlined_call_operand.vmem [shape: f32[32,512], index: 1, kind: input, shape index: {}]
  %s2 = inlined_call_operand.vmem [shape: f32[32,288], index: 2, kind: input, shape index: {}]
  %s3 = inlined_call_operand.vmem [shape: f32[32,1], index: 3, kind: input, shape index: {}]
  %s4 = inlined_call_operand.vmem [shape: f32[32,32], index: 4, kind: input, shape index: {}]
  %s5 = inlined_call_operand.vmem [shape: f32[32,32], index: 5, kind: input, shape index: {}]
  %s6 = inlined_call_operand.vmem [shape: f32[32,32], index: 6, kind: input, shape index: {}]
  %s7 = inlined_call_operand.vmem [shape: f32[32,32], index: 7, kind: input, shape index: {}]
  %s8 = inlined_call_operand.vmem [shape: f32[32,1], index: 8, kind: input, shape index: {}]
  %s9 = inlined_call_operand.vmem [shape: f32[32,512], index: 9, kind: output, shape index: {}]
  %s10 = sld [smem:[#allocation0]]
  $region134: #{ssam_forward.12} parent=0
    _
  %s12 = ssub.s32 1, %s10
  %s13 = scalar_select 0, %s12, %s10
  $region1: #{ssam_forward.12} parent=0
    #allocation2 [shape = 'u8[589824]{0}', space=vmem, size = 0x90000, scoped, tag = 'input window, operand 0']
    #allocation3 [shape = 'u8[65536]{0}', space=vmem, size = 0x10000, scoped, tag = 'input window, operand 1']
    #allocation4 [shape = 'u8[65536]{0}', space=vmem, size = 0x10000, scoped, tag = 'output window, operand 0']
    loop: start=0, step=1, limit=4
    $region2: #{ssam_forward.12} parent=1 // loop_pre_header
      _
    $region3: #{ssam_forward.12} parent=1 // loop_header
      %s15 = sphi 0, %s19
      %p16 = scmp.ge.s32.totalorder %s15, 4
      %s25 = sphi 0, %s27
      %s28 = sphi 0, %s25
      %s29 = sphi 0, %s28
      %s45 = sphi 0, %s29
      %s51 = sphi 0, %s53
      %s54 = sphi 0, %s51
      %s55 = sphi 0, %s54
      %s71 = sphi 0, %s55
      %s75 = sphi 0, %s75
      %s77 = sphi 0, %s75
      %s78 = sphi 0, %s77
      %s92 = sphi 0, %s78
      %s96 = sphi 0, %s96
      %s98 = sphi 0, %s96
      %s99 = sphi 0, %s98
      %s113 = sphi 0, %s99
      %s117 = sphi 0, %s117
      %s119 = sphi 0, %s117
      %s120 = sphi 0, %s119
      %s134 = sphi 0, %s120
      %s138 = sphi 0, %s138
      %s140 = sphi 0, %s138
      %s141 = sphi 0, %s140
      %s155 = sphi 0, %s141
      %s159 = sphi 0, %s159
      %s161 = sphi 0, %s159
      %s162 = sphi 0, %s161
      %s176 = sphi 0, %s162
      %s180 = sphi 0, %s180
      %s182 = sphi 0, %s180
      %s183 = sphi 0, %s182
      %s197 = sphi 0, %s183
      %s201 = sphi 0, %s201
      %s203 = sphi 0, %s201
      %s204 = sphi 0, %s203
      %s218 = sphi 0, %s204
      %s224 = sphi 0, %s226
      %s227 = sphi 0, %s224
      %s228 = sphi 0, %s227
      %s244 = sphi 0, %s228
    $region4: #{ssam_forward.12} parent=1 // loop_header_branch
      %18 = sbr.rel (%p16) target = $region8
    $region5: #{ssam_forward.12} parent=1 // loop_body
      %s20 = ssub.s32 %s15, 1
      %s21 = ssub.s32 %s15, 2
      %s22 = sadd.s32 %s15, 1
      %s23 = ssub.s32 %s15, %s22
      %p24 = scmp.eq.s32.totalorder %s23, 0
      %s26 = sadd.s32 %s25, 1
      %s27 = scalar_select %p24, %s25, %s26
      %p30 = pneg %p24
      %p31 = scmp.eq.s32.totalorder %s15, 1
      %p32 = por %p30, %p31
      %p33 = scmp.ne.s32.totalorder %s25, %s28
      %p34 = scmp.eq.s32.totalorder %s15, 0
      %p35 = por %p33, %p34
      %p36 = scmp.ne.s32.totalorder %s25, %s28
      %p37 = scmp.eq.s32.totalorder %s20, 1
      %p38 = por %p36, %p37
      %p39 = scmp.ne.s32.totalorder %s28, %s29
      %p40 = scmp.eq.s32.totalorder %s20, 0
      %p41 = por %p39, %p40
      %p42 = scmp.ne.s32.totalorder %s28, %s29
      %p43 = scmp.eq.s32.totalorder %s21, 1
      %p44 = por %p42, %p43
      %p46 = scmp.ne.s32.totalorder %s29, %s45
      %p47 = scmp.eq.s32.totalorder %s21, 0
      %p48 = por %p46, %p47
      %s49 = ssub.s32 %s15, %s22
      %p50 = scmp.eq.s32.totalorder %s49, 0
      %s52 = sadd.s32 %s51, 1
      %s53 = scalar_select %p50, %s51, %s52
      %p56 = pneg %p50
      %p57 = scmp.eq.s32.totalorder %s15, 1
      %p58 = por %p56, %p57
      %p59 = scmp.ne.s32.totalorder %s51, %s54
      %p60 = scmp.eq.s32.totalorder %s15, 0
      %p61 = por %p59, %p60
      %p62 = scmp.ne.s32.totalorder %s51, %s54
      %p63 = scmp.eq.s32.totalorder %s20, 1
      %p64 = por %p62, %p63
      %p65 = scmp.ne.s32.totalorder %s54, %s55
      %p66 = scmp.eq.s32.totalorder %s20, 0
      %p67 = por %p65, %p66
      %p68 = scmp.ne.s32.totalorder %s54, %s55
      %p69 = scmp.eq.s32.totalorder %s21, 1
      %p70 = por %p68, %p69
      %p72 = scmp.ne.s32.totalorder %s55, %s71
      %p73 = scmp.eq.s32.totalorder %s21, 0
      %p74 = por %p72, %p73
      %s76 = sadd.s32 %s75, 1
      %p79 = scmp.eq.s32.totalorder %s15, 1
      %p80 = scmp.ne.s32.totalorder %s75, %s77
      %p81 = scmp.eq.s32.totalorder %s15, 0
      %p82 = por %p80, %p81
      %p83 = scmp.ne.s32.totalorder %s75, %s77
      %p84 = scmp.eq.s32.totalorder %s20, 1
      %p85 = por %p83, %p84
      %p86 = scmp.ne.s32.totalorder %s77, %s78
      %p87 = scmp.eq.s32.totalorder %s20, 0
      %p88 = por %p86, %p87
      %p89 = scmp.ne.s32.totalorder %s77, %s78
      %p90 = scmp.eq.s32.totalorder %s21, 1
      %p91 = por %p89, %p90
      %p93 = scmp.ne.s32.totalorder %s78, %s92
      %p94 = scmp.eq.s32.totalorder %s21, 0
      %p95 = por %p93, %p94
      %s97 = sadd.s32 %s96, 1
      %p100 = scmp.eq.s32.totalorder %s15, 1
      %p101 = scmp.ne.s32.totalorder %s96, %s98
      %p102 = scmp.eq.s32.totalorder %s15, 0
      %p103 = por %p101, %p102
      %p104 = scmp.ne.s32.totalorder %s96, %s98
      %p105 = scmp.eq.s32.totalorder %s20, 1
      %p106 = por %p104, %p105
      %p107 = scmp.ne.s32.totalorder %s98, %s99
      %p108 = scmp.eq.s32.totalorder %s20, 0
      %p109 = por %p107, %p108
      %p110 = scmp.ne.s32.totalorder %s98, %s99
      %p111 = scmp.eq.s32.totalorder %s21, 1
      %p112 = por %p110, %p111
      %p114 = scmp.ne.s32.totalorder %s99, %s113
      %p115 = scmp.eq.s32.totalorder %s21, 0
      %p116 = por %p114, %p115
      %s118 = sadd.s32 %s117, 1
      %p121 = scmp.eq.s32.totalorder %s15, 1
      %p122 = scmp.ne.s32.totalorder %s117, %s119
      %p123 = scmp.eq.s32.totalorder %s15, 0
      %p124 = por %p122, %p123
      %p125 = scmp.ne.s32.totalorder %s117, %s119
      %p126 = scmp.eq.s32.totalorder %s20, 1
      %p127 = por %p125, %p126
      %p128 = scmp.ne.s32.totalorder %s119, %s120
      %p129 = scmp.eq.s32.totalorder %s20, 0
      %p130 = por %p128, %p129
      %p131 = scmp.ne.s32.totalorder %s119, %s120
      %p132 = scmp.eq.s32.totalorder %s21, 1
      %p133 = por %p131, %p132
      %p135 = scmp.ne.s32.totalorder %s120, %s134
      %p136 = scmp.eq.s32.totalorder %s21, 0
      %p137 = por %p135, %p136
      %s139 = sadd.s32 %s138, 1
      %p142 = scmp.eq.s32.totalorder %s15, 1
      %p143 = scmp.ne.s32.totalorder %s138, %s140
      %p144 = scmp.eq.s32.totalorder %s15, 0
      %p145 = por %p143, %p144
      %p146 = scmp.ne.s32.totalorder %s138, %s140
      %p147 = scmp.eq.s32.totalorder %s20, 1
      %p148 = por %p146, %p147
      %p149 = scmp.ne.s32.totalorder %s140, %s141
      %p150 = scmp.eq.s32.totalorder %s20, 0
      %p151 = por %p149, %p150
      %p152 = scmp.ne.s32.totalorder %s140, %s141
      %p153 = scmp.eq.s32.totalorder %s21, 1
      %p154 = por %p152, %p153
      %p156 = scmp.ne.s32.totalorder %s141, %s155
      %p157 = scmp.eq.s32.totalorder %s21, 0
      %p158 = por %p156, %p157
      %s160 = sadd.s32 %s159, 1
      %p163 = scmp.eq.s32.totalorder %s15, 1
      %p164 = scmp.ne.s32.totalorder %s159, %s161
      %p165 = scmp.eq.s32.totalorder %s15, 0
      %p166 = por %p164, %p165
      %p167 = scmp.ne.s32.totalorder %s159, %s161
      %p168 = scmp.eq.s32.totalorder %s20, 1
      %p169 = por %p167, %p168
      %p170 = scmp.ne.s32.totalorder %s161, %s162
      %p171 = scmp.eq.s32.totalorder %s20, 0
      %p172 = por %p170, %p171
      %p173 = scmp.ne.s32.totalorder %s161, %s162
      %p174 = scmp.eq.s32.totalorder %s21, 1
      %p175 = por %p173, %p174
      %p177 = scmp.ne.s32.totalorder %s162, %s176
      %p178 = scmp.eq.s32.totalorder %s21, 0
      %p179 = por %p177, %p178
      %s181 = sadd.s32 %s180, 1
      %p184 = scmp.eq.s32.totalorder %s15, 1
      %p185 = scmp.ne.s32.totalorder %s180, %s182
      %p186 = scmp.eq.s32.totalorder %s15, 0
      %p187 = por %p185, %p186
      %p188 = scmp.ne.s32.totalorder %s180, %s182
      %p189 = scmp.eq.s32.totalorder %s20, 1
      %p190 = por %p188, %p189
      %p191 = scmp.ne.s32.totalorder %s182, %s183
      %p192 = scmp.eq.s32.totalorder %s20, 0
      %p193 = por %p191, %p192
      %p194 = scmp.ne.s32.totalorder %s182, %s183
      %p195 = scmp.eq.s32.totalorder %s21, 1
      %p196 = por %p194, %p195
      %p198 = scmp.ne.s32.totalorder %s183, %s197
      %p199 = scmp.eq.s32.totalorder %s21, 0
      %p200 = por %p198, %p199
      %s202 = sadd.s32 %s201, 1
      %p205 = scmp.eq.s32.totalorder %s15, 1
      %p206 = scmp.ne.s32.totalorder %s201, %s203
      %p207 = scmp.eq.s32.totalorder %s15, 0
      %p208 = por %p206, %p207
      %p209 = scmp.ne.s32.totalorder %s201, %s203
      %p210 = scmp.eq.s32.totalorder %s20, 1
      %p211 = por %p209, %p210
      %p212 = scmp.ne.s32.totalorder %s203, %s204
      %p213 = scmp.eq.s32.totalorder %s20, 0
      %p214 = por %p212, %p213
      %p215 = scmp.ne.s32.totalorder %s203, %s204
      %p216 = scmp.eq.s32.totalorder %s21, 1
      %p217 = por %p215, %p216
      %p219 = scmp.ne.s32.totalorder %s204, %s218
      %p220 = scmp.eq.s32.totalorder %s21, 0
      %p221 = por %p219, %p220
      %s222 = ssub.s32 %s15, %s22
      %p223 = scmp.eq.s32.totalorder %s222, 0
      %s225 = sadd.s32 %s224, 1
      %s226 = scalar_select %p223, %s224, %s225
      %p229 = pneg %p223
      %p230 = scmp.eq.s32.totalorder %s15, 1
      %p231 = por %p229, %p230
      %p232 = scmp.ne.s32.totalorder %s224, %s227
      %p233 = scmp.eq.s32.totalorder %s15, 0
      %p234 = por %p232, %p233
      %p235 = scmp.ne.s32.totalorder %s224, %s227
      %p236 = scmp.eq.s32.totalorder %s20, 1
      %p237 = por %p235, %p236
      %p238 = scmp.ne.s32.totalorder %s227, %s228
      %p239 = scmp.eq.s32.totalorder %s20, 0
      %p240 = por %p238, %p239
      %p241 = scmp.ne.s32.totalorder %s227, %s228
      %p242 = scmp.eq.s32.totalorder %s21, 1
      %p243 = por %p241, %p242
      %p245 = scmp.ne.s32.totalorder %s228, %s244
      %p246 = scmp.eq.s32.totalorder %s21, 0
      %p247 = por %p245, %p246
      %p248 = scmp.le.s32.totalorder 1, %s15
      %p249 = scmp.lt.s32.totalorder %s15, 3
      %p250 = pnand %p248, %p249
      %p251 = pneg %p250
      // Predicated region
      $region9: #{ssam_forward.12} parent=5 // pred_check
        _
      $region10: #{ssam_forward.12} parent=5 // pred_check_branch
        %253 = sbr.rel (%p250) target = $region12
      $region11: #{ssam_forward.12} parent=5 // pred_region
        %s254 = ssub.s32 %s15, 1
        // Predicated region
        $region13: #{ssam_forward.12} parent=11 // pred_check
          %p255 = pneg %p88
        $region14: #{ssam_forward.12} parent=11 // pred_check_branch
          %257 = sbr.rel (%p255) target = $region16
        $region15: #{ssam_forward.12} parent=11 // pred_region
          _
        $region16: #{ssam_forward.12} parent=11 // pred_fallthru
          _
        // Predicated region
        $region17: #{ssam_forward.12} parent=11 // pred_check
          %p258 = pneg %p109
        $region18: #{ssam_forward.12} parent=11 // pred_check_branch
          %260 = sbr.rel (%p258) target = $region20
        $region19: #{ssam_forward.12} parent=11 // pred_region
          _
        $region20: #{ssam_forward.12} parent=11 // pred_fallthru
          _
        // Predicated region
        $region21: #{ssam_forward.12} parent=11 // pred_check
          %p261 = pneg %p130
        $region22: #{ssam_forward.12} parent=11 // pred_check_branch
          %263 = sbr.rel (%p261) target = $region24
        $region23: #{ssam_forward.12} parent=11 // pred_region
          _
        $region24: #{ssam_forward.12} parent=11 // pred_fallthru
          _
        // Predicated region
        $region25: #{ssam_forward.12} parent=11 // pred_check
          %p264 = pneg %p151
        $region26: #{ssam_forward.12} parent=11 // pred_check_branch
          %266 = sbr.rel (%p264) target = $region28
        $region27: #{ssam_forward.12} parent=11 // pred_region
          _
        $region28: #{ssam_forward.12} parent=11 // pred_fallthru
          _
        // Predicated region
        $region29: #{ssam_forward.12} parent=11 // pred_check
          %p267 = pneg %p172
        $region30: #{ssam_forward.12} parent=11 // pred_check_branch
          %269 = sbr.rel (%p267) target = $region32
        $region31: #{ssam_forward.12} parent=11 // pred_region
          _
        $region32: #{ssam_forward.12} parent=11 // pred_fallthru
          _
        // Predicated region
        $region33: #{ssam_forward.12} parent=11 // pred_check
          %p270 = pneg %p193
        $region34: #{ssam_forward.12} parent=11 // pred_check_branch
          %272 = sbr.rel (%p270) target = $region36
        $region35: #{ssam_forward.12} parent=11 // pred_region
          _
        $region36: #{ssam_forward.12} parent=11 // pred_fallthru
          _
        // Predicated region
        $region37: #{ssam_forward.12} parent=11 // pred_check
          %p273 = pneg %p214
        $region38: #{ssam_forward.12} parent=11 // pred_check_branch
          %275 = sbr.rel (%p273) target = $region40
        $region39: #{ssam_forward.12} parent=11 // pred_region
          _
        $region40: #{ssam_forward.12} parent=11 // pred_fallthru
          _
      $region12: #{ssam_forward.12} parent=5 // pred_fallthru
        _
      %p276 = scmp.lt.s32.totalorder %s15, 2
      // Predicated region
      $region41: #{ssam_forward.12} parent=5 // pred_check
        %p277 = pneg %p276
      $region42: #{ssam_forward.12} parent=5 // pred_check_branch
        %279 = sbr.rel (%p277) target = $region44
      $region43: #{ssam_forward.12} parent=5 // pred_region
        // Predicated region
        $region45: #{ssam_forward.12} parent=43 // pred_check
          %p280 = pneg %p35
        $region46: #{ssam_forward.12} parent=43 // pred_check_branch
          %282 = sbr.rel (%p280) target = $region48
        $region47: #{ssam_forward.12} parent=43 // pred_region
          %s283 = sand.u32 %s25, 1
          %s284 = sand.u32 %s25, 1
          %s285 = smul.addr %s284, 576
          %s286 = scalar_lea.vmem [#allocation2], %s285
          %s287 = smul.u32 2, %s15
          %s288 = smul.addr %s287, 8
          %s289 = scalar_lea.vmem %s0, %s288
          // Predicated region
          $region49: #{ssam_forward.12} parent=47 // pred_check
            _
          $region50: #{ssam_forward.12} parent=47 // pred_check_branch
            %291 = sbr.rel (0) target = $region52
          $region51: #{ssam_forward.12} parent=47 // pred_region
            // Predicated region
            $region53: #{ssam_forward.12} parent=51 // pred_check
              _
            $region54: #{ssam_forward.12} parent=51 // pred_check_branch
              %293 = sbr.rel (0) target = $region56
            $region55: #{ssam_forward.12} parent=51 // pred_region
              loop: start=0, step=1, limit=1
              $region57: #{ssam_forward.12} parent=55 // loop_pre_header
                _
              $region58: #{ssam_forward.12} parent=55 // loop_header
                %s295 = sphi 0, %s299
                %p296 = scmp.ge.s32.totalorder %s295, 1
                %s300 = sphi %s289, %s289
                %s301 = sphi %s286, %s286
              $region59: #{ssam_forward.12} parent=55 // loop_header_branch
                %298 = sbr.rel (%p296) target = $region63
              $region60: #{ssam_forward.12} parent=55 // loop_body
                %v302 = vld [vmem:[%s300] sm:$0xff]
                %303 = vst [vmem:[%s301] sm:$0xff] %v302
                %v304 = vld [vmem:[%s300 + $0x8] sm:$0xff]
                %305 = vst [vmem:[%s301 + $0x8] sm:$0xff] %v304
                %v306 = vld [vmem:[%s300 + $0x20] sm:$0xff]
                %307 = vst [vmem:[%s301 + $0x10] sm:$0xff] %v306
                %v308 = vld [vmem:[%s300 + $0x28] sm:$0xff]
                %309 = vst [vmem:[%s301 + $0x18] sm:$0xff] %v308
                %v310 = vld [vmem:[%s300 + $0x40] sm:$0xff]
                %311 = vst [vmem:[%s301 + $0x20] sm:$0xff] %v310
                %v312 = vld [vmem:[%s300 + $0x48] sm:$0xff]
                %313 = vst [vmem:[%s301 + $0x28] sm:$0xff] %v312
                %v314 = vld [vmem:[%s300 + $0x60] sm:$0xff]
                %315 = vst [vmem:[%s301 + $0x30] sm:$0xff] %v314
                %v316 = vld [vmem:[%s300 + $0x68] sm:$0xff]
                %317 = vst [vmem:[%s301 + $0x38] sm:$0xff] %v316
                %v318 = vld [vmem:[%s300 + $0x80] sm:$0xff]
                %319 = vst [vmem:[%s301 + $0x40] sm:$0xff] %v318
                %v320 = vld [vmem:[%s300 + $0x88] sm:$0xff]
                %321 = vst [vmem:[%s301 + $0x48] sm:$0xff] %v320
                %v322 = vld [vmem:[%s300 + $0xa0] sm:$0xff]
                %323 = vst [vmem:[%s301 + $0x50] sm:$0xff] %v322
                %v324 = vld [vmem:[%s300 + $0xa8] sm:$0xff]
                %325 = vst [vmem:[%s301 + $0x58] sm:$0xff] %v324
                %v326 = vld [vmem:[%s300 + $0xc0] sm:$0xff]
                %327 = vst [vmem:[%s301 + $0x60] sm:$0xff] %v326
                %v328 = vld [vmem:[%s300 + $0xc8] sm:$0xff]
                %329 = vst [vmem:[%s301 + $0x68] sm:$0xff] %v328
                %v330 = vld [vmem:[%s300 + $0xe0] sm:$0xff]
                %331 = vst [vmem:[%s301 + $0x70] sm:$0xff] %v330
                %v332 = vld [vmem:[%s300 + $0xe8] sm:$0xff]
                %333 = vst [vmem:[%s301 + $0x78] sm:$0xff] %v332
                %v334 = vld [vmem:[%s300 + $0x100] sm:$0xff]
                %335 = vst [vmem:[%s301 + $0x80] sm:$0xff] %v334
                %v336 = vld [vmem:[%s300 + $0x108] sm:$0xff]
                %337 = vst [vmem:[%s301 + $0x88] sm:$0xff] %v336
                %v338 = vld [vmem:[%s300 + $0x120] sm:$0xff]
                %339 = vst [vmem:[%s301 + $0x90] sm:$0xff] %v338
                %v340 = vld [vmem:[%s300 + $0x128] sm:$0xff]
                %341 = vst [vmem:[%s301 + $0x98] sm:$0xff] %v340
                %v342 = vld [vmem:[%s300 + $0x140] sm:$0xff]
                %343 = vst [vmem:[%s301 + $0xa0] sm:$0xff] %v342
                %v344 = vld [vmem:[%s300 + $0x148] sm:$0xff]
                %345 = vst [vmem:[%s301 + $0xa8] sm:$0xff] %v344
                %v346 = vld [vmem:[%s300 + $0x160] sm:$0xff]
                %347 = vst [vmem:[%s301 + $0xb0] sm:$0xff] %v346
                %v348 = vld [vmem:[%s300 + $0x168] sm:$0xff]
                %349 = vst [vmem:[%s301 + $0xb8] sm:$0xff] %v348
                %v350 = vld [vmem:[%s300 + $0x180] sm:$0xff]
                %351 = vst [vmem:[%s301 + $0xc0] sm:$0xff] %v350
                %v352 = vld [vmem:[%s300 + $0x188] sm:$0xff]
                %353 = vst [vmem:[%s301 + $0xc8] sm:$0xff] %v352
                %v354 = vld [vmem:[%s300 + $0x1a0] sm:$0xff]
                %355 = vst [vmem:[%s301 + $0xd0] sm:$0xff] %v354
                %v356 = vld [vmem:[%s300 + $0x1a8] sm:$0xff]
                %357 = vst [vmem:[%s301 + $0xd8] sm:$0xff] %v356
                %v358 = vld [vmem:[%s300 + $0x1c0] sm:$0xff]
                %359 = vst [vmem:[%s301 + $0xe0] sm:$0xff] %v358
                %v360 = vld [vmem:[%s300 + $0x1c8] sm:$0xff]
                %361 = vst [vmem:[%s301 + $0xe8] sm:$0xff] %v360
                %v362 = vld [vmem:[%s300 + $0x1e0] sm:$0xff]
                %363 = vst [vmem:[%s301 + $0xf0] sm:$0xff] %v362
                %v364 = vld [vmem:[%s300 + $0x1e8] sm:$0xff]
                %365 = vst [vmem:[%s301 + $0xf8] sm:$0xff] %v364
                %v366 = vld [vmem:[%s300 + $0x200] sm:$0xff]
                %367 = vst [vmem:[%s301 + $0x100] sm:$0xff] %v366
                %v368 = vld [vmem:[%s300 + $0x208] sm:$0xff]
                %369 = vst [vmem:[%s301 + $0x108] sm:$0xff] %v368
                %v370 = vld [vmem:[%s300 + $0x220] sm:$0xff]
                %371 = vst [vmem:[%s301 + $0x110] sm:$0xff] %v370
                %v372 = vld [vmem:[%s300 + $0x228] sm:$0xff]
                %373 = vst [vmem:[%s301 + $0x118] sm:$0xff] %v372
                %v374 = vld [vmem:[%s300 + $0x240] sm:$0xff]
                %375 = vst [vmem:[%s301 + $0x120] sm:$0xff] %v374
                %v376 = vld [vmem:[%s300 + $0x248] sm:$0xff]
                %377 = vst [vmem:[%s301 + $0x128] sm:$0xff] %v376
                %v378 = vld [vmem:[%s300 + $0x260] sm:$0xff]
                %379 = vst [vmem:[%s301 + $0x130] sm:$0xff] %v378
                %v380 = vld [vmem:[%s300 + $0x268] sm:$0xff]
                %381 = vst [vmem:[%s301 + $0x138] sm:$0xff] %v380
                %v382 = vld [vmem:[%s300 + $0x280] sm:$0xff]
                %383 = vst [vmem:[%s301 + $0x140] sm:$0xff] %v382
                %v384 = vld [vmem:[%s300 + $0x288] sm:$0xff]
                %385 = vst [vmem:[%s301 + $0x148] sm:$0xff] %v384
                %v386 = vld [vmem:[%s300 + $0x2a0] sm:$0xff]
                %387 = vst [vmem:[%s301 + $0x150] sm:$0xff] %v386
                %v388 = vld [vmem:[%s300 + $0x2a8] sm:$0xff]
                %389 = vst [vmem:[%s301 + $0x158] sm:$0xff] %v388
                %v390 = vld [vmem:[%s300 + $0x2c0] sm:$0xff]
                %391 = vst [vmem:[%s301 + $0x160] sm:$0xff] %v390
                %v392 = vld [vmem:[%s300 + $0x2c8] sm:$0xff]
                %393 = vst [vmem:[%s301 + $0x168] sm:$0xff] %v392
                %v394 = vld [vmem:[%s300 + $0x2e0] sm:$0xff]
                %395 = vst [vmem:[%s301 + $0x170] sm:$0xff] %v394
                %v396 = vld [vmem:[%s300 + $0x2e8] sm:$0xff]
                %397 = vst [vmem:[%s301 + $0x178] sm:$0xff] %v396
                %v398 = vld [vmem:[%s300 + $0x300] sm:$0xff]
                %399 = vst [vmem:[%s301 + $0x180] sm:$0xff] %v398
                %v400 = vld [vmem:[%s300 + $0x308] sm:$0xff]
                %401 = vst [vmem:[%s301 + $0x188] sm:$0xff] %v400
                %v402 = vld [vmem:[%s300 + $0x320] sm:$0xff]
                %403 = vst [vmem:[%s301 + $0x190] sm:$0xff] %v402
                %v404 = vld [vmem:[%s300 + $0x328] sm:$0xff]
                %405 = vst [vmem:[%s301 + $0x198] sm:$0xff] %v404
                %v406 = vld [vmem:[%s300 + $0x340] sm:$0xff]
                %407 = vst [vmem:[%s301 + $0x1a0] sm:$0xff] %v406
                %v408 = vld [vmem:[%s300 + $0x348] sm:$0xff]
                %409 = vst [vmem:[%s301 + $0x1a8] sm:$0xff] %v408
                %v410 = vld [vmem:[%s300 + $0x360] sm:$0xff]
                %411 = vst [vmem:[%s301 + $0x1b0] sm:$0xff] %v410
                %v412 = vld [vmem:[%s300 + $0x368] sm:$0xff]
                %413 = vst [vmem:[%s301 + $0x1b8] sm:$0xff] %v412
                %v414 = vld [vmem:[%s300 + $0x380] sm:$0xff]
                %415 = vst [vmem:[%s301 + $0x1c0] sm:$0xff] %v414
                %v416 = vld [vmem:[%s300 + $0x388] sm:$0xff]
                %417 = vst [vmem:[%s301 + $0x1c8] sm:$0xff] %v416
                %v418 = vld [vmem:[%s300 + $0x3a0] sm:$0xff]
                %419 = vst [vmem:[%s301 + $0x1d0] sm:$0xff] %v418
                %v420 = vld [vmem:[%s300 + $0x3a8] sm:$0xff]
                %421 = vst [vmem:[%s301 + $0x1d8] sm:$0xff] %v420
                %v422 = vld [vmem:[%s300 + $0x3c0] sm:$0xff]
                %423 = vst [vmem:[%s301 + $0x1e0] sm:$0xff] %v422
                %v424 = vld [vmem:[%s300 + $0x3c8] sm:$0xff]
                %425 = vst [vmem:[%s301 + $0x1e8] sm:$0xff] %v424
                %v426 = vld [vmem:[%s300 + $0x3e0] sm:$0xff]
                %427 = vst [vmem:[%s301 + $0x1f0] sm:$0xff] %v426
                %v428 = vld [vmem:[%s300 + $0x3e8] sm:$0xff]
                %429 = vst [vmem:[%s301 + $0x1f8] sm:$0xff] %v428
                %v430 = vld [vmem:[%s300 + $0x400] sm:$0xff]
                %431 = vst [vmem:[%s301 + $0x200] sm:$0xff] %v430
                %v432 = vld [vmem:[%s300 + $0x408] sm:$0xff]
                %433 = vst [vmem:[%s301 + $0x208] sm:$0xff] %v432
                %v434 = vld [vmem:[%s300 + $0x420] sm:$0xff]
                %435 = vst [vmem:[%s301 + $0x210] sm:$0xff] %v434
                %v436 = vld [vmem:[%s300 + $0x428] sm:$0xff]
                %437 = vst [vmem:[%s301 + $0x218] sm:$0xff] %v436
                %v438 = vld [vmem:[%s300 + $0x440] sm:$0xff]
                %439 = vst [vmem:[%s301 + $0x220] sm:$0xff] %v438
                %v440 = vld [vmem:[%s300 + $0x448] sm:$0xff]
                %441 = vst [vmem:[%s301 + $0x228] sm:$0xff] %v440
                %v442 = vld [vmem:[%s300 + $0x460] sm:$0xff]
                %443 = vst [vmem:[%s301 + $0x230] sm:$0xff] %v442
                %v444 = vld [vmem:[%s300 + $0x468] sm:$0xff]
                %445 = vst [vmem:[%s301 + $0x238] sm:$0xff] %v444
              $region61: #{ssam_forward.12} parent=55 // loop_footer
                %s299 = sadd.s32 1, %s295
              $region62: #{ssam_forward.12} parent=55 // loop_footer_branch
                %294 = sbr.rel target = $region58
              $region63: #{ssam_forward.12} parent=55 // loop_exit
                _
            $region56: #{ssam_forward.12} parent=51 // pred_fallthru
              _
            // Predicated region
            $region64: #{ssam_forward.12} parent=51 // pred_check
              _
            $region65: #{ssam_forward.12} parent=51 // pred_check_branch
              %447 = sbr.rel target = $region67
            $region66: #{ssam_forward.12} parent=51 // pred_region
              _
            $region67: #{ssam_forward.12} parent=51 // pred_fallthru
              _
          $region52: #{ssam_forward.12} parent=47 // pred_fallthru
            _
          %448 = vnop
        $region48: #{ssam_forward.12} parent=43 // pred_fallthru
          _
        // Predicated region
        $region68: #{ssam_forward.12} parent=43 // pred_check
          %p449 = pneg %p61
        $region69: #{ssam_forward.12} parent=43 // pred_check_branch
          %451 = sbr.rel (%p449) target = $region71
        $region70: #{ssam_forward.12} parent=43 // pred_region
          %s452 = sand.u32 %s51, 1
          %s453 = sand.u32 %s51, 1
          %s454 = smul.addr %s453, 64
          %s455 = scalar_lea.vmem [#allocation3], %s454
          %s456 = smul.u32 2, %s15
          %s457 = smul.addr %s456, 8
          %s458 = scalar_lea.vmem %s1, %s457
          // Predicated region
          $region72: #{ssam_forward.12} parent=70 // pred_check
            _
          $region73: #{ssam_forward.12} parent=70 // pred_check_branch
            %460 = sbr.rel (0) target = $region75
          $region74: #{ssam_forward.12} parent=70 // pred_region
            // Predicated region
            $region76: #{ssam_forward.12} parent=74 // pred_check
              _
            $region77: #{ssam_forward.12} parent=74 // pred_check_branch
              %462 = sbr.rel (0) target = $region79
            $region78: #{ssam_forward.12} parent=74 // pred_region
              loop: start=0, step=1, limit=1
              $region80: #{ssam_forward.12} parent=78 // loop_pre_header
                _
              $region81: #{ssam_forward.12} parent=78 // loop_header
                %s464 = sphi 0, %s468
                %p465 = scmp.ge.s32.totalorder %s464, 1
                %s469 = sphi %s458, %s458
                %s470 = sphi %s455, %s455
              $region82: #{ssam_forward.12} parent=78 // loop_header_branch
                %467 = sbr.rel (%p465) target = $region86
              $region83: #{ssam_forward.12} parent=78 // loop_body
                %v471 = vld [vmem:[%s469] sm:$0xff]
                %472 = vst [vmem:[%s470] sm:$0xff] %v471
                %v473 = vld [vmem:[%s469 + $0x8] sm:$0xff]
                %474 = vst [vmem:[%s470 + $0x8] sm:$0xff] %v473
                %v475 = vld [vmem:[%s469 + $0x20] sm:$0xff]
                %476 = vst [vmem:[%s470 + $0x10] sm:$0xff] %v475
                %v477 = vld [vmem:[%s469 + $0x28] sm:$0xff]
                %478 = vst [vmem:[%s470 + $0x18] sm:$0xff] %v477
                %v479 = vld [vmem:[%s469 + $0x40] sm:$0xff]
                %480 = vst [vmem:[%s470 + $0x20] sm:$0xff] %v479
                %v481 = vld [vmem:[%s469 + $0x48] sm:$0xff]
                %482 = vst [vmem:[%s470 + $0x28] sm:$0xff] %v481
                %v483 = vld [vmem:[%s469 + $0x60] sm:$0xff]
                %484 = vst [vmem:[%s470 + $0x30] sm:$0xff] %v483
                %v485 = vld [vmem:[%s469 + $0x68] sm:$0xff]
                %486 = vst [vmem:[%s470 + $0x38] sm:$0xff] %v485
              $region84: #{ssam_forward.12} parent=78 // loop_footer
                %s468 = sadd.s32 1, %s464
              $region85: #{ssam_forward.12} parent=78 // loop_footer_branch
                %463 = sbr.rel target = $region81
              $region86: #{ssam_forward.12} parent=78 // loop_exit
                _
            $region79: #{ssam_forward.12} parent=74 // pred_fallthru
              _
            // Predicated region
            $region87: #{ssam_forward.12} parent=74 // pred_check
              _
            $region88: #{ssam_forward.12} parent=74 // pred_check_branch
              %488 = sbr.rel target = $region90
            $region89: #{ssam_forward.12} parent=74 // pred_region
              _
            $region90: #{ssam_forward.12} parent=74 // pred_fallthru
              _
          $region75: #{ssam_forward.12} parent=70 // pred_fallthru
            _
          %489 = vnop
        $region71: #{ssam_forward.12} parent=43 // pred_fallthru
          _
      $region44: #{ssam_forward.12} parent=5 // pred_fallthru
        _
      %p490 = scmp.le.s32.totalorder 1, %s15
      %p491 = scmp.lt.s32.totalorder %s15, 3
      %p492 = pnand %p490, %p491
      %p493 = pneg %p492
      // Predicated region
      $region91: #{ssam_forward.12} parent=5 // pred_check
        _
      $region92: #{ssam_forward.12} parent=5 // pred_check_branch
        %495 = sbr.rel (%p492) target = $region94
      $region93: #{ssam_forward.12} parent=5 // pred_region
        %s496 = ssub.s32 %s15, 1
        %s497 = sand.u32 %s28, 1
        %s498 = sand.u32 %s28, 1
        %s499 = smul.addr %s498, 576
        %s500 = scalar_lea.vmem [#allocation2], %s499
        // Predicated region
        $region95: #{ssam_forward.12} parent=93 // pred_check
          %p501 = pneg %p41
        $region96: #{ssam_forward.12} parent=93 // pred_check_branch
          %503 = sbr.rel (%p501) target = $region98
        $region97: #{ssam_forward.12} parent=93 // pred_region
          _
        $region98: #{ssam_forward.12} parent=93 // pred_fallthru
          _
        %s504 = sand.u32 %s54, 1
        %s505 = sand.u32 %s54, 1
        %s506 = smul.addr %s505, 64
        %s507 = scalar_lea.vmem [#allocation3], %s506
        // Predicated region
        $region99: #{ssam_forward.12} parent=93 // pred_check
          %p508 = pneg %p67
        $region100: #{ssam_forward.12} parent=93 // pred_check_branch
          %510 = sbr.rel (%p508) target = $region102
        $region101: #{ssam_forward.12} parent=93 // pred_region
          _
        $region102: #{ssam_forward.12} parent=93 // pred_fallthru
          _
        %s511 = sand.u32 %s28, 1
        %s512 = sand.u32 %s28, 1
        %s513 = smul.addr %s512, 576
        %s514 = scalar_lea.vmem [#allocation2], %s513
        %p515 = pneg %p41
        %p516 = pneg %p38
        %s517 = sand.u32 %s54, 1
        %s518 = sand.u32 %s54, 1
        %s519 = smul.addr %s518, 64
        %s520 = scalar_lea.vmem [#allocation3], %s519
        %p521 = pneg %p67
        %p522 = pneg %p64
        %p523 = pneg %p88
        %p524 = pneg %p85
        %p525 = pneg %p109
        %p526 = pneg %p106
        %p527 = pneg %p130
        %p528 = pneg %p127
        %p529 = pneg %p151
        %p530 = pneg %p148
        %p531 = pneg %p172
        %p532 = pneg %p169
        %p533 = pneg %p193
        %p534 = pneg %p190
        %p535 = pneg %p214
        %p536 = pneg %p211
        %p537 = pneg %p240
        %p538 = pneg %p237
        %s539 = sand.u32 %s227, 1
        %s540 = sand.u32 %s227, 1
        %s541 = smul.addr %s540, 64
        %s542 = scalar_lea.vmem [#allocation4], %s541
        %s543 = smul.u32 2, %s20
        %s544 = smul.u32 2, %s20
        %s545 = smul.u32 2, %s20
        %v546 = vld [vmem:[%s2] sm:$0xff]
        %v547 = vld [vmem:[%s2 + $0x8] sm:$0xff]
        %v548 = vld [vmem:[%s2 + $0x10] sm:$0xff]
        %v549 = vld [vmem:[%s2 + $0x18] sm:$0xff]
        %v550 = vld [vmem:[%s2 + $0x20] sm:$0xff]
        %v551 = vld [vmem:[%s2 + $0x28] sm:$0xff]
        %v552 = vld [vmem:[%s2 + $0x30] sm:$0xff]
        %v553 = vld [vmem:[%s2 + $0x38] sm:$0xff]
        %v554 = vld [vmem:[%s2 + $0x40] sm:$0xff]
        %v555 = vld [vmem:[%s2 + $0x48] sm:$0xff]
        %v556 = vld [vmem:[%s2 + $0x50] sm:$0xff]
        %v557 = vld [vmem:[%s2 + $0x58] sm:$0xff]
        %v558 = vld [vmem:[%s500] sm:$0xff]
        %v559 = vld [vmem:[%s500 + $0x8] sm:$0xff]
        %v560 = vld [vmem:[%s500 + $0x10] sm:$0xff]
        %v561 = vld [vmem:[%s500 + $0x18] sm:$0xff]
        %v562 = vld [vmem:[%s500 + $0x20] sm:$0xff]
        %v563 = vld [vmem:[%s500 + $0x28] sm:$0xff]
        %v564 = vld [vmem:[%s500 + $0x30] sm:$0xff]
        %v565 = vld [vmem:[%s500 + $0x38] sm:$0xff]
        %v566 = vld [vmem:[%s500 + $0x40] sm:$0xff]
        %v567 = vld [vmem:[%s500 + $0x48] sm:$0xff]
        %v568 = vld [vmem:[%s500 + $0x50] sm:$0xff]
        %v569 = vld [vmem:[%s500 + $0x58] sm:$0xff]
        %v570 = vld [vmem:[%s500 + $0x60] sm:$0xff]
        %v571 = vld [vmem:[%s500 + $0x68] sm:$0xff]
        %v572 = vld [vmem:[%s500 + $0x70] sm:$0xff]
        %v573 = vld [vmem:[%s500 + $0x78] sm:$0xff]
        %v574 = vld [vmem:[%s500 + $0x80] sm:$0xff]
        %v575 = vld [vmem:[%s500 + $0x88] sm:$0xff]
        %v576 = vld [vmem:[%s500 + $0x90] sm:$0xff]
        %v577 = vld [vmem:[%s500 + $0x98] sm:$0xff]
        %v578 = vld [vmem:[%s500 + $0xa0] sm:$0xff]
        %v579 = vld [vmem:[%s500 + $0xa8] sm:$0xff]
        %v580 = vld [vmem:[%s500 + $0xb0] sm:$0xff]
        %v581 = vld [vmem:[%s500 + $0xb8] sm:$0xff]
        %v582 = vld [vmem:[%s500 + $0xc0] sm:$0xff]
        %v583 = vld [vmem:[%s500 + $0xc8] sm:$0xff]
        %v584 = vld [vmem:[%s500 + $0xd0] sm:$0xff]
        %v585 = vld [vmem:[%s500 + $0xd8] sm:$0xff]
        %v586 = vld [vmem:[%s500 + $0xe0] sm:$0xff]
        %v587 = vld [vmem:[%s500 + $0xe8] sm:$0xff]
        %v588 = vld [vmem:[%s500 + $0xf0] sm:$0xff]
        %v589 = vld [vmem:[%s500 + $0xf8] sm:$0xff]
        %v590 = vld [vmem:[%s500 + $0x100] sm:$0xff]
        %v591 = vld [vmem:[%s500 + $0x108] sm:$0xff]
        %v592 = vld [vmem:[%s500 + $0x110] sm:$0xff]
        %v593 = vld [vmem:[%s500 + $0x118] sm:$0xff]
        %v594 = vld [vmem:[%s500 + $0x120] sm:$0xff]
        %v595 = vld [vmem:[%s500 + $0x128] sm:$0xff]
        %v596 = vld [vmem:[%s500 + $0x130] sm:$0xff]
        %v597 = vld [vmem:[%s500 + $0x138] sm:$0xff]
        %v598 = vld [vmem:[%s500 + $0x140] sm:$0xff]
        %v599 = vld [vmem:[%s500 + $0x148] sm:$0xff]
        %v600 = vld [vmem:[%s500 + $0x150] sm:$0xff]
        %v601 = vld [vmem:[%s500 + $0x158] sm:$0xff]
        %v602 = vld [vmem:[%s500 + $0x160] sm:$0xff]
        %v603 = vld [vmem:[%s500 + $0x168] sm:$0xff]
        %v604 = vld [vmem:[%s500 + $0x170] sm:$0xff]
        %v605 = vld [vmem:[%s500 + $0x178] sm:$0xff]
        %v606 = vld [vmem:[%s500 + $0x180] sm:$0xff]
        %v607 = vld [vmem:[%s500 + $0x188] sm:$0xff]
        %v608 = vld [vmem:[%s500 + $0x190] sm:$0xff]
        %v609 = vld [vmem:[%s500 + $0x198] sm:$0xff]
        %v610 = vld [vmem:[%s500 + $0x1a0] sm:$0xff]
        %v611 = vld [vmem:[%s500 + $0x1a8] sm:$0xff]
        %v612 = vld [vmem:[%s500 + $0x1b0] sm:$0xff]
        %v613 = vld [vmem:[%s500 + $0x1b8] sm:$0xff]
        %v614 = vld [vmem:[%s500 + $0x1c0] sm:$0xff]
        %v615 = vld [vmem:[%s500 + $0x1c8] sm:$0xff]
        %v616 = vld [vmem:[%s500 + $0x1d0] sm:$0xff]
        %v617 = vld [vmem:[%s500 + $0x1d8] sm:$0xff]
        %v618 = vld [vmem:[%s500 + $0x1e0] sm:$0xff]
        %v619 = vld [vmem:[%s500 + $0x1e8] sm:$0xff]
        %v620 = vld [vmem:[%s500 + $0x1f0] sm:$0xff]
        %v621 = vld [vmem:[%s500 + $0x1f8] sm:$0xff]
        %v622 = vld [vmem:[%s500 + $0x200] sm:$0xff]
        %v623 = vld [vmem:[%s500 + $0x208] sm:$0xff]
        %v624 = vld [vmem:[%s500 + $0x210] sm:$0xff]
        %v625 = vld [vmem:[%s500 + $0x218] sm:$0xff]
        %v626 = vld [vmem:[%s500 + $0x220] sm:$0xff]
        %v627 = vld [vmem:[%s500 + $0x228] sm:$0xff]
        %v628 = vld [vmem:[%s500 + $0x230] sm:$0xff]
        %v629 = vld [vmem:[%s500 + $0x238] sm:$0xff]
        %v630 = vld [vmem:[%s3] sm:$0xff]
        %v631 = vld [vmem:[%s3 + $0x8] sm:$0xff]
        %v632 = vld [vmem:[%s3 + $0x10] sm:$0xff]
        %v633 = vld [vmem:[%s3 + $0x18] sm:$0xff]
        %635 = vset.pattern.permute.xlu0 0
        %636 = vperm.xlu0 %635, %v630
        %v637 = vpop.permute.xlu0 %636
        %640 = vset.pattern.permute.xlu0 0
        %641 = vperm.xlu0 %640, %v631
        %v642 = vpop.permute.xlu0 %641
        %645 = vset.pattern.permute.xlu0 0
        %646 = vperm.xlu0 %645, %v632
        %v647 = vpop.permute.xlu0 %646
        %650 = vset.pattern.permute.xlu0 0
        %651 = vperm.xlu0 %650, %v633
        %v652 = vpop.permute.xlu0 %651
        %vm654 = vcmask 261120
        %v656 = vsel %vm654, %v548, 0
        %v659 = vsel %vm654, %v551, 0
        %v662 = vsel %vm654, %v554, 0
        %v665 = vsel %vm654, %v557, 0
        %667 = vmatpush.msra.mxu0 %v588
        %668 = vmatpush.msra.mxu0 %v586
        %669 = vmatpush.msra.mxu0 %v584
        %670 = vmatpush.msra.mxu0 %v582
        %671 = vmatpush.msra.mxu0 %v580
        %672 = vmatpush.msra.mxu0 %v578
        %673 = vmatpush.msra.mxu0 %v576
        %674 = vmatpush.msra.mxu0 %v574
        %675 = vmatpush.msra.mxu0 %v572
        %676 = vmatpush.msra.mxu0 %v570
        %677 = vmatpush.msra.mxu0 %v568
        %678 = vmatpush.msra.mxu0 %v566
        %679 = vmatpush.msra.mxu0 %v564
        %680 = vmatpush.msra.mxu0 %v562
        %681 = vmatpush.msra.mxu0 %v560
        %682 = vmatpush.msra.mxu0 %v558
        %683 = vmatmul.f32.gmra.mxu0 %v546
        %v684 = vpop.f32.mrf.mxu0
        %v685 = vadd.f32 %v637, %v684
        %686 = vmatmul.f32.gmra.mxu0 %v549
        %v687 = vpop.f32.mrf.mxu0
        %v688 = vadd.f32 %v642, %v687
        %689 = vmatmul.f32.gmra.mxu0 %v552
        %v690 = vpop.f32.mrf.mxu0
        %v691 = vadd.f32 %v647, %v690
        %692 = vmatmul.f32.gmra.mxu0 %v555
        %v693 = vpop.f32.mrf.mxu0
        %v694 = vadd.f32 %v652, %v693
        %695 = vdwg.mxu0
        %696 = vmatpush.msra.mxu0 %v620
        %697 = vmatpush.msra.mxu0 %v618
        %698 = vmatpush.msra.mxu0 %v616
        %699 = vmatpush.msra.mxu0 %v614
        %700 = vmatpush.msra.mxu0 %v612
        %701 = vmatpush.msra.mxu0 %v610
        %702 = vmatpush.msra.mxu0 %v608
        %703 = vmatpush.msra.mxu0 %v606
        %704 = vmatpush.msra.mxu0 %v604
        %705 = vmatpush.msra.mxu0 %v602
        %706 = vmatpush.msra.mxu0 %v600
        %707 = vmatpush.msra.mxu0 %v598
        %708 = vmatpush.msra.mxu0 %v596
        %709 = vmatpush.msra.mxu0 %v594
        %710 = vmatpush.msra.mxu0 %v592
        %711 = vmatpush.msra.mxu0 %v590
        %712 = vmatmul.f32.gmra.mxu0 %v547
        %v713 = vpop.f32.mrf.mxu0
        %v714 = vadd.f32 %v685, %v713
        %715 = vmatmul.f32.gmra.mxu0 %v550
        %v716 = vpop.f32.mrf.mxu0
        %v717 = vadd.f32 %v688, %v716
        %718 = vmatmul.f32.gmra.mxu0 %v553
        %v719 = vpop.f32.mrf.mxu0
        %v720 = vadd.f32 %v691, %v719
        %721 = vmatmul.f32.gmra.mxu0 %v556
        %v722 = vpop.f32.mrf.mxu0
        %v723 = vadd.f32 %v694, %v722
        %724 = vdwg.mxu0
        %725 = vmatpush.msra.mxu0 0.0
        %726 = vmatpush.msra.mxu0 0.0
        %727 = vmatpush.msra.mxu0 0.0
        %728 = vmatpush.msra.mxu0 0.0
        %729 = vmatpush.msra.mxu0 0.0
        %730 = vmatpush.msra.mxu0 0.0
        %731 = vmatpush.msra.mxu0 0.0
        %732 = vmatpush.msra.mxu0 0.0
        %733 = vmatpush.msra.mxu0 0.0
        %734 = vmatpush.msra.mxu0 0.0
        %735 = vmatpush.msra.mxu0 0.0
        %736 = vmatpush.msra.mxu0 0.0
        %737 = vmatpush.msra.mxu0 %v628
        %738 = vmatpush.msra.mxu0 %v626
        %739 = vmatpush.msra.mxu0 %v624
        %740 = vmatpush.msra.mxu0 %v622
        %741 = vmatmul.f32.gmra.mxu0 %v656
        %v742 = vpop.f32.mrf.mxu0
        %v743 = vadd.f32 %v714, %v742
        %744 = vmatmul.f32.gmra.mxu0 %v659
        %v745 = vpop.f32.mrf.mxu0
        %v746 = vadd.f32 %v717, %v745
        %747 = vmatmul.f32.gmra.mxu0 %v662
        %v748 = vpop.f32.mrf.mxu0
        %v749 = vadd.f32 %v720, %v748
        %750 = vmatmul.f32.gmra.mxu0 %v665
        %v751 = vpop.f32.mrf.mxu0
        %v752 = vadd.f32 %v723, %v751
        %753 = vdwg.mxu0
        %754 = vmatpush.msra.mxu0 %v589
        %755 = vmatpush.msra.mxu0 %v587
        %756 = vmatpush.msra.mxu0 %v585
        %757 = vmatpush.msra.mxu0 %v583
        %758 = vmatpush.msra.mxu0 %v581
        %759 = vmatpush.msra.mxu0 %v579
        %760 = vmatpush.msra.mxu0 %v577
        %761 = vmatpush.msra.mxu0 %v575
        %762 = vmatpush.msra.mxu0 %v573
        %763 = vmatpush.msra.mxu0 %v571
        %764 = vmatpush.msra.mxu0 %v569
        %765 = vmatpush.msra.mxu0 %v567
        %766 = vmatpush.msra.mxu0 %v565
        %767 = vmatpush.msra.mxu0 %v563
        %768 = vmatpush.msra.mxu0 %v561
        %769 = vmatpush.msra.mxu0 %v559
        %770 = vmatmul.f32.gmra.mxu0 %v546
        %v771 = vpop.f32.mrf.mxu0
        %v772 = vadd.f32 %v637, %v771
        %773 = vmatmul.f32.gmra.mxu0 %v549
        %v774 = vpop.f32.mrf.mxu0
        %v775 = vadd.f32 %v642, %v774
        %776 = vmatmul.f32.gmra.mxu0 %v552
        %v777 = vpop.f32.mrf.mxu0
        %v778 = vadd.f32 %v647, %v777
        %779 = vmatmul.f32.gmra.mxu0 %v555
        %v780 = vpop.f32.mrf.mxu0
        %v781 = vadd.f32 %v652, %v780
        %782 = vdwg.mxu0
        %783 = vmatpush.msra.mxu0 %v621
        %784 = vmatpush.msra.mxu0 %v619
        %785 = vmatpush.msra.mxu0 %v617
        %786 = vmatpush.msra.mxu0 %v615
        %787 = vmatpush.msra.mxu0 %v613
        %788 = vmatpush.msra.mxu0 %v611
        %789 = vmatpush.msra.mxu0 %v609
        %790 = vmatpush.msra.mxu0 %v607
        %791 = vmatpush.msra.mxu0 %v605
        %792 = vmatpush.msra.mxu0 %v603
        %793 = vmatpush.msra.mxu0 %v601
        %794 = vmatpush.msra.mxu0 %v599
        %795 = vmatpush.msra.mxu0 %v597
        %796 = vmatpush.msra.mxu0 %v595
        %797 = vmatpush.msra.mxu0 %v593
        %798 = vmatpush.msra.mxu0 %v591
        %799 = vmatmul.f32.gmra.mxu0 %v547
        %v800 = vpop.f32.mrf.mxu0
        %v801 = vadd.f32 %v772, %v800
        %802 = vmatmul.f32.gmra.mxu0 %v550
        %v803 = vpop.f32.mrf.mxu0
        %v804 = vadd.f32 %v775, %v803
        %805 = vmatmul.f32.gmra.mxu0 %v553
        %v806 = vpop.f32.mrf.mxu0
        %v807 = vadd.f32 %v778, %v806
        %808 = vmatmul.f32.gmra.mxu0 %v556
        %v809 = vpop.f32.mrf.mxu0
        %v810 = vadd.f32 %v781, %v809
        %811 = vdwg.mxu0
        %812 = vmatpush.msra.mxu0 0.0
        %813 = vmatpush.msra.mxu0 0.0
        %814 = vmatpush.msra.mxu0 0.0
        %815 = vmatpush.msra.mxu0 0.0
        %816 = vmatpush.msra.mxu0 0.0
        %817 = vmatpush.msra.mxu0 0.0
        %818 = vmatpush.msra.mxu0 0.0
        %819 = vmatpush.msra.mxu0 0.0
        %820 = vmatpush.msra.mxu0 0.0
        %821 = vmatpush.msra.mxu0 0.0
        %822 = vmatpush.msra.mxu0 0.0
        %823 = vmatpush.msra.mxu0 0.0
        %824 = vmatpush.msra.mxu0 %v629
        %825 = vmatpush.msra.mxu0 %v627
        %826 = vmatpush.msra.mxu0 %v625
        %827 = vmatpush.msra.mxu0 %v623
        %828 = vmatmul.f32.gmra.mxu0 %v656
        %v829 = vpop.f32.mrf.mxu0
        %v830 = vadd.f32 %v801, %v829
        %831 = vmatmul.f32.gmra.mxu0 %v659
        %v832 = vpop.f32.mrf.mxu0
        %v833 = vadd.f32 %v804, %v832
        %834 = vmatmul.f32.gmra.mxu0 %v662
        %v835 = vpop.f32.mrf.mxu0
        %v836 = vadd.f32 %v807, %v835
        %837 = vmatmul.f32.gmra.mxu0 %v665
        %v838 = vpop.f32.mrf.mxu0
        %v839 = vadd.f32 %v810, %v838
        %840 = vdwg.mxu0
        %v841 = vld [vmem:[%s4] sm:$0xff]
        %v842 = vld [vmem:[%s4 + $0x8] sm:$0xff]
        %v843 = vld [vmem:[%s4 + $0x10] sm:$0xff]
        %v844 = vld [vmem:[%s4 + $0x18] sm:$0xff]
        %v846 = vsel %vm654, %v841, 0
        %v849 = vsel %vm654, %v842, 0
        %v852 = vsel %vm654, %v843, 0
        %v855 = vsel %vm654, %v844, 0
        %857 = vmatpush.msra.mxu0 0.0
        %858 = vmatpush.msra.mxu0 0.0
        %859 = vmatpush.msra.mxu0 0.0
        %860 = vmatpush.msra.mxu0 0.0
        %861 = vmatpush.msra.mxu0 0.0
        %862 = vmatpush.msra.mxu0 0.0
        %863 = vmatpush.msra.mxu0 0.0
        %864 = vmatpush.msra.mxu0 0.0
        %865 = vmatpush.msra.mxu0 0.0
        %866 = vmatpush.msra.mxu0 0.0
        %867 = vmatpush.msra.mxu0 0.0
        %868 = vmatpush.msra.mxu0 0.0
        %869 = vmatpush.msra.mxu0 %v752
        %870 = vmatpush.msra.mxu0 %v749
        %871 = vmatpush.msra.mxu0 %v746
        %872 = vmatpush.msra.mxu0 %v743
        %873 = vmatmul.f32.gmra.mxu0 %v846
        %v874 = vpop.f32.mrf.mxu0
        %v875 = vadd.f32 0.0, %v874
        %876 = vmatmul.f32.gmra.mxu0 %v849
        %v877 = vpop.f32.mrf.mxu0
        %v878 = vadd.f32 0.0, %v877
        %879 = vmatmul.f32.gmra.mxu0 %v852
        %v880 = vpop.f32.mrf.mxu0
        %v881 = vadd.f32 0.0, %v880
        %882 = vmatmul.f32.gmra.mxu0 %v855
        %v883 = vpop.f32.mrf.mxu0
        %v884 = vadd.f32 0.0, %v883
        %885 = vdwg.mxu0
        %886 = vmatpush.msra.mxu0 0.0
        %887 = vmatpush.msra.mxu0 0.0
        %888 = vmatpush.msra.mxu0 0.0
        %889 = vmatpush.msra.mxu0 0.0
        %890 = vmatpush.msra.mxu0 0.0
        %891 = vmatpush.msra.mxu0 0.0
        %892 = vmatpush.msra.mxu0 0.0
        %893 = vmatpush.msra.mxu0 0.0
        %894 = vmatpush.msra.mxu0 0.0
        %895 = vmatpush.msra.mxu0 0.0
        %896 = vmatpush.msra.mxu0 0.0
        %897 = vmatpush.msra.mxu0 0.0
        %898 = vmatpush.msra.mxu0 %v839
        %899 = vmatpush.msra.mxu0 %v836
        %900 = vmatpush.msra.mxu0 %v833
        %901 = vmatpush.msra.mxu0 %v830
        %902 = vmatmul.f32.gmra.mxu0 %v846
        %v903 = vpop.f32.mrf.mxu0
        %v904 = vadd.f32 0.0, %v903
        %905 = vmatmul.f32.gmra.mxu0 %v849
        %v906 = vpop.f32.mrf.mxu0
        %v907 = vadd.f32 0.0, %v906
        %908 = vmatmul.f32.gmra.mxu0 %v852
        %v909 = vpop.f32.mrf.mxu0
        %v910 = vadd.f32 0.0, %v909
        %911 = vmatmul.f32.gmra.mxu0 %v855
        %v912 = vpop.f32.mrf.mxu0
        %v913 = vadd.f32 0.0, %v912
        %914 = vdwg.mxu0
        %v915 = vld [vmem:[%s5] sm:$0xff]
        %v916 = vld [vmem:[%s5 + $0x8] sm:$0xff]
        %v917 = vld [vmem:[%s5 + $0x10] sm:$0xff]
        %v918 = vld [vmem:[%s5 + $0x18] sm:$0xff]
        %v920 = vsel %vm654, %v915, 0
        %v923 = vsel %vm654, %v916, 0
        %v926 = vsel %vm654, %v917, 0
        %v929 = vsel %vm654, %v918, 0
        %931 = vmatpush.msra.mxu0 0.0
        %932 = vmatpush.msra.mxu0 0.0
        %933 = vmatpush.msra.mxu0 0.0
        %934 = vmatpush.msra.mxu0 0.0
        %935 = vmatpush.msra.mxu0 0.0
        %936 = vmatpush.msra.mxu0 0.0
        %937 = vmatpush.msra.mxu0 0.0
        %938 = vmatpush.msra.mxu0 0.0
        %939 = vmatpush.msra.mxu0 0.0
        %940 = vmatpush.msra.mxu0 0.0
        %941 = vmatpush.msra.mxu0 0.0
        %942 = vmatpush.msra.mxu0 0.0
        %943 = vmatpush.msra.mxu0 %v752
        %944 = vmatpush.msra.mxu0 %v749
        %945 = vmatpush.msra.mxu0 %v746
        %946 = vmatpush.msra.mxu0 %v743
        %947 = vmatmul.f32.gmra.mxu0 %v920
        %v948 = vpop.f32.mrf.mxu0
        %v949 = vadd.f32 0.0, %v948
        %950 = vmatmul.f32.gmra.mxu0 %v923
        %v951 = vpop.f32.mrf.mxu0
        %v952 = vadd.f32 0.0, %v951
        %953 = vmatmul.f32.gmra.mxu0 %v926
        %v954 = vpop.f32.mrf.mxu0
        %v955 = vadd.f32 0.0, %v954
        %956 = vmatmul.f32.gmra.mxu0 %v929
        %v957 = vpop.f32.mrf.mxu0
        %v958 = vadd.f32 0.0, %v957
        %959 = vdwg.mxu0
        %960 = vmatpush.msra.mxu0 0.0
        %961 = vmatpush.msra.mxu0 0.0
        %962 = vmatpush.msra.mxu0 0.0
        %963 = vmatpush.msra.mxu0 0.0
        %964 = vmatpush.msra.mxu0 0.0
        %965 = vmatpush.msra.mxu0 0.0
        %966 = vmatpush.msra.mxu0 0.0
        %967 = vmatpush.msra.mxu0 0.0
        %968 = vmatpush.msra.mxu0 0.0
        %969 = vmatpush.msra.mxu0 0.0
        %970 = vmatpush.msra.mxu0 0.0
        %971 = vmatpush.msra.mxu0 0.0
        %972 = vmatpush.msra.mxu0 %v839
        %973 = vmatpush.msra.mxu0 %v836
        %974 = vmatpush.msra.mxu0 %v833
        %975 = vmatpush.msra.mxu0 %v830
        %976 = vmatmul.f32.gmra.mxu0 %v920
        %v977 = vpop.f32.mrf.mxu0
        %v978 = vadd.f32 0.0, %v977
        %979 = vmatmul.f32.gmra.mxu0 %v923
        %v980 = vpop.f32.mrf.mxu0
        %v981 = vadd.f32 0.0, %v980
        %982 = vmatmul.f32.gmra.mxu0 %v926
        %v983 = vpop.f32.mrf.mxu0
        %v984 = vadd.f32 0.0, %v983
        %985 = vmatmul.f32.gmra.mxu0 %v929
        %v986 = vpop.f32.mrf.mxu0
        %v987 = vadd.f32 0.0, %v986
        %988 = vdwg.mxu0
        %v989 = vld [vmem:[%s6] sm:$0xff]
        %v990 = vld [vmem:[%s6 + $0x8] sm:$0xff]
        %v991 = vld [vmem:[%s6 + $0x10] sm:$0xff]
        %v992 = vld [vmem:[%s6 + $0x18] sm:$0xff]
        %v994 = vsel %vm654, %v989, 0
        %v997 = vsel %vm654, %v990, 0
        %v1000 = vsel %vm654, %v991, 0
        %v1003 = vsel %vm654, %v992, 0
        %1005 = vmatpush.msra.mxu0 0.0
        %1006 = vmatpush.msra.mxu0 0.0
        %1007 = vmatpush.msra.mxu0 0.0
        %1008 = vmatpush.msra.mxu0 0.0
        %1009 = vmatpush.msra.mxu0 0.0
        %1010 = vmatpush.msra.mxu0 0.0
        %1011 = vmatpush.msra.mxu0 0.0
        %1012 = vmatpush.msra.mxu0 0.0
        %1013 = vmatpush.msra.mxu0 0.0
        %1014 = vmatpush.msra.mxu0 0.0
        %1015 = vmatpush.msra.mxu0 0.0
        %1016 = vmatpush.msra.mxu0 0.0
        %1017 = vmatpush.msra.mxu0 %v752
        %1018 = vmatpush.msra.mxu0 %v749
        %1019 = vmatpush.msra.mxu0 %v746
        %1020 = vmatpush.msra.mxu0 %v743
        %1021 = vmatmul.f32.gmra.mxu0 %v994
        %v1022 = vpop.f32.mrf.mxu0
        %v1023 = vadd.f32 0.0, %v1022
        %1024 = vmatmul.f32.gmra.mxu0 %v997
        %v1025 = vpop.f32.mrf.mxu0
        %v1026 = vadd.f32 0.0, %v1025
        %1027 = vmatmul.f32.gmra.mxu0 %v1000
        %v1028 = vpop.f32.mrf.mxu0
        %v1029 = vadd.f32 0.0, %v1028
        %1030 = vmatmul.f32.gmra.mxu0 %v1003
        %v1031 = vpop.f32.mrf.mxu0
        %v1032 = vadd.f32 0.0, %v1031
        %1033 = vdwg.mxu0
        %1034 = vmatpush.msra.mxu0 0.0
        %1035 = vmatpush.msra.mxu0 0.0
        %1036 = vmatpush.msra.mxu0 0.0
        %1037 = vmatpush.msra.mxu0 0.0
        %1038 = vmatpush.msra.mxu0 0.0
        %1039 = vmatpush.msra.mxu0 0.0
        %1040 = vmatpush.msra.mxu0 0.0
        %1041 = vmatpush.msra.mxu0 0.0
        %1042 = vmatpush.msra.mxu0 0.0
        %1043 = vmatpush.msra.mxu0 0.0
        %1044 = vmatpush.msra.mxu0 0.0
        %1045 = vmatpush.msra.mxu0 0.0
        %1046 = vmatpush.msra.mxu0 %v839
        %1047 = vmatpush.msra.mxu0 %v836
        %1048 = vmatpush.msra.mxu0 %v833
        %1049 = vmatpush.msra.mxu0 %v830
        %1050 = vmatmul.f32.gmra.mxu0 %v994
        %v1051 = vpop.f32.mrf.mxu0
        %v1052 = vadd.f32 0.0, %v1051
        %1053 = vmatmul.f32.gmra.mxu0 %v997
        %v1054 = vpop.f32.mrf.mxu0
        %v1055 = vadd.f32 0.0, %v1054
        %1056 = vmatmul.f32.gmra.mxu0 %v1000
        %v1057 = vpop.f32.mrf.mxu0
        %v1058 = vadd.f32 0.0, %v1057
        %1059 = vmatmul.f32.gmra.mxu0 %v1003
        %v1060 = vpop.f32.mrf.mxu0
        %v1061 = vadd.f32 0.0, %v1060
        %1062 = vdwg.mxu0
        %v1063 = vmul.f32 %v875, %v875
        %v1064 = vmul.f32 %v904, %v904
        %v1065 = vmul.f32 %v878, %v878
        %v1066 = vmul.f32 %v907, %v907
        %v1067 = vmul.f32 %v881, %v881
        %v1068 = vmul.f32 %v910, %v910
        %v1069 = vmul.f32 %v884, %v884
        %v1070 = vmul.f32 %v913, %v913
        %v1071 = vadd.f32 %v1063, %v1065
        %v1072 = vadd.f32 %v1071, %v1067
        %v1073 = vadd.f32 %v1072, %v1069
        %v1074 = vrot.slane %v1073, 4
        %v1075 = vadd.f32 %v1073, %v1074
        %v1076 = vrot.slane %v1075, 2
        %v1077 = vadd.f32 %v1075, %v1076
        %v1078 = vrot.slane %v1077, 1
        %v1079 = vadd.f32 %v1077, %v1078
        %v1080 = vadd.f32 %v1064, %v1066
        %v1081 = vadd.f32 %v1080, %v1068
        %v1082 = vadd.f32 %v1081, %v1070
        %v1083 = vrot.slane %v1082, 4
        %v1084 = vadd.f32 %v1082, %v1083
        %v1085 = vrot.slane %v1084, 2
        %v1086 = vadd.f32 %v1084, %v1085
        %v1087 = vrot.slane %v1086, 1
        %v1088 = vadd.f32 %v1086, %v1087
        %v1089 = vrsqrt.pop %v1079
        %v1090 = vmul.f32 %v1089, %v1079
        %v1091 = vmul.f32 %v1090, %v1089
        %v1092 = vmul.f32 0.5, %v1091
        %v1093 = vsub.f32 1.5, %v1092
        %v1094 = vmul.f32 %v1089, %v1093
        %v1095 = vmul.f32 %v1079, %v1094
        %vm1096 = vcmp.eq.f32.partialorder %v1079, inf
        %v1097 = vsel %vm1096, %v1079, %v1095
        %vm1098 = vcmp.eq.f32.partialorder %v1079, 0.0
        %v1099 = vand.u32 %v1079, 2147483648
        %v1100 = vsel %vm1098, %v1099, %v1097
        %v1101 = vrsqrt.pop %v1088
        %v1102 = vmul.f32 %v1101, %v1088
        %v1103 = vmul.f32 %v1102, %v1101
        %v1104 = vmul.f32 0.5, %v1103
        %v1105 = vsub.f32 1.5, %v1104
        %v1106 = vmul.f32 %v1101, %v1105
        %v1107 = vmul.f32 %v1088, %v1106
        %vm1108 = vcmp.eq.f32.partialorder %v1088, inf
        %v1109 = vsel %vm1108, %v1088, %v1107
        %vm1110 = vcmp.eq.f32.partialorder %v1088, 0.0
        %v1111 = vand.u32 %v1088, 2147483648
        %v1112 = vsel %vm1110, %v1111, %v1109
        %v1113 = vmax.f32 %v1100, 1e-12
        %v1114 = vmax.f32 %v1112, 1e-12
        %v1115 = vrcp.pop %v1113
        %v1116 = vmul.f32 %v1113, %v1115
        %v1117 = vsub.f32 1.0, %v1116
        %v1118 = vmul.f32 %v1115, %v1117
        %v1119 = vadd.f32 %v1115, %v1118
        %vm1120 = vweird.f32 %v1113
        %vm1121 = vweird.f32 %v1115
        %vm1122 = vmor %vm1120, %vm1121
        %v1123 = vsel %vm1122, %v1115, %v1119
        %v1124 = vand.u32 2147483647, %v1113
        %vm1125 = vcmp.eq.f32.partialorder %v1124, 8.507059e+37
        %v1126 = vand.u32 %v1113, 2147483648
        %v1127 = vor.u32 1.1754944e-38, %v1126
        %v1128 = vsel %vm1125, %v1127, %v1123
        %v1129 = vmul.f32 %v875, %v1128
        %v1130 = vrcp.pop %v1114
        %v1131 = vmul.f32 %v1114, %v1130
        %v1132 = vsub.f32 1.0, %v1131
        %v1133 = vmul.f32 %v1130, %v1132
        %v1134 = vadd.f32 %v1130, %v1133
        %vm1135 = vweird.f32 %v1114
        %vm1136 = vweird.f32 %v1130
        %vm1137 = vmor %vm1135, %vm1136
        %v1138 = vsel %vm1137, %v1130, %v1134
        %v1139 = vand.u32 2147483647, %v1114
        %vm1140 = vcmp.eq.f32.partialorder %v1139, 8.507059e+37
        %v1141 = vand.u32 %v1114, 2147483648
        %v1142 = vor.u32 1.1754944e-38, %v1141
        %v1143 = vsel %vm1140, %v1142, %v1138
        %v1144 = vmul.f32 %v904, %v1143
        %v1145 = vmul.f32 %v878, %v1128
        %v1146 = vmul.f32 %v907, %v1143
        %v1147 = vmul.f32 %v881, %v1128
        %v1148 = vmul.f32 %v910, %v1143
        %v1149 = vmul.f32 %v884, %v1128
        %v1150 = vmul.f32 %v913, %v1143
        %v1151 = vmul.f32 %v949, %v949
        %v1152 = vmul.f32 %v978, %v978
        %v1153 = vmul.f32 %v952, %v952
        %v1154 = vmul.f32 %v981, %v981
        %v1155 = vmul.f32 %v955, %v955
        %v1156 = vmul.f32 %v984, %v984
        %v1157 = vmul.f32 %v958, %v958
        %v1158 = vmul.f32 %v987, %v987
        %v1159 = vadd.f32 %v1151, %v1153
        %v1160 = vadd.f32 %v1159, %v1155
        %v1161 = vadd.f32 %v1160, %v1157
        %v1162 = vrot.slane %v1161, 4
        %v1163 = vadd.f32 %v1161, %v1162
        %v1164 = vrot.slane %v1163, 2
        %v1165 = vadd.f32 %v1163, %v1164
        %v1166 = vrot.slane %v1165, 1
        %v1167 = vadd.f32 %v1165, %v1166
        %v1168 = vadd.f32 %v1152, %v1154
        %v1169 = vadd.f32 %v1168, %v1156
        %v1170 = vadd.f32 %v1169, %v1158
        %v1171 = vrot.slane %v1170, 4
        %v1172 = vadd.f32 %v1170, %v1171
        %v1173 = vrot.slane %v1172, 2
        %v1174 = vadd.f32 %v1172, %v1173
        %v1175 = vrot.slane %v1174, 1
        %v1176 = vadd.f32 %v1174, %v1175
        %v1177 = vrsqrt.pop %v1167
        %v1178 = vmul.f32 %v1177, %v1167
        %v1179 = vmul.f32 %v1178, %v1177
        %v1180 = vmul.f32 0.5, %v1179
        %v1181 = vsub.f32 1.5, %v1180
        %v1182 = vmul.f32 %v1177, %v1181
        %v1183 = vmul.f32 %v1167, %v1182
        %vm1184 = vcmp.eq.f32.partialorder %v1167, inf
        %v1185 = vsel %vm1184, %v1167, %v1183
        %vm1186 = vcmp.eq.f32.partialorder %v1167, 0.0
        %v1187 = vand.u32 %v1167, 2147483648
        %v1188 = vsel %vm1186, %v1187, %v1185
        %v1189 = vrsqrt.pop %v1176
        %v1190 = vmul.f32 %v1189, %v1176
        %v1191 = vmul.f32 %v1190, %v1189
        %v1192 = vmul.f32 0.5, %v1191
        %v1193 = vsub.f32 1.5, %v1192
        %v1194 = vmul.f32 %v1189, %v1193
        %v1195 = vmul.f32 %v1176, %v1194
        %vm1196 = vcmp.eq.f32.partialorder %v1176, inf
        %v1197 = vsel %vm1196, %v1176, %v1195
        %vm1198 = vcmp.eq.f32.partialorder %v1176, 0.0
        %v1199 = vand.u32 %v1176, 2147483648
        %v1200 = vsel %vm1198, %v1199, %v1197
        %v1201 = vmax.f32 %v1188, 1e-12
        %v1202 = vmax.f32 %v1200, 1e-12
        %v1203 = vrcp.pop %v1201
        %v1204 = vmul.f32 %v1201, %v1203
        %v1205 = vsub.f32 1.0, %v1204
        %v1206 = vmul.f32 %v1203, %v1205
        %v1207 = vadd.f32 %v1203, %v1206
        %vm1208 = vweird.f32 %v1201
        %vm1209 = vweird.f32 %v1203
        %vm1210 = vmor %vm1208, %vm1209
        %v1211 = vsel %vm1210, %v1203, %v1207
        %v1212 = vand.u32 2147483647, %v1201
        %vm1213 = vcmp.eq.f32.partialorder %v1212, 8.507059e+37
        %v1214 = vand.u32 %v1201, 2147483648
        %v1215 = vor.u32 1.1754944e-38, %v1214
        %v1216 = vsel %vm1213, %v1215, %v1211
        %v1217 = vmul.f32 %v949, %v1216
        %v1218 = vrcp.pop %v1202
        %v1219 = vmul.f32 %v1202, %v1218
        %v1220 = vsub.f32 1.0, %v1219
        %v1221 = vmul.f32 %v1218, %v1220
        %v1222 = vadd.f32 %v1218, %v1221
        %vm1223 = vweird.f32 %v1202
        %vm1224 = vweird.f32 %v1218
        %vm1225 = vmor %vm1223, %vm1224
        %v1226 = vsel %vm1225, %v1218, %v1222
        %v1227 = vand.u32 2147483647, %v1202
        %vm1228 = vcmp.eq.f32.partialorder %v1227, 8.507059e+37
        %v1229 = vand.u32 %v1202, 2147483648
        %v1230 = vor.u32 1.1754944e-38, %v1229
        %v1231 = vsel %vm1228, %v1230, %v1226
        %v1232 = vmul.f32 %v978, %v1231
        %v1233 = vmul.f32 %v952, %v1216
        %v1234 = vmul.f32 %v981, %v1231
        %v1235 = vmul.f32 %v955, %v1216
        %v1236 = vmul.f32 %v984, %v1231
        %v1237 = vmul.f32 %v958, %v1216
        %v1238 = vmul.f32 %v987, %v1231
        %v1247 = vrot.slane %v1144, 7
        %v1248 = vrot.slane %v1146, 7
        %v1249 = vrot.slane %v1148, 7
        %v1250 = vrot.slane %v1150, 7
        %vm1251 = vcmask 1040384
        %v1252 = vsel %vm1251, %v1129, %v1247
        %vm1253 = vcmask 1041409
        %v1254 = vsel %vm1253, %v1129, %v1247
        %v1255 = vrot.slane %v1254, 1
        %vm1256 = vcmask 1042434
        %v1257 = vsel %vm1256, %v1129, %v1247
        %v1258 = vrot.slane %v1257, 2
        %vm1259 = vcmask 1043459
        %v1260 = vsel %vm1259, %v1129, %v1247
        %v1261 = vrot.slane %v1260, 3
        %vm1262 = vcmask 1044484
        %v1263 = vsel %vm1262, %v1129, %v1247
        %v1264 = vrot.slane %v1263, 4
        %vm1265 = vcmask 1045509
        %v1266 = vsel %vm1265, %v1129, %v1247
        %v1267 = vrot.slane %v1266, 5
        %vm1268 = vcmask 1046534
        %v1269 = vsel %vm1268, %v1129, %v1247
        %v1270 = vrot.slane %v1269, 6
        %vm1271 = vcmask 1046528
        %v1272 = vsel %vm1271, %v1247, %v1129
        %v1273 = vrot.slane %v1272, 7
        %v1274 = vsel %vm1251, %v1145, %v1248
        %v1275 = vsel %vm1253, %v1145, %v1248
        %v1276 = vrot.slane %v1275, 1
        %v1277 = vsel %vm1256, %v1145, %v1248
        %v1278 = vrot.slane %v1277, 2
        %v1279 = vsel %vm1259, %v1145, %v1248
        %v1280 = vrot.slane %v1279, 3
        %v1281 = vsel %vm1262, %v1145, %v1248
        %v1282 = vrot.slane %v1281, 4
        %v1283 = vsel %vm1265, %v1145, %v1248
        %v1284 = vrot.slane %v1283, 5
        %v1285 = vsel %vm1268, %v1145, %v1248
        %v1286 = vrot.slane %v1285, 6
        %v1287 = vsel %vm1271, %v1248, %v1145
        %v1288 = vrot.slane %v1287, 7
        %v1289 = vsel %vm1251, %v1147, %v1249
        %v1290 = vsel %vm1253, %v1147, %v1249
        %v1291 = vrot.slane %v1290, 1
        %v1292 = vsel %vm1256, %v1147, %v1249
        %v1293 = vrot.slane %v1292, 2
        %v1294 = vsel %vm1259, %v1147, %v1249
        %v1295 = vrot.slane %v1294, 3
        %v1296 = vsel %vm1262, %v1147, %v1249
        %v1297 = vrot.slane %v1296, 4
        %v1298 = vsel %vm1265, %v1147, %v1249
        %v1299 = vrot.slane %v1298, 5
        %v1300 = vsel %vm1268, %v1147, %v1249
        %v1301 = vrot.slane %v1300, 6
        %v1302 = vsel %vm1271, %v1249, %v1147
        %v1303 = vrot.slane %v1302, 7
        %v1304 = vsel %vm1251, %v1149, %v1250
        %v1305 = vsel %vm1253, %v1149, %v1250
        %v1306 = vrot.slane %v1305, 1
        %v1307 = vsel %vm1256, %v1149, %v1250
        %v1308 = vrot.slane %v1307, 2
        %v1309 = vsel %vm1259, %v1149, %v1250
        %v1310 = vrot.slane %v1309, 3
        %v1311 = vsel %vm1262, %v1149, %v1250
        %v1312 = vrot.slane %v1311, 4
        %v1313 = vsel %vm1265, %v1149, %v1250
        %v1314 = vrot.slane %v1313, 5
        %v1315 = vsel %vm1268, %v1149, %v1250
        %v1316 = vrot.slane %v1315, 6
        %v1317 = vsel %vm1271, %v1250, %v1149
        %v1318 = vrot.slane %v1317, 7
        %v1319 = vperm.slane %v1252, 0
        %v1320 = vperm.slane %v1252, 1
        %v1321 = vperm.slane %v1255, 0
        %v1322 = vperm.slane %v1255, 1
        %v1323 = vperm.slane %v1258, 0
        %v1324 = vperm.slane %v1258, 1
        %v1325 = vperm.slane %v1261, 0
        %v1326 = vperm.slane %v1261, 1
        %v1327 = vperm.slane %v1264, 0
        %v1328 = vperm.slane %v1264, 1
        %v1329 = vperm.slane %v1267, 0
        %v1330 = vperm.slane %v1267, 1
        %v1331 = vperm.slane %v1270, 0
        %v1332 = vperm.slane %v1270, 1
        %v1333 = vperm.slane %v1273, 0
        %v1334 = vperm.slane %v1273, 1
        %v1335 = vperm.slane %v1274, 0
        %v1336 = vperm.slane %v1274, 1
        %v1337 = vperm.slane %v1276, 0
        %v1338 = vperm.slane %v1276, 1
        %v1339 = vperm.slane %v1278, 0
        %v1340 = vperm.slane %v1278, 1
        %v1341 = vperm.slane %v1280, 0
        %v1342 = vperm.slane %v1280, 1
        %v1343 = vperm.slane %v1282, 0
        %v1344 = vperm.slane %v1282, 1
        %v1345 = vperm.slane %v1284, 0
        %v1346 = vperm.slane %v1284, 1
        %v1347 = vperm.slane %v1286, 0
        %v1348 = vperm.slane %v1286, 1
        %v1349 = vperm.slane %v1288, 0
        %v1350 = vperm.slane %v1288, 1
        %v1351 = vperm.slane %v1289, 0
        %v1352 = vperm.slane %v1289, 1
        %v1353 = vperm.slane %v1291, 0
        %v1354 = vperm.slane %v1291, 1
        %v1355 = vperm.slane %v1293, 0
        %v1356 = vperm.slane %v1293, 1
        %v1357 = vperm.slane %v1295, 0
        %v1358 = vperm.slane %v1295, 1
        %v1359 = vperm.slane %v1297, 0
        %v1360 = vperm.slane %v1297, 1
        %v1361 = vperm.slane %v1299, 0
        %v1362 = vperm.slane %v1299, 1
        %v1363 = vperm.slane %v1301, 0
        %v1364 = vperm.slane %v1301, 1
        %v1365 = vperm.slane %v1303, 0
        %v1366 = vperm.slane %v1303, 1
        %v1367 = vperm.slane %v1304, 0
        %v1368 = vperm.slane %v1304, 1
        %v1369 = vperm.slane %v1306, 0
        %v1370 = vperm.slane %v1306, 1
        %v1371 = vperm.slane %v1308, 0
        %v1372 = vperm.slane %v1308, 1
        %v1373 = vperm.slane %v1310, 0
        %v1374 = vperm.slane %v1310, 1
        %v1375 = vperm.slane %v1312, 0
        %v1376 = vperm.slane %v1312, 1
        %v1377 = vperm.slane %v1314, 0
        %v1378 = vperm.slane %v1314, 1
        %v1379 = vperm.slane %v1316, 0
        %v1380 = vperm.slane %v1316, 1
        %v1381 = vperm.slane %v1318, 0
        %v1382 = vperm.slane %v1318, 1
        %v1447 = vmul.f32 %v1319, %v1217
        %v1448 = vmul.f32 %v1320, %v1232
        %v1449 = vmul.f32 %v1319, %v1233
        %v1450 = vmul.f32 %v1320, %v1234
        %v1451 = vmul.f32 %v1319, %v1235
        %v1452 = vmul.f32 %v1320, %v1236
        %v1453 = vmul.f32 %v1319, %v1237
        %v1454 = vmul.f32 %v1320, %v1238
        %v1455 = vmul.f32 %v1321, %v1217
        %v1456 = vmul.f32 %v1322, %v1232
        %v1457 = vmul.f32 %v1321, %v1233
        %v1458 = vmul.f32 %v1322, %v1234
        %v1459 = vmul.f32 %v1321, %v1235
        %v1460 = vmul.f32 %v1322, %v1236
        %v1461 = vmul.f32 %v1321, %v1237
        %v1462 = vmul.f32 %v1322, %v1238
        %v1463 = vmul.f32 %v1323, %v1217
        %v1464 = vmul.f32 %v1324, %v1232
        %v1465 = vmul.f32 %v1323, %v1233
        %v1466 = vmul.f32 %v1324, %v1234
        %v1467 = vmul.f32 %v1323, %v1235
        %v1468 = vmul.f32 %v1324, %v1236
        %v1469 = vmul.f32 %v1323, %v1237
        %v1470 = vmul.f32 %v1324, %v1238
        %v1471 = vmul.f32 %v1325, %v1217
        %v1472 = vmul.f32 %v1326, %v1232
        %v1473 = vmul.f32 %v1325, %v1233
        %v1474 = vmul.f32 %v1326, %v1234
        %v1475 = vmul.f32 %v1325, %v1235
        %v1476 = vmul.f32 %v1326, %v1236
        %v1477 = vmul.f32 %v1325, %v1237
        %v1478 = vmul.f32 %v1326, %v1238
        %v1479 = vmul.f32 %v1327, %v1217
        %v1480 = vmul.f32 %v1328, %v1232
        %v1481 = vmul.f32 %v1327, %v1233
        %v1482 = vmul.f32 %v1328, %v1234
        %v1483 = vmul.f32 %v1327, %v1235
        %v1484 = vmul.f32 %v1328, %v1236
        %v1485 = vmul.f32 %v1327, %v1237
        %v1486 = vmul.f32 %v1328, %v1238
        %v1487 = vmul.f32 %v1329, %v1217
        %v1488 = vmul.f32 %v1330, %v1232
        %v1489 = vmul.f32 %v1329, %v1233
        %v1490 = vmul.f32 %v1330, %v1234
        %v1491 = vmul.f32 %v1329, %v1235
        %v1492 = vmul.f32 %v1330, %v1236
        %v1493 = vmul.f32 %v1329, %v1237
        %v1494 = vmul.f32 %v1330, %v1238
        %v1495 = vmul.f32 %v1331, %v1217
        %v1496 = vmul.f32 %v1332, %v1232
        %v1497 = vmul.f32 %v1331, %v1233
        %v1498 = vmul.f32 %v1332, %v1234
        %v1499 = vmul.f32 %v1331, %v1235
        %v1500 = vmul.f32 %v1332, %v1236
        %v1501 = vmul.f32 %v1331, %v1237
        %v1502 = vmul.f32 %v1332, %v1238
        %v1503 = vmul.f32 %v1333, %v1217
        %v1504 = vmul.f32 %v1334, %v1232
        %v1505 = vmul.f32 %v1333, %v1233
        %v1506 = vmul.f32 %v1334, %v1234
        %v1507 = vmul.f32 %v1333, %v1235
        %v1508 = vmul.f32 %v1334, %v1236
        %v1509 = vmul.f32 %v1333, %v1237
        %v1510 = vmul.f32 %v1334, %v1238
        %v1511 = vmul.f32 %v1335, %v1217
        %v1512 = vmul.f32 %v1336, %v1232
        %v1513 = vmul.f32 %v1335, %v1233
        %v1514 = vmul.f32 %v1336, %v1234
        %v1515 = vmul.f32 %v1335, %v1235
        %v1516 = vmul.f32 %v1336, %v1236
        %v1517 = vmul.f32 %v1335, %v1237
        %v1518 = vmul.f32 %v1336, %v1238
        %v1519 = vmul.f32 %v1337, %v1217
        %v1520 = vmul.f32 %v1338, %v1232
        %v1521 = vmul.f32 %v1337, %v1233
        %v1522 = vmul.f32 %v1338, %v1234
        %v1523 = vmul.f32 %v1337, %v1235
        %v1524 = vmul.f32 %v1338, %v1236
        %v1525 = vmul.f32 %v1337, %v1237
        %v1526 = vmul.f32 %v1338, %v1238
        %v1527 = vmul.f32 %v1339, %v1217
        %v1528 = vmul.f32 %v1340, %v1232
        %v1529 = vmul.f32 %v1339, %v1233
        %v1530 = vmul.f32 %v1340, %v1234
        %v1531 = vmul.f32 %v1339, %v1235
        %v1532 = vmul.f32 %v1340, %v1236
        %v1533 = vmul.f32 %v1339, %v1237
        %v1534 = vmul.f32 %v1340, %v1238
        %v1535 = vmul.f32 %v1341, %v1217
        %v1536 = vmul.f32 %v1342, %v1232
        %v1537 = vmul.f32 %v1341, %v1233
        %v1538 = vmul.f32 %v1342, %v1234
        %v1539 = vmul.f32 %v1341, %v1235
        %v1540 = vmul.f32 %v1342, %v1236
        %v1541 = vmul.f32 %v1341, %v1237
        %v1542 = vmul.f32 %v1342, %v1238
        %v1543 = vmul.f32 %v1343, %v1217
        %v1544 = vmul.f32 %v1344, %v1232
        %v1545 = vmul.f32 %v1343, %v1233
        %v1546 = vmul.f32 %v1344, %v1234
        %v1547 = vmul.f32 %v1343, %v1235
        %v1548 = vmul.f32 %v1344, %v1236
        %v1549 = vmul.f32 %v1343, %v1237
        %v1550 = vmul.f32 %v1344, %v1238
        %v1551 = vmul.f32 %v1345, %v1217
        %v1552 = vmul.f32 %v1346, %v1232
        %v1553 = vmul.f32 %v1345, %v1233
        %v1554 = vmul.f32 %v1346, %v1234
        %v1555 = vmul.f32 %v1345, %v1235
        %v1556 = vmul.f32 %v1346, %v1236
        %v1557 = vmul.f32 %v1345, %v1237
        %v1558 = vmul.f32 %v1346, %v1238
        %v1559 = vmul.f32 %v1347, %v1217
        %v1560 = vmul.f32 %v1348, %v1232
        %v1561 = vmul.f32 %v1347, %v1233
        %v1562 = vmul.f32 %v1348, %v1234
        %v1563 = vmul.f32 %v1347, %v1235
        %v1564 = vmul.f32 %v1348, %v1236
        %v1565 = vmul.f32 %v1347, %v1237
        %v1566 = vmul.f32 %v1348, %v1238
        %v1567 = vmul.f32 %v1349, %v1217
        %v1568 = vmul.f32 %v1350, %v1232
        %v1569 = vmul.f32 %v1349, %v1233
        %v1570 = vmul.f32 %v1350, %v1234
        %v1571 = vmul.f32 %v1349, %v1235
        %v1572 = vmul.f32 %v1350, %v1236
        %v1573 = vmul.f32 %v1349, %v1237
        %v1574 = vmul.f32 %v1350, %v1238
        %v1575 = vmul.f32 %v1351, %v1217
        %v1576 = vmul.f32 %v1352, %v1232
        %v1577 = vmul.f32 %v1351, %v1233
        %v1578 = vmul.f32 %v1352, %v1234
        %v1579 = vmul.f32 %v1351, %v1235
        %v1580 = vmul.f32 %v1352, %v1236
        %v1581 = vmul.f32 %v1351, %v1237
        %v1582 = vmul.f32 %v1352, %v1238
        %v1583 = vmul.f32 %v1353, %v1217
        %v1584 = vmul.f32 %v1354, %v1232
        %v1585 = vmul.f32 %v1353, %v1233
        %v1586 = vmul.f32 %v1354, %v1234
        %v1587 = vmul.f32 %v1353, %v1235
        %v1588 = vmul.f32 %v1354, %v1236
        %v1589 = vmul.f32 %v1353, %v1237
        %v1590 = vmul.f32 %v1354, %v1238
        %v1591 = vmul.f32 %v1355, %v1217
        %v1592 = vmul.f32 %v1356, %v1232
        %v1593 = vmul.f32 %v1355, %v1233
        %v1594 = vmul.f32 %v1356, %v1234
        %v1595 = vmul.f32 %v1355, %v1235
        %v1596 = vmul.f32 %v1356, %v1236
        %v1597 = vmul.f32 %v1355, %v1237
        %v1598 = vmul.f32 %v1356, %v1238
        %v1599 = vmul.f32 %v1357, %v1217
        %v1600 = vmul.f32 %v1358, %v1232
        %v1601 = vmul.f32 %v1357, %v1233
        %v1602 = vmul.f32 %v1358, %v1234
        %v1603 = vmul.f32 %v1357, %v1235
        %v1604 = vmul.f32 %v1358, %v1236
        %v1605 = vmul.f32 %v1357, %v1237
        %v1606 = vmul.f32 %v1358, %v1238
        %v1607 = vmul.f32 %v1359, %v1217
        %v1608 = vmul.f32 %v1360, %v1232
        %v1609 = vmul.f32 %v1359, %v1233
        %v1610 = vmul.f32 %v1360, %v1234
        %v1611 = vmul.f32 %v1359, %v1235
        %v1612 = vmul.f32 %v1360, %v1236
        %v1613 = vmul.f32 %v1359, %v1237
        %v1614 = vmul.f32 %v1360, %v1238
        %v1615 = vmul.f32 %v1361, %v1217
        %v1616 = vmul.f32 %v1362, %v1232
        %v1617 = vmul.f32 %v1361, %v1233
        %v1618 = vmul.f32 %v1362, %v1234
        %v1619 = vmul.f32 %v1361, %v1235
        %v1620 = vmul.f32 %v1362, %v1236
        %v1621 = vmul.f32 %v1361, %v1237
        %v1622 = vmul.f32 %v1362, %v1238
        %v1623 = vmul.f32 %v1363, %v1217
        %v1624 = vmul.f32 %v1364, %v1232
        %v1625 = vmul.f32 %v1363, %v1233
        %v1626 = vmul.f32 %v1364, %v1234
        %v1627 = vmul.f32 %v1363, %v1235
        %v1628 = vmul.f32 %v1364, %v1236
        %v1629 = vmul.f32 %v1363, %v1237
        %v1630 = vmul.f32 %v1364, %v1238
        %v1631 = vmul.f32 %v1365, %v1217
        %v1632 = vmul.f32 %v1366, %v1232
        %v1633 = vmul.f32 %v1365, %v1233
        %v1634 = vmul.f32 %v1366, %v1234
        %v1635 = vmul.f32 %v1365, %v1235
        %v1636 = vmul.f32 %v1366, %v1236
        %v1637 = vmul.f32 %v1365, %v1237
        %v1638 = vmul.f32 %v1366, %v1238
        %v1639 = vmul.f32 %v1367, %v1217
        %v1640 = vmul.f32 %v1368, %v1232
        %v1641 = vmul.f32 %v1367, %v1233
        %v1642 = vmul.f32 %v1368, %v1234
        %v1643 = vmul.f32 %v1367, %v1235
        %v1644 = vmul.f32 %v1368, %v1236
        %v1645 = vmul.f32 %v1367, %v1237
        %v1646 = vmul.f32 %v1368, %v1238
        %v1647 = vmul.f32 %v1369, %v1217
        %v1648 = vmul.f32 %v1370, %v1232
        %v1649 = vmul.f32 %v1369, %v1233
        %v1650 = vmul.f32 %v1370, %v1234
        %v1651 = vmul.f32 %v1369, %v1235
        %v1652 = vmul.f32 %v1370, %v1236
        %v1653 = vmul.f32 %v1369, %v1237
        %v1654 = vmul.f32 %v1370, %v1238
        %v1655 = vmul.f32 %v1371, %v1217
        %v1656 = vmul.f32 %v1372, %v1232
        %v1657 = vmul.f32 %v1371, %v1233
        %v1658 = vmul.f32 %v1372, %v1234
        %v1659 = vmul.f32 %v1371, %v1235
        %v1660 = vmul.f32 %v1372, %v1236
        %v1661 = vmul.f32 %v1371, %v1237
        %v1662 = vmul.f32 %v1372, %v1238
        %v1663 = vmul.f32 %v1373, %v1217
        %v1664 = vmul.f32 %v1374, %v1232
        %v1665 = vmul.f32 %v1373, %v1233
        %v1666 = vmul.f32 %v1374, %v1234
        %v1667 = vmul.f32 %v1373, %v1235
        %v1668 = vmul.f32 %v1374, %v1236
        %v1669 = vmul.f32 %v1373, %v1237
        %v1670 = vmul.f32 %v1374, %v1238
        %v1671 = vmul.f32 %v1375, %v1217
        %v1672 = vmul.f32 %v1376, %v1232
        %v1673 = vmul.f32 %v1375, %v1233
        %v1674 = vmul.f32 %v1376, %v1234
        %v1675 = vmul.f32 %v1375, %v1235
        %v1676 = vmul.f32 %v1376, %v1236
        %v1677 = vmul.f32 %v1375, %v1237
        %v1678 = vmul.f32 %v1376, %v1238
        %v1679 = vmul.f32 %v1377, %v1217
        %v1680 = vmul.f32 %v1378, %v1232
        %v1681 = vmul.f32 %v1377, %v1233
        %v1682 = vmul.f32 %v1378, %v1234
        %v1683 = vmul.f32 %v1377, %v1235
        %v1684 = vmul.f32 %v1378, %v1236
        %v1685 = vmul.f32 %v1377, %v1237
        %v1686 = vmul.f32 %v1378, %v1238
        %v1687 = vmul.f32 %v1379, %v1217
        %v1688 = vmul.f32 %v1380, %v1232
        %v1689 = vmul.f32 %v1379, %v1233
        %v1690 = vmul.f32 %v1380, %v1234
        %v1691 = vmul.f32 %v1379, %v1235
        %v1692 = vmul.f32 %v1380, %v1236
        %v1693 = vmul.f32 %v1379, %v1237
        %v1694 = vmul.f32 %v1380, %v1238
        %v1695 = vmul.f32 %v1381, %v1217
        %v1696 = vmul.f32 %v1382, %v1232
        %v1697 = vmul.f32 %v1381, %v1233
        %v1698 = vmul.f32 %v1382, %v1234
        %v1699 = vmul.f32 %v1381, %v1235
        %v1700 = vmul.f32 %v1382, %v1236
        %v1701 = vmul.f32 %v1381, %v1237
        %v1702 = vmul.f32 %v1382, %v1238
        %v1703 = vmax.f32 %v1447, %v1449
        %v1704 = vmax.f32 %v1703, %v1451
        %v1705 = vmax.f32 %v1704, %v1453
        %v1706 = vrot.slane %v1705, 4
        %v1707 = vmax.f32 %v1705, %v1706
        %v1708 = vrot.slane %v1707, 2
        %v1709 = vmax.f32 %v1707, %v1708
        %v1710 = vrot.slane %v1709, 1
        %v1711 = vmax.f32 %v1709, %v1710
        %v1712 = vmax.f32 %v1448, %v1450
        %v1713 = vmax.f32 %v1712, %v1452
        %v1714 = vmax.f32 %v1713, %v1454
        %v1715 = vrot.slane %v1714, 4
        %v1716 = vmax.f32 %v1714, %v1715
        %v1717 = vrot.slane %v1716, 2
        %v1718 = vmax.f32 %v1716, %v1717
        %v1719 = vrot.slane %v1718, 1
        %v1720 = vmax.f32 %v1718, %v1719
        %v1721 = vmax.f32 %v1455, %v1457
        %v1722 = vmax.f32 %v1721, %v1459
        %v1723 = vmax.f32 %v1722, %v1461
        %v1724 = vrot.slane %v1723, 4
        %v1725 = vmax.f32 %v1723, %v1724
        %v1726 = vrot.slane %v1725, 2
        %v1727 = vmax.f32 %v1725, %v1726
        %v1728 = vrot.slane %v1727, 1
        %v1729 = vmax.f32 %v1727, %v1728
        %v1730 = vmax.f32 %v1456, %v1458
        %v1731 = vmax.f32 %v1730, %v1460
        %v1732 = vmax.f32 %v1731, %v1462
        %v1733 = vrot.slane %v1732, 4
        %v1734 = vmax.f32 %v1732, %v1733
        %v1735 = vrot.slane %v1734, 2
        %v1736 = vmax.f32 %v1734, %v1735
        %v1737 = vrot.slane %v1736, 1
        %v1738 = vmax.f32 %v1736, %v1737
        %v1739 = vmax.f32 %v1463, %v1465
        %v1740 = vmax.f32 %v1739, %v1467
        %v1741 = vmax.f32 %v1740, %v1469
        %v1742 = vrot.slane %v1741, 4
        %v1743 = vmax.f32 %v1741, %v1742
        %v1744 = vrot.slane %v1743, 2
        %v1745 = vmax.f32 %v1743, %v1744
        %v1746 = vrot.slane %v1745, 1
        %v1747 = vmax.f32 %v1745, %v1746
        %v1748 = vmax.f32 %v1464, %v1466
        %v1749 = vmax.f32 %v1748, %v1468
        %v1750 = vmax.f32 %v1749, %v1470
        %v1751 = vrot.slane %v1750, 4
        %v1752 = vmax.f32 %v1750, %v1751
        %v1753 = vrot.slane %v1752, 2
        %v1754 = vmax.f32 %v1752, %v1753
        %v1755 = vrot.slane %v1754, 1
        %v1756 = vmax.f32 %v1754, %v1755
        %v1757 = vmax.f32 %v1471, %v1473
        %v1758 = vmax.f32 %v1757, %v1475
        %v1759 = vmax.f32 %v1758, %v1477
        %v1760 = vrot.slane %v1759, 4
        %v1761 = vmax.f32 %v1759, %v1760
        %v1762 = vrot.slane %v1761, 2
        %v1763 = vmax.f32 %v1761, %v1762
        %v1764 = vrot.slane %v1763, 1
        %v1765 = vmax.f32 %v1763, %v1764
        %v1766 = vmax.f32 %v1472, %v1474
        %v1767 = vmax.f32 %v1766, %v1476
        %v1768 = vmax.f32 %v1767, %v1478
        %v1769 = vrot.slane %v1768, 4
        %v1770 = vmax.f32 %v1768, %v1769
        %v1771 = vrot.slane %v1770, 2
        %v1772 = vmax.f32 %v1770, %v1771
        %v1773 = vrot.slane %v1772, 1
        %v1774 = vmax.f32 %v1772, %v1773
        %v1775 = vmax.f32 %v1479, %v1481
        %v1776 = vmax.f32 %v1775, %v1483
        %v1777 = vmax.f32 %v1776, %v1485
        %v1778 = vrot.slane %v1777, 4
        %v1779 = vmax.f32 %v1777, %v1778
        %v1780 = vrot.slane %v1779, 2
        %v1781 = vmax.f32 %v1779, %v1780
        %v1782 = vrot.slane %v1781, 1
        %v1783 = vmax.f32 %v1781, %v1782
        %v1784 = vmax.f32 %v1480, %v1482
        %v1785 = vmax.f32 %v1784, %v1484
        %v1786 = vmax.f32 %v1785, %v1486
        %v1787 = vrot.slane %v1786, 4
        %v1788 = vmax.f32 %v1786, %v1787
        %v1789 = vrot.slane %v1788, 2
        %v1790 = vmax.f32 %v1788, %v1789
        %v1791 = vrot.slane %v1790, 1
        %v1792 = vmax.f32 %v1790, %v1791
        %v1793 = vmax.f32 %v1487, %v1489
        %v1794 = vmax.f32 %v1793, %v1491
        %v1795 = vmax.f32 %v1794, %v1493
        %v1796 = vrot.slane %v1795, 4
        %v1797 = vmax.f32 %v1795, %v1796
        %v1798 = vrot.slane %v1797, 2
        %v1799 = vmax.f32 %v1797, %v1798
        %v1800 = vrot.slane %v1799, 1
        %v1801 = vmax.f32 %v1799, %v1800
        %v1802 = vmax.f32 %v1488, %v1490
        %v1803 = vmax.f32 %v1802, %v1492
        %v1804 = vmax.f32 %v1803, %v1494
        %v1805 = vrot.slane %v1804, 4
        %v1806 = vmax.f32 %v1804, %v1805
        %v1807 = vrot.slane %v1806, 2
        %v1808 = vmax.f32 %v1806, %v1807
        %v1809 = vrot.slane %v1808, 1
        %v1810 = vmax.f32 %v1808, %v1809
        %v1811 = vmax.f32 %v1495, %v1497
        %v1812 = vmax.f32 %v1811, %v1499
        %v1813 = vmax.f32 %v1812, %v1501
        %v1814 = vrot.slane %v1813, 4
        %v1815 = vmax.f32 %v1813, %v1814
        %v1816 = vrot.slane %v1815, 2
        %v1817 = vmax.f32 %v1815, %v1816
        %v1818 = vrot.slane %v1817, 1
        %v1819 = vmax.f32 %v1817, %v1818
        %v1820 = vmax.f32 %v1496, %v1498
        %v1821 = vmax.f32 %v1820, %v1500
        %v1822 = vmax.f32 %v1821, %v1502
        %v1823 = vrot.slane %v1822, 4
        %v1824 = vmax.f32 %v1822, %v1823
        %v1825 = vrot.slane %v1824, 2
        %v1826 = vmax.f32 %v1824, %v1825
        %v1827 = vrot.slane %v1826, 1
        %v1828 = vmax.f32 %v1826, %v1827
        %v1829 = vmax.f32 %v1503, %v1505
        %v1830 = vmax.f32 %v1829, %v1507
        %v1831 = vmax.f32 %v1830, %v1509
        %v1832 = vrot.slane %v1831, 4
        %v1833 = vmax.f32 %v1831, %v1832
        %v1834 = vrot.slane %v1833, 2
        %v1835 = vmax.f32 %v1833, %v1834
        %v1836 = vrot.slane %v1835, 1
        %v1837 = vmax.f32 %v1835, %v1836
        %v1838 = vmax.f32 %v1504, %v1506
        %v1839 = vmax.f32 %v1838, %v1508
        %v1840 = vmax.f32 %v1839, %v1510
        %v1841 = vrot.slane %v1840, 4
        %v1842 = vmax.f32 %v1840, %v1841
        %v1843 = vrot.slane %v1842, 2
        %v1844 = vmax.f32 %v1842, %v1843
        %v1845 = vrot.slane %v1844, 1
        %v1846 = vmax.f32 %v1844, %v1845
        %v1847 = vmax.f32 %v1511, %v1513
        %v1848 = vmax.f32 %v1847, %v1515
        %v1849 = vmax.f32 %v1848, %v1517
        %v1850 = vrot.slane %v1849, 4
        %v1851 = vmax.f32 %v1849, %v1850
        %v1852 = vrot.slane %v1851, 2
        %v1853 = vmax.f32 %v1851, %v1852
        %v1854 = vrot.slane %v1853, 1
        %v1855 = vmax.f32 %v1853, %v1854
        %v1856 = vmax.f32 %v1512, %v1514
        %v1857 = vmax.f32 %v1856, %v1516
        %v1858 = vmax.f32 %v1857, %v1518
        %v1859 = vrot.slane %v1858, 4
        %v1860 = vmax.f32 %v1858, %v1859
        %v1861 = vrot.slane %v1860, 2
        %v1862 = vmax.f32 %v1860, %v1861
        %v1863 = vrot.slane %v1862, 1
        %v1864 = vmax.f32 %v1862, %v1863
        %v1865 = vmax.f32 %v1519, %v1521
        %v1866 = vmax.f32 %v1865, %v1523
        %v1867 = vmax.f32 %v1866, %v1525
        %v1868 = vrot.slane %v1867, 4
        %v1869 = vmax.f32 %v1867, %v1868
        %v1870 = vrot.slane %v1869, 2
        %v1871 = vmax.f32 %v1869, %v1870
        %v1872 = vrot.slane %v1871, 1
        %v1873 = vmax.f32 %v1871, %v1872
        %v1874 = vmax.f32 %v1520, %v1522
        %v1875 = vmax.f32 %v1874, %v1524
        %v1876 = vmax.f32 %v1875, %v1526
        %v1877 = vrot.slane %v1876, 4
        %v1878 = vmax.f32 %v1876, %v1877
        %v1879 = vrot.slane %v1878, 2
        %v1880 = vmax.f32 %v1878, %v1879
        %v1881 = vrot.slane %v1880, 1
        %v1882 = vmax.f32 %v1880, %v1881
        %v1883 = vmax.f32 %v1527, %v1529
        %v1884 = vmax.f32 %v1883, %v1531
        %v1885 = vmax.f32 %v1884, %v1533
        %v1886 = vrot.slane %v1885, 4
        %v1887 = vmax.f32 %v1885, %v1886
        %v1888 = vrot.slane %v1887, 2
        %v1889 = vmax.f32 %v1887, %v1888
        %v1890 = vrot.slane %v1889, 1
        %v1891 = vmax.f32 %v1889, %v1890
        %v1892 = vmax.f32 %v1528, %v1530
        %v1893 = vmax.f32 %v1892, %v1532
        %v1894 = vmax.f32 %v1893, %v1534
        %v1895 = vrot.slane %v1894, 4
        %v1896 = vmax.f32 %v1894, %v1895
        %v1897 = vrot.slane %v1896, 2
        %v1898 = vmax.f32 %v1896, %v1897
        %v1899 = vrot.slane %v1898, 1
        %v1900 = vmax.f32 %v1898, %v1899
        %v1901 = vmax.f32 %v1535, %v1537
        %v1902 = vmax.f32 %v1901, %v1539
        %v1903 = vmax.f32 %v1902, %v1541
        %v1904 = vrot.slane %v1903, 4
        %v1905 = vmax.f32 %v1903, %v1904
        %v1906 = vrot.slane %v1905, 2
        %v1907 = vmax.f32 %v1905, %v1906
        %v1908 = vrot.slane %v1907, 1
        %v1909 = vmax.f32 %v1907, %v1908
        %v1910 = vmax.f32 %v1536, %v1538
        %v1911 = vmax.f32 %v1910, %v1540
        %v1912 = vmax.f32 %v1911, %v1542
        %v1913 = vrot.slane %v1912, 4
        %v1914 = vmax.f32 %v1912, %v1913
        %v1915 = vrot.slane %v1914, 2
        %v1916 = vmax.f32 %v1914, %v1915
        %v1917 = vrot.slane %v1916, 1
        %v1918 = vmax.f32 %v1916, %v1917
        %v1919 = vmax.f32 %v1543, %v1545
        %v1920 = vmax.f32 %v1919, %v1547
        %v1921 = vmax.f32 %v1920, %v1549
        %v1922 = vrot.slane %v1921, 4
        %v1923 = vmax.f32 %v1921, %v1922
        %v1924 = vrot.slane %v1923, 2
        %v1925 = vmax.f32 %v1923, %v1924
        %v1926 = vrot.slane %v1925, 1
        %v1927 = vmax.f32 %v1925, %v1926
        %v1928 = vmax.f32 %v1544, %v1546
        %v1929 = vmax.f32 %v1928, %v1548
        %v1930 = vmax.f32 %v1929, %v1550
        %v1931 = vrot.slane %v1930, 4
        %v1932 = vmax.f32 %v1930, %v1931
        %v1933 = vrot.slane %v1932, 2
        %v1934 = vmax.f32 %v1932, %v1933
        %v1935 = vrot.slane %v1934, 1
        %v1936 = vmax.f32 %v1934, %v1935
        %v1937 = vmax.f32 %v1551, %v1553
        %v1938 = vmax.f32 %v1937, %v1555
        %v1939 = vmax.f32 %v1938, %v1557
        %v1940 = vrot.slane %v1939, 4
        %v1941 = vmax.f32 %v1939, %v1940
        %v1942 = vrot.slane %v1941, 2
        %v1943 = vmax.f32 %v1941, %v1942
        %v1944 = vrot.slane %v1943, 1
        %v1945 = vmax.f32 %v1943, %v1944
        %v1946 = vmax.f32 %v1552, %v1554
        %v1947 = vmax.f32 %v1946, %v1556
        %v1948 = vmax.f32 %v1947, %v1558
        %v1949 = vrot.slane %v1948, 4
        %v1950 = vmax.f32 %v1948, %v1949
        %v1951 = vrot.slane %v1950, 2
        %v1952 = vmax.f32 %v1950, %v1951
        %v1953 = vrot.slane %v1952, 1
        %v1954 = vmax.f32 %v1952, %v1953
        %v1955 = vmax.f32 %v1559, %v1561
        %v1956 = vmax.f32 %v1955, %v1563
        %v1957 = vmax.f32 %v1956, %v1565
        %v1958 = vrot.slane %v1957, 4
        %v1959 = vmax.f32 %v1957, %v1958
        %v1960 = vrot.slane %v1959, 2
        %v1961 = vmax.f32 %v1959, %v1960
        %v1962 = vrot.slane %v1961, 1
        %v1963 = vmax.f32 %v1961, %v1962
        %v1964 = vmax.f32 %v1560, %v1562
        %v1965 = vmax.f32 %v1964, %v1564
        %v1966 = vmax.f32 %v1965, %v1566
        %v1967 = vrot.slane %v1966, 4
        %v1968 = vmax.f32 %v1966, %v1967
        %v1969 = vrot.slane %v1968, 2
        %v1970 = vmax.f32 %v1968, %v1969
        %v1971 = vrot.slane %v1970, 1
        %v1972 = vmax.f32 %v1970, %v1971
        %v1973 = vmax.f32 %v1567, %v1569
        %v1974 = vmax.f32 %v1973, %v1571
        %v1975 = vmax.f32 %v1974, %v1573
        %v1976 = vrot.slane %v1975, 4
        %v1977 = vmax.f32 %v1975, %v1976
        %v1978 = vrot.slane %v1977, 2
        %v1979 = vmax.f32 %v1977, %v1978
        %v1980 = vrot.slane %v1979, 1
        %v1981 = vmax.f32 %v1979, %v1980
        %v1982 = vmax.f32 %v1568, %v1570
        %v1983 = vmax.f32 %v1982, %v1572
        %v1984 = vmax.f32 %v1983, %v1574
        %v1985 = vrot.slane %v1984, 4
        %v1986 = vmax.f32 %v1984, %v1985
        %v1987 = vrot.slane %v1986, 2
        %v1988 = vmax.f32 %v1986, %v1987
        %v1989 = vrot.slane %v1988, 1
        %v1990 = vmax.f32 %v1988, %v1989
        %v1991 = vmax.f32 %v1575, %v1577
        %v1992 = vmax.f32 %v1991, %v1579
        %v1993 = vmax.f32 %v1992, %v1581
        %v1994 = vrot.slane %v1993, 4
        %v1995 = vmax.f32 %v1993, %v1994
        %v1996 = vrot.slane %v1995, 2
        %v1997 = vmax.f32 %v1995, %v1996
        %v1998 = vrot.slane %v1997, 1
        %v1999 = vmax.f32 %v1997, %v1998
        %v2000 = vmax.f32 %v1576, %v1578
        %v2001 = vmax.f32 %v2000, %v1580
        %v2002 = vmax.f32 %v2001, %v1582
        %v2003 = vrot.slane %v2002, 4
        %v2004 = vmax.f32 %v2002, %v2003
        %v2005 = vrot.slane %v2004, 2
        %v2006 = vmax.f32 %v2004, %v2005
        %v2007 = vrot.slane %v2006, 1
        %v2008 = vmax.f32 %v2006, %v2007
        %v2009 = vmax.f32 %v1583, %v1585
        %v2010 = vmax.f32 %v2009, %v1587
        %v2011 = vmax.f32 %v2010, %v1589
        %v2012 = vrot.slane %v2011, 4
        %v2013 = vmax.f32 %v2011, %v2012
        %v2014 = vrot.slane %v2013, 2
        %v2015 = vmax.f32 %v2013, %v2014
        %v2016 = vrot.slane %v2015, 1
        %v2017 = vmax.f32 %v2015, %v2016
        %v2018 = vmax.f32 %v1584, %v1586
        %v2019 = vmax.f32 %v2018, %v1588
        %v2020 = vmax.f32 %v2019, %v1590
        %v2021 = vrot.slane %v2020, 4
        %v2022 = vmax.f32 %v2020, %v2021
        %v2023 = vrot.slane %v2022, 2
        %v2024 = vmax.f32 %v2022, %v2023
        %v2025 = vrot.slane %v2024, 1
        %v2026 = vmax.f32 %v2024, %v2025
        %v2027 = vmax.f32 %v1591, %v1593
        %v2028 = vmax.f32 %v2027, %v1595
        %v2029 = vmax.f32 %v2028, %v1597
        %v2030 = vrot.slane %v2029, 4
        %v2031 = vmax.f32 %v2029, %v2030
        %v2032 = vrot.slane %v2031, 2
        %v2033 = vmax.f32 %v2031, %v2032
        %v2034 = vrot.slane %v2033, 1
        %v2035 = vmax.f32 %v2033, %v2034
        %v2036 = vmax.f32 %v1592, %v1594
        %v2037 = vmax.f32 %v2036, %v1596
        %v2038 = vmax.f32 %v2037, %v1598
        %v2039 = vrot.slane %v2038, 4
        %v2040 = vmax.f32 %v2038, %v2039
        %v2041 = vrot.slane %v2040, 2
        %v2042 = vmax.f32 %v2040, %v2041
        %v2043 = vrot.slane %v2042, 1
        %v2044 = vmax.f32 %v2042, %v2043
        %v2045 = vmax.f32 %v1599, %v1601
        %v2046 = vmax.f32 %v2045, %v1603
        %v2047 = vmax.f32 %v2046, %v1605
        %v2048 = vrot.slane %v2047, 4
        %v2049 = vmax.f32 %v2047, %v2048
        %v2050 = vrot.slane %v2049, 2
        %v2051 = vmax.f32 %v2049, %v2050
        %v2052 = vrot.slane %v2051, 1
        %v2053 = vmax.f32 %v2051, %v2052
        %v2054 = vmax.f32 %v1600, %v1602
        %v2055 = vmax.f32 %v2054, %v1604
        %v2056 = vmax.f32 %v2055, %v1606
        %v2057 = vrot.slane %v2056, 4
        %v2058 = vmax.f32 %v2056, %v2057
        %v2059 = vrot.slane %v2058, 2
        %v2060 = vmax.f32 %v2058, %v2059
        %v2061 = vrot.slane %v2060, 1
        %v2062 = vmax.f32 %v2060, %v2061
        %v2063 = vmax.f32 %v1607, %v1609
        %v2064 = vmax.f32 %v2063, %v1611
        %v2065 = vmax.f32 %v2064, %v1613
        %v2066 = vrot.slane %v2065, 4
        %v2067 = vmax.f32 %v2065, %v2066
        %v2068 = vrot.slane %v2067, 2
        %v2069 = vmax.f32 %v2067, %v2068
        %v2070 = vrot.slane %v2069, 1
        %v2071 = vmax.f32 %v2069, %v2070
        %v2072 = vmax.f32 %v1608, %v1610
        %v2073 = vmax.f32 %v2072, %v1612
        %v2074 = vmax.f32 %v2073, %v1614
        %v2075 = vrot.slane %v2074, 4
        %v2076 = vmax.f32 %v2074, %v2075
        %v2077 = vrot.slane %v2076, 2
        %v2078 = vmax.f32 %v2076, %v2077
        %v2079 = vrot.slane %v2078, 1
        %v2080 = vmax.f32 %v2078, %v2079
        %v2081 = vmax.f32 %v1615, %v1617
        %v2082 = vmax.f32 %v2081, %v1619
        %v2083 = vmax.f32 %v2082, %v1621
        %v2084 = vrot.slane %v2083, 4
        %v2085 = vmax.f32 %v2083, %v2084
        %v2086 = vrot.slane %v2085, 2
        %v2087 = vmax.f32 %v2085, %v2086
        %v2088 = vrot.slane %v2087, 1
        %v2089 = vmax.f32 %v2087, %v2088
        %v2090 = vmax.f32 %v1616, %v1618
        %v2091 = vmax.f32 %v2090, %v1620
        %v2092 = vmax.f32 %v2091, %v1622
        %v2093 = vrot.slane %v2092, 4
        %v2094 = vmax.f32 %v2092, %v2093
        %v2095 = vrot.slane %v2094, 2
        %v2096 = vmax.f32 %v2094, %v2095
        %v2097 = vrot.slane %v2096, 1
        %v2098 = vmax.f32 %v2096, %v2097
        %v2099 = vmax.f32 %v1623, %v1625
        %v2100 = vmax.f32 %v2099, %v1627
        %v2101 = vmax.f32 %v2100, %v1629
        %v2102 = vrot.slane %v2101, 4
        %v2103 = vmax.f32 %v2101, %v2102
        %v2104 = vrot.slane %v2103, 2
        %v2105 = vmax.f32 %v2103, %v2104
        %v2106 = vrot.slane %v2105, 1
        %v2107 = vmax.f32 %v2105, %v2106
        %v2108 = vmax.f32 %v1624, %v1626
        %v2109 = vmax.f32 %v2108, %v1628
        %v2110 = vmax.f32 %v2109, %v1630
        %v2111 = vrot.slane %v2110, 4
        %v2112 = vmax.f32 %v2110, %v2111
        %v2113 = vrot.slane %v2112, 2
        %v2114 = vmax.f32 %v2112, %v2113
        %v2115 = vrot.slane %v2114, 1
        %v2116 = vmax.f32 %v2114, %v2115
        %v2117 = vmax.f32 %v1631, %v1633
        %v2118 = vmax.f32 %v2117, %v1635
        %v2119 = vmax.f32 %v2118, %v1637
        %v2120 = vrot.slane %v2119, 4
        %v2121 = vmax.f32 %v2119, %v2120
        %v2122 = vrot.slane %v2121, 2
        %v2123 = vmax.f32 %v2121, %v2122
        %v2124 = vrot.slane %v2123, 1
        %v2125 = vmax.f32 %v2123, %v2124
        %v2126 = vmax.f32 %v1632, %v1634
        %v2127 = vmax.f32 %v2126, %v1636
        %v2128 = vmax.f32 %v2127, %v1638
        %v2129 = vrot.slane %v2128, 4
        %v2130 = vmax.f32 %v2128, %v2129
        %v2131 = vrot.slane %v2130, 2
        %v2132 = vmax.f32 %v2130, %v2131
        %v2133 = vrot.slane %v2132, 1
        %v2134 = vmax.f32 %v2132, %v2133
        %v2135 = vmax.f32 %v1639, %v1641
        %v2136 = vmax.f32 %v2135, %v1643
        %v2137 = vmax.f32 %v2136, %v1645
        %v2138 = vrot.slane %v2137, 4
        %v2139 = vmax.f32 %v2137, %v2138
        %v2140 = vrot.slane %v2139, 2
        %v2141 = vmax.f32 %v2139, %v2140
        %v2142 = vrot.slane %v2141, 1
        %v2143 = vmax.f32 %v2141, %v2142
        %v2144 = vmax.f32 %v1640, %v1642
        %v2145 = vmax.f32 %v2144, %v1644
        %v2146 = vmax.f32 %v2145, %v1646
        %v2147 = vrot.slane %v2146, 4
        %v2148 = vmax.f32 %v2146, %v2147
        %v2149 = vrot.slane %v2148, 2
        %v2150 = vmax.f32 %v2148, %v2149
        %v2151 = vrot.slane %v2150, 1
        %v2152 = vmax.f32 %v2150, %v2151
        %v2153 = vmax.f32 %v1647, %v1649
        %v2154 = vmax.f32 %v2153, %v1651
        %v2155 = vmax.f32 %v2154, %v1653
        %v2156 = vrot.slane %v2155, 4
        %v2157 = vmax.f32 %v2155, %v2156
        %v2158 = vrot.slane %v2157, 2
        %v2159 = vmax.f32 %v2157, %v2158
        %v2160 = vrot.slane %v2159, 1
        %v2161 = vmax.f32 %v2159, %v2160
        %v2162 = vmax.f32 %v1648, %v1650
        %v2163 = vmax.f32 %v2162, %v1652
        %v2164 = vmax.f32 %v2163, %v1654
        %v2165 = vrot.slane %v2164, 4
        %v2166 = vmax.f32 %v2164, %v2165
        %v2167 = vrot.slane %v2166, 2
        %v2168 = vmax.f32 %v2166, %v2167
        %v2169 = vrot.slane %v2168, 1
        %v2170 = vmax.f32 %v2168, %v2169
        %v2171 = vmax.f32 %v1655, %v1657
        %v2172 = vmax.f32 %v2171, %v1659
        %v2173 = vmax.f32 %v2172, %v1661
        %v2174 = vrot.slane %v2173, 4
        %v2175 = vmax.f32 %v2173, %v2174
        %v2176 = vrot.slane %v2175, 2
        %v2177 = vmax.f32 %v2175, %v2176
        %v2178 = vrot.slane %v2177, 1
        %v2179 = vmax.f32 %v2177, %v2178
        %v2180 = vmax.f32 %v1656, %v1658
        %v2181 = vmax.f32 %v2180, %v1660
        %v2182 = vmax.f32 %v2181, %v1662
        %v2183 = vrot.slane %v2182, 4
        %v2184 = vmax.f32 %v2182, %v2183
        %v2185 = vrot.slane %v2184, 2
        %v2186 = vmax.f32 %v2184, %v2185
        %v2187 = vrot.slane %v2186, 1
        %v2188 = vmax.f32 %v2186, %v2187
        %v2189 = vmax.f32 %v1663, %v1665
        %v2190 = vmax.f32 %v2189, %v1667
        %v2191 = vmax.f32 %v2190, %v1669
        %v2192 = vrot.slane %v2191, 4
        %v2193 = vmax.f32 %v2191, %v2192
        %v2194 = vrot.slane %v2193, 2
        %v2195 = vmax.f32 %v2193, %v2194
        %v2196 = vrot.slane %v2195, 1
        %v2197 = vmax.f32 %v2195, %v2196
        %v2198 = vmax.f32 %v1664, %v1666
        %v2199 = vmax.f32 %v2198, %v1668
        %v2200 = vmax.f32 %v2199, %v1670
        %v2201 = vrot.slane %v2200, 4
        %v2202 = vmax.f32 %v2200, %v2201
        %v2203 = vrot.slane %v2202, 2
        %v2204 = vmax.f32 %v2202, %v2203
        %v2205 = vrot.slane %v2204, 1
        %v2206 = vmax.f32 %v2204, %v2205
        %v2207 = vmax.f32 %v1671, %v1673
        %v2208 = vmax.f32 %v2207, %v1675
        %v2209 = vmax.f32 %v2208, %v1677
        %v2210 = vrot.slane %v2209, 4
        %v2211 = vmax.f32 %v2209, %v2210
        %v2212 = vrot.slane %v2211, 2
        %v2213 = vmax.f32 %v2211, %v2212
        %v2214 = vrot.slane %v2213, 1
        %v2215 = vmax.f32 %v2213, %v2214
        %v2216 = vmax.f32 %v1672, %v1674
        %v2217 = vmax.f32 %v2216, %v1676
        %v2218 = vmax.f32 %v2217, %v1678
        %v2219 = vrot.slane %v2218, 4
        %v2220 = vmax.f32 %v2218, %v2219
        %v2221 = vrot.slane %v2220, 2
        %v2222 = vmax.f32 %v2220, %v2221
        %v2223 = vrot.slane %v2222, 1
        %v2224 = vmax.f32 %v2222, %v2223
        %v2225 = vmax.f32 %v1679, %v1681
        %v2226 = vmax.f32 %v2225, %v1683
        %v2227 = vmax.f32 %v2226, %v1685
        %v2228 = vrot.slane %v2227, 4
        %v2229 = vmax.f32 %v2227, %v2228
        %v2230 = vrot.slane %v2229, 2
        %v2231 = vmax.f32 %v2229, %v2230
        %v2232 = vrot.slane %v2231, 1
        %v2233 = vmax.f32 %v2231, %v2232
        %v2234 = vmax.f32 %v1680, %v1682
        %v2235 = vmax.f32 %v2234, %v1684
        %v2236 = vmax.f32 %v2235, %v1686
        %v2237 = vrot.slane %v2236, 4
        %v2238 = vmax.f32 %v2236, %v2237
        %v2239 = vrot.slane %v2238, 2
        %v2240 = vmax.f32 %v2238, %v2239
        %v2241 = vrot.slane %v2240, 1
        %v2242 = vmax.f32 %v2240, %v2241
        %v2243 = vmax.f32 %v1687, %v1689
        %v2244 = vmax.f32 %v2243, %v1691
        %v2245 = vmax.f32 %v2244, %v1693
        %v2246 = vrot.slane %v2245, 4
        %v2247 = vmax.f32 %v2245, %v2246
        %v2248 = vrot.slane %v2247, 2
        %v2249 = vmax.f32 %v2247, %v2248
        %v2250 = vrot.slane %v2249, 1
        %v2251 = vmax.f32 %v2249, %v2250
        %v2252 = vmax.f32 %v1688, %v1690
        %v2253 = vmax.f32 %v2252, %v1692
        %v2254 = vmax.f32 %v2253, %v1694
        %v2255 = vrot.slane %v2254, 4
        %v2256 = vmax.f32 %v2254, %v2255
        %v2257 = vrot.slane %v2256, 2
        %v2258 = vmax.f32 %v2256, %v2257
        %v2259 = vrot.slane %v2258, 1
        %v2260 = vmax.f32 %v2258, %v2259
        %v2261 = vmax.f32 %v1695, %v1697
        %v2262 = vmax.f32 %v2261, %v1699
        %v2263 = vmax.f32 %v2262, %v1701
        %v2264 = vrot.slane %v2263, 4
        %v2265 = vmax.f32 %v2263, %v2264
        %v2266 = vrot.slane %v2265, 2
        %v2267 = vmax.f32 %v2265, %v2266
        %v2268 = vrot.slane %v2267, 1
        %v2269 = vmax.f32 %v2267, %v2268
        %v2270 = vmax.f32 %v1696, %v1698
        %v2271 = vmax.f32 %v2270, %v1700
        %v2272 = vmax.f32 %v2271, %v1702
        %v2273 = vrot.slane %v2272, 4
        %v2274 = vmax.f32 %v2272, %v2273
        %v2275 = vrot.slane %v2274, 2
        %v2276 = vmax.f32 %v2274, %v2275
        %v2277 = vrot.slane %v2276, 1
        %v2278 = vmax.f32 %v2276, %v2277
        %v2279 = vsub.f32 %v1447, %v1711
        %v2280 = vsub.f32 %v1448, %v1720
        %v2281 = vsub.f32 %v1449, %v1711
        %v2282 = vsub.f32 %v1450, %v1720
        %v2283 = vsub.f32 %v1451, %v1711
        %v2284 = vsub.f32 %v1452, %v1720
        %v2285 = vsub.f32 %v1453, %v1711
        %v2286 = vsub.f32 %v1454, %v1720
        %v2287 = vsub.f32 %v1455, %v1729
        %v2288 = vsub.f32 %v1456, %v1738
        %v2289 = vsub.f32 %v1457, %v1729
        %v2290 = vsub.f32 %v1458, %v1738
        %v2291 = vsub.f32 %v1459, %v1729
        %v2292 = vsub.f32 %v1460, %v1738
        %v2293 = vsub.f32 %v1461, %v1729
        %v2294 = vsub.f32 %v1462, %v1738
        %v2295 = vsub.f32 %v1463, %v1747
        %v2296 = vsub.f32 %v1464, %v1756
        %v2297 = vsub.f32 %v1465, %v1747
        %v2298 = vsub.f32 %v1466, %v1756
        %v2299 = vsub.f32 %v1467, %v1747
        %v2300 = vsub.f32 %v1468, %v1756
        %v2301 = vsub.f32 %v1469, %v1747
        %v2302 = vsub.f32 %v1470, %v1756
        %v2303 = vsub.f32 %v1471, %v1765
        %v2304 = vsub.f32 %v1472, %v1774
        %v2305 = vsub.f32 %v1473, %v1765
        %v2306 = vsub.f32 %v1474, %v1774
        %v2307 = vsub.f32 %v1475, %v1765
        %v2308 = vsub.f32 %v1476, %v1774
        %v2309 = vsub.f32 %v1477, %v1765
        %v2310 = vsub.f32 %v1478, %v1774
        %v2311 = vsub.f32 %v1479, %v1783
        %v2312 = vsub.f32 %v1480, %v1792
        %v2313 = vsub.f32 %v1481, %v1783
        %v2314 = vsub.f32 %v1482, %v1792
        %v2315 = vsub.f32 %v1483, %v1783
        %v2316 = vsub.f32 %v1484, %v1792
        %v2317 = vsub.f32 %v1485, %v1783
        %v2318 = vsub.f32 %v1486, %v1792
        %v2319 = vsub.f32 %v1487, %v1801
        %v2320 = vsub.f32 %v1488, %v1810
        %v2321 = vsub.f32 %v1489, %v1801
        %v2322 = vsub.f32 %v1490, %v1810
        %v2323 = vsub.f32 %v1491, %v1801
        %v2324 = vsub.f32 %v1492, %v1810
        %v2325 = vsub.f32 %v1493, %v1801
        %v2326 = vsub.f32 %v1494, %v1810
        %v2327 = vsub.f32 %v1495, %v1819
        %v2328 = vsub.f32 %v1496, %v1828
        %v2329 = vsub.f32 %v1497, %v1819
        %v2330 = vsub.f32 %v1498, %v1828
        %v2331 = vsub.f32 %v1499, %v1819
        %v2332 = vsub.f32 %v1500, %v1828
        %v2333 = vsub.f32 %v1501, %v1819
        %v2334 = vsub.f32 %v1502, %v1828
        %v2335 = vsub.f32 %v1503, %v1837
        %v2336 = vsub.f32 %v1504, %v1846
        %v2337 = vsub.f32 %v1505, %v1837
        %v2338 = vsub.f32 %v1506, %v1846
        %v2339 = vsub.f32 %v1507, %v1837
        %v2340 = vsub.f32 %v1508, %v1846
        %v2341 = vsub.f32 %v1509, %v1837
        %v2342 = vsub.f32 %v1510, %v1846
        %v2343 = vsub.f32 %v1511, %v1855
        %v2344 = vsub.f32 %v1512, %v1864
        %v2345 = vsub.f32 %v1513, %v1855
        %v2346 = vsub.f32 %v1514, %v1864
        %v2347 = vsub.f32 %v1515, %v1855
        %v2348 = vsub.f32 %v1516, %v1864
        %v2349 = vsub.f32 %v1517, %v1855
        %v2350 = vsub.f32 %v1518, %v1864
        %v2351 = vsub.f32 %v1519, %v1873
        %v2352 = vsub.f32 %v1520, %v1882
        %v2353 = vsub.f32 %v1521, %v1873
        %v2354 = vsub.f32 %v1522, %v1882
        %v2355 = vsub.f32 %v1523, %v1873
        %v2356 = vsub.f32 %v1524, %v1882
        %v2357 = vsub.f32 %v1525, %v1873
        %v2358 = vsub.f32 %v1526, %v1882
        %v2359 = vsub.f32 %v1527, %v1891
        %v2360 = vsub.f32 %v1528, %v1900
        %v2361 = vsub.f32 %v1529, %v1891
        %v2362 = vsub.f32 %v1530, %v1900
        %v2363 = vsub.f32 %v1531, %v1891
        %v2364 = vsub.f32 %v1532, %v1900
        %v2365 = vsub.f32 %v1533, %v1891
        %v2366 = vsub.f32 %v1534, %v1900
        %v2367 = vsub.f32 %v1535, %v1909
        %v2368 = vsub.f32 %v1536, %v1918
        %v2369 = vsub.f32 %v1537, %v1909
        %v2370 = vsub.f32 %v1538, %v1918
        %v2371 = vsub.f32 %v1539, %v1909
        %v2372 = vsub.f32 %v1540, %v1918
        %v2373 = vsub.f32 %v1541, %v1909
        %v2374 = vsub.f32 %v1542, %v1918
        %v2375 = vsub.f32 %v1543, %v1927
        %v2376 = vsub.f32 %v1544, %v1936
        %v2377 = vsub.f32 %v1545, %v1927
        %v2378 = vsub.f32 %v1546, %v1936
        %v2379 = vsub.f32 %v1547, %v1927
        %v2380 = vsub.f32 %v1548, %v1936
        %v2381 = vsub.f32 %v1549, %v1927
        %v2382 = vsub.f32 %v1550, %v1936
        %v2383 = vsub.f32 %v1551, %v1945
        %v2384 = vsub.f32 %v1552, %v1954
        %v2385 = vsub.f32 %v1553, %v1945
        %v2386 = vsub.f32 %v1554, %v1954
        %v2387 = vsub.f32 %v1555, %v1945
        %v2388 = vsub.f32 %v1556, %v1954
        %v2389 = vsub.f32 %v1557, %v1945
        %v2390 = vsub.f32 %v1558, %v1954
        %v2391 = vsub.f32 %v1559, %v1963
        %v2392 = vsub.f32 %v1560, %v1972
        %v2393 = vsub.f32 %v1561, %v1963
        %v2394 = vsub.f32 %v1562, %v1972
        %v2395 = vsub.f32 %v1563, %v1963
        %v2396 = vsub.f32 %v1564, %v1972
        %v2397 = vsub.f32 %v1565, %v1963
        %v2398 = vsub.f32 %v1566, %v1972
        %v2399 = vsub.f32 %v1567, %v1981
        %v2400 = vsub.f32 %v1568, %v1990
        %v2401 = vsub.f32 %v1569, %v1981
        %v2402 = vsub.f32 %v1570, %v1990
        %v2403 = vsub.f32 %v1571, %v1981
        %v2404 = vsub.f32 %v1572, %v1990
        %v2405 = vsub.f32 %v1573, %v1981
        %v2406 = vsub.f32 %v1574, %v1990
        %v2407 = vsub.f32 %v1575, %v1999
        %v2408 = vsub.f32 %v1576, %v2008
        %v2409 = vsub.f32 %v1577, %v1999
        %v2410 = vsub.f32 %v1578, %v2008
        %v2411 = vsub.f32 %v1579, %v1999
        %v2412 = vsub.f32 %v1580, %v2008
        %v2413 = vsub.f32 %v1581, %v1999
        %v2414 = vsub.f32 %v1582, %v2008
        %v2415 = vsub.f32 %v1583, %v2017
        %v2416 = vsub.f32 %v1584, %v2026
        %v2417 = vsub.f32 %v1585, %v2017
        %v2418 = vsub.f32 %v1586, %v2026
        %v2419 = vsub.f32 %v1587, %v2017
        %v2420 = vsub.f32 %v1588, %v2026
        %v2421 = vsub.f32 %v1589, %v2017
        %v2422 = vsub.f32 %v1590, %v2026
        %v2423 = vsub.f32 %v1591, %v2035
        %v2424 = vsub.f32 %v1592, %v2044
        %v2425 = vsub.f32 %v1593, %v2035
        %v2426 = vsub.f32 %v1594, %v2044
        %v2427 = vsub.f32 %v1595, %v2035
        %v2428 = vsub.f32 %v1596, %v2044
        %v2429 = vsub.f32 %v1597, %v2035
        %v2430 = vsub.f32 %v1598, %v2044
        %v2431 = vsub.f32 %v1599, %v2053
        %v2432 = vsub.f32 %v1600, %v2062
        %v2433 = vsub.f32 %v1601, %v2053
        %v2434 = vsub.f32 %v1602, %v2062
        %v2435 = vsub.f32 %v1603, %v2053
        %v2436 = vsub.f32 %v1604, %v2062
        %v2437 = vsub.f32 %v1605, %v2053
        %v2438 = vsub.f32 %v1606, %v2062
        %v2439 = vsub.f32 %v1607, %v2071
        %v2440 = vsub.f32 %v1608, %v2080
        %v2441 = vsub.f32 %v1609, %v2071
        %v2442 = vsub.f32 %v1610, %v2080
        %v2443 = vsub.f32 %v1611, %v2071
        %v2444 = vsub.f32 %v1612, %v2080
        %v2445 = vsub.f32 %v1613, %v2071
        %v2446 = vsub.f32 %v1614, %v2080
        %v2447 = vsub.f32 %v1615, %v2089
        %v2448 = vsub.f32 %v1616, %v2098
        %v2449 = vsub.f32 %v1617, %v2089
        %v2450 = vsub.f32 %v1618, %v2098
        %v2451 = vsub.f32 %v1619, %v2089
        %v2452 = vsub.f32 %v1620, %v2098
        %v2453 = vsub.f32 %v1621, %v2089
        %v2454 = vsub.f32 %v1622, %v2098
        %v2455 = vsub.f32 %v1623, %v2107
        %v2456 = vsub.f32 %v1624, %v2116
        %v2457 = vsub.f32 %v1625, %v2107
        %v2458 = vsub.f32 %v1626, %v2116
        %v2459 = vsub.f32 %v1627, %v2107
        %v2460 = vsub.f32 %v1628, %v2116
        %v2461 = vsub.f32 %v1629, %v2107
        %v2462 = vsub.f32 %v1630, %v2116
        %v2463 = vsub.f32 %v1631, %v2125
        %v2464 = vsub.f32 %v1632, %v2134
        %v2465 = vsub.f32 %v1633, %v2125
        %v2466 = vsub.f32 %v1634, %v2134
        %v2467 = vsub.f32 %v1635, %v2125
        %v2468 = vsub.f32 %v1636, %v2134
        %v2469 = vsub.f32 %v1637, %v2125
        %v2470 = vsub.f32 %v1638, %v2134
        %v2471 = vsub.f32 %v1639, %v2143
        %v2472 = vsub.f32 %v1640, %v2152
        %v2473 = vsub.f32 %v1641, %v2143
        %v2474 = vsub.f32 %v1642, %v2152
        %v2475 = vsub.f32 %v1643, %v2143
        %v2476 = vsub.f32 %v1644, %v2152
        %v2477 = vsub.f32 %v1645, %v2143
        %v2478 = vsub.f32 %v1646, %v2152
        %v2479 = vsub.f32 %v1647, %v2161
        %v2480 = vsub.f32 %v1648, %v2170
        %v2481 = vsub.f32 %v1649, %v2161
        %v2482 = vsub.f32 %v1650, %v2170
        %v2483 = vsub.f32 %v1651, %v2161
        %v2484 = vsub.f32 %v1652, %v2170
        %v2485 = vsub.f32 %v1653, %v2161
        %v2486 = vsub.f32 %v1654, %v2170
        %v2487 = vsub.f32 %v1655, %v2179
        %v2488 = vsub.f32 %v1656, %v2188
        %v2489 = vsub.f32 %v1657, %v2179
        %v2490 = vsub.f32 %v1658, %v2188
        %v2491 = vsub.f32 %v1659, %v2179
        %v2492 = vsub.f32 %v1660, %v2188
        %v2493 = vsub.f32 %v1661, %v2179
        %v2494 = vsub.f32 %v1662, %v2188
        %v2495 = vsub.f32 %v1663, %v2197
        %v2496 = vsub.f32 %v1664, %v2206
        %v2497 = vsub.f32 %v1665, %v2197
        %v2498 = vsub.f32 %v1666, %v2206
        %v2499 = vsub.f32 %v1667, %v2197
        %v2500 = vsub.f32 %v1668, %v2206
        %v2501 = vsub.f32 %v1669, %v2197
        %v2502 = vsub.f32 %v1670, %v2206
        %v2503 = vsub.f32 %v1671, %v2215
        %v2504 = vsub.f32 %v1672, %v2224
        %v2505 = vsub.f32 %v1673, %v2215
        %v2506 = vsub.f32 %v1674, %v2224
        %v2507 = vsub.f32 %v1675, %v2215
        %v2508 = vsub.f32 %v1676, %v2224
        %v2509 = vsub.f32 %v1677, %v2215
        %v2510 = vsub.f32 %v1678, %v2224
        %v2511 = vsub.f32 %v1679, %v2233
        %v2512 = vsub.f32 %v1680, %v2242
        %v2513 = vsub.f32 %v1681, %v2233
        %v2514 = vsub.f32 %v1682, %v2242
        %v2515 = vsub.f32 %v1683, %v2233
        %v2516 = vsub.f32 %v1684, %v2242
        %v2517 = vsub.f32 %v1685, %v2233
        %v2518 = vsub.f32 %v1686, %v2242
        %v2519 = vsub.f32 %v1687, %v2251
        %v2520 = vsub.f32 %v1688, %v2260
        %v2521 = vsub.f32 %v1689, %v2251
        %v2522 = vsub.f32 %v1690, %v2260
        %v2523 = vsub.f32 %v1691, %v2251
        %v2524 = vsub.f32 %v1692, %v2260
        %v2525 = vsub.f32 %v1693, %v2251
        %v2526 = vsub.f32 %v1694, %v2260
        %v2527 = vsub.f32 %v1695, %v2269
        %v2528 = vsub.f32 %v1696, %v2278
        %v2529 = vsub.f32 %v1697, %v2269
        %v2530 = vsub.f32 %v1698, %v2278
        %v2531 = vsub.f32 %v1699, %v2269
        %v2532 = vsub.f32 %v1700, %v2278
        %v2533 = vsub.f32 %v1701, %v2269
        %v2534 = vsub.f32 %v1702, %v2278
        %v2535 = vmul.f32 %v2279, 1.442695
        %v2536 = vpow.pop %v2535
        %v2537 = vmul.f32 %v2280, 1.442695
        %v2538 = vpow.pop %v2537
        %v2539 = vmul.f32 %v2281, 1.442695
        %v2540 = vpow.pop %v2539
        %v2541 = vmul.f32 %v2282, 1.442695
        %v2542 = vpow.pop %v2541
        %v2543 = vmul.f32 %v2283, 1.442695
        %v2544 = vpow.pop %v2543
        %v2545 = vmul.f32 %v2284, 1.442695
        %v2546 = vpow.pop %v2545
        %v2547 = vmul.f32 %v2285, 1.442695
        %v2548 = vpow.pop %v2547
        %v2549 = vmul.f32 %v2286, 1.442695
        %v2550 = vpow.pop %v2549
        %v2551 = vmul.f32 %v2287, 1.442695
        %v2552 = vpow.pop %v2551
        %v2553 = vmul.f32 %v2288, 1.442695
        %v2554 = vpow.pop %v2553
        %v2555 = vmul.f32 %v2289, 1.442695
        %v2556 = vpow.pop %v2555
        %v2557 = vmul.f32 %v2290, 1.442695
        %v2558 = vpow.pop %v2557
        %v2559 = vmul.f32 %v2291, 1.442695
        %v2560 = vpow.pop %v2559
        %v2561 = vmul.f32 %v2292, 1.442695
        %v2562 = vpow.pop %v2561
        %v2563 = vmul.f32 %v2293, 1.442695
        %v2564 = vpow.pop %v2563
        %v2565 = vmul.f32 %v2294, 1.442695
        %v2566 = vpow.pop %v2565
        %v2567 = vmul.f32 %v2295, 1.442695
        %v2568 = vpow.pop %v2567
        %v2569 = vmul.f32 %v2296, 1.442695
        %v2570 = vpow.pop %v2569
        %v2571 = vmul.f32 %v2297, 1.442695
        %v2572 = vpow.pop %v2571
        %v2573 = vmul.f32 %v2298, 1.442695
        %v2574 = vpow.pop %v2573
        %v2575 = vmul.f32 %v2299, 1.442695
        %v2576 = vpow.pop %v2575
        %v2577 = vmul.f32 %v2300, 1.442695
        %v2578 = vpow.pop %v2577
        %v2579 = vmul.f32 %v2301, 1.442695
        %v2580 = vpow.pop %v2579
        %v2581 = vmul.f32 %v2302, 1.442695
        %v2582 = vpow.pop %v2581
        %v2583 = vmul.f32 %v2303, 1.442695
        %v2584 = vpow.pop %v2583
        %v2585 = vmul.f32 %v2304, 1.442695
        %v2586 = vpow.pop %v2585
        %v2587 = vmul.f32 %v2305, 1.442695
        %v2588 = vpow.pop %v2587
        %v2589 = vmul.f32 %v2306, 1.442695
        %v2590 = vpow.pop %v2589
        %v2591 = vmul.f32 %v2307, 1.442695
        %v2592 = vpow.pop %v2591
        %v2593 = vmul.f32 %v2308, 1.442695
        %v2594 = vpow.pop %v2593
        %v2595 = vmul.f32 %v2309, 1.442695
        %v2596 = vpow.pop %v2595
        %v2597 = vmul.f32 %v2310, 1.442695
        %v2598 = vpow.pop %v2597
        %v2599 = vmul.f32 %v2311, 1.442695
        %v2600 = vpow.pop %v2599
        %v2601 = vmul.f32 %v2312, 1.442695
        %v2602 = vpow.pop %v2601
        %v2603 = vmul.f32 %v2313, 1.442695
        %v2604 = vpow.pop %v2603
        %v2605 = vmul.f32 %v2314, 1.442695
        %v2606 = vpow.pop %v2605
        %v2607 = vmul.f32 %v2315, 1.442695
        %v2608 = vpow.pop %v2607
        %v2609 = vmul.f32 %v2316, 1.442695
        %v2610 = vpow.pop %v2609
        %v2611 = vmul.f32 %v2317, 1.442695
        %v2612 = vpow.pop %v2611
        %v2613 = vmul.f32 %v2318, 1.442695
        %v2614 = vpow.pop %v2613
        %v2615 = vmul.f32 %v2319, 1.442695
        %v2616 = vpow.pop %v2615
        %v2617 = vmul.f32 %v2320, 1.442695
        %v2618 = vpow.pop %v2617
        %v2619 = vmul.f32 %v2321, 1.442695
        %v2620 = vpow.pop %v2619
        %v2621 = vmul.f32 %v2322, 1.442695
        %v2622 = vpow.pop %v2621
        %v2623 = vmul.f32 %v2323, 1.442695
        %v2624 = vpow.pop %v2623
        %v2625 = vmul.f32 %v2324, 1.442695
        %v2626 = vpow.pop %v2625
        %v2627 = vmul.f32 %v2325, 1.442695
        %v2628 = vpow.pop %v2627
        %v2629 = vmul.f32 %v2326, 1.442695
        %v2630 = vpow.pop %v2629
        %v2631 = vmul.f32 %v2327, 1.442695
        %v2632 = vpow.pop %v2631
        %v2633 = vmul.f32 %v2328, 1.442695
        %v2634 = vpow.pop %v2633
        %v2635 = vmul.f32 %v2329, 1.442695
        %v2636 = vpow.pop %v2635
        %v2637 = vmul.f32 %v2330, 1.442695
        %v2638 = vpow.pop %v2637
        %v2639 = vmul.f32 %v2331, 1.442695
        %v2640 = vpow.pop %v2639
        %v2641 = vmul.f32 %v2332, 1.442695
        %v2642 = vpow.pop %v2641
        %v2643 = vmul.f32 %v2333, 1.442695
        %v2644 = vpow.pop %v2643
        %v2645 = vmul.f32 %v2334, 1.442695
        %v2646 = vpow.pop %v2645
        %v2647 = vmul.f32 %v2335, 1.442695
        %v2648 = vpow.pop %v2647
        %v2649 = vmul.f32 %v2336, 1.442695
        %v2650 = vpow.pop %v2649
        %v2651 = vmul.f32 %v2337, 1.442695
        %v2652 = vpow.pop %v2651
        %v2653 = vmul.f32 %v2338, 1.442695
        %v2654 = vpow.pop %v2653
        %v2655 = vmul.f32 %v2339, 1.442695
        %v2656 = vpow.pop %v2655
        %v2657 = vmul.f32 %v2340, 1.442695
        %v2658 = vpow.pop %v2657
        %v2659 = vmul.f32 %v2341, 1.442695
        %v2660 = vpow.pop %v2659
        %v2661 = vmul.f32 %v2342, 1.442695
        %v2662 = vpow.pop %v2661
        %v2663 = vmul.f32 %v2343, 1.442695
        %v2664 = vpow.pop %v2663
        %v2665 = vmul.f32 %v2344, 1.442695
        %v2666 = vpow.pop %v2665
        %v2667 = vmul.f32 %v2345, 1.442695
        %v2668 = vpow.pop %v2667
        %v2669 = vmul.f32 %v2346, 1.442695
        %v2670 = vpow.pop %v2669
        %v2671 = vmul.f32 %v2347, 1.442695
        %v2672 = vpow.pop %v2671
        %v2673 = vmul.f32 %v2348, 1.442695
        %v2674 = vpow.pop %v2673
        %v2675 = vmul.f32 %v2349, 1.442695
        %v2676 = vpow.pop %v2675
        %v2677 = vmul.f32 %v2350, 1.442695
        %v2678 = vpow.pop %v2677
        %v2679 = vmul.f32 %v2351, 1.442695
        %v2680 = vpow.pop %v2679
        %v2681 = vmul.f32 %v2352, 1.442695
        %v2682 = vpow.pop %v2681
        %v2683 = vmul.f32 %v2353, 1.442695
        %v2684 = vpow.pop %v2683
        %v2685 = vmul.f32 %v2354, 1.442695
        %v2686 = vpow.pop %v2685
        %v2687 = vmul.f32 %v2355, 1.442695
        %v2688 = vpow.pop %v2687
        %v2689 = vmul.f32 %v2356, 1.442695
        %v2690 = vpow.pop %v2689
        %v2691 = vmul.f32 %v2357, 1.442695
        %v2692 = vpow.pop %v2691
        %v2693 = vmul.f32 %v2358, 1.442695
        %v2694 = vpow.pop %v2693
        %v2695 = vmul.f32 %v2359, 1.442695
        %v2696 = vpow.pop %v2695
        %v2697 = vmul.f32 %v2360, 1.442695
        %v2698 = vpow.pop %v2697
        %v2699 = vmul.f32 %v2361, 1.442695
        %v2700 = vpow.pop %v2699
        %v2701 = vmul.f32 %v2362, 1.442695
        %v2702 = vpow.pop %v2701
        %v2703 = vmul.f32 %v2363, 1.442695
        %v2704 = vpow.pop %v2703
        %v2705 = vmul.f32 %v2364, 1.442695
        %v2706 = vpow.pop %v2705
        %v2707 = vmul.f32 %v2365, 1.442695
        %v2708 = vpow.pop %v2707
        %v2709 = vmul.f32 %v2366, 1.442695
        %v2710 = vpow.pop %v2709
        %v2711 = vmul.f32 %v2367, 1.442695
        %v2712 = vpow.pop %v2711
        %v2713 = vmul.f32 %v2368, 1.442695
        %v2714 = vpow.pop %v2713
        %v2715 = vmul.f32 %v2369, 1.442695
        %v2716 = vpow.pop %v2715
        %v2717 = vmul.f32 %v2370, 1.442695
        %v2718 = vpow.pop %v2717
        %v2719 = vmul.f32 %v2371, 1.442695
        %v2720 = vpow.pop %v2719
        %v2721 = vmul.f32 %v2372, 1.442695
        %v2722 = vpow.pop %v2721
        %v2723 = vmul.f32 %v2373, 1.442695
        %v2724 = vpow.pop %v2723
        %v2725 = vmul.f32 %v2374, 1.442695
        %v2726 = vpow.pop %v2725
        %v2727 = vmul.f32 %v2375, 1.442695
        %v2728 = vpow.pop %v2727
        %v2729 = vmul.f32 %v2376, 1.442695
        %v2730 = vpow.pop %v2729
        %v2731 = vmul.f32 %v2377, 1.442695
        %v2732 = vpow.pop %v2731
        %v2733 = vmul.f32 %v2378, 1.442695
        %v2734 = vpow.pop %v2733
        %v2735 = vmul.f32 %v2379, 1.442695
        %v2736 = vpow.pop %v2735
        %v2737 = vmul.f32 %v2380, 1.442695
        %v2738 = vpow.pop %v2737
        %v2739 = vmul.f32 %v2381, 1.442695
        %v2740 = vpow.pop %v2739
        %v2741 = vmul.f32 %v2382, 1.442695
        %v2742 = vpow.pop %v2741
        %v2743 = vmul.f32 %v2383, 1.442695
        %v2744 = vpow.pop %v2743
        %v2745 = vmul.f32 %v2384, 1.442695
        %v2746 = vpow.pop %v2745
        %v2747 = vmul.f32 %v2385, 1.442695
        %v2748 = vpow.pop %v2747
        %v2749 = vmul.f32 %v2386, 1.442695
        %v2750 = vpow.pop %v2749
        %v2751 = vmul.f32 %v2387, 1.442695
        %v2752 = vpow.pop %v2751
        %v2753 = vmul.f32 %v2388, 1.442695
        %v2754 = vpow.pop %v2753
        %v2755 = vmul.f32 %v2389, 1.442695
        %v2756 = vpow.pop %v2755
        %v2757 = vmul.f32 %v2390, 1.442695
        %v2758 = vpow.pop %v2757
        %v2759 = vmul.f32 %v2391, 1.442695
        %v2760 = vpow.pop %v2759
        %v2761 = vmul.f32 %v2392, 1.442695
        %v2762 = vpow.pop %v2761
        %v2763 = vmul.f32 %v2393, 1.442695
        %v2764 = vpow.pop %v2763
        %v2765 = vmul.f32 %v2394, 1.442695
        %v2766 = vpow.pop %v2765
        %v2767 = vmul.f32 %v2395, 1.442695
        %v2768 = vpow.pop %v2767
        %v2769 = vmul.f32 %v2396, 1.442695
        %v2770 = vpow.pop %v2769
        %v2771 = vmul.f32 %v2397, 1.442695
        %v2772 = vpow.pop %v2771
        %v2773 = vmul.f32 %v2398, 1.442695
        %v2774 = vpow.pop %v2773
        %v2775 = vmul.f32 %v2399, 1.442695
        %v2776 = vpow.pop %v2775
        %v2777 = vmul.f32 %v2400, 1.442695
        %v2778 = vpow.pop %v2777
        %v2779 = vmul.f32 %v2401, 1.442695
        %v2780 = vpow.pop %v2779
        %v2781 = vmul.f32 %v2402, 1.442695
        %v2782 = vpow.pop %v2781
        %v2783 = vmul.f32 %v2403, 1.442695
        %v2784 = vpow.pop %v2783
        %v2785 = vmul.f32 %v2404, 1.442695
        %v2786 = vpow.pop %v2785
        %v2787 = vmul.f32 %v2405, 1.442695
        %v2788 = vpow.pop %v2787
        %v2789 = vmul.f32 %v2406, 1.442695
        %v2790 = vpow.pop %v2789
        %v2791 = vmul.f32 %v2407, 1.442695
        %v2792 = vpow.pop %v2791
        %v2793 = vmul.f32 %v2408, 1.442695
        %v2794 = vpow.pop %v2793
        %v2795 = vmul.f32 %v2409, 1.442695
        %v2796 = vpow.pop %v2795
        %v2797 = vmul.f32 %v2410, 1.442695
        %v2798 = vpow.pop %v2797
        %v2799 = vmul.f32 %v2411, 1.442695
        %v2800 = vpow.pop %v2799
        %v2801 = vmul.f32 %v2412, 1.442695
        %v2802 = vpow.pop %v2801
        %v2803 = vmul.f32 %v2413, 1.442695
        %v2804 = vpow.pop %v2803
        %v2805 = vmul.f32 %v2414, 1.442695
        %v2806 = vpow.pop %v2805
        %v2807 = vmul.f32 %v2415, 1.442695
        %v2808 = vpow.pop %v2807
        %v2809 = vmul.f32 %v2416, 1.442695
        %v2810 = vpow.pop %v2809
        %v2811 = vmul.f32 %v2417, 1.442695
        %v2812 = vpow.pop %v2811
        %v2813 = vmul.f32 %v2418, 1.442695
        %v2814 = vpow.pop %v2813
        %v2815 = vmul.f32 %v2419, 1.442695
        %v2816 = vpow.pop %v2815
        %v2817 = vmul.f32 %v2420, 1.442695
        %v2818 = vpow.pop %v2817
        %v2819 = vmul.f32 %v2421, 1.442695
        %v2820 = vpow.pop %v2819
        %v2821 = vmul.f32 %v2422, 1.442695
        %v2822 = vpow.pop %v2821
        %v2823 = vmul.f32 %v2423, 1.442695
        %v2824 = vpow.pop %v2823
        %v2825 = vmul.f32 %v2424, 1.442695
        %v2826 = vpow.pop %v2825
        %v2827 = vmul.f32 %v2425, 1.442695
        %v2828 = vpow.pop %v2827
        %v2829 = vmul.f32 %v2426, 1.442695
        %v2830 = vpow.pop %v2829
        %v2831 = vmul.f32 %v2427, 1.442695
        %v2832 = vpow.pop %v2831
        %v2833 = vmul.f32 %v2428, 1.442695
        %v2834 = vpow.pop %v2833
        %v2835 = vmul.f32 %v2429, 1.442695
        %v2836 = vpow.pop %v2835
        %v2837 = vmul.f32 %v2430, 1.442695
        %v2838 = vpow.pop %v2837
        %v2839 = vmul.f32 %v2431, 1.442695
        %v2840 = vpow.pop %v2839
        %v2841 = vmul.f32 %v2432, 1.442695
        %v2842 = vpow.pop %v2841
        %v2843 = vmul.f32 %v2433, 1.442695
        %v2844 = vpow.pop %v2843
        %v2845 = vmul.f32 %v2434, 1.442695
        %v2846 = vpow.pop %v2845
        %v2847 = vmul.f32 %v2435, 1.442695
        %v2848 = vpow.pop %v2847
        %v2849 = vmul.f32 %v2436, 1.442695
        %v2850 = vpow.pop %v2849
        %v2851 = vmul.f32 %v2437, 1.442695
        %v2852 = vpow.pop %v2851
        %v2853 = vmul.f32 %v2438, 1.442695
        %v2854 = vpow.pop %v2853
        %v2855 = vmul.f32 %v2439, 1.442695
        %v2856 = vpow.pop %v2855
        %v2857 = vmul.f32 %v2440, 1.442695
        %v2858 = vpow.pop %v2857
        %v2859 = vmul.f32 %v2441, 1.442695
        %v2860 = vpow.pop %v2859
        %v2861 = vmul.f32 %v2442, 1.442695
        %v2862 = vpow.pop %v2861
        %v2863 = vmul.f32 %v2443, 1.442695
        %v2864 = vpow.pop %v2863
        %v2865 = vmul.f32 %v2444, 1.442695
        %v2866 = vpow.pop %v2865
        %v2867 = vmul.f32 %v2445, 1.442695
        %v2868 = vpow.pop %v2867
        %v2869 = vmul.f32 %v2446, 1.442695
        %v2870 = vpow.pop %v2869
        %v2871 = vmul.f32 %v2447, 1.442695
        %v2872 = vpow.pop %v2871
        %v2873 = vmul.f32 %v2448, 1.442695
        %v2874 = vpow.pop %v2873
        %v2875 = vmul.f32 %v2449, 1.442695
        %v2876 = vpow.pop %v2875
        %v2877 = vmul.f32 %v2450, 1.442695
        %v2878 = vpow.pop %v2877
        %v2879 = vmul.f32 %v2451, 1.442695
        %v2880 = vpow.pop %v2879
        %v2881 = vmul.f32 %v2452, 1.442695
        %v2882 = vpow.pop %v2881
        %v2883 = vmul.f32 %v2453, 1.442695
        %v2884 = vpow.pop %v2883
        %v2885 = vmul.f32 %v2454, 1.442695
        %v2886 = vpow.pop %v2885
        %v2887 = vmul.f32 %v2455, 1.442695
        %v2888 = vpow.pop %v2887
        %v2889 = vmul.f32 %v2456, 1.442695
        %v2890 = vpow.pop %v2889
        %v2891 = vmul.f32 %v2457, 1.442695
        %v2892 = vpow.pop %v2891
        %v2893 = vmul.f32 %v2458, 1.442695
        %v2894 = vpow.pop %v2893
        %v2895 = vmul.f32 %v2459, 1.442695
        %v2896 = vpow.pop %v2895
        %v2897 = vmul.f32 %v2460, 1.442695
        %v2898 = vpow.pop %v2897
        %v2899 = vmul.f32 %v2461, 1.442695
        %v2900 = vpow.pop %v2899
        %v2901 = vmul.f32 %v2462, 1.442695
        %v2902 = vpow.pop %v2901
        %v2903 = vmul.f32 %v2463, 1.442695
        %v2904 = vpow.pop %v2903
        %v2905 = vmul.f32 %v2464, 1.442695
        %v2906 = vpow.pop %v2905
        %v2907 = vmul.f32 %v2465, 1.442695
        %v2908 = vpow.pop %v2907
        %v2909 = vmul.f32 %v2466, 1.442695
        %v2910 = vpow.pop %v2909
        %v2911 = vmul.f32 %v2467, 1.442695
        %v2912 = vpow.pop %v2911
        %v2913 = vmul.f32 %v2468, 1.442695
        %v2914 = vpow.pop %v2913
        %v2915 = vmul.f32 %v2469, 1.442695
        %v2916 = vpow.pop %v2915
        %v2917 = vmul.f32 %v2470, 1.442695
        %v2918 = vpow.pop %v2917
        %v2919 = vmul.f32 %v2471, 1.442695
        %v2920 = vpow.pop %v2919
        %v2921 = vmul.f32 %v2472, 1.442695
        %v2922 = vpow.pop %v2921
        %v2923 = vmul.f32 %v2473, 1.442695
        %v2924 = vpow.pop %v2923
        %v2925 = vmul.f32 %v2474, 1.442695
        %v2926 = vpow.pop %v2925
        %v2927 = vmul.f32 %v2475, 1.442695
        %v2928 = vpow.pop %v2927
        %v2929 = vmul.f32 %v2476, 1.442695
        %v2930 = vpow.pop %v2929
        %v2931 = vmul.f32 %v2477, 1.442695
        %v2932 = vpow.pop %v2931
        %v2933 = vmul.f32 %v2478, 1.442695
        %v2934 = vpow.pop %v2933
        %v2935 = vmul.f32 %v2479, 1.442695
        %v2936 = vpow.pop %v2935
        %v2937 = vmul.f32 %v2480, 1.442695
        %v2938 = vpow.pop %v2937
        %v2939 = vmul.f32 %v2481, 1.442695
        %v2940 = vpow.pop %v2939
        %v2941 = vmul.f32 %v2482, 1.442695
        %v2942 = vpow.pop %v2941
        %v2943 = vmul.f32 %v2483, 1.442695
        %v2944 = vpow.pop %v2943
        %v2945 = vmul.f32 %v2484, 1.442695
        %v2946 = vpow.pop %v2945
        %v2947 = vmul.f32 %v2485, 1.442695
        %v2948 = vpow.pop %v2947
        %v2949 = vmul.f32 %v2486, 1.442695
        %v2950 = vpow.pop %v2949
        %v2951 = vmul.f32 %v2487, 1.442695
        %v2952 = vpow.pop %v2951
        %v2953 = vmul.f32 %v2488, 1.442695
        %v2954 = vpow.pop %v2953
        %v2955 = vmul.f32 %v2489, 1.442695
        %v2956 = vpow.pop %v2955
        %v2957 = vmul.f32 %v2490, 1.442695
        %v2958 = vpow.pop %v2957
        %v2959 = vmul.f32 %v2491, 1.442695
        %v2960 = vpow.pop %v2959
        %v2961 = vmul.f32 %v2492, 1.442695
        %v2962 = vpow.pop %v2961
        %v2963 = vmul.f32 %v2493, 1.442695
        %v2964 = vpow.pop %v2963
        %v2965 = vmul.f32 %v2494, 1.442695
        %v2966 = vpow.pop %v2965
        %v2967 = vmul.f32 %v2495, 1.442695
        %v2968 = vpow.pop %v2967
        %v2969 = vmul.f32 %v2496, 1.442695
        %v2970 = vpow.pop %v2969
        %v2971 = vmul.f32 %v2497, 1.442695
        %v2972 = vpow.pop %v2971
        %v2973 = vmul.f32 %v2498, 1.442695
        %v2974 = vpow.pop %v2973
        %v2975 = vmul.f32 %v2499, 1.442695
        %v2976 = vpow.pop %v2975
        %v2977 = vmul.f32 %v2500, 1.442695
        %v2978 = vpow.pop %v2977
        %v2979 = vmul.f32 %v2501, 1.442695
        %v2980 = vpow.pop %v2979
        %v2981 = vmul.f32 %v2502, 1.442695
        %v2982 = vpow.pop %v2981
        %v2983 = vmul.f32 %v2503, 1.442695
        %v2984 = vpow.pop %v2983
        %v2985 = vmul.f32 %v2504, 1.442695
        %v2986 = vpow.pop %v2985
        %v2987 = vmul.f32 %v2505, 1.442695
        %v2988 = vpow.pop %v2987
        %v2989 = vmul.f32 %v2506, 1.442695
        %v2990 = vpow.pop %v2989
        %v2991 = vmul.f32 %v2507, 1.442695
        %v2992 = vpow.pop %v2991
        %v2993 = vmul.f32 %v2508, 1.442695
        %v2994 = vpow.pop %v2993
        %v2995 = vmul.f32 %v2509, 1.442695
        %v2996 = vpow.pop %v2995
        %v2997 = vmul.f32 %v2510, 1.442695
        %v2998 = vpow.pop %v2997
        %v2999 = vmul.f32 %v2511, 1.442695
        %v3000 = vpow.pop %v2999
        %v3001 = vmul.f32 %v2512, 1.442695
        %v3002 = vpow.pop %v3001
        %v3003 = vmul.f32 %v2513, 1.442695
        %v3004 = vpow.pop %v3003
        %v3005 = vmul.f32 %v2514, 1.442695
        %v3006 = vpow.pop %v3005
        %v3007 = vmul.f32 %v2515, 1.442695
        %v3008 = vpow.pop %v3007
        %v3009 = vmul.f32 %v2516, 1.442695
        %v3010 = vpow.pop %v3009
        %v3011 = vmul.f32 %v2517, 1.442695
        %v3012 = vpow.pop %v3011
        %v3013 = vmul.f32 %v2518, 1.442695
        %v3014 = vpow.pop %v3013
        %v3015 = vmul.f32 %v2519, 1.442695
        %v3016 = vpow.pop %v3015
        %v3017 = vmul.f32 %v2520, 1.442695
        %v3018 = vpow.pop %v3017
        %v3019 = vmul.f32 %v2521, 1.442695
        %v3020 = vpow.pop %v3019
        %v3021 = vmul.f32 %v2522, 1.442695
        %v3022 = vpow.pop %v3021
        %v3023 = vmul.f32 %v2523, 1.442695
        %v3024 = vpow.pop %v3023
        %v3025 = vmul.f32 %v2524, 1.442695
        %v3026 = vpow.pop %v3025
        %v3027 = vmul.f32 %v2525, 1.442695
        %v3028 = vpow.pop %v3027
        %v3029 = vmul.f32 %v2526, 1.442695
        %v3030 = vpow.pop %v3029
        %v3031 = vmul.f32 %v2527, 1.442695
        %v3032 = vpow.pop %v3031
        %v3033 = vmul.f32 %v2528, 1.442695
        %v3034 = vpow.pop %v3033
        %v3035 = vmul.f32 %v2529, 1.442695
        %v3036 = vpow.pop %v3035
        %v3037 = vmul.f32 %v2530, 1.442695
        %v3038 = vpow.pop %v3037
        %v3039 = vmul.f32 %v2531, 1.442695
        %v3040 = vpow.pop %v3039
        %v3041 = vmul.f32 %v2532, 1.442695
        %v3042 = vpow.pop %v3041
        %v3043 = vmul.f32 %v2533, 1.442695
        %v3044 = vpow.pop %v3043
        %v3045 = vmul.f32 %v2534, 1.442695
        %v3046 = vpow.pop %v3045
        %v3047 = vadd.f32 %v2536, %v2540
        %v3048 = vadd.f32 %v3047, %v2544
        %v3049 = vadd.f32 %v3048, %v2548
        %v3050 = vrot.slane %v3049, 4
        %v3051 = vadd.f32 %v3049, %v3050
        %v3052 = vrot.slane %v3051, 2
        %v3053 = vadd.f32 %v3051, %v3052
        %v3054 = vrot.slane %v3053, 1
        %v3055 = vadd.f32 %v3053, %v3054
        %v3056 = vadd.f32 %v2538, %v2542
        %v3057 = vadd.f32 %v3056, %v2546
        %v3058 = vadd.f32 %v3057, %v2550
        %v3059 = vrot.slane %v3058, 4
        %v3060 = vadd.f32 %v3058, %v3059
        %v3061 = vrot.slane %v3060, 2
        %v3062 = vadd.f32 %v3060, %v3061
        %v3063 = vrot.slane %v3062, 1
        %v3064 = vadd.f32 %v3062, %v3063
        %v3065 = vadd.f32 %v2552, %v2556
        %v3066 = vadd.f32 %v3065, %v2560
        %v3067 = vadd.f32 %v3066, %v2564
        %v3068 = vrot.slane %v3067, 4
        %v3069 = vadd.f32 %v3067, %v3068
        %v3070 = vrot.slane %v3069, 2
        %v3071 = vadd.f32 %v3069, %v3070
        %v3072 = vrot.slane %v3071, 1
        %v3073 = vadd.f32 %v3071, %v3072
        %v3074 = vadd.f32 %v2554, %v2558
        %v3075 = vadd.f32 %v3074, %v2562
        %v3076 = vadd.f32 %v3075, %v2566
        %v3077 = vrot.slane %v3076, 4
        %v3078 = vadd.f32 %v3076, %v3077
        %v3079 = vrot.slane %v3078, 2
        %v3080 = vadd.f32 %v3078, %v3079
        %v3081 = vrot.slane %v3080, 1
        %v3082 = vadd.f32 %v3080, %v3081
        %v3083 = vadd.f32 %v2568, %v2572
        %v3084 = vadd.f32 %v3083, %v2576
        %v3085 = vadd.f32 %v3084, %v2580
        %v3086 = vrot.slane %v3085, 4
        %v3087 = vadd.f32 %v3085, %v3086
        %v3088 = vrot.slane %v3087, 2
        %v3089 = vadd.f32 %v3087, %v3088
        %v3090 = vrot.slane %v3089, 1
        %v3091 = vadd.f32 %v3089, %v3090
        %v3092 = vadd.f32 %v2570, %v2574
        %v3093 = vadd.f32 %v3092, %v2578
        %v3094 = vadd.f32 %v3093, %v2582
        %v3095 = vrot.slane %v3094, 4
        %v3096 = vadd.f32 %v3094, %v3095
        %v3097 = vrot.slane %v3096, 2
        %v3098 = vadd.f32 %v3096, %v3097
        %v3099 = vrot.slane %v3098, 1
        %v3100 = vadd.f32 %v3098, %v3099
        %v3101 = vadd.f32 %v2584, %v2588
        %v3102 = vadd.f32 %v3101, %v2592
        %v3103 = vadd.f32 %v3102, %v2596
        %v3104 = vrot.slane %v3103, 4
        %v3105 = vadd.f32 %v3103, %v3104
        %v3106 = vrot.slane %v3105, 2
        %v3107 = vadd.f32 %v3105, %v3106
        %v3108 = vrot.slane %v3107, 1
        %v3109 = vadd.f32 %v3107, %v3108
        %v3110 = vadd.f32 %v2586, %v2590
        %v3111 = vadd.f32 %v3110, %v2594
        %v3112 = vadd.f32 %v3111, %v2598
        %v3113 = vrot.slane %v3112, 4
        %v3114 = vadd.f32 %v3112, %v3113
        %v3115 = vrot.slane %v3114, 2
        %v3116 = vadd.f32 %v3114, %v3115
        %v3117 = vrot.slane %v3116, 1
        %v3118 = vadd.f32 %v3116, %v3117
        %v3119 = vadd.f32 %v2600, %v2604
        %v3120 = vadd.f32 %v3119, %v2608
        %v3121 = vadd.f32 %v3120, %v2612
        %v3122 = vrot.slane %v3121, 4
        %v3123 = vadd.f32 %v3121, %v3122
        %v3124 = vrot.slane %v3123, 2
        %v3125 = vadd.f32 %v3123, %v3124
        %v3126 = vrot.slane %v3125, 1
        %v3127 = vadd.f32 %v3125, %v3126
        %v3128 = vadd.f32 %v2602, %v2606
        %v3129 = vadd.f32 %v3128, %v2610
        %v3130 = vadd.f32 %v3129, %v2614
        %v3131 = vrot.slane %v3130, 4
        %v3132 = vadd.f32 %v3130, %v3131
        %v3133 = vrot.slane %v3132, 2
        %v3134 = vadd.f32 %v3132, %v3133
        %v3135 = vrot.slane %v3134, 1
        %v3136 = vadd.f32 %v3134, %v3135
        %v3137 = vadd.f32 %v2616, %v2620
        %v3138 = vadd.f32 %v3137, %v2624
        %v3139 = vadd.f32 %v3138, %v2628
        %v3140 = vrot.slane %v3139, 4
        %v3141 = vadd.f32 %v3139, %v3140
        %v3142 = vrot.slane %v3141, 2
        %v3143 = vadd.f32 %v3141, %v3142
        %v3144 = vrot.slane %v3143, 1
        %v3145 = vadd.f32 %v3143, %v3144
        %v3146 = vadd.f32 %v2618, %v2622
        %v3147 = vadd.f32 %v3146, %v2626
        %v3148 = vadd.f32 %v3147, %v2630
        %v3149 = vrot.slane %v3148, 4
        %v3150 = vadd.f32 %v3148, %v3149
        %v3151 = vrot.slane %v3150, 2
        %v3152 = vadd.f32 %v3150, %v3151
        %v3153 = vrot.slane %v3152, 1
        %v3154 = vadd.f32 %v3152, %v3153
        %v3155 = vadd.f32 %v2632, %v2636
        %v3156 = vadd.f32 %v3155, %v2640
        %v3157 = vadd.f32 %v3156, %v2644
        %v3158 = vrot.slane %v3157, 4
        %v3159 = vadd.f32 %v3157, %v3158
        %v3160 = vrot.slane %v3159, 2
        %v3161 = vadd.f32 %v3159, %v3160
        %v3162 = vrot.slane %v3161, 1
        %v3163 = vadd.f32 %v3161, %v3162
        %v3164 = vadd.f32 %v2634, %v2638
        %v3165 = vadd.f32 %v3164, %v2642
        %v3166 = vadd.f32 %v3165, %v2646
        %v3167 = vrot.slane %v3166, 4
        %v3168 = vadd.f32 %v3166, %v3167
        %v3169 = vrot.slane %v3168, 2
        %v3170 = vadd.f32 %v3168, %v3169
        %v3171 = vrot.slane %v3170, 1
        %v3172 = vadd.f32 %v3170, %v3171
        %v3173 = vadd.f32 %v2648, %v2652
        %v3174 = vadd.f32 %v3173, %v2656
        %v3175 = vadd.f32 %v3174, %v2660
        %v3176 = vrot.slane %v3175, 4
        %v3177 = vadd.f32 %v3175, %v3176
        %v3178 = vrot.slane %v3177, 2
        %v3179 = vadd.f32 %v3177, %v3178
        %v3180 = vrot.slane %v3179, 1
        %v3181 = vadd.f32 %v3179, %v3180
        %v3182 = vadd.f32 %v2650, %v2654
        %v3183 = vadd.f32 %v3182, %v2658
        %v3184 = vadd.f32 %v3183, %v2662
        %v3185 = vrot.slane %v3184, 4
        %v3186 = vadd.f32 %v3184, %v3185
        %v3187 = vrot.slane %v3186, 2
        %v3188 = vadd.f32 %v3186, %v3187
        %v3189 = vrot.slane %v3188, 1
        %v3190 = vadd.f32 %v3188, %v3189
        %v3191 = vadd.f32 %v2664, %v2668
        %v3192 = vadd.f32 %v3191, %v2672
        %v3193 = vadd.f32 %v3192, %v2676
        %v3194 = vrot.slane %v3193, 4
        %v3195 = vadd.f32 %v3193, %v3194
        %v3196 = vrot.slane %v3195, 2
        %v3197 = vadd.f32 %v3195, %v3196
        %v3198 = vrot.slane %v3197, 1
        %v3199 = vadd.f32 %v3197, %v3198
        %v3200 = vadd.f32 %v2666, %v2670
        %v3201 = vadd.f32 %v3200, %v2674
        %v3202 = vadd.f32 %v3201, %v2678
        %v3203 = vrot.slane %v3202, 4
        %v3204 = vadd.f32 %v3202, %v3203
        %v3205 = vrot.slane %v3204, 2
        %v3206 = vadd.f32 %v3204, %v3205
        %v3207 = vrot.slane %v3206, 1
        %v3208 = vadd.f32 %v3206, %v3207
        %v3209 = vadd.f32 %v2680, %v2684
        %v3210 = vadd.f32 %v3209, %v2688
        %v3211 = vadd.f32 %v3210, %v2692
        %v3212 = vrot.slane %v3211, 4
        %v3213 = vadd.f32 %v3211, %v3212
        %v3214 = vrot.slane %v3213, 2
        %v3215 = vadd.f32 %v3213, %v3214
        %v3216 = vrot.slane %v3215, 1
        %v3217 = vadd.f32 %v3215, %v3216
        %v3218 = vadd.f32 %v2682, %v2686
        %v3219 = vadd.f32 %v3218, %v2690
        %v3220 = vadd.f32 %v3219, %v2694
        %v3221 = vrot.slane %v3220, 4
        %v3222 = vadd.f32 %v3220, %v3221
        %v3223 = vrot.slane %v3222, 2
        %v3224 = vadd.f32 %v3222, %v3223
        %v3225 = vrot.slane %v3224, 1
        %v3226 = vadd.f32 %v3224, %v3225
        %v3227 = vadd.f32 %v2696, %v2700
        %v3228 = vadd.f32 %v3227, %v2704
        %v3229 = vadd.f32 %v3228, %v2708
        %v3230 = vrot.slane %v3229, 4
        %v3231 = vadd.f32 %v3229, %v3230
        %v3232 = vrot.slane %v3231, 2
        %v3233 = vadd.f32 %v3231, %v3232
        %v3234 = vrot.slane %v3233, 1
        %v3235 = vadd.f32 %v3233, %v3234
        %v3236 = vadd.f32 %v2698, %v2702
        %v3237 = vadd.f32 %v3236, %v2706
        %v3238 = vadd.f32 %v3237, %v2710
        %v3239 = vrot.slane %v3238, 4
        %v3240 = vadd.f32 %v3238, %v3239
        %v3241 = vrot.slane %v3240, 2
        %v3242 = vadd.f32 %v3240, %v3241
        %v3243 = vrot.slane %v3242, 1
        %v3244 = vadd.f32 %v3242, %v3243
        %v3245 = vadd.f32 %v2712, %v2716
        %v3246 = vadd.f32 %v3245, %v2720
        %v3247 = vadd.f32 %v3246, %v2724
        %v3248 = vrot.slane %v3247, 4
        %v3249 = vadd.f32 %v3247, %v3248
        %v3250 = vrot.slane %v3249, 2
        %v3251 = vadd.f32 %v3249, %v3250
        %v3252 = vrot.slane %v3251, 1
        %v3253 = vadd.f32 %v3251, %v3252
        %v3254 = vadd.f32 %v2714, %v2718
        %v3255 = vadd.f32 %v3254, %v2722
        %v3256 = vadd.f32 %v3255, %v2726
        %v3257 = vrot.slane %v3256, 4
        %v3258 = vadd.f32 %v3256, %v3257
        %v3259 = vrot.slane %v3258, 2
        %v3260 = vadd.f32 %v3258, %v3259
        %v3261 = vrot.slane %v3260, 1
        %v3262 = vadd.f32 %v3260, %v3261
        %v3263 = vadd.f32 %v2728, %v2732
        %v3264 = vadd.f32 %v3263, %v2736
        %v3265 = vadd.f32 %v3264, %v2740
        %v3266 = vrot.slane %v3265, 4
        %v3267 = vadd.f32 %v3265, %v3266
        %v3268 = vrot.slane %v3267, 2
        %v3269 = vadd.f32 %v3267, %v3268
        %v3270 = vrot.slane %v3269, 1
        %v3271 = vadd.f32 %v3269, %v3270
        %v3272 = vadd.f32 %v2730, %v2734
        %v3273 = vadd.f32 %v3272, %v2738
        %v3274 = vadd.f32 %v3273, %v2742
        %v3275 = vrot.slane %v3274, 4
        %v3276 = vadd.f32 %v3274, %v3275
        %v3277 = vrot.slane %v3276, 2
        %v3278 = vadd.f32 %v3276, %v3277
        %v3279 = vrot.slane %v3278, 1
        %v3280 = vadd.f32 %v3278, %v3279
        %v3281 = vadd.f32 %v2744, %v2748
        %v3282 = vadd.f32 %v3281, %v2752
        %v3283 = vadd.f32 %v3282, %v2756
        %v3284 = vrot.slane %v3283, 4
        %v3285 = vadd.f32 %v3283, %v3284
        %v3286 = vrot.slane %v3285, 2
        %v3287 = vadd.f32 %v3285, %v3286
        %v3288 = vrot.slane %v3287, 1
        %v3289 = vadd.f32 %v3287, %v3288
        %v3290 = vadd.f32 %v2746, %v2750
        %v3291 = vadd.f32 %v3290, %v2754
        %v3292 = vadd.f32 %v3291, %v2758
        %v3293 = vrot.slane %v3292, 4
        %v3294 = vadd.f32 %v3292, %v3293
        %v3295 = vrot.slane %v3294, 2
        %v3296 = vadd.f32 %v3294, %v3295
        %v3297 = vrot.slane %v3296, 1
        %v3298 = vadd.f32 %v3296, %v3297
        %v3299 = vadd.f32 %v2760, %v2764
        %v3300 = vadd.f32 %v3299, %v2768
        %v3301 = vadd.f32 %v3300, %v2772
        %v3302 = vrot.slane %v3301, 4
        %v3303 = vadd.f32 %v3301, %v3302
        %v3304 = vrot.slane %v3303, 2
        %v3305 = vadd.f32 %v3303, %v3304
        %v3306 = vrot.slane %v3305, 1
        %v3307 = vadd.f32 %v3305, %v3306
        %v3308 = vadd.f32 %v2762, %v2766
        %v3309 = vadd.f32 %v3308, %v2770
        %v3310 = vadd.f32 %v3309, %v2774
        %v3311 = vrot.slane %v3310, 4
        %v3312 = vadd.f32 %v3310, %v3311
        %v3313 = vrot.slane %v3312, 2
        %v3314 = vadd.f32 %v3312, %v3313
        %v3315 = vrot.slane %v3314, 1
        %v3316 = vadd.f32 %v3314, %v3315
        %v3317 = vadd.f32 %v2776, %v2780
        %v3318 = vadd.f32 %v3317, %v2784
        %v3319 = vadd.f32 %v3318, %v2788
        %v3320 = vrot.slane %v3319, 4
        %v3321 = vadd.f32 %v3319, %v3320
        %v3322 = vrot.slane %v3321, 2
        %v3323 = vadd.f32 %v3321, %v3322
        %v3324 = vrot.slane %v3323, 1
        %v3325 = vadd.f32 %v3323, %v3324
        %v3326 = vadd.f32 %v2778, %v2782
        %v3327 = vadd.f32 %v3326, %v2786
        %v3328 = vadd.f32 %v3327, %v2790
        %v3329 = vrot.slane %v3328, 4
        %v3330 = vadd.f32 %v3328, %v3329
        %v3331 = vrot.slane %v3330, 2
        %v3332 = vadd.f32 %v3330, %v3331
        %v3333 = vrot.slane %v3332, 1
        %v3334 = vadd.f32 %v3332, %v3333
        %v3335 = vadd.f32 %v2792, %v2796
        %v3336 = vadd.f32 %v3335, %v2800
        %v3337 = vadd.f32 %v3336, %v2804
        %v3338 = vrot.slane %v3337, 4
        %v3339 = vadd.f32 %v3337, %v3338
        %v3340 = vrot.slane %v3339, 2
        %v3341 = vadd.f32 %v3339, %v3340
        %v3342 = vrot.slane %v3341, 1
        %v3343 = vadd.f32 %v3341, %v3342
        %v3344 = vadd.f32 %v2794, %v2798
        %v3345 = vadd.f32 %v3344, %v2802
        %v3346 = vadd.f32 %v3345, %v2806
        %v3347 = vrot.slane %v3346, 4
        %v3348 = vadd.f32 %v3346, %v3347
        %v3349 = vrot.slane %v3348, 2
        %v3350 = vadd.f32 %v3348, %v3349
        %v3351 = vrot.slane %v3350, 1
        %v3352 = vadd.f32 %v3350, %v3351
        %v3353 = vadd.f32 %v2808, %v2812
        %v3354 = vadd.f32 %v3353, %v2816
        %v3355 = vadd.f32 %v3354, %v2820
        %v3356 = vrot.slane %v3355, 4
        %v3357 = vadd.f32 %v3355, %v3356
        %v3358 = vrot.slane %v3357, 2
        %v3359 = vadd.f32 %v3357, %v3358
        %v3360 = vrot.slane %v3359, 1
        %v3361 = vadd.f32 %v3359, %v3360
        %v3362 = vadd.f32 %v2810, %v2814
        %v3363 = vadd.f32 %v3362, %v2818
        %v3364 = vadd.f32 %v3363, %v2822
        %v3365 = vrot.slane %v3364, 4
        %v3366 = vadd.f32 %v3364, %v3365
        %v3367 = vrot.slane %v3366, 2
        %v3368 = vadd.f32 %v3366, %v3367
        %v3369 = vrot.slane %v3368, 1
        %v3370 = vadd.f32 %v3368, %v3369
        %v3371 = vadd.f32 %v2824, %v2828
        %v3372 = vadd.f32 %v3371, %v2832
        %v3373 = vadd.f32 %v3372, %v2836
        %v3374 = vrot.slane %v3373, 4
        %v3375 = vadd.f32 %v3373, %v3374
        %v3376 = vrot.slane %v3375, 2
        %v3377 = vadd.f32 %v3375, %v3376
        %v3378 = vrot.slane %v3377, 1
        %v3379 = vadd.f32 %v3377, %v3378
        %v3380 = vadd.f32 %v2826, %v2830
        %v3381 = vadd.f32 %v3380, %v2834
        %v3382 = vadd.f32 %v3381, %v2838
        %v3383 = vrot.slane %v3382, 4
        %v3384 = vadd.f32 %v3382, %v3383
        %v3385 = vrot.slane %v3384, 2
        %v3386 = vadd.f32 %v3384, %v3385
        %v3387 = vrot.slane %v3386, 1
        %v3388 = vadd.f32 %v3386, %v3387
        %v3389 = vadd.f32 %v2840, %v2844
        %v3390 = vadd.f32 %v3389, %v2848
        %v3391 = vadd.f32 %v3390, %v2852
        %v3392 = vrot.slane %v3391, 4
        %v3393 = vadd.f32 %v3391, %v3392
        %v3394 = vrot.slane %v3393, 2
        %v3395 = vadd.f32 %v3393, %v3394
        %v3396 = vrot.slane %v3395, 1
        %v3397 = vadd.f32 %v3395, %v3396
        %v3398 = vadd.f32 %v2842, %v2846
        %v3399 = vadd.f32 %v3398, %v2850
        %v3400 = vadd.f32 %v3399, %v2854
        %v3401 = vrot.slane %v3400, 4
        %v3402 = vadd.f32 %v3400, %v3401
        %v3403 = vrot.slane %v3402, 2
        %v3404 = vadd.f32 %v3402, %v3403
        %v3405 = vrot.slane %v3404, 1
        %v3406 = vadd.f32 %v3404, %v3405
        %v3407 = vadd.f32 %v2856, %v2860
        %v3408 = vadd.f32 %v3407, %v2864
        %v3409 = vadd.f32 %v3408, %v2868
        %v3410 = vrot.slane %v3409, 4
        %v3411 = vadd.f32 %v3409, %v3410
        %v3412 = vrot.slane %v3411, 2
        %v3413 = vadd.f32 %v3411, %v3412
        %v3414 = vrot.slane %v3413, 1
        %v3415 = vadd.f32 %v3413, %v3414
        %v3416 = vadd.f32 %v2858, %v2862
        %v3417 = vadd.f32 %v3416, %v2866
        %v3418 = vadd.f32 %v3417, %v2870
        %v3419 = vrot.slane %v3418, 4
        %v3420 = vadd.f32 %v3418, %v3419
        %v3421 = vrot.slane %v3420, 2
        %v3422 = vadd.f32 %v3420, %v3421
        %v3423 = vrot.slane %v3422, 1
        %v3424 = vadd.f32 %v3422, %v3423
        %v3425 = vadd.f32 %v2872, %v2876
        %v3426 = vadd.f32 %v3425, %v2880
        %v3427 = vadd.f32 %v3426, %v2884
        %v3428 = vrot.slane %v3427, 4
        %v3429 = vadd.f32 %v3427, %v3428
        %v3430 = vrot.slane %v3429, 2
        %v3431 = vadd.f32 %v3429, %v3430
        %v3432 = vrot.slane %v3431, 1
        %v3433 = vadd.f32 %v3431, %v3432
        %v3434 = vadd.f32 %v2874, %v2878
        %v3435 = vadd.f32 %v3434, %v2882
        %v3436 = vadd.f32 %v3435, %v2886
        %v3437 = vrot.slane %v3436, 4
        %v3438 = vadd.f32 %v3436, %v3437
        %v3439 = vrot.slane %v3438, 2
        %v3440 = vadd.f32 %v3438, %v3439
        %v3441 = vrot.slane %v3440, 1
        %v3442 = vadd.f32 %v3440, %v3441
        %v3443 = vadd.f32 %v2888, %v2892
        %v3444 = vadd.f32 %v3443, %v2896
        %v3445 = vadd.f32 %v3444, %v2900
        %v3446 = vrot.slane %v3445, 4
        %v3447 = vadd.f32 %v3445, %v3446
        %v3448 = vrot.slane %v3447, 2
        %v3449 = vadd.f32 %v3447, %v3448
        %v3450 = vrot.slane %v3449, 1
        %v3451 = vadd.f32 %v3449, %v3450
        %v3452 = vadd.f32 %v2890, %v2894
        %v3453 = vadd.f32 %v3452, %v2898
        %v3454 = vadd.f32 %v3453, %v2902
        %v3455 = vrot.slane %v3454, 4
        %v3456 = vadd.f32 %v3454, %v3455
        %v3457 = vrot.slane %v3456, 2
        %v3458 = vadd.f32 %v3456, %v3457
        %v3459 = vrot.slane %v3458, 1
        %v3460 = vadd.f32 %v3458, %v3459
        %v3461 = vadd.f32 %v2904, %v2908
        %v3462 = vadd.f32 %v3461, %v2912
        %v3463 = vadd.f32 %v3462, %v2916
        %v3464 = vrot.slane %v3463, 4
        %v3465 = vadd.f32 %v3463, %v3464
        %v3466 = vrot.slane %v3465, 2
        %v3467 = vadd.f32 %v3465, %v3466
        %v3468 = vrot.slane %v3467, 1
        %v3469 = vadd.f32 %v3467, %v3468
        %v3470 = vadd.f32 %v2906, %v2910
        %v3471 = vadd.f32 %v3470, %v2914
        %v3472 = vadd.f32 %v3471, %v2918
        %v3473 = vrot.slane %v3472, 4
        %v3474 = vadd.f32 %v3472, %v3473
        %v3475 = vrot.slane %v3474, 2
        %v3476 = vadd.f32 %v3474, %v3475
        %v3477 = vrot.slane %v3476, 1
        %v3478 = vadd.f32 %v3476, %v3477
        %v3479 = vadd.f32 %v2920, %v2924
        %v3480 = vadd.f32 %v3479, %v2928
        %v3481 = vadd.f32 %v3480, %v2932
        %v3482 = vrot.slane %v3481, 4
        %v3483 = vadd.f32 %v3481, %v3482
        %v3484 = vrot.slane %v3483, 2
        %v3485 = vadd.f32 %v3483, %v3484
        %v3486 = vrot.slane %v3485, 1
        %v3487 = vadd.f32 %v3485, %v3486
        %v3488 = vadd.f32 %v2922, %v2926
        %v3489 = vadd.f32 %v3488, %v2930
        %v3490 = vadd.f32 %v3489, %v2934
        %v3491 = vrot.slane %v3490, 4
        %v3492 = vadd.f32 %v3490, %v3491
        %v3493 = vrot.slane %v3492, 2
        %v3494 = vadd.f32 %v3492, %v3493
        %v3495 = vrot.slane %v3494, 1
        %v3496 = vadd.f32 %v3494, %v3495
        %v3497 = vadd.f32 %v2936, %v2940
        %v3498 = vadd.f32 %v3497, %v2944
        %v3499 = vadd.f32 %v3498, %v2948
        %v3500 = vrot.slane %v3499, 4
        %v3501 = vadd.f32 %v3499, %v3500
        %v3502 = vrot.slane %v3501, 2
        %v3503 = vadd.f32 %v3501, %v3502
        %v3504 = vrot.slane %v3503, 1
        %v3505 = vadd.f32 %v3503, %v3504
        %v3506 = vadd.f32 %v2938, %v2942
        %v3507 = vadd.f32 %v3506, %v2946
        %v3508 = vadd.f32 %v3507, %v2950
        %v3509 = vrot.slane %v3508, 4
        %v3510 = vadd.f32 %v3508, %v3509
        %v3511 = vrot.slane %v3510, 2
        %v3512 = vadd.f32 %v3510, %v3511
        %v3513 = vrot.slane %v3512, 1
        %v3514 = vadd.f32 %v3512, %v3513
        %v3515 = vadd.f32 %v2952, %v2956
        %v3516 = vadd.f32 %v3515, %v2960
        %v3517 = vadd.f32 %v3516, %v2964
        %v3518 = vrot.slane %v3517, 4
        %v3519 = vadd.f32 %v3517, %v3518
        %v3520 = vrot.slane %v3519, 2
        %v3521 = vadd.f32 %v3519, %v3520
        %v3522 = vrot.slane %v3521, 1
        %v3523 = vadd.f32 %v3521, %v3522
        %v3524 = vadd.f32 %v2954, %v2958
        %v3525 = vadd.f32 %v3524, %v2962
        %v3526 = vadd.f32 %v3525, %v2966
        %v3527 = vrot.slane %v3526, 4
        %v3528 = vadd.f32 %v3526, %v3527
        %v3529 = vrot.slane %v3528, 2
        %v3530 = vadd.f32 %v3528, %v3529
        %v3531 = vrot.slane %v3530, 1
        %v3532 = vadd.f32 %v3530, %v3531
        %v3533 = vadd.f32 %v2968, %v2972
        %v3534 = vadd.f32 %v3533, %v2976
        %v3535 = vadd.f32 %v3534, %v2980
        %v3536 = vrot.slane %v3535, 4
        %v3537 = vadd.f32 %v3535, %v3536
        %v3538 = vrot.slane %v3537, 2
        %v3539 = vadd.f32 %v3537, %v3538
        %v3540 = vrot.slane %v3539, 1
        %v3541 = vadd.f32 %v3539, %v3540
        %v3542 = vadd.f32 %v2970, %v2974
        %v3543 = vadd.f32 %v3542, %v2978
        %v3544 = vadd.f32 %v3543, %v2982
        %v3545 = vrot.slane %v3544, 4
        %v3546 = vadd.f32 %v3544, %v3545
        %v3547 = vrot.slane %v3546, 2
        %v3548 = vadd.f32 %v3546, %v3547
        %v3549 = vrot.slane %v3548, 1
        %v3550 = vadd.f32 %v3548, %v3549
        %v3551 = vadd.f32 %v2984, %v2988
        %v3552 = vadd.f32 %v3551, %v2992
        %v3553 = vadd.f32 %v3552, %v2996
        %v3554 = vrot.slane %v3553, 4
        %v3555 = vadd.f32 %v3553, %v3554
        %v3556 = vrot.slane %v3555, 2
        %v3557 = vadd.f32 %v3555, %v3556
        %v3558 = vrot.slane %v3557, 1
        %v3559 = vadd.f32 %v3557, %v3558
        %v3560 = vadd.f32 %v2986, %v2990
        %v3561 = vadd.f32 %v3560, %v2994
        %v3562 = vadd.f32 %v3561, %v2998
        %v3563 = vrot.slane %v3562, 4
        %v3564 = vadd.f32 %v3562, %v3563
        %v3565 = vrot.slane %v3564, 2
        %v3566 = vadd.f32 %v3564, %v3565
        %v3567 = vrot.slane %v3566, 1
        %v3568 = vadd.f32 %v3566, %v3567
        %v3569 = vadd.f32 %v3000, %v3004
        %v3570 = vadd.f32 %v3569, %v3008
        %v3571 = vadd.f32 %v3570, %v3012
        %v3572 = vrot.slane %v3571, 4
        %v3573 = vadd.f32 %v3571, %v3572
        %v3574 = vrot.slane %v3573, 2
        %v3575 = vadd.f32 %v3573, %v3574
        %v3576 = vrot.slane %v3575, 1
        %v3577 = vadd.f32 %v3575, %v3576
        %v3578 = vadd.f32 %v3002, %v3006
        %v3579 = vadd.f32 %v3578, %v3010
        %v3580 = vadd.f32 %v3579, %v3014
        %v3581 = vrot.slane %v3580, 4
        %v3582 = vadd.f32 %v3580, %v3581
        %v3583 = vrot.slane %v3582, 2
        %v3584 = vadd.f32 %v3582, %v3583
        %v3585 = vrot.slane %v3584, 1
        %v3586 = vadd.f32 %v3584, %v3585
        %v3587 = vadd.f32 %v3016, %v3020
        %v3588 = vadd.f32 %v3587, %v3024
        %v3589 = vadd.f32 %v3588, %v3028
        %v3590 = vrot.slane %v3589, 4
        %v3591 = vadd.f32 %v3589, %v3590
        %v3592 = vrot.slane %v3591, 2
        %v3593 = vadd.f32 %v3591, %v3592
        %v3594 = vrot.slane %v3593, 1
        %v3595 = vadd.f32 %v3593, %v3594
        %v3596 = vadd.f32 %v3018, %v3022
        %v3597 = vadd.f32 %v3596, %v3026
        %v3598 = vadd.f32 %v3597, %v3030
        %v3599 = vrot.slane %v3598, 4
        %v3600 = vadd.f32 %v3598, %v3599
        %v3601 = vrot.slane %v3600, 2
        %v3602 = vadd.f32 %v3600, %v3601
        %v3603 = vrot.slane %v3602, 1
        %v3604 = vadd.f32 %v3602, %v3603
        %v3605 = vadd.f32 %v3032, %v3036
        %v3606 = vadd.f32 %v3605, %v3040
        %v3607 = vadd.f32 %v3606, %v3044
        %v3608 = vrot.slane %v3607, 4
        %v3609 = vadd.f32 %v3607, %v3608
        %v3610 = vrot.slane %v3609, 2
        %v3611 = vadd.f32 %v3609, %v3610
        %v3612 = vrot.slane %v3611, 1
        %v3613 = vadd.f32 %v3611, %v3612
        %v3614 = vadd.f32 %v3034, %v3038
        %v3615 = vadd.f32 %v3614, %v3042
        %v3616 = vadd.f32 %v3615, %v3046
        %v3617 = vrot.slane %v3616, 4
        %v3618 = vadd.f32 %v3616, %v3617
        %v3619 = vrot.slane %v3618, 2
        %v3620 = vadd.f32 %v3618, %v3619
        %v3621 = vrot.slane %v3620, 1
        %v3622 = vadd.f32 %v3620, %v3621
        %v3623 = vrcp.pop %v3055
        %v3624 = vmul.f32 %v3055, %v3623
        %v3625 = vsub.f32 1.0, %v3624
        %v3626 = vmul.f32 %v3623, %v3625
        %v3627 = vadd.f32 %v3623, %v3626
        %vm3628 = vweird.f32 %v3055
        %vm3629 = vweird.f32 %v3623
        %vm3630 = vmor %vm3628, %vm3629
        %v3631 = vsel %vm3630, %v3623, %v3627
        %v3632 = vand.u32 2147483647, %v3055
        %vm3633 = vcmp.eq.f32.partialorder %v3632, 8.507059e+37
        %v3634 = vand.u32 %v3055, 2147483648
        %v3635 = vor.u32 1.1754944e-38, %v3634
        %v3636 = vsel %vm3633, %v3635, %v3631
        %v3637 = vmul.f32 %v2536, %v3636
        %v3638 = vrcp.pop %v3064
        %v3639 = vmul.f32 %v3064, %v3638
        %v3640 = vsub.f32 1.0, %v3639
        %v3641 = vmul.f32 %v3638, %v3640
        %v3642 = vadd.f32 %v3638, %v3641
        %vm3643 = vweird.f32 %v3064
        %vm3644 = vweird.f32 %v3638
        %vm3645 = vmor %vm3643, %vm3644
        %v3646 = vsel %vm3645, %v3638, %v3642
        %v3647 = vand.u32 2147483647, %v3064
        %vm3648 = vcmp.eq.f32.partialorder %v3647, 8.507059e+37
        %v3649 = vand.u32 %v3064, 2147483648
        %v3650 = vor.u32 1.1754944e-38, %v3649
        %v3651 = vsel %vm3648, %v3650, %v3646
        %v3652 = vmul.f32 %v2538, %v3651
        %v3653 = vmul.f32 %v2540, %v3636
        %v3654 = vmul.f32 %v2542, %v3651
        %v3655 = vmul.f32 %v2544, %v3636
        %v3656 = vmul.f32 %v2546, %v3651
        %v3657 = vmul.f32 %v2548, %v3636
        %v3658 = vmul.f32 %v2550, %v3651
        %v3659 = vrcp.pop %v3073
        %v3660 = vmul.f32 %v3073, %v3659
        %v3661 = vsub.f32 1.0, %v3660
        %v3662 = vmul.f32 %v3659, %v3661
        %v3663 = vadd.f32 %v3659, %v3662
        %vm3664 = vweird.f32 %v3073
        %vm3665 = vweird.f32 %v3659
        %vm3666 = vmor %vm3664, %vm3665
        %v3667 = vsel %vm3666, %v3659, %v3663
        %v3668 = vand.u32 2147483647, %v3073
        %vm3669 = vcmp.eq.f32.partialorder %v3668, 8.507059e+37
        %v3670 = vand.u32 %v3073, 2147483648
        %v3671 = vor.u32 1.1754944e-38, %v3670
        %v3672 = vsel %vm3669, %v3671, %v3667
        %v3673 = vmul.f32 %v2552, %v3672
        %v3674 = vrcp.pop %v3082
        %v3675 = vmul.f32 %v3082, %v3674
        %v3676 = vsub.f32 1.0, %v3675
        %v3677 = vmul.f32 %v3674, %v3676
        %v3678 = vadd.f32 %v3674, %v3677
        %vm3679 = vweird.f32 %v3082
        %vm3680 = vweird.f32 %v3674
        %vm3681 = vmor %vm3679, %vm3680
        %v3682 = vsel %vm3681, %v3674, %v3678
        %v3683 = vand.u32 2147483647, %v3082
        %vm3684 = vcmp.eq.f32.partialorder %v3683, 8.507059e+37
        %v3685 = vand.u32 %v3082, 2147483648
        %v3686 = vor.u32 1.1754944e-38, %v3685
        %v3687 = vsel %vm3684, %v3686, %v3682
        %v3688 = vmul.f32 %v2554, %v3687
        %v3689 = vmul.f32 %v2556, %v3672
        %v3690 = vmul.f32 %v2558, %v3687
        %v3691 = vmul.f32 %v2560, %v3672
        %v3692 = vmul.f32 %v2562, %v3687
        %v3693 = vmul.f32 %v2564, %v3672
        %v3694 = vmul.f32 %v2566, %v3687
        %v3695 = vrcp.pop %v3091
        %v3696 = vmul.f32 %v3091, %v3695
        %v3697 = vsub.f32 1.0, %v3696
        %v3698 = vmul.f32 %v3695, %v3697
        %v3699 = vadd.f32 %v3695, %v3698
        %vm3700 = vweird.f32 %v3091
        %vm3701 = vweird.f32 %v3695
        %vm3702 = vmor %vm3700, %vm3701
        %v3703 = vsel %vm3702, %v3695, %v3699
        %v3704 = vand.u32 2147483647, %v3091
        %vm3705 = vcmp.eq.f32.partialorder %v3704, 8.507059e+37
        %v3706 = vand.u32 %v3091, 2147483648
        %v3707 = vor.u32 1.1754944e-38, %v3706
        %v3708 = vsel %vm3705, %v3707, %v3703
        %v3709 = vmul.f32 %v2568, %v3708
        %v3710 = vrcp.pop %v3100
        %v3711 = vmul.f32 %v3100, %v3710
        %v3712 = vsub.f32 1.0, %v3711
        %v3713 = vmul.f32 %v3710, %v3712
        %v3714 = vadd.f32 %v3710, %v3713
        %vm3715 = vweird.f32 %v3100
        %vm3716 = vweird.f32 %v3710
        %vm3717 = vmor %vm3715, %vm3716
        %v3718 = vsel %vm3717, %v3710, %v3714
        %v3719 = vand.u32 2147483647, %v3100
        %vm3720 = vcmp.eq.f32.partialorder %v3719, 8.507059e+37
        %v3721 = vand.u32 %v3100, 2147483648
        %v3722 = vor.u32 1.1754944e-38, %v3721
        %v3723 = vsel %vm3720, %v3722, %v3718
        %v3724 = vmul.f32 %v2570, %v3723
        %v3725 = vmul.f32 %v2572, %v3708
        %v3726 = vmul.f32 %v2574, %v3723
        %v3727 = vmul.f32 %v2576, %v3708
        %v3728 = vmul.f32 %v2578, %v3723
        %v3729 = vmul.f32 %v2580, %v3708
        %v3730 = vmul.f32 %v2582, %v3723
        %v3731 = vrcp.pop %v3109
        %v3732 = vmul.f32 %v3109, %v3731
        %v3733 = vsub.f32 1.0, %v3732
        %v3734 = vmul.f32 %v3731, %v3733
        %v3735 = vadd.f32 %v3731, %v3734
        %vm3736 = vweird.f32 %v3109
        %vm3737 = vweird.f32 %v3731
        %vm3738 = vmor %vm3736, %vm3737
        %v3739 = vsel %vm3738, %v3731, %v3735
        %v3740 = vand.u32 2147483647, %v3109
        %vm3741 = vcmp.eq.f32.partialorder %v3740, 8.507059e+37
        %v3742 = vand.u32 %v3109, 2147483648
        %v3743 = vor.u32 1.1754944e-38, %v3742
        %v3744 = vsel %vm3741, %v3743, %v3739
        %v3745 = vmul.f32 %v2584, %v3744
        %v3746 = vrcp.pop %v3118
        %v3747 = vmul.f32 %v3118, %v3746
        %v3748 = vsub.f32 1.0, %v3747
        %v3749 = vmul.f32 %v3746, %v3748
        %v3750 = vadd.f32 %v3746, %v3749
        %vm3751 = vweird.f32 %v3118
        %vm3752 = vweird.f32 %v3746
        %vm3753 = vmor %vm3751, %vm3752
        %v3754 = vsel %vm3753, %v3746, %v3750
        %v3755 = vand.u32 2147483647, %v3118
        %vm3756 = vcmp.eq.f32.partialorder %v3755, 8.507059e+37
        %v3757 = vand.u32 %v3118, 2147483648
        %v3758 = vor.u32 1.1754944e-38, %v3757
        %v3759 = vsel %vm3756, %v3758, %v3754
        %v3760 = vmul.f32 %v2586, %v3759
        %v3761 = vmul.f32 %v2588, %v3744
        %v3762 = vmul.f32 %v2590, %v3759
        %v3763 = vmul.f32 %v2592, %v3744
        %v3764 = vmul.f32 %v2594, %v3759
        %v3765 = vmul.f32 %v2596, %v3744
        %v3766 = vmul.f32 %v2598, %v3759
        %v3767 = vrcp.pop %v3127
        %v3768 = vmul.f32 %v3127, %v3767
        %v3769 = vsub.f32 1.0, %v3768
        %v3770 = vmul.f32 %v3767, %v3769
        %v3771 = vadd.f32 %v3767, %v3770
        %vm3772 = vweird.f32 %v3127
        %vm3773 = vweird.f32 %v3767
        %vm3774 = vmor %vm3772, %vm3773
        %v3775 = vsel %vm3774, %v3767, %v3771
        %v3776 = vand.u32 2147483647, %v3127
        %vm3777 = vcmp.eq.f32.partialorder %v3776, 8.507059e+37
        %v3778 = vand.u32 %v3127, 2147483648
        %v3779 = vor.u32 1.1754944e-38, %v3778
        %v3780 = vsel %vm3777, %v3779, %v3775
        %v3781 = vmul.f32 %v2600, %v3780
        %v3782 = vrcp.pop %v3136
        %v3783 = vmul.f32 %v3136, %v3782
        %v3784 = vsub.f32 1.0, %v3783
        %v3785 = vmul.f32 %v3782, %v3784
        %v3786 = vadd.f32 %v3782, %v3785
        %vm3787 = vweird.f32 %v3136
        %vm3788 = vweird.f32 %v3782
        %vm3789 = vmor %vm3787, %vm3788
        %v3790 = vsel %vm3789, %v3782, %v3786
        %v3791 = vand.u32 2147483647, %v3136
        %vm3792 = vcmp.eq.f32.partialorder %v3791, 8.507059e+37
        %v3793 = vand.u32 %v3136, 2147483648
        %v3794 = vor.u32 1.1754944e-38, %v3793
        %v3795 = vsel %vm3792, %v3794, %v3790
        %v3796 = vmul.f32 %v2602, %v3795
        %v3797 = vmul.f32 %v2604, %v3780
        %v3798 = vmul.f32 %v2606, %v3795
        %v3799 = vmul.f32 %v2608, %v3780
        %v3800 = vmul.f32 %v2610, %v3795
        %v3801 = vmul.f32 %v2612, %v3780
        %v3802 = vmul.f32 %v2614, %v3795
        %v3803 = vrcp.pop %v3145
        %v3804 = vmul.f32 %v3145, %v3803
        %v3805 = vsub.f32 1.0, %v3804
        %v3806 = vmul.f32 %v3803, %v3805
        %v3807 = vadd.f32 %v3803, %v3806
        %vm3808 = vweird.f32 %v3145
        %vm3809 = vweird.f32 %v3803
        %vm3810 = vmor %vm3808, %vm3809
        %v3811 = vsel %vm3810, %v3803, %v3807
        %v3812 = vand.u32 2147483647, %v3145
        %vm3813 = vcmp.eq.f32.partialorder %v3812, 8.507059e+37
        %v3814 = vand.u32 %v3145, 2147483648
        %v3815 = vor.u32 1.1754944e-38, %v3814
        %v3816 = vsel %vm3813, %v3815, %v3811
        %v3817 = vmul.f32 %v2616, %v3816
        %v3818 = vrcp.pop %v3154
        %v3819 = vmul.f32 %v3154, %v3818
        %v3820 = vsub.f32 1.0, %v3819
        %v3821 = vmul.f32 %v3818, %v3820
        %v3822 = vadd.f32 %v3818, %v3821
        %vm3823 = vweird.f32 %v3154
        %vm3824 = vweird.f32 %v3818
        %vm3825 = vmor %vm3823, %vm3824
        %v3826 = vsel %vm3825, %v3818, %v3822
        %v3827 = vand.u32 2147483647, %v3154
        %vm3828 = vcmp.eq.f32.partialorder %v3827, 8.507059e+37
        %v3829 = vand.u32 %v3154, 2147483648
        %v3830 = vor.u32 1.1754944e-38, %v3829
        %v3831 = vsel %vm3828, %v3830, %v3826
        %v3832 = vmul.f32 %v2618, %v3831
        %v3833 = vmul.f32 %v2620, %v3816
        %v3834 = vmul.f32 %v2622, %v3831
        %v3835 = vmul.f32 %v2624, %v3816
        %v3836 = vmul.f32 %v2626, %v3831
        %v3837 = vmul.f32 %v2628, %v3816
        %v3838 = vmul.f32 %v2630, %v3831
        %v3839 = vrcp.pop %v3163
        %v3840 = vmul.f32 %v3163, %v3839
        %v3841 = vsub.f32 1.0, %v3840
        %v3842 = vmul.f32 %v3839, %v3841
        %v3843 = vadd.f32 %v3839, %v3842
        %vm3844 = vweird.f32 %v3163
        %vm3845 = vweird.f32 %v3839
        %vm3846 = vmor %vm3844, %vm3845
        %v3847 = vsel %vm3846, %v3839, %v3843
        %v3848 = vand.u32 2147483647, %v3163
        %vm3849 = vcmp.eq.f32.partialorder %v3848, 8.507059e+37
        %v3850 = vand.u32 %v3163, 2147483648
        %v3851 = vor.u32 1.1754944e-38, %v3850
        %v3852 = vsel %vm3849, %v3851, %v3847
        %v3853 = vmul.f32 %v2632, %v3852
        %v3854 = vrcp.pop %v3172
        %v3855 = vmul.f32 %v3172, %v3854
        %v3856 = vsub.f32 1.0, %v3855
        %v3857 = vmul.f32 %v3854, %v3856
        %v3858 = vadd.f32 %v3854, %v3857
        %vm3859 = vweird.f32 %v3172
        %vm3860 = vweird.f32 %v3854
        %vm3861 = vmor %vm3859, %vm3860
        %v3862 = vsel %vm3861, %v3854, %v3858
        %v3863 = vand.u32 2147483647, %v3172
        %vm3864 = vcmp.eq.f32.partialorder %v3863, 8.507059e+37
        %v3865 = vand.u32 %v3172, 2147483648
        %v3866 = vor.u32 1.1754944e-38, %v3865
        %v3867 = vsel %vm3864, %v3866, %v3862
        %v3868 = vmul.f32 %v2634, %v3867
        %v3869 = vmul.f32 %v2636, %v3852
        %v3870 = vmul.f32 %v2638, %v3867
        %v3871 = vmul.f32 %v2640, %v3852
        %v3872 = vmul.f32 %v2642, %v3867
        %v3873 = vmul.f32 %v2644, %v3852
        %v3874 = vmul.f32 %v2646, %v3867
        %v3875 = vrcp.pop %v3181
        %v3876 = vmul.f32 %v3181, %v3875
        %v3877 = vsub.f32 1.0, %v3876
        %v3878 = vmul.f32 %v3875, %v3877
        %v3879 = vadd.f32 %v3875, %v3878
        %vm3880 = vweird.f32 %v3181
        %vm3881 = vweird.f32 %v3875
        %vm3882 = vmor %vm3880, %vm3881
        %v3883 = vsel %vm3882, %v3875, %v3879
        %v3884 = vand.u32 2147483647, %v3181
        %vm3885 = vcmp.eq.f32.partialorder %v3884, 8.507059e+37
        %v3886 = vand.u32 %v3181, 2147483648
        %v3887 = vor.u32 1.1754944e-38, %v3886
        %v3888 = vsel %vm3885, %v3887, %v3883
        %v3889 = vmul.f32 %v2648, %v3888
        %v3890 = vrcp.pop %v3190
        %v3891 = vmul.f32 %v3190, %v3890
        %v3892 = vsub.f32 1.0, %v3891
        %v3893 = vmul.f32 %v3890, %v3892
        %v3894 = vadd.f32 %v3890, %v3893
        %vm3895 = vweird.f32 %v3190
        %vm3896 = vweird.f32 %v3890
        %vm3897 = vmor %vm3895, %vm3896
        %v3898 = vsel %vm3897, %v3890, %v3894
        %v3899 = vand.u32 2147483647, %v3190
        %vm3900 = vcmp.eq.f32.partialorder %v3899, 8.507059e+37
        %v3901 = vand.u32 %v3190, 2147483648
        %v3902 = vor.u32 1.1754944e-38, %v3901
        %v3903 = vsel %vm3900, %v3902, %v3898
        %v3904 = vmul.f32 %v2650, %v3903
        %v3905 = vmul.f32 %v2652, %v3888
        %v3906 = vmul.f32 %v2654, %v3903
        %v3907 = vmul.f32 %v2656, %v3888
        %v3908 = vmul.f32 %v2658, %v3903
        %v3909 = vmul.f32 %v2660, %v3888
        %v3910 = vmul.f32 %v2662, %v3903
        %v3911 = vrcp.pop %v3199
        %v3912 = vmul.f32 %v3199, %v3911
        %v3913 = vsub.f32 1.0, %v3912
        %v3914 = vmul.f32 %v3911, %v3913
        %v3915 = vadd.f32 %v3911, %v3914
        %vm3916 = vweird.f32 %v3199
        %vm3917 = vweird.f32 %v3911
        %vm3918 = vmor %vm3916, %vm3917
        %v3919 = vsel %vm3918, %v3911, %v3915
        %v3920 = vand.u32 2147483647, %v3199
        %vm3921 = vcmp.eq.f32.partialorder %v3920, 8.507059e+37
        %v3922 = vand.u32 %v3199, 2147483648
        %v3923 = vor.u32 1.1754944e-38, %v3922
        %v3924 = vsel %vm3921, %v3923, %v3919
        %v3925 = vmul.f32 %v2664, %v3924
        %v3926 = vrcp.pop %v3208
        %v3927 = vmul.f32 %v3208, %v3926
        %v3928 = vsub.f32 1.0, %v3927
        %v3929 = vmul.f32 %v3926, %v3928
        %v3930 = vadd.f32 %v3926, %v3929
        %vm3931 = vweird.f32 %v3208
        %vm3932 = vweird.f32 %v3926
        %vm3933 = vmor %vm3931, %vm3932
        %v3934 = vsel %vm3933, %v3926, %v3930
        %v3935 = vand.u32 2147483647, %v3208
        %vm3936 = vcmp.eq.f32.partialorder %v3935, 8.507059e+37
        %v3937 = vand.u32 %v3208, 2147483648
        %v3938 = vor.u32 1.1754944e-38, %v3937
        %v3939 = vsel %vm3936, %v3938, %v3934
        %v3940 = vmul.f32 %v2666, %v3939
        %v3941 = vmul.f32 %v2668, %v3924
        %v3942 = vmul.f32 %v2670, %v3939
        %v3943 = vmul.f32 %v2672, %v3924
        %v3944 = vmul.f32 %v2674, %v3939
        %v3945 = vmul.f32 %v2676, %v3924
        %v3946 = vmul.f32 %v2678, %v3939
        %v3947 = vrcp.pop %v3217
        %v3948 = vmul.f32 %v3217, %v3947
        %v3949 = vsub.f32 1.0, %v3948
        %v3950 = vmul.f32 %v3947, %v3949
        %v3951 = vadd.f32 %v3947, %v3950
        %vm3952 = vweird.f32 %v3217
        %vm3953 = vweird.f32 %v3947
        %vm3954 = vmor %vm3952, %vm3953
        %v3955 = vsel %vm3954, %v3947, %v3951
        %v3956 = vand.u32 2147483647, %v3217
        %vm3957 = vcmp.eq.f32.partialorder %v3956, 8.507059e+37
        %v3958 = vand.u32 %v3217, 2147483648
        %v3959 = vor.u32 1.1754944e-38, %v3958
        %v3960 = vsel %vm3957, %v3959, %v3955
        %v3961 = vmul.f32 %v2680, %v3960
        %v3962 = vrcp.pop %v3226
        %v3963 = vmul.f32 %v3226, %v3962
        %v3964 = vsub.f32 1.0, %v3963
        %v3965 = vmul.f32 %v3962, %v3964
        %v3966 = vadd.f32 %v3962, %v3965
        %vm3967 = vweird.f32 %v3226
        %vm3968 = vweird.f32 %v3962
        %vm3969 = vmor %vm3967, %vm3968
        %v3970 = vsel %vm3969, %v3962, %v3966
        %v3971 = vand.u32 2147483647, %v3226
        %vm3972 = vcmp.eq.f32.partialorder %v3971, 8.507059e+37
        %v3973 = vand.u32 %v3226, 2147483648
        %v3974 = vor.u32 1.1754944e-38, %v3973
        %v3975 = vsel %vm3972, %v3974, %v3970
        %v3976 = vmul.f32 %v2682, %v3975
        %v3977 = vmul.f32 %v2684, %v3960
        %v3978 = vmul.f32 %v2686, %v3975
        %v3979 = vmul.f32 %v2688, %v3960
        %v3980 = vmul.f32 %v2690, %v3975
        %v3981 = vmul.f32 %v2692, %v3960
        %v3982 = vmul.f32 %v2694, %v3975
        %v3983 = vrcp.pop %v3235
        %v3984 = vmul.f32 %v3235, %v3983
        %v3985 = vsub.f32 1.0, %v3984
        %v3986 = vmul.f32 %v3983, %v3985
        %v3987 = vadd.f32 %v3983, %v3986
        %vm3988 = vweird.f32 %v3235
        %vm3989 = vweird.f32 %v3983
        %vm3990 = vmor %vm3988, %vm3989
        %v3991 = vsel %vm3990, %v3983, %v3987
        %v3992 = vand.u32 2147483647, %v3235
        %vm3993 = vcmp.eq.f32.partialorder %v3992, 8.507059e+37
        %v3994 = vand.u32 %v3235, 2147483648
        %v3995 = vor.u32 1.1754944e-38, %v3994
        %v3996 = vsel %vm3993, %v3995, %v3991
        %v3997 = vmul.f32 %v2696, %v3996
        %v3998 = vrcp.pop %v3244
        %v3999 = vmul.f32 %v3244, %v3998
        %v4000 = vsub.f32 1.0, %v3999
        %v4001 = vmul.f32 %v3998, %v4000
        %v4002 = vadd.f32 %v3998, %v4001
        %vm4003 = vweird.f32 %v3244
        %vm4004 = vweird.f32 %v3998
        %vm4005 = vmor %vm4003, %vm4004
        %v4006 = vsel %vm4005, %v3998, %v4002
        %v4007 = vand.u32 2147483647, %v3244
        %vm4008 = vcmp.eq.f32.partialorder %v4007, 8.507059e+37
        %v4009 = vand.u32 %v3244, 2147483648
        %v4010 = vor.u32 1.1754944e-38, %v4009
        %v4011 = vsel %vm4008, %v4010, %v4006
        %v4012 = vmul.f32 %v2698, %v4011
        %v4013 = vmul.f32 %v2700, %v3996
        %v4014 = vmul.f32 %v2702, %v4011
        %v4015 = vmul.f32 %v2704, %v3996
        %v4016 = vmul.f32 %v2706, %v4011
        %v4017 = vmul.f32 %v2708, %v3996
        %v4018 = vmul.f32 %v2710, %v4011
        %v4019 = vrcp.pop %v3253
        %v4020 = vmul.f32 %v3253, %v4019
        %v4021 = vsub.f32 1.0, %v4020
        %v4022 = vmul.f32 %v4019, %v4021
        %v4023 = vadd.f32 %v4019, %v4022
        %vm4024 = vweird.f32 %v3253
        %vm4025 = vweird.f32 %v4019
        %vm4026 = vmor %vm4024, %vm4025
        %v4027 = vsel %vm4026, %v4019, %v4023
        %v4028 = vand.u32 2147483647, %v3253
        %vm4029 = vcmp.eq.f32.partialorder %v4028, 8.507059e+37
        %v4030 = vand.u32 %v3253, 2147483648
        %v4031 = vor.u32 1.1754944e-38, %v4030
        %v4032 = vsel %vm4029, %v4031, %v4027
        %v4033 = vmul.f32 %v2712, %v4032
        %v4034 = vrcp.pop %v3262
        %v4035 = vmul.f32 %v3262, %v4034
        %v4036 = vsub.f32 1.0, %v4035
        %v4037 = vmul.f32 %v4034, %v4036
        %v4038 = vadd.f32 %v4034, %v4037
        %vm4039 = vweird.f32 %v3262
        %vm4040 = vweird.f32 %v4034
        %vm4041 = vmor %vm4039, %vm4040
        %v4042 = vsel %vm4041, %v4034, %v4038
        %v4043 = vand.u32 2147483647, %v3262
        %vm4044 = vcmp.eq.f32.partialorder %v4043, 8.507059e+37
        %v4045 = vand.u32 %v3262, 2147483648
        %v4046 = vor.u32 1.1754944e-38, %v4045
        %v4047 = vsel %vm4044, %v4046, %v4042
        %v4048 = vmul.f32 %v2714, %v4047
        %v4049 = vmul.f32 %v2716, %v4032
        %v4050 = vmul.f32 %v2718, %v4047
        %v4051 = vmul.f32 %v2720, %v4032
        %v4052 = vmul.f32 %v2722, %v4047
        %v4053 = vmul.f32 %v2724, %v4032
        %v4054 = vmul.f32 %v2726, %v4047
        %v4055 = vrcp.pop %v3271
        %v4056 = vmul.f32 %v3271, %v4055
        %v4057 = vsub.f32 1.0, %v4056
        %v4058 = vmul.f32 %v4055, %v4057
        %v4059 = vadd.f32 %v4055, %v4058
        %vm4060 = vweird.f32 %v3271
        %vm4061 = vweird.f32 %v4055
        %vm4062 = vmor %vm4060, %vm4061
        %v4063 = vsel %vm4062, %v4055, %v4059
        %v4064 = vand.u32 2147483647, %v3271
        %vm4065 = vcmp.eq.f32.partialorder %v4064, 8.507059e+37
        %v4066 = vand.u32 %v3271, 2147483648
        %v4067 = vor.u32 1.1754944e-38, %v4066
        %v4068 = vsel %vm4065, %v4067, %v4063
        %v4069 = vmul.f32 %v2728, %v4068
        %v4070 = vrcp.pop %v3280
        %v4071 = vmul.f32 %v3280, %v4070
        %v4072 = vsub.f32 1.0, %v4071
        %v4073 = vmul.f32 %v4070, %v4072
        %v4074 = vadd.f32 %v4070, %v4073
        %vm4075 = vweird.f32 %v3280
        %vm4076 = vweird.f32 %v4070
        %vm4077 = vmor %vm4075, %vm4076
        %v4078 = vsel %vm4077, %v4070, %v4074
        %v4079 = vand.u32 2147483647, %v3280
        %vm4080 = vcmp.eq.f32.partialorder %v4079, 8.507059e+37
        %v4081 = vand.u32 %v3280, 2147483648
        %v4082 = vor.u32 1.1754944e-38, %v4081
        %v4083 = vsel %vm4080, %v4082, %v4078
        %v4084 = vmul.f32 %v2730, %v4083
        %v4085 = vmul.f32 %v2732, %v4068
        %v4086 = vmul.f32 %v2734, %v4083
        %v4087 = vmul.f32 %v2736, %v4068
        %v4088 = vmul.f32 %v2738, %v4083
        %v4089 = vmul.f32 %v2740, %v4068
        %v4090 = vmul.f32 %v2742, %v4083
        %v4091 = vrcp.pop %v3289
        %v4092 = vmul.f32 %v3289, %v4091
        %v4093 = vsub.f32 1.0, %v4092
        %v4094 = vmul.f32 %v4091, %v4093
        %v4095 = vadd.f32 %v4091, %v4094
        %vm4096 = vweird.f32 %v3289
        %vm4097 = vweird.f32 %v4091
        %vm4098 = vmor %vm4096, %vm4097
        %v4099 = vsel %vm4098, %v4091, %v4095
        %v4100 = vand.u32 2147483647, %v3289
        %vm4101 = vcmp.eq.f32.partialorder %v4100, 8.507059e+37
        %v4102 = vand.u32 %v3289, 2147483648
        %v4103 = vor.u32 1.1754944e-38, %v4102
        %v4104 = vsel %vm4101, %v4103, %v4099
        %v4105 = vmul.f32 %v2744, %v4104
        %v4106 = vrcp.pop %v3298
        %v4107 = vmul.f32 %v3298, %v4106
        %v4108 = vsub.f32 1.0, %v4107
        %v4109 = vmul.f32 %v4106, %v4108
        %v4110 = vadd.f32 %v4106, %v4109
        %vm4111 = vweird.f32 %v3298
        %vm4112 = vweird.f32 %v4106
        %vm4113 = vmor %vm4111, %vm4112
        %v4114 = vsel %vm4113, %v4106, %v4110
        %v4115 = vand.u32 2147483647, %v3298
        %vm4116 = vcmp.eq.f32.partialorder %v4115, 8.507059e+37
        %v4117 = vand.u32 %v3298, 2147483648
        %v4118 = vor.u32 1.1754944e-38, %v4117
        %v4119 = vsel %vm4116, %v4118, %v4114
        %v4120 = vmul.f32 %v2746, %v4119
        %v4121 = vmul.f32 %v2748, %v4104
        %v4122 = vmul.f32 %v2750, %v4119
        %v4123 = vmul.f32 %v2752, %v4104
        %v4124 = vmul.f32 %v2754, %v4119
        %v4125 = vmul.f32 %v2756, %v4104
        %v4126 = vmul.f32 %v2758, %v4119
        %v4127 = vrcp.pop %v3307
        %v4128 = vmul.f32 %v3307, %v4127
        %v4129 = vsub.f32 1.0, %v4128
        %v4130 = vmul.f32 %v4127, %v4129
        %v4131 = vadd.f32 %v4127, %v4130
        %vm4132 = vweird.f32 %v3307
        %vm4133 = vweird.f32 %v4127
        %vm4134 = vmor %vm4132, %vm4133
        %v4135 = vsel %vm4134, %v4127, %v4131
        %v4136 = vand.u32 2147483647, %v3307
        %vm4137 = vcmp.eq.f32.partialorder %v4136, 8.507059e+37
        %v4138 = vand.u32 %v3307, 2147483648
        %v4139 = vor.u32 1.1754944e-38, %v4138
        %v4140 = vsel %vm4137, %v4139, %v4135
        %v4141 = vmul.f32 %v2760, %v4140
        %v4142 = vrcp.pop %v3316
        %v4143 = vmul.f32 %v3316, %v4142
        %v4144 = vsub.f32 1.0, %v4143
        %v4145 = vmul.f32 %v4142, %v4144
        %v4146 = vadd.f32 %v4142, %v4145
        %vm4147 = vweird.f32 %v3316
        %vm4148 = vweird.f32 %v4142
        %vm4149 = vmor %vm4147, %vm4148
        %v4150 = vsel %vm4149, %v4142, %v4146
        %v4151 = vand.u32 2147483647, %v3316
        %vm4152 = vcmp.eq.f32.partialorder %v4151, 8.507059e+37
        %v4153 = vand.u32 %v3316, 2147483648
        %v4154 = vor.u32 1.1754944e-38, %v4153
        %v4155 = vsel %vm4152, %v4154, %v4150
        %v4156 = vmul.f32 %v2762, %v4155
        %v4157 = vmul.f32 %v2764, %v4140
        %v4158 = vmul.f32 %v2766, %v4155
        %v4159 = vmul.f32 %v2768, %v4140
        %v4160 = vmul.f32 %v2770, %v4155
        %v4161 = vmul.f32 %v2772, %v4140
        %v4162 = vmul.f32 %v2774, %v4155
        %v4163 = vrcp.pop %v3325
        %v4164 = vmul.f32 %v3325, %v4163
        %v4165 = vsub.f32 1.0, %v4164
        %v4166 = vmul.f32 %v4163, %v4165
        %v4167 = vadd.f32 %v4163, %v4166
        %vm4168 = vweird.f32 %v3325
        %vm4169 = vweird.f32 %v4163
        %vm4170 = vmor %vm4168, %vm4169
        %v4171 = vsel %vm4170, %v4163, %v4167
        %v4172 = vand.u32 2147483647, %v3325
        %vm4173 = vcmp.eq.f32.partialorder %v4172, 8.507059e+37
        %v4174 = vand.u32 %v3325, 2147483648
        %v4175 = vor.u32 1.1754944e-38, %v4174
        %v4176 = vsel %vm4173, %v4175, %v4171
        %v4177 = vmul.f32 %v2776, %v4176
        %v4178 = vrcp.pop %v3334
        %v4179 = vmul.f32 %v3334, %v4178
        %v4180 = vsub.f32 1.0, %v4179
        %v4181 = vmul.f32 %v4178, %v4180
        %v4182 = vadd.f32 %v4178, %v4181
        %vm4183 = vweird.f32 %v3334
        %vm4184 = vweird.f32 %v4178
        %vm4185 = vmor %vm4183, %vm4184
        %v4186 = vsel %vm4185, %v4178, %v4182
        %v4187 = vand.u32 2147483647, %v3334
        %vm4188 = vcmp.eq.f32.partialorder %v4187, 8.507059e+37
        %v4189 = vand.u32 %v3334, 2147483648
        %v4190 = vor.u32 1.1754944e-38, %v4189
        %v4191 = vsel %vm4188, %v4190, %v4186
        %v4192 = vmul.f32 %v2778, %v4191
        %v4193 = vmul.f32 %v2780, %v4176
        %v4194 = vmul.f32 %v2782, %v4191
        %v4195 = vmul.f32 %v2784, %v4176
        %v4196 = vmul.f32 %v2786, %v4191
        %v4197 = vmul.f32 %v2788, %v4176
        %v4198 = vmul.f32 %v2790, %v4191
        %v4199 = vrcp.pop %v3343
        %v4200 = vmul.f32 %v3343, %v4199
        %v4201 = vsub.f32 1.0, %v4200
        %v4202 = vmul.f32 %v4199, %v4201
        %v4203 = vadd.f32 %v4199, %v4202
        %vm4204 = vweird.f32 %v3343
        %vm4205 = vweird.f32 %v4199
        %vm4206 = vmor %vm4204, %vm4205
        %v4207 = vsel %vm4206, %v4199, %v4203
        %v4208 = vand.u32 2147483647, %v3343
        %vm4209 = vcmp.eq.f32.partialorder %v4208, 8.507059e+37
        %v4210 = vand.u32 %v3343, 2147483648
        %v4211 = vor.u32 1.1754944e-38, %v4210
        %v4212 = vsel %vm4209, %v4211, %v4207
        %v4213 = vmul.f32 %v2792, %v4212
        %v4214 = vrcp.pop %v3352
        %v4215 = vmul.f32 %v3352, %v4214
        %v4216 = vsub.f32 1.0, %v4215
        %v4217 = vmul.f32 %v4214, %v4216
        %v4218 = vadd.f32 %v4214, %v4217
        %vm4219 = vweird.f32 %v3352
        %vm4220 = vweird.f32 %v4214
        %vm4221 = vmor %vm4219, %vm4220
        %v4222 = vsel %vm4221, %v4214, %v4218
        %v4223 = vand.u32 2147483647, %v3352
        %vm4224 = vcmp.eq.f32.partialorder %v4223, 8.507059e+37
        %v4225 = vand.u32 %v3352, 2147483648
        %v4226 = vor.u32 1.1754944e-38, %v4225
        %v4227 = vsel %vm4224, %v4226, %v4222
        %v4228 = vmul.f32 %v2794, %v4227
        %v4229 = vmul.f32 %v2796, %v4212
        %v4230 = vmul.f32 %v2798, %v4227
        %v4231 = vmul.f32 %v2800, %v4212
        %v4232 = vmul.f32 %v2802, %v4227
        %v4233 = vmul.f32 %v2804, %v4212
        %v4234 = vmul.f32 %v2806, %v4227
        %v4235 = vrcp.pop %v3361
        %v4236 = vmul.f32 %v3361, %v4235
        %v4237 = vsub.f32 1.0, %v4236
        %v4238 = vmul.f32 %v4235, %v4237
        %v4239 = vadd.f32 %v4235, %v4238
        %vm4240 = vweird.f32 %v3361
        %vm4241 = vweird.f32 %v4235
        %vm4242 = vmor %vm4240, %vm4241
        %v4243 = vsel %vm4242, %v4235, %v4239
        %v4244 = vand.u32 2147483647, %v3361
        %vm4245 = vcmp.eq.f32.partialorder %v4244, 8.507059e+37
        %v4246 = vand.u32 %v3361, 2147483648
        %v4247 = vor.u32 1.1754944e-38, %v4246
        %v4248 = vsel %vm4245, %v4247, %v4243
        %v4249 = vmul.f32 %v2808, %v4248
        %v4250 = vrcp.pop %v3370
        %v4251 = vmul.f32 %v3370, %v4250
        %v4252 = vsub.f32 1.0, %v4251
        %v4253 = vmul.f32 %v4250, %v4252
        %v4254 = vadd.f32 %v4250, %v4253
        %vm4255 = vweird.f32 %v3370
        %vm4256 = vweird.f32 %v4250
        %vm4257 = vmor %vm4255, %vm4256
        %v4258 = vsel %vm4257, %v4250, %v4254
        %v4259 = vand.u32 2147483647, %v3370
        %vm4260 = vcmp.eq.f32.partialorder %v4259, 8.507059e+37
        %v4261 = vand.u32 %v3370, 2147483648
        %v4262 = vor.u32 1.1754944e-38, %v4261
        %v4263 = vsel %vm4260, %v4262, %v4258
        %v4264 = vmul.f32 %v2810, %v4263
        %v4265 = vmul.f32 %v2812, %v4248
        %v4266 = vmul.f32 %v2814, %v4263
        %v4267 = vmul.f32 %v2816, %v4248
        %v4268 = vmul.f32 %v2818, %v4263
        %v4269 = vmul.f32 %v2820, %v4248
        %v4270 = vmul.f32 %v2822, %v4263
        %v4271 = vrcp.pop %v3379
        %v4272 = vmul.f32 %v3379, %v4271
        %v4273 = vsub.f32 1.0, %v4272
        %v4274 = vmul.f32 %v4271, %v4273
        %v4275 = vadd.f32 %v4271, %v4274
        %vm4276 = vweird.f32 %v3379
        %vm4277 = vweird.f32 %v4271
        %vm4278 = vmor %vm4276, %vm4277
        %v4279 = vsel %vm4278, %v4271, %v4275
        %v4280 = vand.u32 2147483647, %v3379
        %vm4281 = vcmp.eq.f32.partialorder %v4280, 8.507059e+37
        %v4282 = vand.u32 %v3379, 2147483648
        %v4283 = vor.u32 1.1754944e-38, %v4282
        %v4284 = vsel %vm4281, %v4283, %v4279
        %v4285 = vmul.f32 %v2824, %v4284
        %v4286 = vrcp.pop %v3388
        %v4287 = vmul.f32 %v3388, %v4286
        %v4288 = vsub.f32 1.0, %v4287
        %v4289 = vmul.f32 %v4286, %v4288
        %v4290 = vadd.f32 %v4286, %v4289
        %vm4291 = vweird.f32 %v3388
        %vm4292 = vweird.f32 %v4286
        %vm4293 = vmor %vm4291, %vm4292
        %v4294 = vsel %vm4293, %v4286, %v4290
        %v4295 = vand.u32 2147483647, %v3388
        %vm4296 = vcmp.eq.f32.partialorder %v4295, 8.507059e+37
        %v4297 = vand.u32 %v3388, 2147483648
        %v4298 = vor.u32 1.1754944e-38, %v4297
        %v4299 = vsel %vm4296, %v4298, %v4294
        %v4300 = vmul.f32 %v2826, %v4299
        %v4301 = vmul.f32 %v2828, %v4284
        %v4302 = vmul.f32 %v2830, %v4299
        %v4303 = vmul.f32 %v2832, %v4284
        %v4304 = vmul.f32 %v2834, %v4299
        %v4305 = vmul.f32 %v2836, %v4284
        %v4306 = vmul.f32 %v2838, %v4299
        %v4307 = vrcp.pop %v3397
        %v4308 = vmul.f32 %v3397, %v4307
        %v4309 = vsub.f32 1.0, %v4308
        %v4310 = vmul.f32 %v4307, %v4309
        %v4311 = vadd.f32 %v4307, %v4310
        %vm4312 = vweird.f32 %v3397
        %vm4313 = vweird.f32 %v4307
        %vm4314 = vmor %vm4312, %vm4313
        %v4315 = vsel %vm4314, %v4307, %v4311
        %v4316 = vand.u32 2147483647, %v3397
        %vm4317 = vcmp.eq.f32.partialorder %v4316, 8.507059e+37
        %v4318 = vand.u32 %v3397, 2147483648
        %v4319 = vor.u32 1.1754944e-38, %v4318
        %v4320 = vsel %vm4317, %v4319, %v4315
        %v4321 = vmul.f32 %v2840, %v4320
        %v4322 = vrcp.pop %v3406
        %v4323 = vmul.f32 %v3406, %v4322
        %v4324 = vsub.f32 1.0, %v4323
        %v4325 = vmul.f32 %v4322, %v4324
        %v4326 = vadd.f32 %v4322, %v4325
        %vm4327 = vweird.f32 %v3406
        %vm4328 = vweird.f32 %v4322
        %vm4329 = vmor %vm4327, %vm4328
        %v4330 = vsel %vm4329, %v4322, %v4326
        %v4331 = vand.u32 2147483647, %v3406
        %vm4332 = vcmp.eq.f32.partialorder %v4331, 8.507059e+37
        %v4333 = vand.u32 %v3406, 2147483648
        %v4334 = vor.u32 1.1754944e-38, %v4333
        %v4335 = vsel %vm4332, %v4334, %v4330
        %v4336 = vmul.f32 %v2842, %v4335
        %v4337 = vmul.f32 %v2844, %v4320
        %v4338 = vmul.f32 %v2846, %v4335
        %v4339 = vmul.f32 %v2848, %v4320
        %v4340 = vmul.f32 %v2850, %v4335
        %v4341 = vmul.f32 %v2852, %v4320
        %v4342 = vmul.f32 %v2854, %v4335
        %v4343 = vrcp.pop %v3415
        %v4344 = vmul.f32 %v3415, %v4343
        %v4345 = vsub.f32 1.0, %v4344
        %v4346 = vmul.f32 %v4343, %v4345
        %v4347 = vadd.f32 %v4343, %v4346
        %vm4348 = vweird.f32 %v3415
        %vm4349 = vweird.f32 %v4343
        %vm4350 = vmor %vm4348, %vm4349
        %v4351 = vsel %vm4350, %v4343, %v4347
        %v4352 = vand.u32 2147483647, %v3415
        %vm4353 = vcmp.eq.f32.partialorder %v4352, 8.507059e+37
        %v4354 = vand.u32 %v3415, 2147483648
        %v4355 = vor.u32 1.1754944e-38, %v4354
        %v4356 = vsel %vm4353, %v4355, %v4351
        %v4357 = vmul.f32 %v2856, %v4356
        %v4358 = vrcp.pop %v3424
        %v4359 = vmul.f32 %v3424, %v4358
        %v4360 = vsub.f32 1.0, %v4359
        %v4361 = vmul.f32 %v4358, %v4360
        %v4362 = vadd.f32 %v4358, %v4361
        %vm4363 = vweird.f32 %v3424
        %vm4364 = vweird.f32 %v4358
        %vm4365 = vmor %vm4363, %vm4364
        %v4366 = vsel %vm4365, %v4358, %v4362
        %v4367 = vand.u32 2147483647, %v3424
        %vm4368 = vcmp.eq.f32.partialorder %v4367, 8.507059e+37
        %v4369 = vand.u32 %v3424, 2147483648
        %v4370 = vor.u32 1.1754944e-38, %v4369
        %v4371 = vsel %vm4368, %v4370, %v4366
        %v4372 = vmul.f32 %v2858, %v4371
        %v4373 = vmul.f32 %v2860, %v4356
        %v4374 = vmul.f32 %v2862, %v4371
        %v4375 = vmul.f32 %v2864, %v4356
        %v4376 = vmul.f32 %v2866, %v4371
        %v4377 = vmul.f32 %v2868, %v4356
        %v4378 = vmul.f32 %v2870, %v4371
        %v4379 = vrcp.pop %v3433
        %v4380 = vmul.f32 %v3433, %v4379
        %v4381 = vsub.f32 1.0, %v4380
        %v4382 = vmul.f32 %v4379, %v4381
        %v4383 = vadd.f32 %v4379, %v4382
        %vm4384 = vweird.f32 %v3433
        %vm4385 = vweird.f32 %v4379
        %vm4386 = vmor %vm4384, %vm4385
        %v4387 = vsel %vm4386, %v4379, %v4383
        %v4388 = vand.u32 2147483647, %v3433
        %vm4389 = vcmp.eq.f32.partialorder %v4388, 8.507059e+37
        %v4390 = vand.u32 %v3433, 2147483648
        %v4391 = vor.u32 1.1754944e-38, %v4390
        %v4392 = vsel %vm4389, %v4391, %v4387
        %v4393 = vmul.f32 %v2872, %v4392
        %v4394 = vrcp.pop %v3442
        %v4395 = vmul.f32 %v3442, %v4394
        %v4396 = vsub.f32 1.0, %v4395
        %v4397 = vmul.f32 %v4394, %v4396
        %v4398 = vadd.f32 %v4394, %v4397
        %vm4399 = vweird.f32 %v3442
        %vm4400 = vweird.f32 %v4394
        %vm4401 = vmor %vm4399, %vm4400
        %v4402 = vsel %vm4401, %v4394, %v4398
        %v4403 = vand.u32 2147483647, %v3442
        %vm4404 = vcmp.eq.f32.partialorder %v4403, 8.507059e+37
        %v4405 = vand.u32 %v3442, 2147483648
        %v4406 = vor.u32 1.1754944e-38, %v4405
        %v4407 = vsel %vm4404, %v4406, %v4402
        %v4408 = vmul.f32 %v2874, %v4407
        %v4409 = vmul.f32 %v2876, %v4392
        %v4410 = vmul.f32 %v2878, %v4407
        %v4411 = vmul.f32 %v2880, %v4392
        %v4412 = vmul.f32 %v2882, %v4407
        %v4413 = vmul.f32 %v2884, %v4392
        %v4414 = vmul.f32 %v2886, %v4407
        %v4415 = vrcp.pop %v3451
        %v4416 = vmul.f32 %v3451, %v4415
        %v4417 = vsub.f32 1.0, %v4416
        %v4418 = vmul.f32 %v4415, %v4417
        %v4419 = vadd.f32 %v4415, %v4418
        %vm4420 = vweird.f32 %v3451
        %vm4421 = vweird.f32 %v4415
        %vm4422 = vmor %vm4420, %vm4421
        %v4423 = vsel %vm4422, %v4415, %v4419
        %v4424 = vand.u32 2147483647, %v3451
        %vm4425 = vcmp.eq.f32.partialorder %v4424, 8.507059e+37
        %v4426 = vand.u32 %v3451, 2147483648
        %v4427 = vor.u32 1.1754944e-38, %v4426
        %v4428 = vsel %vm4425, %v4427, %v4423
        %v4429 = vmul.f32 %v2888, %v4428
        %v4430 = vrcp.pop %v3460
        %v4431 = vmul.f32 %v3460, %v4430
        %v4432 = vsub.f32 1.0, %v4431
        %v4433 = vmul.f32 %v4430, %v4432
        %v4434 = vadd.f32 %v4430, %v4433
        %vm4435 = vweird.f32 %v3460
        %vm4436 = vweird.f32 %v4430
        %vm4437 = vmor %vm4435, %vm4436
        %v4438 = vsel %vm4437, %v4430, %v4434
        %v4439 = vand.u32 2147483647, %v3460
        %vm4440 = vcmp.eq.f32.partialorder %v4439, 8.507059e+37
        %v4441 = vand.u32 %v3460, 2147483648
        %v4442 = vor.u32 1.1754944e-38, %v4441
        %v4443 = vsel %vm4440, %v4442, %v4438
        %v4444 = vmul.f32 %v2890, %v4443
        %v4445 = vmul.f32 %v2892, %v4428
        %v4446 = vmul.f32 %v2894, %v4443
        %v4447 = vmul.f32 %v2896, %v4428
        %v4448 = vmul.f32 %v2898, %v4443
        %v4449 = vmul.f32 %v2900, %v4428
        %v4450 = vmul.f32 %v2902, %v4443
        %v4451 = vrcp.pop %v3469
        %v4452 = vmul.f32 %v3469, %v4451
        %v4453 = vsub.f32 1.0, %v4452
        %v4454 = vmul.f32 %v4451, %v4453
        %v4455 = vadd.f32 %v4451, %v4454
        %vm4456 = vweird.f32 %v3469
        %vm4457 = vweird.f32 %v4451
        %vm4458 = vmor %vm4456, %vm4457
        %v4459 = vsel %vm4458, %v4451, %v4455
        %v4460 = vand.u32 2147483647, %v3469
        %vm4461 = vcmp.eq.f32.partialorder %v4460, 8.507059e+37
        %v4462 = vand.u32 %v3469, 2147483648
        %v4463 = vor.u32 1.1754944e-38, %v4462
        %v4464 = vsel %vm4461, %v4463, %v4459
        %v4465 = vmul.f32 %v2904, %v4464
        %v4466 = vrcp.pop %v3478
        %v4467 = vmul.f32 %v3478, %v4466
        %v4468 = vsub.f32 1.0, %v4467
        %v4469 = vmul.f32 %v4466, %v4468
        %v4470 = vadd.f32 %v4466, %v4469
        %vm4471 = vweird.f32 %v3478
        %vm4472 = vweird.f32 %v4466
        %vm4473 = vmor %vm4471, %vm4472
        %v4474 = vsel %vm4473, %v4466, %v4470
        %v4475 = vand.u32 2147483647, %v3478
        %vm4476 = vcmp.eq.f32.partialorder %v4475, 8.507059e+37
        %v4477 = vand.u32 %v3478, 2147483648
        %v4478 = vor.u32 1.1754944e-38, %v4477
        %v4479 = vsel %vm4476, %v4478, %v4474
        %v4480 = vmul.f32 %v2906, %v4479
        %v4481 = vmul.f32 %v2908, %v4464
        %v4482 = vmul.f32 %v2910, %v4479
        %v4483 = vmul.f32 %v2912, %v4464
        %v4484 = vmul.f32 %v2914, %v4479
        %v4485 = vmul.f32 %v2916, %v4464
        %v4486 = vmul.f32 %v2918, %v4479
        %v4487 = vrcp.pop %v3487
        %v4488 = vmul.f32 %v3487, %v4487
        %v4489 = vsub.f32 1.0, %v4488
        %v4490 = vmul.f32 %v4487, %v4489
        %v4491 = vadd.f32 %v4487, %v4490
        %vm4492 = vweird.f32 %v3487
        %vm4493 = vweird.f32 %v4487
        %vm4494 = vmor %vm4492, %vm4493
        %v4495 = vsel %vm4494, %v4487, %v4491
        %v4496 = vand.u32 2147483647, %v3487
        %vm4497 = vcmp.eq.f32.partialorder %v4496, 8.507059e+37
        %v4498 = vand.u32 %v3487, 2147483648
        %v4499 = vor.u32 1.1754944e-38, %v4498
        %v4500 = vsel %vm4497, %v4499, %v4495
        %v4501 = vmul.f32 %v2920, %v4500
        %v4502 = vrcp.pop %v3496
        %v4503 = vmul.f32 %v3496, %v4502
        %v4504 = vsub.f32 1.0, %v4503
        %v4505 = vmul.f32 %v4502, %v4504
        %v4506 = vadd.f32 %v4502, %v4505
        %vm4507 = vweird.f32 %v3496
        %vm4508 = vweird.f32 %v4502
        %vm4509 = vmor %vm4507, %vm4508
        %v4510 = vsel %vm4509, %v4502, %v4506
        %v4511 = vand.u32 2147483647, %v3496
        %vm4512 = vcmp.eq.f32.partialorder %v4511, 8.507059e+37
        %v4513 = vand.u32 %v3496, 2147483648
        %v4514 = vor.u32 1.1754944e-38, %v4513
        %v4515 = vsel %vm4512, %v4514, %v4510
        %v4516 = vmul.f32 %v2922, %v4515
        %v4517 = vmul.f32 %v2924, %v4500
        %v4518 = vmul.f32 %v2926, %v4515
        %v4519 = vmul.f32 %v2928, %v4500
        %v4520 = vmul.f32 %v2930, %v4515
        %v4521 = vmul.f32 %v2932, %v4500
        %v4522 = vmul.f32 %v2934, %v4515
        %v4523 = vrcp.pop %v3505
        %v4524 = vmul.f32 %v3505, %v4523
        %v4525 = vsub.f32 1.0, %v4524
        %v4526 = vmul.f32 %v4523, %v4525
        %v4527 = vadd.f32 %v4523, %v4526
        %vm4528 = vweird.f32 %v3505
        %vm4529 = vweird.f32 %v4523
        %vm4530 = vmor %vm4528, %vm4529
        %v4531 = vsel %vm4530, %v4523, %v4527
        %v4532 = vand.u32 2147483647, %v3505
        %vm4533 = vcmp.eq.f32.partialorder %v4532, 8.507059e+37
        %v4534 = vand.u32 %v3505, 2147483648
        %v4535 = vor.u32 1.1754944e-38, %v4534
        %v4536 = vsel %vm4533, %v4535, %v4531
        %v4537 = vmul.f32 %v2936, %v4536
        %v4538 = vrcp.pop %v3514
        %v4539 = vmul.f32 %v3514, %v4538
        %v4540 = vsub.f32 1.0, %v4539
        %v4541 = vmul.f32 %v4538, %v4540
        %v4542 = vadd.f32 %v4538, %v4541
        %vm4543 = vweird.f32 %v3514
        %vm4544 = vweird.f32 %v4538
        %vm4545 = vmor %vm4543, %vm4544
        %v4546 = vsel %vm4545, %v4538, %v4542
        %v4547 = vand.u32 2147483647, %v3514
        %vm4548 = vcmp.eq.f32.partialorder %v4547, 8.507059e+37
        %v4549 = vand.u32 %v3514, 2147483648
        %v4550 = vor.u32 1.1754944e-38, %v4549
        %v4551 = vsel %vm4548, %v4550, %v4546
        %v4552 = vmul.f32 %v2938, %v4551
        %v4553 = vmul.f32 %v2940, %v4536
        %v4554 = vmul.f32 %v2942, %v4551
        %v4555 = vmul.f32 %v2944, %v4536
        %v4556 = vmul.f32 %v2946, %v4551
        %v4557 = vmul.f32 %v2948, %v4536
        %v4558 = vmul.f32 %v2950, %v4551
        %v4559 = vrcp.pop %v3523
        %v4560 = vmul.f32 %v3523, %v4559
        %v4561 = vsub.f32 1.0, %v4560
        %v4562 = vmul.f32 %v4559, %v4561
        %v4563 = vadd.f32 %v4559, %v4562
        %vm4564 = vweird.f32 %v3523
        %vm4565 = vweird.f32 %v4559
        %vm4566 = vmor %vm4564, %vm4565
        %v4567 = vsel %vm4566, %v4559, %v4563
        %v4568 = vand.u32 2147483647, %v3523
        %vm4569 = vcmp.eq.f32.partialorder %v4568, 8.507059e+37
        %v4570 = vand.u32 %v3523, 2147483648
        %v4571 = vor.u32 1.1754944e-38, %v4570
        %v4572 = vsel %vm4569, %v4571, %v4567
        %v4573 = vmul.f32 %v2952, %v4572
        %v4574 = vrcp.pop %v3532
        %v4575 = vmul.f32 %v3532, %v4574
        %v4576 = vsub.f32 1.0, %v4575
        %v4577 = vmul.f32 %v4574, %v4576
        %v4578 = vadd.f32 %v4574, %v4577
        %vm4579 = vweird.f32 %v3532
        %vm4580 = vweird.f32 %v4574
        %vm4581 = vmor %vm4579, %vm4580
        %v4582 = vsel %vm4581, %v4574, %v4578
        %v4583 = vand.u32 2147483647, %v3532
        %vm4584 = vcmp.eq.f32.partialorder %v4583, 8.507059e+37
        %v4585 = vand.u32 %v3532, 2147483648
        %v4586 = vor.u32 1.1754944e-38, %v4585
        %v4587 = vsel %vm4584, %v4586, %v4582
        %v4588 = vmul.f32 %v2954, %v4587
        %v4589 = vmul.f32 %v2956, %v4572
        %v4590 = vmul.f32 %v2958, %v4587
        %v4591 = vmul.f32 %v2960, %v4572
        %v4592 = vmul.f32 %v2962, %v4587
        %v4593 = vmul.f32 %v2964, %v4572
        %v4594 = vmul.f32 %v2966, %v4587
        %v4595 = vrcp.pop %v3541
        %v4596 = vmul.f32 %v3541, %v4595
        %v4597 = vsub.f32 1.0, %v4596
        %v4598 = vmul.f32 %v4595, %v4597
        %v4599 = vadd.f32 %v4595, %v4598
        %vm4600 = vweird.f32 %v3541
        %vm4601 = vweird.f32 %v4595
        %vm4602 = vmor %vm4600, %vm4601
        %v4603 = vsel %vm4602, %v4595, %v4599
        %v4604 = vand.u32 2147483647, %v3541
        %vm4605 = vcmp.eq.f32.partialorder %v4604, 8.507059e+37
        %v4606 = vand.u32 %v3541, 2147483648
        %v4607 = vor.u32 1.1754944e-38, %v4606
        %v4608 = vsel %vm4605, %v4607, %v4603
        %v4609 = vmul.f32 %v2968, %v4608
        %v4610 = vrcp.pop %v3550
        %v4611 = vmul.f32 %v3550, %v4610
        %v4612 = vsub.f32 1.0, %v4611
        %v4613 = vmul.f32 %v4610, %v4612
        %v4614 = vadd.f32 %v4610, %v4613
        %vm4615 = vweird.f32 %v3550
        %vm4616 = vweird.f32 %v4610
        %vm4617 = vmor %vm4615, %vm4616
        %v4618 = vsel %vm4617, %v4610, %v4614
        %v4619 = vand.u32 2147483647, %v3550
        %vm4620 = vcmp.eq.f32.partialorder %v4619, 8.507059e+37
        %v4621 = vand.u32 %v3550, 2147483648
        %v4622 = vor.u32 1.1754944e-38, %v4621
        %v4623 = vsel %vm4620, %v4622, %v4618
        %v4624 = vmul.f32 %v2970, %v4623
        %v4625 = vmul.f32 %v2972, %v4608
        %v4626 = vmul.f32 %v2974, %v4623
        %v4627 = vmul.f32 %v2976, %v4608
        %v4628 = vmul.f32 %v2978, %v4623
        %v4629 = vmul.f32 %v2980, %v4608
        %v4630 = vmul.f32 %v2982, %v4623
        %v4631 = vrcp.pop %v3559
        %v4632 = vmul.f32 %v3559, %v4631
        %v4633 = vsub.f32 1.0, %v4632
        %v4634 = vmul.f32 %v4631, %v4633
        %v4635 = vadd.f32 %v4631, %v4634
        %vm4636 = vweird.f32 %v3559
        %vm4637 = vweird.f32 %v4631
        %vm4638 = vmor %vm4636, %vm4637
        %v4639 = vsel %vm4638, %v4631, %v4635
        %v4640 = vand.u32 2147483647, %v3559
        %vm4641 = vcmp.eq.f32.partialorder %v4640, 8.507059e+37
        %v4642 = vand.u32 %v3559, 2147483648
        %v4643 = vor.u32 1.1754944e-38, %v4642
        %v4644 = vsel %vm4641, %v4643, %v4639
        %v4645 = vmul.f32 %v2984, %v4644
        %v4646 = vrcp.pop %v3568
        %v4647 = vmul.f32 %v3568, %v4646
        %v4648 = vsub.f32 1.0, %v4647
        %v4649 = vmul.f32 %v4646, %v4648
        %v4650 = vadd.f32 %v4646, %v4649
        %vm4651 = vweird.f32 %v3568
        %vm4652 = vweird.f32 %v4646
        %vm4653 = vmor %vm4651, %vm4652
        %v4654 = vsel %vm4653, %v4646, %v4650
        %v4655 = vand.u32 2147483647, %v3568
        %vm4656 = vcmp.eq.f32.partialorder %v4655, 8.507059e+37
        %v4657 = vand.u32 %v3568, 2147483648
        %v4658 = vor.u32 1.1754944e-38, %v4657
        %v4659 = vsel %vm4656, %v4658, %v4654
        %v4660 = vmul.f32 %v2986, %v4659
        %v4661 = vmul.f32 %v2988, %v4644
        %v4662 = vmul.f32 %v2990, %v4659
        %v4663 = vmul.f32 %v2992, %v4644
        %v4664 = vmul.f32 %v2994, %v4659
        %v4665 = vmul.f32 %v2996, %v4644
        %v4666 = vmul.f32 %v2998, %v4659
        %v4667 = vrcp.pop %v3577
        %v4668 = vmul.f32 %v3577, %v4667
        %v4669 = vsub.f32 1.0, %v4668
        %v4670 = vmul.f32 %v4667, %v4669
        %v4671 = vadd.f32 %v4667, %v4670
        %vm4672 = vweird.f32 %v3577
        %vm4673 = vweird.f32 %v4667
        %vm4674 = vmor %vm4672, %vm4673
        %v4675 = vsel %vm4674, %v4667, %v4671
        %v4676 = vand.u32 2147483647, %v3577
        %vm4677 = vcmp.eq.f32.partialorder %v4676, 8.507059e+37
        %v4678 = vand.u32 %v3577, 2147483648
        %v4679 = vor.u32 1.1754944e-38, %v4678
        %v4680 = vsel %vm4677, %v4679, %v4675
        %v4681 = vmul.f32 %v3000, %v4680
        %v4682 = vrcp.pop %v3586
        %v4683 = vmul.f32 %v3586, %v4682
        %v4684 = vsub.f32 1.0, %v4683
        %v4685 = vmul.f32 %v4682, %v4684
        %v4686 = vadd.f32 %v4682, %v4685
        %vm4687 = vweird.f32 %v3586
        %vm4688 = vweird.f32 %v4682
        %vm4689 = vmor %vm4687, %vm4688
        %v4690 = vsel %vm4689, %v4682, %v4686
        %v4691 = vand.u32 2147483647, %v3586
        %vm4692 = vcmp.eq.f32.partialorder %v4691, 8.507059e+37
        %v4693 = vand.u32 %v3586, 2147483648
        %v4694 = vor.u32 1.1754944e-38, %v4693
        %v4695 = vsel %vm4692, %v4694, %v4690
        %v4696 = vmul.f32 %v3002, %v4695
        %v4697 = vmul.f32 %v3004, %v4680
        %v4698 = vmul.f32 %v3006, %v4695
        %v4699 = vmul.f32 %v3008, %v4680
        %v4700 = vmul.f32 %v3010, %v4695
        %v4701 = vmul.f32 %v3012, %v4680
        %v4702 = vmul.f32 %v3014, %v4695
        %v4703 = vrcp.pop %v3595
        %v4704 = vmul.f32 %v3595, %v4703
        %v4705 = vsub.f32 1.0, %v4704
        %v4706 = vmul.f32 %v4703, %v4705
        %v4707 = vadd.f32 %v4703, %v4706
        %vm4708 = vweird.f32 %v3595
        %vm4709 = vweird.f32 %v4703
        %vm4710 = vmor %vm4708, %vm4709
        %v4711 = vsel %vm4710, %v4703, %v4707
        %v4712 = vand.u32 2147483647, %v3595
        %vm4713 = vcmp.eq.f32.partialorder %v4712, 8.507059e+37
        %v4714 = vand.u32 %v3595, 2147483648
        %v4715 = vor.u32 1.1754944e-38, %v4714
        %v4716 = vsel %vm4713, %v4715, %v4711
        %v4717 = vmul.f32 %v3016, %v4716
        %v4718 = vrcp.pop %v3604
        %v4719 = vmul.f32 %v3604, %v4718
        %v4720 = vsub.f32 1.0, %v4719
        %v4721 = vmul.f32 %v4718, %v4720
        %v4722 = vadd.f32 %v4718, %v4721
        %vm4723 = vweird.f32 %v3604
        %vm4724 = vweird.f32 %v4718
        %vm4725 = vmor %vm4723, %vm4724
        %v4726 = vsel %vm4725, %v4718, %v4722
        %v4727 = vand.u32 2147483647, %v3604
        %vm4728 = vcmp.eq.f32.partialorder %v4727, 8.507059e+37
        %v4729 = vand.u32 %v3604, 2147483648
        %v4730 = vor.u32 1.1754944e-38, %v4729
        %v4731 = vsel %vm4728, %v4730, %v4726
        %v4732 = vmul.f32 %v3018, %v4731
        %v4733 = vmul.f32 %v3020, %v4716
        %v4734 = vmul.f32 %v3022, %v4731
        %v4735 = vmul.f32 %v3024, %v4716
        %v4736 = vmul.f32 %v3026, %v4731
        %v4737 = vmul.f32 %v3028, %v4716
        %v4738 = vmul.f32 %v3030, %v4731
        %v4739 = vrcp.pop %v3613
        %v4740 = vmul.f32 %v3613, %v4739
        %v4741 = vsub.f32 1.0, %v4740
        %v4742 = vmul.f32 %v4739, %v4741
        %v4743 = vadd.f32 %v4739, %v4742
        %vm4744 = vweird.f32 %v3613
        %vm4745 = vweird.f32 %v4739
        %vm4746 = vmor %vm4744, %vm4745
        %v4747 = vsel %vm4746, %v4739, %v4743
        %v4748 = vand.u32 2147483647, %v3613
        %vm4749 = vcmp.eq.f32.partialorder %v4748, 8.507059e+37
        %v4750 = vand.u32 %v3613, 2147483648
        %v4751 = vor.u32 1.1754944e-38, %v4750
        %v4752 = vsel %vm4749, %v4751, %v4747
        %v4753 = vmul.f32 %v3032, %v4752
        %v4754 = vrcp.pop %v3622
        %v4755 = vmul.f32 %v3622, %v4754
        %v4756 = vsub.f32 1.0, %v4755
        %v4757 = vmul.f32 %v4754, %v4756
        %v4758 = vadd.f32 %v4754, %v4757
        %vm4759 = vweird.f32 %v3622
        %vm4760 = vweird.f32 %v4754
        %vm4761 = vmor %vm4759, %vm4760
        %v4762 = vsel %vm4761, %v4754, %v4758
        %v4763 = vand.u32 2147483647, %v3622
        %vm4764 = vcmp.eq.f32.partialorder %v4763, 8.507059e+37
        %v4765 = vand.u32 %v3622, 2147483648
        %v4766 = vor.u32 1.1754944e-38, %v4765
        %v4767 = vsel %vm4764, %v4766, %v4762
        %v4768 = vmul.f32 %v3034, %v4767
        %v4769 = vmul.f32 %v3036, %v4752
        %v4770 = vmul.f32 %v3038, %v4767
        %v4771 = vmul.f32 %v3040, %v4752
        %v4772 = vmul.f32 %v3042, %v4767
        %v4773 = vmul.f32 %v3044, %v4752
        %v4774 = vmul.f32 %v3046, %v4767
        %v4775 = vmul.f32 %v3637, %v1023
        %v4776 = vmul.f32 %v3652, %v1052
        %v4777 = vmul.f32 %v3653, %v1026
        %v4778 = vmul.f32 %v3654, %v1055
        %v4779 = vmul.f32 %v3655, %v1029
        %v4780 = vmul.f32 %v3656, %v1058
        %v4781 = vmul.f32 %v3657, %v1032
        %v4782 = vmul.f32 %v3658, %v1061
        %v4783 = vmul.f32 %v3673, %v1023
        %v4784 = vmul.f32 %v3688, %v1052
        %v4785 = vmul.f32 %v3689, %v1026
        %v4786 = vmul.f32 %v3690, %v1055
        %v4787 = vmul.f32 %v3691, %v1029
        %v4788 = vmul.f32 %v3692, %v1058
        %v4789 = vmul.f32 %v3693, %v1032
        %v4790 = vmul.f32 %v3694, %v1061
        %v4791 = vmul.f32 %v3709, %v1023
        %v4792 = vmul.f32 %v3724, %v1052
        %v4793 = vmul.f32 %v3725, %v1026
        %v4794 = vmul.f32 %v3726, %v1055
        %v4795 = vmul.f32 %v3727, %v1029
        %v4796 = vmul.f32 %v3728, %v1058
        %v4797 = vmul.f32 %v3729, %v1032
        %v4798 = vmul.f32 %v3730, %v1061
        %v4799 = vmul.f32 %v3745, %v1023
        %v4800 = vmul.f32 %v3760, %v1052
        %v4801 = vmul.f32 %v3761, %v1026
        %v4802 = vmul.f32 %v3762, %v1055
        %v4803 = vmul.f32 %v3763, %v1029
        %v4804 = vmul.f32 %v3764, %v1058
        %v4805 = vmul.f32 %v3765, %v1032
        %v4806 = vmul.f32 %v3766, %v1061
        %v4807 = vmul.f32 %v3781, %v1023
        %v4808 = vmul.f32 %v3796, %v1052
        %v4809 = vmul.f32 %v3797, %v1026
        %v4810 = vmul.f32 %v3798, %v1055
        %v4811 = vmul.f32 %v3799, %v1029
        %v4812 = vmul.f32 %v3800, %v1058
        %v4813 = vmul.f32 %v3801, %v1032
        %v4814 = vmul.f32 %v3802, %v1061
        %v4815 = vmul.f32 %v3817, %v1023
        %v4816 = vmul.f32 %v3832, %v1052
        %v4817 = vmul.f32 %v3833, %v1026
        %v4818 = vmul.f32 %v3834, %v1055
        %v4819 = vmul.f32 %v3835, %v1029
        %v4820 = vmul.f32 %v3836, %v1058
        %v4821 = vmul.f32 %v3837, %v1032
        %v4822 = vmul.f32 %v3838, %v1061
        %v4823 = vmul.f32 %v3853, %v1023
        %v4824 = vmul.f32 %v3868, %v1052
        %v4825 = vmul.f32 %v3869, %v1026
        %v4826 = vmul.f32 %v3870, %v1055
        %v4827 = vmul.f32 %v3871, %v1029
        %v4828 = vmul.f32 %v3872, %v1058
        %v4829 = vmul.f32 %v3873, %v1032
        %v4830 = vmul.f32 %v3874, %v1061
        %v4831 = vmul.f32 %v3889, %v1023
        %v4832 = vmul.f32 %v3904, %v1052
        %v4833 = vmul.f32 %v3905, %v1026
        %v4834 = vmul.f32 %v3906, %v1055
        %v4835 = vmul.f32 %v3907, %v1029
        %v4836 = vmul.f32 %v3908, %v1058
        %v4837 = vmul.f32 %v3909, %v1032
        %v4838 = vmul.f32 %v3910, %v1061
        %v4839 = vmul.f32 %v3925, %v1023
        %v4840 = vmul.f32 %v3940, %v1052
        %v4841 = vmul.f32 %v3941, %v1026
        %v4842 = vmul.f32 %v3942, %v1055
        %v4843 = vmul.f32 %v3943, %v1029
        %v4844 = vmul.f32 %v3944, %v1058
        %v4845 = vmul.f32 %v3945, %v1032
        %v4846 = vmul.f32 %v3946, %v1061
        %v4847 = vmul.f32 %v3961, %v1023
        %v4848 = vmul.f32 %v3976, %v1052
        %v4849 = vmul.f32 %v3977, %v1026
        %v4850 = vmul.f32 %v3978, %v1055
        %v4851 = vmul.f32 %v3979, %v1029
        %v4852 = vmul.f32 %v3980, %v1058
        %v4853 = vmul.f32 %v3981, %v1032
        %v4854 = vmul.f32 %v3982, %v1061
        %v4855 = vmul.f32 %v3997, %v1023
        %v4856 = vmul.f32 %v4012, %v1052
        %v4857 = vmul.f32 %v4013, %v1026
        %v4858 = vmul.f32 %v4014, %v1055
        %v4859 = vmul.f32 %v4015, %v1029
        %v4860 = vmul.f32 %v4016, %v1058
        %v4861 = vmul.f32 %v4017, %v1032
        %v4862 = vmul.f32 %v4018, %v1061
        %v4863 = vmul.f32 %v4033, %v1023
        %v4864 = vmul.f32 %v4048, %v1052
        %v4865 = vmul.f32 %v4049, %v1026
        %v4866 = vmul.f32 %v4050, %v1055
        %v4867 = vmul.f32 %v4051, %v1029
        %v4868 = vmul.f32 %v4052, %v1058
        %v4869 = vmul.f32 %v4053, %v1032
        %v4870 = vmul.f32 %v4054, %v1061
        %v4871 = vmul.f32 %v4069, %v1023
        %v4872 = vmul.f32 %v4084, %v1052
        %v4873 = vmul.f32 %v4085, %v1026
        %v4874 = vmul.f32 %v4086, %v1055
        %v4875 = vmul.f32 %v4087, %v1029
        %v4876 = vmul.f32 %v4088, %v1058
        %v4877 = vmul.f32 %v4089, %v1032
        %v4878 = vmul.f32 %v4090, %v1061
        %v4879 = vmul.f32 %v4105, %v1023
        %v4880 = vmul.f32 %v4120, %v1052
        %v4881 = vmul.f32 %v4121, %v1026
        %v4882 = vmul.f32 %v4122, %v1055
        %v4883 = vmul.f32 %v4123, %v1029
        %v4884 = vmul.f32 %v4124, %v1058
        %v4885 = vmul.f32 %v4125, %v1032
        %v4886 = vmul.f32 %v4126, %v1061
        %v4887 = vmul.f32 %v4141, %v1023
        %v4888 = vmul.f32 %v4156, %v1052
        %v4889 = vmul.f32 %v4157, %v1026
        %v4890 = vmul.f32 %v4158, %v1055
        %v4891 = vmul.f32 %v4159, %v1029
        %v4892 = vmul.f32 %v4160, %v1058
        %v4893 = vmul.f32 %v4161, %v1032
        %v4894 = vmul.f32 %v4162, %v1061
        %v4895 = vmul.f32 %v4177, %v1023
        %v4896 = vmul.f32 %v4192, %v1052
        %v4897 = vmul.f32 %v4193, %v1026
        %v4898 = vmul.f32 %v4194, %v1055
        %v4899 = vmul.f32 %v4195, %v1029
        %v4900 = vmul.f32 %v4196, %v1058
        %v4901 = vmul.f32 %v4197, %v1032
        %v4902 = vmul.f32 %v4198, %v1061
        %v4903 = vmul.f32 %v4213, %v1023
        %v4904 = vmul.f32 %v4228, %v1052
        %v4905 = vmul.f32 %v4229, %v1026
        %v4906 = vmul.f32 %v4230, %v1055
        %v4907 = vmul.f32 %v4231, %v1029
        %v4908 = vmul.f32 %v4232, %v1058
        %v4909 = vmul.f32 %v4233, %v1032
        %v4910 = vmul.f32 %v4234, %v1061
        %v4911 = vmul.f32 %v4249, %v1023
        %v4912 = vmul.f32 %v4264, %v1052
        %v4913 = vmul.f32 %v4265, %v1026
        %v4914 = vmul.f32 %v4266, %v1055
        %v4915 = vmul.f32 %v4267, %v1029
        %v4916 = vmul.f32 %v4268, %v1058
        %v4917 = vmul.f32 %v4269, %v1032
        %v4918 = vmul.f32 %v4270, %v1061
        %v4919 = vmul.f32 %v4285, %v1023
        %v4920 = vmul.f32 %v4300, %v1052
        %v4921 = vmul.f32 %v4301, %v1026
        %v4922 = vmul.f32 %v4302, %v1055
        %v4923 = vmul.f32 %v4303, %v1029
        %v4924 = vmul.f32 %v4304, %v1058
        %v4925 = vmul.f32 %v4305, %v1032
        %v4926 = vmul.f32 %v4306, %v1061
        %v4927 = vmul.f32 %v4321, %v1023
        %v4928 = vmul.f32 %v4336, %v1052
        %v4929 = vmul.f32 %v4337, %v1026
        %v4930 = vmul.f32 %v4338, %v1055
        %v4931 = vmul.f32 %v4339, %v1029
        %v4932 = vmul.f32 %v4340, %v1058
        %v4933 = vmul.f32 %v4341, %v1032
        %v4934 = vmul.f32 %v4342, %v1061
        %v4935 = vmul.f32 %v4357, %v1023
        %v4936 = vmul.f32 %v4372, %v1052
        %v4937 = vmul.f32 %v4373, %v1026
        %v4938 = vmul.f32 %v4374, %v1055
        %v4939 = vmul.f32 %v4375, %v1029
        %v4940 = vmul.f32 %v4376, %v1058
        %v4941 = vmul.f32 %v4377, %v1032
        %v4942 = vmul.f32 %v4378, %v1061
        %v4943 = vmul.f32 %v4393, %v1023
        %v4944 = vmul.f32 %v4408, %v1052
        %v4945 = vmul.f32 %v4409, %v1026
        %v4946 = vmul.f32 %v4410, %v1055
        %v4947 = vmul.f32 %v4411, %v1029
        %v4948 = vmul.f32 %v4412, %v1058
        %v4949 = vmul.f32 %v4413, %v1032
        %v4950 = vmul.f32 %v4414, %v1061
        %v4951 = vmul.f32 %v4429, %v1023
        %v4952 = vmul.f32 %v4444, %v1052
        %v4953 = vmul.f32 %v4445, %v1026
        %v4954 = vmul.f32 %v4446, %v1055
        %v4955 = vmul.f32 %v4447, %v1029
        %v4956 = vmul.f32 %v4448, %v1058
        %v4957 = vmul.f32 %v4449, %v1032
        %v4958 = vmul.f32 %v4450, %v1061
        %v4959 = vmul.f32 %v4465, %v1023
        %v4960 = vmul.f32 %v4480, %v1052
        %v4961 = vmul.f32 %v4481, %v1026
        %v4962 = vmul.f32 %v4482, %v1055
        %v4963 = vmul.f32 %v4483, %v1029
        %v4964 = vmul.f32 %v4484, %v1058
        %v4965 = vmul.f32 %v4485, %v1032
        %v4966 = vmul.f32 %v4486, %v1061
        %v4967 = vmul.f32 %v4501, %v1023
        %v4968 = vmul.f32 %v4516, %v1052
        %v4969 = vmul.f32 %v4517, %v1026
        %v4970 = vmul.f32 %v4518, %v1055
        %v4971 = vmul.f32 %v4519, %v1029
        %v4972 = vmul.f32 %v4520, %v1058
        %v4973 = vmul.f32 %v4521, %v1032
        %v4974 = vmul.f32 %v4522, %v1061
        %v4975 = vmul.f32 %v4537, %v1023
        %v4976 = vmul.f32 %v4552, %v1052
        %v4977 = vmul.f32 %v4553, %v1026
        %v4978 = vmul.f32 %v4554, %v1055
        %v4979 = vmul.f32 %v4555, %v1029
        %v4980 = vmul.f32 %v4556, %v1058
        %v4981 = vmul.f32 %v4557, %v1032
        %v4982 = vmul.f32 %v4558, %v1061
        %v4983 = vmul.f32 %v4573, %v1023
        %v4984 = vmul.f32 %v4588, %v1052
        %v4985 = vmul.f32 %v4589, %v1026
        %v4986 = vmul.f32 %v4590, %v1055
        %v4987 = vmul.f32 %v4591, %v1029
        %v4988 = vmul.f32 %v4592, %v1058
        %v4989 = vmul.f32 %v4593, %v1032
        %v4990 = vmul.f32 %v4594, %v1061
        %v4991 = vmul.f32 %v4609, %v1023
        %v4992 = vmul.f32 %v4624, %v1052
        %v4993 = vmul.f32 %v4625, %v1026
        %v4994 = vmul.f32 %v4626, %v1055
        %v4995 = vmul.f32 %v4627, %v1029
        %v4996 = vmul.f32 %v4628, %v1058
        %v4997 = vmul.f32 %v4629, %v1032
        %v4998 = vmul.f32 %v4630, %v1061
        %v4999 = vmul.f32 %v4645, %v1023
        %v5000 = vmul.f32 %v4660, %v1052
        %v5001 = vmul.f32 %v4661, %v1026
        %v5002 = vmul.f32 %v4662, %v1055
        %v5003 = vmul.f32 %v4663, %v1029
        %v5004 = vmul.f32 %v4664, %v1058
        %v5005 = vmul.f32 %v4665, %v1032
        %v5006 = vmul.f32 %v4666, %v1061
        %v5007 = vmul.f32 %v4681, %v1023
        %v5008 = vmul.f32 %v4696, %v1052
        %v5009 = vmul.f32 %v4697, %v1026
        %v5010 = vmul.f32 %v4698, %v1055
        %v5011 = vmul.f32 %v4699, %v1029
        %v5012 = vmul.f32 %v4700, %v1058
        %v5013 = vmul.f32 %v4701, %v1032
        %v5014 = vmul.f32 %v4702, %v1061
        %v5015 = vmul.f32 %v4717, %v1023
        %v5016 = vmul.f32 %v4732, %v1052
        %v5017 = vmul.f32 %v4733, %v1026
        %v5018 = vmul.f32 %v4734, %v1055
        %v5019 = vmul.f32 %v4735, %v1029
        %v5020 = vmul.f32 %v4736, %v1058
        %v5021 = vmul.f32 %v4737, %v1032
        %v5022 = vmul.f32 %v4738, %v1061
        %v5023 = vmul.f32 %v4753, %v1023
        %v5024 = vmul.f32 %v4768, %v1052
        %v5025 = vmul.f32 %v4769, %v1026
        %v5026 = vmul.f32 %v4770, %v1055
        %v5027 = vmul.f32 %v4771, %v1029
        %v5028 = vmul.f32 %v4772, %v1058
        %v5029 = vmul.f32 %v4773, %v1032
        %v5030 = vmul.f32 %v4774, %v1061
        %v5031 = vadd.f32 %v4775, %v4777
        %v5032 = vadd.f32 %v5031, %v4779
        %v5033 = vadd.f32 %v5032, %v4781
        %v5034 = vrot.slane %v5033, 4
        %v5035 = vadd.f32 %v5033, %v5034
        %v5036 = vrot.slane %v5035, 2
        %v5037 = vadd.f32 %v5035, %v5036
        %v5038 = vrot.slane %v5037, 1
        %v5039 = vadd.f32 %v5037, %v5038
        %v5040 = vadd.f32 %v4776, %v4778
        %v5041 = vadd.f32 %v5040, %v4780
        %v5042 = vadd.f32 %v5041, %v4782
        %v5043 = vrot.slane %v5042, 4
        %v5044 = vadd.f32 %v5042, %v5043
        %v5045 = vrot.slane %v5044, 2
        %v5046 = vadd.f32 %v5044, %v5045
        %v5047 = vrot.slane %v5046, 1
        %v5048 = vadd.f32 %v5046, %v5047
        %v5049 = vadd.f32 %v4783, %v4785
        %v5050 = vadd.f32 %v5049, %v4787
        %v5051 = vadd.f32 %v5050, %v4789
        %v5052 = vrot.slane %v5051, 4
        %v5053 = vadd.f32 %v5051, %v5052
        %v5054 = vrot.slane %v5053, 2
        %v5055 = vadd.f32 %v5053, %v5054
        %v5056 = vrot.slane %v5055, 1
        %v5057 = vadd.f32 %v5055, %v5056
        %v5058 = vadd.f32 %v4784, %v4786
        %v5059 = vadd.f32 %v5058, %v4788
        %v5060 = vadd.f32 %v5059, %v4790
        %v5061 = vrot.slane %v5060, 4
        %v5062 = vadd.f32 %v5060, %v5061
        %v5063 = vrot.slane %v5062, 2
        %v5064 = vadd.f32 %v5062, %v5063
        %v5065 = vrot.slane %v5064, 1
        %v5066 = vadd.f32 %v5064, %v5065
        %v5067 = vadd.f32 %v4791, %v4793
        %v5068 = vadd.f32 %v5067, %v4795
        %v5069 = vadd.f32 %v5068, %v4797
        %v5070 = vrot.slane %v5069, 4
        %v5071 = vadd.f32 %v5069, %v5070
        %v5072 = vrot.slane %v5071, 2
        %v5073 = vadd.f32 %v5071, %v5072
        %v5074 = vrot.slane %v5073, 1
        %v5075 = vadd.f32 %v5073, %v5074
        %v5076 = vadd.f32 %v4792, %v4794
        %v5077 = vadd.f32 %v5076, %v4796
        %v5078 = vadd.f32 %v5077, %v4798
        %v5079 = vrot.slane %v5078, 4
        %v5080 = vadd.f32 %v5078, %v5079
        %v5081 = vrot.slane %v5080, 2
        %v5082 = vadd.f32 %v5080, %v5081
        %v5083 = vrot.slane %v5082, 1
        %v5084 = vadd.f32 %v5082, %v5083
        %v5085 = vadd.f32 %v4799, %v4801
        %v5086 = vadd.f32 %v5085, %v4803
        %v5087 = vadd.f32 %v5086, %v4805
        %v5088 = vrot.slane %v5087, 4
        %v5089 = vadd.f32 %v5087, %v5088
        %v5090 = vrot.slane %v5089, 2
        %v5091 = vadd.f32 %v5089, %v5090
        %v5092 = vrot.slane %v5091, 1
        %v5093 = vadd.f32 %v5091, %v5092
        %v5094 = vadd.f32 %v4800, %v4802
        %v5095 = vadd.f32 %v5094, %v4804
        %v5096 = vadd.f32 %v5095, %v4806
        %v5097 = vrot.slane %v5096, 4
        %v5098 = vadd.f32 %v5096, %v5097
        %v5099 = vrot.slane %v5098, 2
        %v5100 = vadd.f32 %v5098, %v5099
        %v5101 = vrot.slane %v5100, 1
        %v5102 = vadd.f32 %v5100, %v5101
        %v5103 = vadd.f32 %v4807, %v4809
        %v5104 = vadd.f32 %v5103, %v4811
        %v5105 = vadd.f32 %v5104, %v4813
        %v5106 = vrot.slane %v5105, 4
        %v5107 = vadd.f32 %v5105, %v5106
        %v5108 = vrot.slane %v5107, 2
        %v5109 = vadd.f32 %v5107, %v5108
        %v5110 = vrot.slane %v5109, 1
        %v5111 = vadd.f32 %v5109, %v5110
        %v5112 = vadd.f32 %v4808, %v4810
        %v5113 = vadd.f32 %v5112, %v4812
        %v5114 = vadd.f32 %v5113, %v4814
        %v5115 = vrot.slane %v5114, 4
        %v5116 = vadd.f32 %v5114, %v5115
        %v5117 = vrot.slane %v5116, 2
        %v5118 = vadd.f32 %v5116, %v5117
        %v5119 = vrot.slane %v5118, 1
        %v5120 = vadd.f32 %v5118, %v5119
        %v5121 = vadd.f32 %v4815, %v4817
        %v5122 = vadd.f32 %v5121, %v4819
        %v5123 = vadd.f32 %v5122, %v4821
        %v5124 = vrot.slane %v5123, 4
        %v5125 = vadd.f32 %v5123, %v5124
        %v5126 = vrot.slane %v5125, 2
        %v5127 = vadd.f32 %v5125, %v5126
        %v5128 = vrot.slane %v5127, 1
        %v5129 = vadd.f32 %v5127, %v5128
        %v5130 = vadd.f32 %v4816, %v4818
        %v5131 = vadd.f32 %v5130, %v4820
        %v5132 = vadd.f32 %v5131, %v4822
        %v5133 = vrot.slane %v5132, 4
        %v5134 = vadd.f32 %v5132, %v5133
        %v5135 = vrot.slane %v5134, 2
        %v5136 = vadd.f32 %v5134, %v5135
        %v5137 = vrot.slane %v5136, 1
        %v5138 = vadd.f32 %v5136, %v5137
        %v5139 = vadd.f32 %v4823, %v4825
        %v5140 = vadd.f32 %v5139, %v4827
        %v5141 = vadd.f32 %v5140, %v4829
        %v5142 = vrot.slane %v5141, 4
        %v5143 = vadd.f32 %v5141, %v5142
        %v5144 = vrot.slane %v5143, 2
        %v5145 = vadd.f32 %v5143, %v5144
        %v5146 = vrot.slane %v5145, 1
        %v5147 = vadd.f32 %v5145, %v5146
        %v5148 = vadd.f32 %v4824, %v4826
        %v5149 = vadd.f32 %v5148, %v4828
        %v5150 = vadd.f32 %v5149, %v4830
        %v5151 = vrot.slane %v5150, 4
        %v5152 = vadd.f32 %v5150, %v5151
        %v5153 = vrot.slane %v5152, 2
        %v5154 = vadd.f32 %v5152, %v5153
        %v5155 = vrot.slane %v5154, 1
        %v5156 = vadd.f32 %v5154, %v5155
        %v5157 = vadd.f32 %v4831, %v4833
        %v5158 = vadd.f32 %v5157, %v4835
        %v5159 = vadd.f32 %v5158, %v4837
        %v5160 = vrot.slane %v5159, 4
        %v5161 = vadd.f32 %v5159, %v5160
        %v5162 = vrot.slane %v5161, 2
        %v5163 = vadd.f32 %v5161, %v5162
        %v5164 = vrot.slane %v5163, 1
        %v5165 = vadd.f32 %v5163, %v5164
        %v5166 = vadd.f32 %v4832, %v4834
        %v5167 = vadd.f32 %v5166, %v4836
        %v5168 = vadd.f32 %v5167, %v4838
        %v5169 = vrot.slane %v5168, 4
        %v5170 = vadd.f32 %v5168, %v5169
        %v5171 = vrot.slane %v5170, 2
        %v5172 = vadd.f32 %v5170, %v5171
        %v5173 = vrot.slane %v5172, 1
        %v5174 = vadd.f32 %v5172, %v5173
        %v5175 = vadd.f32 %v4839, %v4841
        %v5176 = vadd.f32 %v5175, %v4843
        %v5177 = vadd.f32 %v5176, %v4845
        %v5178 = vrot.slane %v5177, 4
        %v5179 = vadd.f32 %v5177, %v5178
        %v5180 = vrot.slane %v5179, 2
        %v5181 = vadd.f32 %v5179, %v5180
        %v5182 = vrot.slane %v5181, 1
        %v5183 = vadd.f32 %v5181, %v5182
        %v5184 = vadd.f32 %v4840, %v4842
        %v5185 = vadd.f32 %v5184, %v4844
        %v5186 = vadd.f32 %v5185, %v4846
        %v5187 = vrot.slane %v5186, 4
        %v5188 = vadd.f32 %v5186, %v5187
        %v5189 = vrot.slane %v5188, 2
        %v5190 = vadd.f32 %v5188, %v5189
        %v5191 = vrot.slane %v5190, 1
        %v5192 = vadd.f32 %v5190, %v5191
        %v5193 = vadd.f32 %v4847, %v4849
        %v5194 = vadd.f32 %v5193, %v4851
        %v5195 = vadd.f32 %v5194, %v4853
        %v5196 = vrot.slane %v5195, 4
        %v5197 = vadd.f32 %v5195, %v5196
        %v5198 = vrot.slane %v5197, 2
        %v5199 = vadd.f32 %v5197, %v5198
        %v5200 = vrot.slane %v5199, 1
        %v5201 = vadd.f32 %v5199, %v5200
        %v5202 = vadd.f32 %v4848, %v4850
        %v5203 = vadd.f32 %v5202, %v4852
        %v5204 = vadd.f32 %v5203, %v4854
        %v5205 = vrot.slane %v5204, 4
        %v5206 = vadd.f32 %v5204, %v5205
        %v5207 = vrot.slane %v5206, 2
        %v5208 = vadd.f32 %v5206, %v5207
        %v5209 = vrot.slane %v5208, 1
        %v5210 = vadd.f32 %v5208, %v5209
        %v5211 = vadd.f32 %v4855, %v4857
        %v5212 = vadd.f32 %v5211, %v4859
        %v5213 = vadd.f32 %v5212, %v4861
        %v5214 = vrot.slane %v5213, 4
        %v5215 = vadd.f32 %v5213, %v5214
        %v5216 = vrot.slane %v5215, 2
        %v5217 = vadd.f32 %v5215, %v5216
        %v5218 = vrot.slane %v5217, 1
        %v5219 = vadd.f32 %v5217, %v5218
        %v5220 = vadd.f32 %v4856, %v4858
        %v5221 = vadd.f32 %v5220, %v4860
        %v5222 = vadd.f32 %v5221, %v4862
        %v5223 = vrot.slane %v5222, 4
        %v5224 = vadd.f32 %v5222, %v5223
        %v5225 = vrot.slane %v5224, 2
        %v5226 = vadd.f32 %v5224, %v5225
        %v5227 = vrot.slane %v5226, 1
        %v5228 = vadd.f32 %v5226, %v5227
        %v5229 = vadd.f32 %v4863, %v4865
        %v5230 = vadd.f32 %v5229, %v4867
        %v5231 = vadd.f32 %v5230, %v4869
        %v5232 = vrot.slane %v5231, 4
        %v5233 = vadd.f32 %v5231, %v5232
        %v5234 = vrot.slane %v5233, 2
        %v5235 = vadd.f32 %v5233, %v5234
        %v5236 = vrot.slane %v5235, 1
        %v5237 = vadd.f32 %v5235, %v5236
        %v5238 = vadd.f32 %v4864, %v4866
        %v5239 = vadd.f32 %v5238, %v4868
        %v5240 = vadd.f32 %v5239, %v4870
        %v5241 = vrot.slane %v5240, 4
        %v5242 = vadd.f32 %v5240, %v5241
        %v5243 = vrot.slane %v5242, 2
        %v5244 = vadd.f32 %v5242, %v5243
        %v5245 = vrot.slane %v5244, 1
        %v5246 = vadd.f32 %v5244, %v5245
        %v5247 = vadd.f32 %v4871, %v4873
        %v5248 = vadd.f32 %v5247, %v4875
        %v5249 = vadd.f32 %v5248, %v4877
        %v5250 = vrot.slane %v5249, 4
        %v5251 = vadd.f32 %v5249, %v5250
        %v5252 = vrot.slane %v5251, 2
        %v5253 = vadd.f32 %v5251, %v5252
        %v5254 = vrot.slane %v5253, 1
        %v5255 = vadd.f32 %v5253, %v5254
        %v5256 = vadd.f32 %v4872, %v4874
        %v5257 = vadd.f32 %v5256, %v4876
        %v5258 = vadd.f32 %v5257, %v4878
        %v5259 = vrot.slane %v5258, 4
        %v5260 = vadd.f32 %v5258, %v5259
        %v5261 = vrot.slane %v5260, 2
        %v5262 = vadd.f32 %v5260, %v5261
        %v5263 = vrot.slane %v5262, 1
        %v5264 = vadd.f32 %v5262, %v5263
        %v5265 = vadd.f32 %v4879, %v4881
        %v5266 = vadd.f32 %v5265, %v4883
        %v5267 = vadd.f32 %v5266, %v4885
        %v5268 = vrot.slane %v5267, 4
        %v5269 = vadd.f32 %v5267, %v5268
        %v5270 = vrot.slane %v5269, 2
        %v5271 = vadd.f32 %v5269, %v5270
        %v5272 = vrot.slane %v5271, 1
        %v5273 = vadd.f32 %v5271, %v5272
        %v5274 = vadd.f32 %v4880, %v4882
        %v5275 = vadd.f32 %v5274, %v4884
        %v5276 = vadd.f32 %v5275, %v4886
        %v5277 = vrot.slane %v5276, 4
        %v5278 = vadd.f32 %v5276, %v5277
        %v5279 = vrot.slane %v5278, 2
        %v5280 = vadd.f32 %v5278, %v5279
        %v5281 = vrot.slane %v5280, 1
        %v5282 = vadd.f32 %v5280, %v5281
        %v5283 = vadd.f32 %v4887, %v4889
        %v5284 = vadd.f32 %v5283, %v4891
        %v5285 = vadd.f32 %v5284, %v4893
        %v5286 = vrot.slane %v5285, 4
        %v5287 = vadd.f32 %v5285, %v5286
        %v5288 = vrot.slane %v5287, 2
        %v5289 = vadd.f32 %v5287, %v5288
        %v5290 = vrot.slane %v5289, 1
        %v5291 = vadd.f32 %v5289, %v5290
        %v5292 = vadd.f32 %v4888, %v4890
        %v5293 = vadd.f32 %v5292, %v4892
        %v5294 = vadd.f32 %v5293, %v4894
        %v5295 = vrot.slane %v5294, 4
        %v5296 = vadd.f32 %v5294, %v5295
        %v5297 = vrot.slane %v5296, 2
        %v5298 = vadd.f32 %v5296, %v5297
        %v5299 = vrot.slane %v5298, 1
        %v5300 = vadd.f32 %v5298, %v5299
        %v5301 = vadd.f32 %v4895, %v4897
        %v5302 = vadd.f32 %v5301, %v4899
        %v5303 = vadd.f32 %v5302, %v4901
        %v5304 = vrot.slane %v5303, 4
        %v5305 = vadd.f32 %v5303, %v5304
        %v5306 = vrot.slane %v5305, 2
        %v5307 = vadd.f32 %v5305, %v5306
        %v5308 = vrot.slane %v5307, 1
        %v5309 = vadd.f32 %v5307, %v5308
        %v5310 = vadd.f32 %v4896, %v4898
        %v5311 = vadd.f32 %v5310, %v4900
        %v5312 = vadd.f32 %v5311, %v4902
        %v5313 = vrot.slane %v5312, 4
        %v5314 = vadd.f32 %v5312, %v5313
        %v5315 = vrot.slane %v5314, 2
        %v5316 = vadd.f32 %v5314, %v5315
        %v5317 = vrot.slane %v5316, 1
        %v5318 = vadd.f32 %v5316, %v5317
        %v5319 = vadd.f32 %v4903, %v4905
        %v5320 = vadd.f32 %v5319, %v4907
        %v5321 = vadd.f32 %v5320, %v4909
        %v5322 = vrot.slane %v5321, 4
        %v5323 = vadd.f32 %v5321, %v5322
        %v5324 = vrot.slane %v5323, 2
        %v5325 = vadd.f32 %v5323, %v5324
        %v5326 = vrot.slane %v5325, 1
        %v5327 = vadd.f32 %v5325, %v5326
        %v5328 = vadd.f32 %v4904, %v4906
        %v5329 = vadd.f32 %v5328, %v4908
        %v5330 = vadd.f32 %v5329, %v4910
        %v5331 = vrot.slane %v5330, 4
        %v5332 = vadd.f32 %v5330, %v5331
        %v5333 = vrot.slane %v5332, 2
        %v5334 = vadd.f32 %v5332, %v5333
        %v5335 = vrot.slane %v5334, 1
        %v5336 = vadd.f32 %v5334, %v5335
        %v5337 = vadd.f32 %v4911, %v4913
        %v5338 = vadd.f32 %v5337, %v4915
        %v5339 = vadd.f32 %v5338, %v4917
        %v5340 = vrot.slane %v5339, 4
        %v5341 = vadd.f32 %v5339, %v5340
        %v5342 = vrot.slane %v5341, 2
        %v5343 = vadd.f32 %v5341, %v5342
        %v5344 = vrot.slane %v5343, 1
        %v5345 = vadd.f32 %v5343, %v5344
        %v5346 = vadd.f32 %v4912, %v4914
        %v5347 = vadd.f32 %v5346, %v4916
        %v5348 = vadd.f32 %v5347, %v4918
        %v5349 = vrot.slane %v5348, 4
        %v5350 = vadd.f32 %v5348, %v5349
        %v5351 = vrot.slane %v5350, 2
        %v5352 = vadd.f32 %v5350, %v5351
        %v5353 = vrot.slane %v5352, 1
        %v5354 = vadd.f32 %v5352, %v5353
        %v5355 = vadd.f32 %v4919, %v4921
        %v5356 = vadd.f32 %v5355, %v4923
        %v5357 = vadd.f32 %v5356, %v4925
        %v5358 = vrot.slane %v5357, 4
        %v5359 = vadd.f32 %v5357, %v5358
        %v5360 = vrot.slane %v5359, 2
        %v5361 = vadd.f32 %v5359, %v5360
        %v5362 = vrot.slane %v5361, 1
        %v5363 = vadd.f32 %v5361, %v5362
        %v5364 = vadd.f32 %v4920, %v4922
        %v5365 = vadd.f32 %v5364, %v4924
        %v5366 = vadd.f32 %v5365, %v4926
        %v5367 = vrot.slane %v5366, 4
        %v5368 = vadd.f32 %v5366, %v5367
        %v5369 = vrot.slane %v5368, 2
        %v5370 = vadd.f32 %v5368, %v5369
        %v5371 = vrot.slane %v5370, 1
        %v5372 = vadd.f32 %v5370, %v5371
        %v5373 = vadd.f32 %v4927, %v4929
        %v5374 = vadd.f32 %v5373, %v4931
        %v5375 = vadd.f32 %v5374, %v4933
        %v5376 = vrot.slane %v5375, 4
        %v5377 = vadd.f32 %v5375, %v5376
        %v5378 = vrot.slane %v5377, 2
        %v5379 = vadd.f32 %v5377, %v5378
        %v5380 = vrot.slane %v5379, 1
        %v5381 = vadd.f32 %v5379, %v5380
        %v5382 = vadd.f32 %v4928, %v4930
        %v5383 = vadd.f32 %v5382, %v4932
        %v5384 = vadd.f32 %v5383, %v4934
        %v5385 = vrot.slane %v5384, 4
        %v5386 = vadd.f32 %v5384, %v5385
        %v5387 = vrot.slane %v5386, 2
        %v5388 = vadd.f32 %v5386, %v5387
        %v5389 = vrot.slane %v5388, 1
        %v5390 = vadd.f32 %v5388, %v5389
        %v5391 = vadd.f32 %v4935, %v4937
        %v5392 = vadd.f32 %v5391, %v4939
        %v5393 = vadd.f32 %v5392, %v4941
        %v5394 = vrot.slane %v5393, 4
        %v5395 = vadd.f32 %v5393, %v5394
        %v5396 = vrot.slane %v5395, 2
        %v5397 = vadd.f32 %v5395, %v5396
        %v5398 = vrot.slane %v5397, 1
        %v5399 = vadd.f32 %v5397, %v5398
        %v5400 = vadd.f32 %v4936, %v4938
        %v5401 = vadd.f32 %v5400, %v4940
        %v5402 = vadd.f32 %v5401, %v4942
        %v5403 = vrot.slane %v5402, 4
        %v5404 = vadd.f32 %v5402, %v5403
        %v5405 = vrot.slane %v5404, 2
        %v5406 = vadd.f32 %v5404, %v5405
        %v5407 = vrot.slane %v5406, 1
        %v5408 = vadd.f32 %v5406, %v5407
        %v5409 = vadd.f32 %v4943, %v4945
        %v5410 = vadd.f32 %v5409, %v4947
        %v5411 = vadd.f32 %v5410, %v4949
        %v5412 = vrot.slane %v5411, 4
        %v5413 = vadd.f32 %v5411, %v5412
        %v5414 = vrot.slane %v5413, 2
        %v5415 = vadd.f32 %v5413, %v5414
        %v5416 = vrot.slane %v5415, 1
        %v5417 = vadd.f32 %v5415, %v5416
        %v5418 = vadd.f32 %v4944, %v4946
        %v5419 = vadd.f32 %v5418, %v4948
        %v5420 = vadd.f32 %v5419, %v4950
        %v5421 = vrot.slane %v5420, 4
        %v5422 = vadd.f32 %v5420, %v5421
        %v5423 = vrot.slane %v5422, 2
        %v5424 = vadd.f32 %v5422, %v5423
        %v5425 = vrot.slane %v5424, 1
        %v5426 = vadd.f32 %v5424, %v5425
        %v5427 = vadd.f32 %v4951, %v4953
        %v5428 = vadd.f32 %v5427, %v4955
        %v5429 = vadd.f32 %v5428, %v4957
        %v5430 = vrot.slane %v5429, 4
        %v5431 = vadd.f32 %v5429, %v5430
        %v5432 = vrot.slane %v5431, 2
        %v5433 = vadd.f32 %v5431, %v5432
        %v5434 = vrot.slane %v5433, 1
        %v5435 = vadd.f32 %v5433, %v5434
        %v5436 = vadd.f32 %v4952, %v4954
        %v5437 = vadd.f32 %v5436, %v4956
        %v5438 = vadd.f32 %v5437, %v4958
        %v5439 = vrot.slane %v5438, 4
        %v5440 = vadd.f32 %v5438, %v5439
        %v5441 = vrot.slane %v5440, 2
        %v5442 = vadd.f32 %v5440, %v5441
        %v5443 = vrot.slane %v5442, 1
        %v5444 = vadd.f32 %v5442, %v5443
        %v5445 = vadd.f32 %v4959, %v4961
        %v5446 = vadd.f32 %v5445, %v4963
        %v5447 = vadd.f32 %v5446, %v4965
        %v5448 = vrot.slane %v5447, 4
        %v5449 = vadd.f32 %v5447, %v5448
        %v5450 = vrot.slane %v5449, 2
        %v5451 = vadd.f32 %v5449, %v5450
        %v5452 = vrot.slane %v5451, 1
        %v5453 = vadd.f32 %v5451, %v5452
        %v5454 = vadd.f32 %v4960, %v4962
        %v5455 = vadd.f32 %v5454, %v4964
        %v5456 = vadd.f32 %v5455, %v4966
        %v5457 = vrot.slane %v5456, 4
        %v5458 = vadd.f32 %v5456, %v5457
        %v5459 = vrot.slane %v5458, 2
        %v5460 = vadd.f32 %v5458, %v5459
        %v5461 = vrot.slane %v5460, 1
        %v5462 = vadd.f32 %v5460, %v5461
        %v5463 = vadd.f32 %v4967, %v4969
        %v5464 = vadd.f32 %v5463, %v4971
        %v5465 = vadd.f32 %v5464, %v4973
        %v5466 = vrot.slane %v5465, 4
        %v5467 = vadd.f32 %v5465, %v5466
        %v5468 = vrot.slane %v5467, 2
        %v5469 = vadd.f32 %v5467, %v5468
        %v5470 = vrot.slane %v5469, 1
        %v5471 = vadd.f32 %v5469, %v5470
        %v5472 = vadd.f32 %v4968, %v4970
        %v5473 = vadd.f32 %v5472, %v4972
        %v5474 = vadd.f32 %v5473, %v4974
        %v5475 = vrot.slane %v5474, 4
        %v5476 = vadd.f32 %v5474, %v5475
        %v5477 = vrot.slane %v5476, 2
        %v5478 = vadd.f32 %v5476, %v5477
        %v5479 = vrot.slane %v5478, 1
        %v5480 = vadd.f32 %v5478, %v5479
        %v5481 = vadd.f32 %v4975, %v4977
        %v5482 = vadd.f32 %v5481, %v4979
        %v5483 = vadd.f32 %v5482, %v4981
        %v5484 = vrot.slane %v5483, 4
        %v5485 = vadd.f32 %v5483, %v5484
        %v5486 = vrot.slane %v5485, 2
        %v5487 = vadd.f32 %v5485, %v5486
        %v5488 = vrot.slane %v5487, 1
        %v5489 = vadd.f32 %v5487, %v5488
        %v5490 = vadd.f32 %v4976, %v4978
        %v5491 = vadd.f32 %v5490, %v4980
        %v5492 = vadd.f32 %v5491, %v4982
        %v5493 = vrot.slane %v5492, 4
        %v5494 = vadd.f32 %v5492, %v5493
        %v5495 = vrot.slane %v5494, 2
        %v5496 = vadd.f32 %v5494, %v5495
        %v5497 = vrot.slane %v5496, 1
        %v5498 = vadd.f32 %v5496, %v5497
        %v5499 = vadd.f32 %v4983, %v4985
        %v5500 = vadd.f32 %v5499, %v4987
        %v5501 = vadd.f32 %v5500, %v4989
        %v5502 = vrot.slane %v5501, 4
        %v5503 = vadd.f32 %v5501, %v5502
        %v5504 = vrot.slane %v5503, 2
        %v5505 = vadd.f32 %v5503, %v5504
        %v5506 = vrot.slane %v5505, 1
        %v5507 = vadd.f32 %v5505, %v5506
        %v5508 = vadd.f32 %v4984, %v4986
        %v5509 = vadd.f32 %v5508, %v4988
        %v5510 = vadd.f32 %v5509, %v4990
        %v5511 = vrot.slane %v5510, 4
        %v5512 = vadd.f32 %v5510, %v5511
        %v5513 = vrot.slane %v5512, 2
        %v5514 = vadd.f32 %v5512, %v5513
        %v5515 = vrot.slane %v5514, 1
        %v5516 = vadd.f32 %v5514, %v5515
        %v5517 = vadd.f32 %v4991, %v4993
        %v5518 = vadd.f32 %v5517, %v4995
        %v5519 = vadd.f32 %v5518, %v4997
        %v5520 = vrot.slane %v5519, 4
        %v5521 = vadd.f32 %v5519, %v5520
        %v5522 = vrot.slane %v5521, 2
        %v5523 = vadd.f32 %v5521, %v5522
        %v5524 = vrot.slane %v5523, 1
        %v5525 = vadd.f32 %v5523, %v5524
        %v5526 = vadd.f32 %v4992, %v4994
        %v5527 = vadd.f32 %v5526, %v4996
        %v5528 = vadd.f32 %v5527, %v4998
        %v5529 = vrot.slane %v5528, 4
        %v5530 = vadd.f32 %v5528, %v5529
        %v5531 = vrot.slane %v5530, 2
        %v5532 = vadd.f32 %v5530, %v5531
        %v5533 = vrot.slane %v5532, 1
        %v5534 = vadd.f32 %v5532, %v5533
        %v5535 = vadd.f32 %v4999, %v5001
        %v5536 = vadd.f32 %v5535, %v5003
        %v5537 = vadd.f32 %v5536, %v5005
        %v5538 = vrot.slane %v5537, 4
        %v5539 = vadd.f32 %v5537, %v5538
        %v5540 = vrot.slane %v5539, 2
        %v5541 = vadd.f32 %v5539, %v5540
        %v5542 = vrot.slane %v5541, 1
        %v5543 = vadd.f32 %v5541, %v5542
        %v5544 = vadd.f32 %v5000, %v5002
        %v5545 = vadd.f32 %v5544, %v5004
        %v5546 = vadd.f32 %v5545, %v5006
        %v5547 = vrot.slane %v5546, 4
        %v5548 = vadd.f32 %v5546, %v5547
        %v5549 = vrot.slane %v5548, 2
        %v5550 = vadd.f32 %v5548, %v5549
        %v5551 = vrot.slane %v5550, 1
        %v5552 = vadd.f32 %v5550, %v5551
        %v5553 = vadd.f32 %v5007, %v5009
        %v5554 = vadd.f32 %v5553, %v5011
        %v5555 = vadd.f32 %v5554, %v5013
        %v5556 = vrot.slane %v5555, 4
        %v5557 = vadd.f32 %v5555, %v5556
        %v5558 = vrot.slane %v5557, 2
        %v5559 = vadd.f32 %v5557, %v5558
        %v5560 = vrot.slane %v5559, 1
        %v5561 = vadd.f32 %v5559, %v5560
        %v5562 = vadd.f32 %v5008, %v5010
        %v5563 = vadd.f32 %v5562, %v5012
        %v5564 = vadd.f32 %v5563, %v5014
        %v5565 = vrot.slane %v5564, 4
        %v5566 = vadd.f32 %v5564, %v5565
        %v5567 = vrot.slane %v5566, 2
        %v5568 = vadd.f32 %v5566, %v5567
        %v5569 = vrot.slane %v5568, 1
        %v5570 = vadd.f32 %v5568, %v5569
        %v5571 = vadd.f32 %v5015, %v5017
        %v5572 = vadd.f32 %v5571, %v5019
        %v5573 = vadd.f32 %v5572, %v5021
        %v5574 = vrot.slane %v5573, 4
        %v5575 = vadd.f32 %v5573, %v5574
        %v5576 = vrot.slane %v5575, 2
        %v5577 = vadd.f32 %v5575, %v5576
        %v5578 = vrot.slane %v5577, 1
        %v5579 = vadd.f32 %v5577, %v5578
        %v5580 = vadd.f32 %v5016, %v5018
        %v5581 = vadd.f32 %v5580, %v5020
        %v5582 = vadd.f32 %v5581, %v5022
        %v5583 = vrot.slane %v5582, 4
        %v5584 = vadd.f32 %v5582, %v5583
        %v5585 = vrot.slane %v5584, 2
        %v5586 = vadd.f32 %v5584, %v5585
        %v5587 = vrot.slane %v5586, 1
        %v5588 = vadd.f32 %v5586, %v5587
        %v5589 = vadd.f32 %v5023, %v5025
        %v5590 = vadd.f32 %v5589, %v5027
        %v5591 = vadd.f32 %v5590, %v5029
        %v5592 = vrot.slane %v5591, 4
        %v5593 = vadd.f32 %v5591, %v5592
        %v5594 = vrot.slane %v5593, 2
        %v5595 = vadd.f32 %v5593, %v5594
        %v5596 = vrot.slane %v5595, 1
        %v5597 = vadd.f32 %v5595, %v5596
        %v5598 = vadd.f32 %v5024, %v5026
        %v5599 = vadd.f32 %v5598, %v5028
        %v5600 = vadd.f32 %v5599, %v5030
        %v5601 = vrot.slane %v5600, 4
        %v5602 = vadd.f32 %v5600, %v5601
        %v5603 = vrot.slane %v5602, 2
        %v5604 = vadd.f32 %v5602, %v5603
        %v5605 = vrot.slane %v5604, 1
        %v5606 = vadd.f32 %v5604, %v5605
        %v5607 = vld [vmem:[%s7] sm:$0xff]
        %v5608 = vld [vmem:[%s7 + $0x8] sm:$0xff]
        %v5609 = vld [vmem:[%s7 + $0x10] sm:$0xff]
        %v5610 = vld [vmem:[%s7 + $0x18] sm:$0xff]
        %v5611 = vld [vmem:[%s8] sm:$0xff]
        %v5612 = vld [vmem:[%s8 + $0x8] sm:$0xff]
        %v5613 = vld [vmem:[%s8 + $0x10] sm:$0xff]
        %v5614 = vld [vmem:[%s8 + $0x18] sm:$0xff]
        %5616 = vset.pattern.permute.xlu0 0
        %5617 = vperm.xlu0 %5616, %v5611
        %v5618 = vpop.permute.xlu0 %5617
        %5621 = vset.pattern.permute.xlu0 0
        %5622 = vperm.xlu0 %5621, %v5612
        %v5623 = vpop.permute.xlu0 %5622
        %5626 = vset.pattern.permute.xlu0 0
        %5627 = vperm.xlu0 %5626, %v5613
        %v5628 = vpop.permute.xlu0 %5627
        %5631 = vset.pattern.permute.xlu0 0
        %5632 = vperm.xlu0 %5631, %v5614
        %v5633 = vpop.permute.xlu0 %5632
        %v5699 = vsel %vm1253, %v5057, %v5039
        %v5700 = vsel %vm1256, %v5075, %v5699
        %v5701 = vsel %vm1259, %v5093, %v5700
        %v5702 = vsel %vm1262, %v5111, %v5701
        %v5703 = vsel %vm1265, %v5129, %v5702
        %v5704 = vsel %vm1268, %v5147, %v5703
        %vm5705 = vcmask 1047559
        %v5706 = vsel %vm5705, %v5165, %v5704
        %v5707 = vsel %vm1253, %v5066, %v5048
        %v5708 = vsel %vm1256, %v5084, %v5707
        %v5709 = vsel %vm1259, %v5102, %v5708
        %v5710 = vsel %vm1262, %v5120, %v5709
        %v5711 = vsel %vm1265, %v5138, %v5710
        %v5712 = vsel %vm1268, %v5156, %v5711
        %v5713 = vsel %vm5705, %v5174, %v5712
        %v5714 = vsel %vm1253, %v5201, %v5183
        %v5715 = vsel %vm1256, %v5219, %v5714
        %v5716 = vsel %vm1259, %v5237, %v5715
        %v5717 = vsel %vm1262, %v5255, %v5716
        %v5718 = vsel %vm1265, %v5273, %v5717
        %v5719 = vsel %vm1268, %v5291, %v5718
        %v5720 = vsel %vm5705, %v5309, %v5719
        %v5721 = vsel %vm1253, %v5210, %v5192
        %v5722 = vsel %vm1256, %v5228, %v5721
        %v5723 = vsel %vm1259, %v5246, %v5722
        %v5724 = vsel %vm1262, %v5264, %v5723
        %v5725 = vsel %vm1265, %v5282, %v5724
        %v5726 = vsel %vm1268, %v5300, %v5725
        %v5727 = vsel %vm5705, %v5318, %v5726
        %v5728 = vsel %vm1253, %v5345, %v5327
        %v5729 = vsel %vm1256, %v5363, %v5728
        %v5730 = vsel %vm1259, %v5381, %v5729
        %v5731 = vsel %vm1262, %v5399, %v5730
        %v5732 = vsel %vm1265, %v5417, %v5731
        %v5733 = vsel %vm1268, %v5435, %v5732
        %v5734 = vsel %vm5705, %v5453, %v5733
        %v5735 = vsel %vm1253, %v5354, %v5336
        %v5736 = vsel %vm1256, %v5372, %v5735
        %v5737 = vsel %vm1259, %v5390, %v5736
        %v5738 = vsel %vm1262, %v5408, %v5737
        %v5739 = vsel %vm1265, %v5426, %v5738
        %v5740 = vsel %vm1268, %v5444, %v5739
        %v5741 = vsel %vm5705, %v5462, %v5740
        %v5742 = vsel %vm1253, %v5489, %v5471
        %v5743 = vsel %vm1256, %v5507, %v5742
        %v5744 = vsel %vm1259, %v5525, %v5743
        %v5745 = vsel %vm1262, %v5543, %v5744
        %v5746 = vsel %vm1265, %v5561, %v5745
        %v5747 = vsel %vm1268, %v5579, %v5746
        %v5748 = vsel %vm5705, %v5597, %v5747
        %v5749 = vsel %vm1253, %v5498, %v5480
        %v5750 = vsel %vm1256, %v5516, %v5749
        %v5751 = vsel %vm1259, %v5534, %v5750
        %v5752 = vsel %vm1262, %v5552, %v5751
        %v5753 = vsel %vm1265, %v5570, %v5752
        %v5754 = vsel %vm1268, %v5588, %v5753
        %v5755 = vsel %vm5705, %v5606, %v5754
        %v5765 = vsel %vm654, %v5607, 0
        %v5768 = vsel %vm654, %v5608, 0
        %v5771 = vsel %vm654, %v5609, 0
        %v5774 = vsel %vm654, %v5610, 0
        %5776 = vmatpush.msra.mxu0 0.0
        %5777 = vmatpush.msra.mxu0 0.0
        %5778 = vmatpush.msra.mxu0 0.0
        %5779 = vmatpush.msra.mxu0 0.0
        %5780 = vmatpush.msra.mxu0 0.0
        %5781 = vmatpush.msra.mxu0 0.0
        %5782 = vmatpush.msra.mxu0 0.0
        %5783 = vmatpush.msra.mxu0 0.0
        %5784 = vmatpush.msra.mxu0 0.0
        %5785 = vmatpush.msra.mxu0 0.0
        %5786 = vmatpush.msra.mxu0 0.0
        %5787 = vmatpush.msra.mxu0 0.0
        %5788 = vmatpush.msra.mxu0 %v5748
        %5789 = vmatpush.msra.mxu0 %v5734
        %5790 = vmatpush.msra.mxu0 %v5720
        %5791 = vmatpush.msra.mxu0 %v5706
        %5792 = vmatmul.f32.gmra.mxu0 %v5765
        %v5793 = vpop.f32.mrf.mxu0
        %v5794 = vadd.f32 %v5618, %v5793
        %5795 = vmatmul.f32.gmra.mxu0 %v5768
        %v5796 = vpop.f32.mrf.mxu0
        %v5797 = vadd.f32 %v5623, %v5796
        %5798 = vmatmul.f32.gmra.mxu0 %v5771
        %v5799 = vpop.f32.mrf.mxu0
        %v5800 = vadd.f32 %v5628, %v5799
        %5801 = vmatmul.f32.gmra.mxu0 %v5774
        %v5802 = vpop.f32.mrf.mxu0
        %v5803 = vadd.f32 %v5633, %v5802
        %5804 = vdwg.mxu0
        %5805 = vmatpush.msra.mxu0 0.0
        %5806 = vmatpush.msra.mxu0 0.0
        %5807 = vmatpush.msra.mxu0 0.0
        %5808 = vmatpush.msra.mxu0 0.0
        %5809 = vmatpush.msra.mxu0 0.0
        %5810 = vmatpush.msra.mxu0 0.0
        %5811 = vmatpush.msra.mxu0 0.0
        %5812 = vmatpush.msra.mxu0 0.0
        %5813 = vmatpush.msra.mxu0 0.0
        %5814 = vmatpush.msra.mxu0 0.0
        %5815 = vmatpush.msra.mxu0 0.0
        %5816 = vmatpush.msra.mxu0 0.0
        %5817 = vmatpush.msra.mxu0 %v5755
        %5818 = vmatpush.msra.mxu0 %v5741
        %5819 = vmatpush.msra.mxu0 %v5727
        %5820 = vmatpush.msra.mxu0 %v5713
        %5821 = vmatmul.f32.gmra.mxu0 %v5765
        %v5822 = vpop.f32.mrf.mxu0
        %v5823 = vadd.f32 %v5618, %v5822
        %5824 = vmatmul.f32.gmra.mxu0 %v5768
        %v5825 = vpop.f32.mrf.mxu0
        %v5826 = vadd.f32 %v5623, %v5825
        %5827 = vmatmul.f32.gmra.mxu0 %v5771
        %v5828 = vpop.f32.mrf.mxu0
        %v5829 = vadd.f32 %v5628, %v5828
        %5830 = vmatmul.f32.gmra.mxu0 %v5774
        %v5831 = vpop.f32.mrf.mxu0
        %v5832 = vadd.f32 %v5633, %v5831
        %5833 = vdwg.mxu0
        %v5834 = vadd.f32 %v5794, %v743
        %v5835 = vadd.f32 %v5823, %v830
        %v5836 = vadd.f32 %v5797, %v746
        %v5837 = vadd.f32 %v5826, %v833
        %v5838 = vadd.f32 %v5800, %v749
        %v5839 = vadd.f32 %v5829, %v836
        %v5840 = vadd.f32 %v5803, %v752
        %v5841 = vadd.f32 %v5832, %v839
        %v5842 = vld [vmem:[%s507] sm:$0xff]
        %v5843 = vld [vmem:[%s507 + $0x8] sm:$0xff]
        %v5844 = vld [vmem:[%s507 + $0x10] sm:$0xff]
        %v5845 = vld [vmem:[%s507 + $0x18] sm:$0xff]
        %v5846 = vld [vmem:[%s507 + $0x20] sm:$0xff]
        %v5847 = vld [vmem:[%s507 + $0x28] sm:$0xff]
        %v5848 = vld [vmem:[%s507 + $0x30] sm:$0xff]
        %v5849 = vld [vmem:[%s507 + $0x38] sm:$0xff]
        %v5850 = vsub.f32 %v5834, %v5842
        %v5851 = vsub.f32 %v5835, %v5843
        %v5852 = vsub.f32 %v5836, %v5844
        %v5853 = vsub.f32 %v5837, %v5845
        %v5854 = vsub.f32 %v5838, %v5846
        %v5855 = vsub.f32 %v5839, %v5847
        %v5856 = vsub.f32 %v5840, %v5848
        %v5857 = vsub.f32 %v5841, %v5849
        %5858 = vst [vmem:[%s542] sm:$0xff] %v5850
        %5859 = vst [vmem:[%s542 + $0x8] sm:$0xff] %v5851
        %5860 = vst [vmem:[%s542 + $0x10] sm:$0xff] %v5852
        %5861 = vst [vmem:[%s542 + $0x18] sm:$0xff] %v5853
        %5862 = vst [vmem:[%s542 + $0x20] sm:$0xff] %v5854
        %5863 = vst [vmem:[%s542 + $0x28] sm:$0xff] %v5855
        %5864 = vst [vmem:[%s542 + $0x30] sm:$0xff] %v5856
        %5865 = vst [vmem:[%s542 + $0x38] sm:$0xff] %v5857
        %s5866 = sand.u32 %s227, 1
        %s5867 = sand.u32 %s227, 1
        %s5868 = smul.addr %s5867, 64
        %s5869 = scalar_lea.vmem [#allocation4], %s5868
        // Predicated region
        $region103: #{ssam_forward.12} parent=93 // pred_check
          %p5870 = pneg %p237
        $region104: #{ssam_forward.12} parent=93 // pred_check_branch
          %5872 = sbr.rel (%p5870) target = $region106
        $region105: #{ssam_forward.12} parent=93 // pred_region
          %s5873 = smul.u32 2, %s20
          %s5874 = smul.addr %s5873, 8
          %s5875 = scalar_lea.vmem %s9, %s5874
          // Predicated region
          $region107: #{ssam_forward.12} parent=105 // pred_check
            _
          $region108: #{ssam_forward.12} parent=105 // pred_check_branch
            %5877 = sbr.rel (0) target = $region110
          $region109: #{ssam_forward.12} parent=105 // pred_region
            // Predicated region
            $region111: #{ssam_forward.12} parent=109 // pred_check
              _
            $region112: #{ssam_forward.12} parent=109 // pred_check_branch
              %5879 = sbr.rel (0) target = $region114
            $region113: #{ssam_forward.12} parent=109 // pred_region
              loop: start=0, step=1, limit=1
              $region115: #{ssam_forward.12} parent=113 // loop_pre_header
                _
              $region116: #{ssam_forward.12} parent=113 // loop_header
                %s5881 = sphi 0, %s5885
                %p5882 = scmp.ge.s32.totalorder %s5881, 1
                %s5886 = sphi %s5869, %s5869
                %s5887 = sphi %s5875, %s5875
              $region117: #{ssam_forward.12} parent=113 // loop_header_branch
                %5884 = sbr.rel (%p5882) target = $region121
              $region118: #{ssam_forward.12} parent=113 // loop_body
                %v5888 = vld [vmem:[%s5886] sm:$0xff]
                %5889 = vst [vmem:[%s5887] sm:$0xff] %v5888
                %v5890 = vld [vmem:[%s5886 + $0x8] sm:$0xff]
                %5891 = vst [vmem:[%s5887 + $0x8] sm:$0xff] %v5890
                %v5892 = vld [vmem:[%s5886 + $0x10] sm:$0xff]
                %5893 = vst [vmem:[%s5887 + $0x20] sm:$0xff] %v5892
                %v5894 = vld [vmem:[%s5886 + $0x18] sm:$0xff]
                %5895 = vst [vmem:[%s5887 + $0x28] sm:$0xff] %v5894
                %v5896 = vld [vmem:[%s5886 + $0x20] sm:$0xff]
                %5897 = vst [vmem:[%s5887 + $0x40] sm:$0xff] %v5896
                %v5898 = vld [vmem:[%s5886 + $0x28] sm:$0xff]
                %5899 = vst [vmem:[%s5887 + $0x48] sm:$0xff] %v5898
                %v5900 = vld [vmem:[%s5886 + $0x30] sm:$0xff]
                %5901 = vst [vmem:[%s5887 + $0x60] sm:$0xff] %v5900
                %v5902 = vld [vmem:[%s5886 + $0x38] sm:$0xff]
                %5903 = vst [vmem:[%s5887 + $0x68] sm:$0xff] %v5902
              $region119: #{ssam_forward.12} parent=113 // loop_footer
                %s5885 = sadd.s32 1, %s5881
              $region120: #{ssam_forward.12} parent=113 // loop_footer_branch
                %5880 = sbr.rel target = $region116
              $region121: #{ssam_forward.12} parent=113 // loop_exit
                _
            $region114: #{ssam_forward.12} parent=109 // pred_fallthru
              _
            // Predicated region
            $region122: #{ssam_forward.12} parent=109 // pred_check
              _
            $region123: #{ssam_forward.12} parent=109 // pred_check_branch
              %5905 = sbr.rel target = $region125
            $region124: #{ssam_forward.12} parent=109 // pred_region
              _
            $region125: #{ssam_forward.12} parent=109 // pred_fallthru
              _
          $region110: #{ssam_forward.12} parent=105 // pred_fallthru
            _
          %5906 = vnop
        $region106: #{ssam_forward.12} parent=93 // pred_fallthru
          _
      $region94: #{ssam_forward.12} parent=5 // pred_fallthru
        _
      %p5907 = scmp.le.s32.totalorder 2, %s15
      // Predicated region
      $region126: #{ssam_forward.12} parent=5 // pred_check
        %p5908 = pneg %p5907
      $region127: #{ssam_forward.12} parent=5 // pred_check_branch
        %5910 = sbr.rel (%p5908) target = $region129
      $region128: #{ssam_forward.12} parent=5 // pred_region
        %s5911 = ssub.s32 %s15, 2
        // Predicated region
        $region130: #{ssam_forward.12} parent=128 // pred_check
          %p5912 = pneg %p243
        $region131: #{ssam_forward.12} parent=128 // pred_check_branch
          %5914 = sbr.rel (%p5912) target = $region133
        $region132: #{ssam_forward.12} parent=128 // pred_region
          %s5915 = sand.u32 %s228, 1
          %s5916 = sand.u32 %s228, 1
          %s5917 = smul.addr %s5916, 64
          %s5918 = scalar_lea.vmem [#allocation4], %s5917
        $region133: #{ssam_forward.12} parent=128 // pred_fallthru
          _
      $region129: #{ssam_forward.12} parent=5 // pred_fallthru
        _
    $region6: #{ssam_forward.12} parent=1 // loop_footer
      %s19 = sadd.s32 1, %s15
    $region7: #{ssam_forward.12} parent=1 // loop_footer_branch
      %14 = sbr.rel target = $region3
    $region8: #{ssam_forward.12} parent=1 // loop_exit
      _

// kernel: ssam_forward.14
$region0: #{ssam_forward.14}
  #allocation0 [shape = 'u32[]', space=smem, size = 0x4, offset = 0x4, fixed_abs, tag = 'smem constant byte address 0x4 - core index']
  #allocation1 [shape = 'u32[72,128]{1,0:T(1,128)}', space=vmem, size = 0x9000, scoped, tag = 'internal scratch']
  %s0 = inlined_call_operand.vmem [shape: f32[72,98], index: 0, kind: input, shape index: {}]
  %s1 = inlined_call_operand.vmem [shape: f32[8,72], index: 1, kind: input, shape index: {}]
  %s2 = inlined_call_operand.vmem [shape: f32[8,1], index: 2, kind: input, shape index: {}]
  %s3 = inlined_call_operand.vmem [shape: f32[8,98], index: 3, kind: output, shape index: {}]
  %s4 = sld [smem:[#allocation0]]
  $region22: #{ssam_forward.14} parent=0
    _
  %s6 = ssub.s32 1, %s4
  %s7 = scalar_select 0, %s6, %s4
  // Predicated region
  $region2: #{ssam_forward.14} parent=0 // pred_check
    _
  $region3: #{ssam_forward.14} parent=0 // pred_check_branch
    %9 = sbr.rel (0) target = $region5
  $region4: #{ssam_forward.14} parent=0 // pred_region
    _
  $region5: #{ssam_forward.14} parent=0 // pred_fallthru
    _
  // Predicated region
  $region6: #{ssam_forward.14} parent=0 // pred_check
    _
  $region7: #{ssam_forward.14} parent=0 // pred_check_branch
    %11 = sbr.rel (0) target = $region9
  $region8: #{ssam_forward.14} parent=0 // pred_region
    _
  $region9: #{ssam_forward.14} parent=0 // pred_fallthru
    _
  // Predicated region
  $region10: #{ssam_forward.14} parent=0 // pred_check
    _
  $region11: #{ssam_forward.14} parent=0 // pred_check_branch
    %13 = sbr.rel (0) target = $region13
  $region12: #{ssam_forward.14} parent=0 // pred_region
    _
  $region13: #{ssam_forward.14} parent=0 // pred_fallthru
    _
  %v14 = vld [vmem:[%s1] sm:$0xff]
  %v15 = vld [vmem:[%s0] sm:$0xff]
  %v16 = vld [vmem:[%s0 + $0x8] sm:$0xff]
  %v17 = vld [vmem:[%s0 + $0x10] sm:$0xff]
  %v18 = vld [vmem:[%s0 + $0x18] sm:$0xff]
  %v19 = vld [vmem:[%s0 + $0x20] sm:$0xff]
  %v20 = vld [vmem:[%s0 + $0x28] sm:$0xff]
  %v21 = vld [vmem:[%s0 + $0x30] sm:$0xff]
  %v22 = vld [vmem:[%s0 + $0x38] sm:$0xff]
  %v23 = vld [vmem:[%s0 + $0x40] sm:$0xff]
  %v24 = vld [vmem:[%s2] sm:$0xff]
  %26 = vset.pattern.permute.xlu0 0
  %27 = vperm.xlu0 %26, %v24
  %v28 = vpop.permute.xlu0 %27
  %vm30 = vcmask 588800
  %v32 = vsel %vm30, %v14, 0
  %34 = vmatpush.msra.mxu0 0.0
  %35 = vmatpush.msra.mxu0 0.0
  %36 = vmatpush.msra.mxu0 0.0
  %37 = vmatpush.msra.mxu0 0.0
  %38 = vmatpush.msra.mxu0 0.0
  %39 = vmatpush.msra.mxu0 0.0
  %40 = vmatpush.msra.mxu0 0.0
  %41 = vmatpush.msra.mxu0 %v23
  %42 = vmatpush.msra.mxu0 %v22
  %43 = vmatpush.msra.mxu0 %v21
  %44 = vmatpush.msra.mxu0 %v20
  %45 = vmatpush.msra.mxu0 %v19
  %46 = vmatpush.msra.mxu0 %v18
  %47 = vmatpush.msra.mxu0 %v17
  %48 = vmatpush.msra.mxu0 %v16
  %49 = vmatpush.msra.mxu0 %v15
  %50 = vmatmul.f32.gmra.mxu0 %v32
  %v51 = vpop.f32.mrf.mxu0
  %v52 = vadd.f32 %v28, %v51
  %53 = vdwg.mxu0
  %vm54 = vcmask 801792
  %55 = vst.msk [vmem:[%s3] sm:$0xff] %vm54, %v52
  // Predicated region
  $region14: #{ssam_forward.14} parent=0 // pred_check
    _
  $region15: #{ssam_forward.14} parent=0 // pred_check_branch
    %57 = sbr.rel (0) target = $region17
  $region16: #{ssam_forward.14} parent=0 // pred_region
    _
  $region17: #{ssam_forward.14} parent=0 // pred_fallthru
    _
  // Predicated region
  $region18: #{ssam_forward.14} parent=0 // pred_check
    _
  $region19: #{ssam_forward.14} parent=0 // pred_check_branch
    %59 = sbr.rel (0) target = $region21
  $region20: #{ssam_forward.14} parent=0 // pred_region
    _
  $region21: #{ssam_forward.14} parent=0 // pred_fallthru
    _

// kernel: ssam_forward.17
$region0: #{ssam_forward.17}
  #allocation0 [shape = 'u32[]', space=smem, size = 0x4, offset = 0x4, fixed_abs, tag = 'smem constant byte address 0x4 - core index']
  #allocation1 [shape = 'u32[72,128]{1,0:T(1,128)}', space=vmem, size = 0x9000, scoped, tag = 'internal scratch']
  %s0 = inlined_call_operand.vmem [shape: f32[72,2], index: 0, kind: input, shape index: {}]
  %s1 = inlined_call_operand.vmem [shape: f32[8,72], index: 1, kind: input, shape index: {}]
  %s2 = inlined_call_operand.vmem [shape: f32[8,1], index: 2, kind: input, shape index: {}]
  %s3 = inlined_call_operand.vmem [shape: f32[8,2], index: 3, kind: output, shape index: {}]
  %s4 = sld [smem:[#allocation0]]
  $region22: #{ssam_forward.17} parent=0
    _
  %s6 = ssub.s32 1, %s4
  %s7 = scalar_select 0, %s6, %s4
  // Predicated region
  $region2: #{ssam_forward.17} parent=0 // pred_check
    _
  $region3: #{ssam_forward.17} parent=0 // pred_check_branch
    %9 = sbr.rel (0) target = $region5
  $region4: #{ssam_forward.17} parent=0 // pred_region
    _
  $region5: #{ssam_forward.17} parent=0 // pred_fallthru
    _
  // Predicated region
  $region6: #{ssam_forward.17} parent=0 // pred_check
    _
  $region7: #{ssam_forward.17} parent=0 // pred_check_branch
    %11 = sbr.rel (0) target = $region9
  $region8: #{ssam_forward.17} parent=0 // pred_region
    _
  $region9: #{ssam_forward.17} parent=0 // pred_fallthru
    _
  // Predicated region
  $region10: #{ssam_forward.17} parent=0 // pred_check
    _
  $region11: #{ssam_forward.17} parent=0 // pred_check_branch
    %13 = sbr.rel (0) target = $region13
  $region12: #{ssam_forward.17} parent=0 // pred_region
    _
  $region13: #{ssam_forward.17} parent=0 // pred_fallthru
    _
  %v14 = vld [vmem:[%s1] sm:$0xff]
  %v15 = vld [vmem:[%s0] sm:$0xff]
  %v16 = vld [vmem:[%s0 + $0x8] sm:$0xff]
  %v17 = vld [vmem:[%s0 + $0x10] sm:$0xff]
  %v18 = vld [vmem:[%s0 + $0x18] sm:$0xff]
  %v19 = vld [vmem:[%s0 + $0x20] sm:$0xff]
  %v20 = vld [vmem:[%s0 + $0x28] sm:$0xff]
  %v21 = vld [vmem:[%s0 + $0x30] sm:$0xff]
  %v22 = vld [vmem:[%s0 + $0x38] sm:$0xff]
  %v23 = vld [vmem:[%s0 + $0x40] sm:$0xff]
  %v24 = vld [vmem:[%s2] sm:$0xff]
  %26 = vset.pattern.permute.xlu0 0
  %27 = vperm.xlu0 %26, %v24
  %v28 = vpop.permute.xlu0 %27
  %vm30 = vcmask 588800
  %v32 = vsel %vm30, %v14, 0
  %34 = vmatpush.msra.mxu0 0.0
  %35 = vmatpush.msra.mxu0 0.0
  %36 = vmatpush.msra.mxu0 0.0
  %37 = vmatpush.msra.mxu0 0.0
  %38 = vmatpush.msra.mxu0 0.0
  %39 = vmatpush.msra.mxu0 0.0
  %40 = vmatpush.msra.mxu0 0.0
  %41 = vmatpush.msra.mxu0 %v23
  %42 = vmatpush.msra.mxu0 %v22
  %43 = vmatpush.msra.mxu0 %v21
  %44 = vmatpush.msra.mxu0 %v20
  %45 = vmatpush.msra.mxu0 %v19
  %46 = vmatpush.msra.mxu0 %v18
  %47 = vmatpush.msra.mxu0 %v17
  %48 = vmatpush.msra.mxu0 %v16
  %49 = vmatpush.msra.mxu0 %v15
  %50 = vmatmul.f32.gmra.mxu0 %v32
  %v51 = vpop.f32.mrf.mxu0
  %v52 = vadd.f32 %v28, %v51
  %53 = vdwg.mxu0
  %vm54 = vcmask 15360
  %55 = vst.msk [vmem:[%s3] sm:$0xff] %vm54, %v52
  // Predicated region
  $region14: #{ssam_forward.17} parent=0 // pred_check
    _
  $region15: #{ssam_forward.17} parent=0 // pred_check_branch
    %57 = sbr.rel (0) target = $region17
  $region16: #{ssam_forward.17} parent=0 // pred_region
    _
  $region17: #{ssam_forward.17} parent=0 // pred_fallthru
    _
  // Predicated region
  $region18: #{ssam_forward.17} parent=0 // pred_check
    _
  $region19: #{ssam_forward.17} parent=0 // pred_check_branch
    %59 = sbr.rel (0) target = $region21
  $region20: #{ssam_forward.17} parent=0 // pred_region
    _
  $region21: #{ssam_forward.17} parent=0 // pred_fallthru
    _

// kernel: ssam_forward.15
$region0: #{ssam_forward.15}
  #allocation0 [shape = 'u32[]', space=smem, size = 0x4, offset = 0x4, fixed_abs, tag = 'smem constant byte address 0x4 - core index']
  #allocation1 [shape = 'u32[72,128]{1,0:T(1,128)}', space=vmem, size = 0x9000, scoped, tag = 'internal scratch']
  %s0 = inlined_call_operand.vmem [shape: f32[72,2], index: 0, kind: input, shape index: {}]
  %s1 = inlined_call_operand.vmem [shape: f32[8,72], index: 1, kind: input, shape index: {}]
  %s2 = inlined_call_operand.vmem [shape: f32[8,1], index: 2, kind: input, shape index: {}]
  %s3 = inlined_call_operand.vmem [shape: f32[8,2], index: 3, kind: output, shape index: {}]
  %s4 = sld [smem:[#allocation0]]
  $region22: #{ssam_forward.15} parent=0
    _
  %s6 = ssub.s32 1, %s4
  %s7 = scalar_select 0, %s6, %s4
  // Predicated region
  $region2: #{ssam_forward.15} parent=0 // pred_check
    _
  $region3: #{ssam_forward.15} parent=0 // pred_check_branch
    %9 = sbr.rel (0) target = $region5
  $region4: #{ssam_forward.15} parent=0 // pred_region
    _
  $region5: #{ssam_forward.15} parent=0 // pred_fallthru
    _
  // Predicated region
  $region6: #{ssam_forward.15} parent=0 // pred_check
    _
  $region7: #{ssam_forward.15} parent=0 // pred_check_branch
    %11 = sbr.rel (0) target = $region9
  $region8: #{ssam_forward.15} parent=0 // pred_region
    _
  $region9: #{ssam_forward.15} parent=0 // pred_fallthru
    _
  // Predicated region
  $region10: #{ssam_forward.15} parent=0 // pred_check
    _
  $region11: #{ssam_forward.15} parent=0 // pred_check_branch
    %13 = sbr.rel (0) target = $region13
  $region12: #{ssam_forward.15} parent=0 // pred_region
    _
  $region13: #{ssam_forward.15} parent=0 // pred_fallthru
    _
  %v14 = vld [vmem:[%s1] sm:$0xff]
  %v15 = vld [vmem:[%s0] sm:$0xff]
  %v16 = vld [vmem:[%s0 + $0x8] sm:$0xff]
  %v17 = vld [vmem:[%s0 + $0x10] sm:$0xff]
  %v18 = vld [vmem:[%s0 + $0x18] sm:$0xff]
  %v19 = vld [vmem:[%s0 + $0x20] sm:$0xff]
  %v20 = vld [vmem:[%s0 + $0x28] sm:$0xff]
  %v21 = vld [vmem:[%s0 + $0x30] sm:$0xff]
  %v22 = vld [vmem:[%s0 + $0x38] sm:$0xff]
  %v23 = vld [vmem:[%s0 + $0x40] sm:$0xff]
  %v24 = vld [vmem:[%s2] sm:$0xff]
  %26 = vset.pattern.permute.xlu0 0
  %27 = vperm.xlu0 %26, %v24
  %v28 = vpop.permute.xlu0 %27
  %vm30 = vcmask 588800
  %v32 = vsel %vm30, %v14, 0
  %34 = vmatpush.msra.mxu0 0.0
  %35 = vmatpush.msra.mxu0 0.0
  %36 = vmatpush.msra.mxu0 0.0
  %37 = vmatpush.msra.mxu0 0.0
  %38 = vmatpush.msra.mxu0 0.0
  %39 = vmatpush.msra.mxu0 0.0
  %40 = vmatpush.msra.mxu0 0.0
  %41 = vmatpush.msra.mxu0 %v23
  %42 = vmatpush.msra.mxu0 %v22
  %43 = vmatpush.msra.mxu0 %v21
  %44 = vmatpush.msra.mxu0 %v20
  %45 = vmatpush.msra.mxu0 %v19
  %46 = vmatpush.msra.mxu0 %v18
  %47 = vmatpush.msra.mxu0 %v17
  %48 = vmatpush.msra.mxu0 %v16
  %49 = vmatpush.msra.mxu0 %v15
  %50 = vmatmul.f32.gmra.mxu0 %v32
  %v51 = vpop.f32.mrf.mxu0
  %v52 = vadd.f32 %v28, %v51
  %53 = vdwg.mxu0
  %v54 = vmax.f32 %v52, 0.0
  %vm55 = vcmask 15360
  %56 = vst.msk [vmem:[%s3] sm:$0xff] %vm55, %v54
  // Predicated region
  $region14: #{ssam_forward.15} parent=0 // pred_check
    _
  $region15: #{ssam_forward.15} parent=0 // pred_check_branch
    %58 = sbr.rel (0) target = $region17
  $region16: #{ssam_forward.15} parent=0 // pred_region
    _
  $region17: #{ssam_forward.15} parent=0 // pred_fallthru
    _
  // Predicated region
  $region18: #{ssam_forward.15} parent=0 // pred_check
    _
  $region19: #{ssam_forward.15} parent=0 // pred_check_branch
    %60 = sbr.rel (0) target = $region21
  $region20: #{ssam_forward.15} parent=0 // pred_region
    _
  $region21: #{ssam_forward.15} parent=0 // pred_fallthru
    _

// kernel: ssam_forward.18
$region0: #{ssam_forward.18}
  #allocation0 [shape = 'u32[]', space=smem, size = 0x4, offset = 0x4, fixed_abs, tag = 'smem constant byte address 0x4 - core index']
  #allocation1 [shape = 'u32[72,128]{1,0:T(1,128)}', space=vmem, size = 0x9000, scoped, tag = 'internal scratch']
  %s0 = inlined_call_operand.vmem [shape: f32[8,512], index: 0, kind: input, shape index: {}]
  %s1 = inlined_call_operand.vmem [shape: f32[8,512], index: 1, kind: input, shape index: {}]
  %s2 = inlined_call_operand.vmem [shape: f32[32,512], index: 2, kind: input, shape index: {}]
  %s3 = inlined_call_operand.vmem [shape: f32[8,8], index: 3, kind: input, shape index: {}]
  %s4 = inlined_call_operand.vmem [shape: f32[8,1], index: 4, kind: input, shape index: {}]
  %s5 = inlined_call_operand.vmem [shape: f32[32,8], index: 5, kind: input, shape index: {}]
  %s6 = inlined_call_operand.vmem [shape: f32[32,1], index: 6, kind: input, shape index: {}]
  %s7 = inlined_call_operand.vmem [shape: f32[32,512], index: 7, kind: output, shape index: {}]
  %s8 = sld [smem:[#allocation0]]
  $region103: #{ssam_forward.18} parent=0
    _
  %s10 = ssub.s32 1, %s8
  %s11 = scalar_select 0, %s10, %s8
  $region1: #{ssam_forward.18} parent=0
    #allocation2 [shape = 'u8[65536]{0}', space=vmem, size = 0x10000, scoped, tag = 'input window, operand 2']
    #allocation3 [shape = 'u8[65536]{0}', space=vmem, size = 0x10000, scoped, tag = 'output window, operand 0']
    loop: start=0, step=1, limit=4
    $region2: #{ssam_forward.18} parent=1 // loop_pre_header
      _
    $region3: #{ssam_forward.18} parent=1 // loop_header
      %s13 = sphi 0, %s17
      %p14 = scmp.ge.s32.totalorder %s13, 4
      %s23 = sphi 0, %s25
      %s26 = sphi 0, %s23
      %s27 = sphi 0, %s26
      %s43 = sphi 0, %s27
      %s49 = sphi 0, %s51
      %s52 = sphi 0, %s49
      %s53 = sphi 0, %s52
      %s69 = sphi 0, %s53
      %s75 = sphi 0, %s77
      %s78 = sphi 0, %s75
      %s79 = sphi 0, %s78
      %s95 = sphi 0, %s79
      %s99 = sphi 0, %s99
      %s101 = sphi 0, %s99
      %s102 = sphi 0, %s101
      %s116 = sphi 0, %s102
      %s120 = sphi 0, %s120
      %s122 = sphi 0, %s120
      %s123 = sphi 0, %s122
      %s137 = sphi 0, %s123
      %s141 = sphi 0, %s141
      %s143 = sphi 0, %s141
      %s144 = sphi 0, %s143
      %s158 = sphi 0, %s144
      %s162 = sphi 0, %s162
      %s164 = sphi 0, %s162
      %s165 = sphi 0, %s164
      %s179 = sphi 0, %s165
      %s185 = sphi 0, %s187
      %s188 = sphi 0, %s185
      %s189 = sphi 0, %s188
      %s205 = sphi 0, %s189
    $region4: #{ssam_forward.18} parent=1 // loop_header_branch
      %16 = sbr.rel (%p14) target = $region8
    $region5: #{ssam_forward.18} parent=1 // loop_body
      %s18 = ssub.s32 %s13, 1
      %s19 = ssub.s32 %s13, 2
      %s20 = sadd.s32 %s13, 1
      %s21 = ssub.s32 %s13, %s20
      %p22 = scmp.eq.s32.totalorder %s21, 0
      %s24 = sadd.s32 %s23, 1
      %s25 = scalar_select %p22, %s23, %s24
      %p28 = pneg %p22
      %p29 = scmp.eq.s32.totalorder %s13, 1
      %p30 = por %p28, %p29
      %p31 = scmp.ne.s32.totalorder %s23, %s26
      %p32 = scmp.eq.s32.totalorder %s13, 0
      %p33 = por %p31, %p32
      %p34 = scmp.ne.s32.totalorder %s23, %s26
      %p35 = scmp.eq.s32.totalorder %s18, 1
      %p36 = por %p34, %p35
      %p37 = scmp.ne.s32.totalorder %s26, %s27
      %p38 = scmp.eq.s32.totalorder %s18, 0
      %p39 = por %p37, %p38
      %p40 = scmp.ne.s32.totalorder %s26, %s27
      %p41 = scmp.eq.s32.totalorder %s19, 1
      %p42 = por %p40, %p41
      %p44 = scmp.ne.s32.totalorder %s27, %s43
      %p45 = scmp.eq.s32.totalorder %s19, 0
      %p46 = por %p44, %p45
      %s47 = ssub.s32 %s13, %s20
      %p48 = scmp.eq.s32.totalorder %s47, 0
      %s50 = sadd.s32 %s49, 1
      %s51 = scalar_select %p48, %s49, %s50
      %p54 = pneg %p48
      %p55 = scmp.eq.s32.totalorder %s13, 1
      %p56 = por %p54, %p55
      %p57 = scmp.ne.s32.totalorder %s49, %s52
      %p58 = scmp.eq.s32.totalorder %s13, 0
      %p59 = por %p57, %p58
      %p60 = scmp.ne.s32.totalorder %s49, %s52
      %p61 = scmp.eq.s32.totalorder %s18, 1
      %p62 = por %p60, %p61
      %p63 = scmp.ne.s32.totalorder %s52, %s53
      %p64 = scmp.eq.s32.totalorder %s18, 0
      %p65 = por %p63, %p64
      %p66 = scmp.ne.s32.totalorder %s52, %s53
      %p67 = scmp.eq.s32.totalorder %s19, 1
      %p68 = por %p66, %p67
      %p70 = scmp.ne.s32.totalorder %s53, %s69
      %p71 = scmp.eq.s32.totalorder %s19, 0
      %p72 = por %p70, %p71
      %s73 = ssub.s32 %s13, %s20
      %p74 = scmp.eq.s32.totalorder %s73, 0
      %s76 = sadd.s32 %s75, 1
      %s77 = scalar_select %p74, %s75, %s76
      %p80 = pneg %p74
      %p81 = scmp.eq.s32.totalorder %s13, 1
      %p82 = por %p80, %p81
      %p83 = scmp.ne.s32.totalorder %s75, %s78
      %p84 = scmp.eq.s32.totalorder %s13, 0
      %p85 = por %p83, %p84
      %p86 = scmp.ne.s32.totalorder %s75, %s78
      %p87 = scmp.eq.s32.totalorder %s18, 1
      %p88 = por %p86, %p87
      %p89 = scmp.ne.s32.totalorder %s78, %s79
      %p90 = scmp.eq.s32.totalorder %s18, 0
      %p91 = por %p89, %p90
      %p92 = scmp.ne.s32.totalorder %s78, %s79
      %p93 = scmp.eq.s32.totalorder %s19, 1
      %p94 = por %p92, %p93
      %p96 = scmp.ne.s32.totalorder %s79, %s95
      %p97 = scmp.eq.s32.totalorder %s19, 0
      %p98 = por %p96, %p97
      %s100 = sadd.s32 %s99, 1
      %p103 = scmp.eq.s32.totalorder %s13, 1
      %p104 = scmp.ne.s32.totalorder %s99, %s101
      %p105 = scmp.eq.s32.totalorder %s13, 0
      %p106 = por %p104, %p105
      %p107 = scmp.ne.s32.totalorder %s99, %s101
      %p108 = scmp.eq.s32.totalorder %s18, 1
      %p109 = por %p107, %p108
      %p110 = scmp.ne.s32.totalorder %s101, %s102
      %p111 = scmp.eq.s32.totalorder %s18, 0
      %p112 = por %p110, %p111
      %p113 = scmp.ne.s32.totalorder %s101, %s102
      %p114 = scmp.eq.s32.totalorder %s19, 1
      %p115 = por %p113, %p114
      %p117 = scmp.ne.s32.totalorder %s102, %s116
      %p118 = scmp.eq.s32.totalorder %s19, 0
      %p119 = por %p117, %p118
      %s121 = sadd.s32 %s120, 1
      %p124 = scmp.eq.s32.totalorder %s13, 1
      %p125 = scmp.ne.s32.totalorder %s120, %s122
      %p126 = scmp.eq.s32.totalorder %s13, 0
      %p127 = por %p125, %p126
      %p128 = scmp.ne.s32.totalorder %s120, %s122
      %p129 = scmp.eq.s32.totalorder %s18, 1
      %p130 = por %p128, %p129
      %p131 = scmp.ne.s32.totalorder %s122, %s123
      %p132 = scmp.eq.s32.totalorder %s18, 0
      %p133 = por %p131, %p132
      %p134 = scmp.ne.s32.totalorder %s122, %s123
      %p135 = scmp.eq.s32.totalorder %s19, 1
      %p136 = por %p134, %p135
      %p138 = scmp.ne.s32.totalorder %s123, %s137
      %p139 = scmp.eq.s32.totalorder %s19, 0
      %p140 = por %p138, %p139
      %s142 = sadd.s32 %s141, 1
      %p145 = scmp.eq.s32.totalorder %s13, 1
      %p146 = scmp.ne.s32.totalorder %s141, %s143
      %p147 = scmp.eq.s32.totalorder %s13, 0
      %p148 = por %p146, %p147
      %p149 = scmp.ne.s32.totalorder %s141, %s143
      %p150 = scmp.eq.s32.totalorder %s18, 1
      %p151 = por %p149, %p150
      %p152 = scmp.ne.s32.totalorder %s143, %s144
      %p153 = scmp.eq.s32.totalorder %s18, 0
      %p154 = por %p152, %p153
      %p155 = scmp.ne.s32.totalorder %s143, %s144
      %p156 = scmp.eq.s32.totalorder %s19, 1
      %p157 = por %p155, %p156
      %p159 = scmp.ne.s32.totalorder %s144, %s158
      %p160 = scmp.eq.s32.totalorder %s19, 0
      %p161 = por %p159, %p160
      %s163 = sadd.s32 %s162, 1
      %p166 = scmp.eq.s32.totalorder %s13, 1
      %p167 = scmp.ne.s32.totalorder %s162, %s164
      %p168 = scmp.eq.s32.totalorder %s13, 0
      %p169 = por %p167, %p168
      %p170 = scmp.ne.s32.totalorder %s162, %s164
      %p171 = scmp.eq.s32.totalorder %s18, 1
      %p172 = por %p170, %p171
      %p173 = scmp.ne.s32.totalorder %s164, %s165
      %p174 = scmp.eq.s32.totalorder %s18, 0
      %p175 = por %p173, %p174
      %p176 = scmp.ne.s32.totalorder %s164, %s165
      %p177 = scmp.eq.s32.totalorder %s19, 1
      %p178 = por %p176, %p177
      %p180 = scmp.ne.s32.totalorder %s165, %s179
      %p181 = scmp.eq.s32.totalorder %s19, 0
      %p182 = por %p180, %p181
      %s183 = ssub.s32 %s13, %s20
      %p184 = scmp.eq.s32.totalorder %s183, 0
      %s186 = sadd.s32 %s185, 1
      %s187 = scalar_select %p184, %s185, %s186
      %p190 = pneg %p184
      %p191 = scmp.eq.s32.totalorder %s13, 1
      %p192 = por %p190, %p191
      %p193 = scmp.ne.s32.totalorder %s185, %s188
      %p194 = scmp.eq.s32.totalorder %s13, 0
      %p195 = por %p193, %p194
      %p196 = scmp.ne.s32.totalorder %s185, %s188
      %p197 = scmp.eq.s32.totalorder %s18, 1
      %p198 = por %p196, %p197
      %p199 = scmp.ne.s32.totalorder %s188, %s189
      %p200 = scmp.eq.s32.totalorder %s18, 0
      %p201 = por %p199, %p200
      %p202 = scmp.ne.s32.totalorder %s188, %s189
      %p203 = scmp.eq.s32.totalorder %s19, 1
      %p204 = por %p202, %p203
      %p206 = scmp.ne.s32.totalorder %s189, %s205
      %p207 = scmp.eq.s32.totalorder %s19, 0
      %p208 = por %p206, %p207
      %p209 = scmp.le.s32.totalorder 1, %s13
      %p210 = scmp.lt.s32.totalorder %s13, 3
      %p211 = pnand %p209, %p210
      %p212 = pneg %p211
      // Predicated region
      $region9: #{ssam_forward.18} parent=5 // pred_check
        _
      $region10: #{ssam_forward.18} parent=5 // pred_check_branch
        %214 = sbr.rel (%p211) target = $region12
      $region11: #{ssam_forward.18} parent=5 // pred_region
        %s215 = ssub.s32 %s13, 1
        // Predicated region
        $region13: #{ssam_forward.18} parent=11 // pred_check
          %p216 = pneg %p112
        $region14: #{ssam_forward.18} parent=11 // pred_check_branch
          %218 = sbr.rel (%p216) target = $region16
        $region15: #{ssam_forward.18} parent=11 // pred_region
          _
        $region16: #{ssam_forward.18} parent=11 // pred_fallthru
          _
        // Predicated region
        $region17: #{ssam_forward.18} parent=11 // pred_check
          %p219 = pneg %p133
        $region18: #{ssam_forward.18} parent=11 // pred_check_branch
          %221 = sbr.rel (%p219) target = $region20
        $region19: #{ssam_forward.18} parent=11 // pred_region
          _
        $region20: #{ssam_forward.18} parent=11 // pred_fallthru
          _
        // Predicated region
        $region21: #{ssam_forward.18} parent=11 // pred_check
          %p222 = pneg %p154
        $region22: #{ssam_forward.18} parent=11 // pred_check_branch
          %224 = sbr.rel (%p222) target = $region24
        $region23: #{ssam_forward.18} parent=11 // pred_region
          _
        $region24: #{ssam_forward.18} parent=11 // pred_fallthru
          _
        // Predicated region
        $region25: #{ssam_forward.18} parent=11 // pred_check
          %p225 = pneg %p175
        $region26: #{ssam_forward.18} parent=11 // pred_check_branch
          %227 = sbr.rel (%p225) target = $region28
        $region27: #{ssam_forward.18} parent=11 // pred_region
          _
        $region28: #{ssam_forward.18} parent=11 // pred_fallthru
          _
      $region12: #{ssam_forward.18} parent=5 // pred_fallthru
        _
      %p228 = scmp.lt.s32.totalorder %s13, 2
      // Predicated region
      $region29: #{ssam_forward.18} parent=5 // pred_check
        %p229 = pneg %p228
      $region30: #{ssam_forward.18} parent=5 // pred_check_branch
        %231 = sbr.rel (%p229) target = $region32
      $region31: #{ssam_forward.18} parent=5 // pred_region
        // Predicated region
        $region33: #{ssam_forward.18} parent=31 // pred_check
          %p232 = pneg %p33
        $region34: #{ssam_forward.18} parent=31 // pred_check_branch
          %234 = sbr.rel (%p232) target = $region36
        $region35: #{ssam_forward.18} parent=31 // pred_region
          %s235 = smul.u32 2, %s13
          %p236 = scmp.lt.s32.totalorder %s235, 3
          %s237 = scalar_select %p236, %s235, 3
          %s238 = smul.addr %s237, 8
          %s239 = scalar_lea.vmem %s0, %s238
          %s240 = smul.u32 2, %s13
        $region36: #{ssam_forward.18} parent=31 // pred_fallthru
          _
        // Predicated region
        $region37: #{ssam_forward.18} parent=31 // pred_check
          %p241 = pneg %p59
        $region38: #{ssam_forward.18} parent=31 // pred_check_branch
          %243 = sbr.rel (%p241) target = $region40
        $region39: #{ssam_forward.18} parent=31 // pred_region
          %s244 = smul.u32 2, %s13
          %p245 = scmp.lt.s32.totalorder %s244, 3
          %s246 = scalar_select %p245, %s244, 3
          %s247 = smul.addr %s246, 8
          %s248 = scalar_lea.vmem %s1, %s247
          %s249 = smul.u32 2, %s13
        $region40: #{ssam_forward.18} parent=31 // pred_fallthru
          _
        // Predicated region
        $region41: #{ssam_forward.18} parent=31 // pred_check
          %p250 = pneg %p85
        $region42: #{ssam_forward.18} parent=31 // pred_check_branch
          %252 = sbr.rel (%p250) target = $region44
        $region43: #{ssam_forward.18} parent=31 // pred_region
          %s253 = sand.u32 %s75, 1
          %s254 = sand.u32 %s75, 1
          %s255 = smul.addr %s254, 64
          %s256 = scalar_lea.vmem [#allocation2], %s255
          %s257 = smul.u32 2, %s13
          %s258 = smul.addr %s257, 8
          %s259 = scalar_lea.vmem %s2, %s258
          // Predicated region
          $region45: #{ssam_forward.18} parent=43 // pred_check
            _
          $region46: #{ssam_forward.18} parent=43 // pred_check_branch
            %261 = sbr.rel (0) target = $region48
          $region47: #{ssam_forward.18} parent=43 // pred_region
            // Predicated region
            $region49: #{ssam_forward.18} parent=47 // pred_check
              _
            $region50: #{ssam_forward.18} parent=47 // pred_check_branch
              %263 = sbr.rel (0) target = $region52
            $region51: #{ssam_forward.18} parent=47 // pred_region
              loop: start=0, step=1, limit=1
              $region53: #{ssam_forward.18} parent=51 // loop_pre_header
                _
              $region54: #{ssam_forward.18} parent=51 // loop_header
                %s265 = sphi 0, %s269
                %p266 = scmp.ge.s32.totalorder %s265, 1
                %s270 = sphi %s259, %s259
                %s271 = sphi %s256, %s256
              $region55: #{ssam_forward.18} parent=51 // loop_header_branch
                %268 = sbr.rel (%p266) target = $region59
              $region56: #{ssam_forward.18} parent=51 // loop_body
                %v272 = vld [vmem:[%s270] sm:$0xff]
                %273 = vst [vmem:[%s271] sm:$0xff] %v272
                %v274 = vld [vmem:[%s270 + $0x8] sm:$0xff]
                %275 = vst [vmem:[%s271 + $0x8] sm:$0xff] %v274
                %v276 = vld [vmem:[%s270 + $0x20] sm:$0xff]
                %277 = vst [vmem:[%s271 + $0x10] sm:$0xff] %v276
                %v278 = vld [vmem:[%s270 + $0x28] sm:$0xff]
                %279 = vst [vmem:[%s271 + $0x18] sm:$0xff] %v278
                %v280 = vld [vmem:[%s270 + $0x40] sm:$0xff]
                %281 = vst [vmem:[%s271 + $0x20] sm:$0xff] %v280
                %v282 = vld [vmem:[%s270 + $0x48] sm:$0xff]
                %283 = vst [vmem:[%s271 + $0x28] sm:$0xff] %v282
                %v284 = vld [vmem:[%s270 + $0x60] sm:$0xff]
                %285 = vst [vmem:[%s271 + $0x30] sm:$0xff] %v284
                %v286 = vld [vmem:[%s270 + $0x68] sm:$0xff]
                %287 = vst [vmem:[%s271 + $0x38] sm:$0xff] %v286
              $region57: #{ssam_forward.18} parent=51 // loop_footer
                %s269 = sadd.s32 1, %s265
              $region58: #{ssam_forward.18} parent=51 // loop_footer_branch
                %264 = sbr.rel target = $region54
              $region59: #{ssam_forward.18} parent=51 // loop_exit
                _
            $region52: #{ssam_forward.18} parent=47 // pred_fallthru
              _
            // Predicated region
            $region60: #{ssam_forward.18} parent=47 // pred_check
              _
            $region61: #{ssam_forward.18} parent=47 // pred_check_branch
              %289 = sbr.rel target = $region63
            $region62: #{ssam_forward.18} parent=47 // pred_region
              _
            $region63: #{ssam_forward.18} parent=47 // pred_fallthru
              _
          $region48: #{ssam_forward.18} parent=43 // pred_fallthru
            _
          %290 = vnop
        $region44: #{ssam_forward.18} parent=31 // pred_fallthru
          _
      $region32: #{ssam_forward.18} parent=5 // pred_fallthru
        _
      %p291 = scmp.le.s32.totalorder 1, %s13
      %p292 = scmp.lt.s32.totalorder %s13, 3
      %p293 = pnand %p291, %p292
      %p294 = pneg %p293
      // Predicated region
      $region64: #{ssam_forward.18} parent=5 // pred_check
        _
      $region65: #{ssam_forward.18} parent=5 // pred_check_branch
        %296 = sbr.rel (%p293) target = $region67
      $region66: #{ssam_forward.18} parent=5 // pred_region
        %s297 = ssub.s32 %s13, 1
        %s298 = sand.u32 %s78, 1
        %s299 = sand.u32 %s78, 1
        %s300 = smul.addr %s299, 64
        %s301 = scalar_lea.vmem [#allocation2], %s300
        // Predicated region
        $region68: #{ssam_forward.18} parent=66 // pred_check
          %p302 = pneg %p91
        $region69: #{ssam_forward.18} parent=66 // pred_check_branch
          %304 = sbr.rel (%p302) target = $region71
        $region70: #{ssam_forward.18} parent=66 // pred_region
          _
        $region71: #{ssam_forward.18} parent=66 // pred_fallthru
          _
        %s305 = smul.u32 2, %s18
        %p306 = scmp.lt.s32.totalorder %s305, 3
        %s307 = scalar_select %p306, %s305, 3
        %s308 = smul.addr %s307, 8
        %s309 = scalar_lea.vmem %s0, %s308
        %p310 = pneg %p39
        %p311 = pneg %p36
        %s312 = smul.u32 2, %s18
        %p313 = scmp.lt.s32.totalorder %s312, 3
        %s314 = scalar_select %p313, %s312, 3
        %s315 = smul.addr %s314, 8
        %s316 = scalar_lea.vmem %s1, %s315
        %p317 = pneg %p65
        %p318 = pneg %p62
        %s319 = sand.u32 %s78, 1
        %s320 = sand.u32 %s78, 1
        %s321 = smul.addr %s320, 64
        %s322 = scalar_lea.vmem [#allocation2], %s321
        %p323 = pneg %p91
        %p324 = pneg %p88
        %p325 = pneg %p112
        %p326 = pneg %p109
        %p327 = pneg %p133
        %p328 = pneg %p130
        %p329 = pneg %p154
        %p330 = pneg %p151
        %p331 = pneg %p175
        %p332 = pneg %p172
        %p333 = pneg %p201
        %p334 = pneg %p198
        %s335 = sand.u32 %s188, 1
        %s336 = sand.u32 %s188, 1
        %s337 = smul.addr %s336, 64
        %s338 = scalar_lea.vmem [#allocation3], %s337
        %s339 = smul.u32 2, %s18
        %p340 = scmp.lt.s32.totalorder %s339, 3
        %s341 = scalar_select %p340, %s339, 3
        %s342 = smul.addr %s341, 8
        %s343 = scalar_lea.vmem %s0, %s342
        %s344 = smul.u32 2, %s18
        %s345 = smul.u32 2, %s18
        %p346 = scmp.lt.s32.totalorder %s345, 3
        %s347 = scalar_select %p346, %s345, 3
        %s348 = smul.addr %s347, 8
        %s349 = scalar_lea.vmem %s1, %s348
        %s350 = smul.u32 2, %s18
        %s351 = smul.u32 2, %s18
        %s352 = smul.u32 2, %s18
        %v353 = vld [vmem:[%s3] sm:$0xff]
        %v354 = vld [vmem:[%s343] sm:$0xff]
        %v355 = vld [vmem:[%s343 + $0x8] sm:$0xff]
        %v356 = vld [vmem:[%s4] sm:$0xff]
        %358 = vset.pattern.permute.xlu0 0
        %359 = vperm.xlu0 %358, %v356
        %v360 = vpop.permute.xlu0 %359
        %vm362 = vcmask 64512
        %v364 = vsel %vm362, %v353, 0
        %366 = vmatpush.msra.mxu0 0.0
        %367 = vmatpush.msra.mxu0 0.0
        %368 = vmatpush.msra.mxu0 0.0
        %369 = vmatpush.msra.mxu0 0.0
        %370 = vmatpush.msra.mxu0 0.0
        %371 = vmatpush.msra.mxu0 0.0
        %372 = vmatpush.msra.mxu0 0.0
        %373 = vmatpush.msra.mxu0 0.0
        %374 = vmatpush.msra.mxu0 0.0
        %375 = vmatpush.msra.mxu0 0.0
        %376 = vmatpush.msra.mxu0 0.0
        %377 = vmatpush.msra.mxu0 0.0
        %378 = vmatpush.msra.mxu0 0.0
        %379 = vmatpush.msra.mxu0 0.0
        %380 = vmatpush.msra.mxu0 0.0
        %381 = vmatpush.msra.mxu0 %v354
        %382 = vmatmul.f32.gmra.mxu0 %v364
        %v383 = vpop.f32.mrf.mxu0
        %v384 = vadd.f32 %v360, %v383
        %385 = vdwg.mxu0
        %386 = vmatpush.msra.mxu0 0.0
        %387 = vmatpush.msra.mxu0 0.0
        %388 = vmatpush.msra.mxu0 0.0
        %389 = vmatpush.msra.mxu0 0.0
        %390 = vmatpush.msra.mxu0 0.0
        %391 = vmatpush.msra.mxu0 0.0
        %392 = vmatpush.msra.mxu0 0.0
        %393 = vmatpush.msra.mxu0 0.0
        %394 = vmatpush.msra.mxu0 0.0
        %395 = vmatpush.msra.mxu0 0.0
        %396 = vmatpush.msra.mxu0 0.0
        %397 = vmatpush.msra.mxu0 0.0
        %398 = vmatpush.msra.mxu0 0.0
        %399 = vmatpush.msra.mxu0 0.0
        %400 = vmatpush.msra.mxu0 0.0
        %401 = vmatpush.msra.mxu0 %v355
        %402 = vmatmul.f32.gmra.mxu0 %v364
        %v403 = vpop.f32.mrf.mxu0
        %v404 = vadd.f32 %v360, %v403
        %405 = vdwg.mxu0
        %v406 = vld [vmem:[%s5] sm:$0xff]
        %v407 = vld [vmem:[%s5 + $0x8] sm:$0xff]
        %v408 = vld [vmem:[%s5 + $0x10] sm:$0xff]
        %v409 = vld [vmem:[%s5 + $0x18] sm:$0xff]
        %v410 = vld [vmem:[%s349] sm:$0xff]
        %v411 = vld [vmem:[%s349 + $0x8] sm:$0xff]
        %v412 = vadd.f32 %v410, %v384
        %v413 = vadd.f32 %v411, %v404
        %v414 = vld [vmem:[%s6] sm:$0xff]
        %v415 = vld [vmem:[%s6 + $0x8] sm:$0xff]
        %v416 = vld [vmem:[%s6 + $0x10] sm:$0xff]
        %v417 = vld [vmem:[%s6 + $0x18] sm:$0xff]
        %419 = vset.pattern.permute.xlu0 0
        %420 = vperm.xlu0 %419, %v414
        %v421 = vpop.permute.xlu0 %420
        %424 = vset.pattern.permute.xlu0 0
        %425 = vperm.xlu0 %424, %v415
        %v426 = vpop.permute.xlu0 %425
        %429 = vset.pattern.permute.xlu0 0
        %430 = vperm.xlu0 %429, %v416
        %v431 = vpop.permute.xlu0 %430
        %434 = vset.pattern.permute.xlu0 0
        %435 = vperm.xlu0 %434, %v417
        %v436 = vpop.permute.xlu0 %435
        %v439 = vsel %vm362, %v406, 0
        %v442 = vsel %vm362, %v407, 0
        %v445 = vsel %vm362, %v408, 0
        %v448 = vsel %vm362, %v409, 0
        %450 = vmatpush.msra.mxu0 0.0
        %451 = vmatpush.msra.mxu0 0.0
        %452 = vmatpush.msra.mxu0 0.0
        %453 = vmatpush.msra.mxu0 0.0
        %454 = vmatpush.msra.mxu0 0.0
        %455 = vmatpush.msra.mxu0 0.0
        %456 = vmatpush.msra.mxu0 0.0
        %457 = vmatpush.msra.mxu0 0.0
        %458 = vmatpush.msra.mxu0 0.0
        %459 = vmatpush.msra.mxu0 0.0
        %460 = vmatpush.msra.mxu0 0.0
        %461 = vmatpush.msra.mxu0 0.0
        %462 = vmatpush.msra.mxu0 0.0
        %463 = vmatpush.msra.mxu0 0.0
        %464 = vmatpush.msra.mxu0 0.0
        %465 = vmatpush.msra.mxu0 %v412
        %466 = vmatmul.f32.gmra.mxu0 %v439
        %v467 = vpop.f32.mrf.mxu0
        %v468 = vadd.f32 %v421, %v467
        %469 = vmatmul.f32.gmra.mxu0 %v442
        %v470 = vpop.f32.mrf.mxu0
        %v471 = vadd.f32 %v426, %v470
        %472 = vmatmul.f32.gmra.mxu0 %v445
        %v473 = vpop.f32.mrf.mxu0
        %v474 = vadd.f32 %v431, %v473
        %475 = vmatmul.f32.gmra.mxu0 %v448
        %v476 = vpop.f32.mrf.mxu0
        %v477 = vadd.f32 %v436, %v476
        %478 = vdwg.mxu0
        %479 = vmatpush.msra.mxu0 0.0
        %480 = vmatpush.msra.mxu0 0.0
        %481 = vmatpush.msra.mxu0 0.0
        %482 = vmatpush.msra.mxu0 0.0
        %483 = vmatpush.msra.mxu0 0.0
        %484 = vmatpush.msra.mxu0 0.0
        %485 = vmatpush.msra.mxu0 0.0
        %486 = vmatpush.msra.mxu0 0.0
        %487 = vmatpush.msra.mxu0 0.0
        %488 = vmatpush.msra.mxu0 0.0
        %489 = vmatpush.msra.mxu0 0.0
        %490 = vmatpush.msra.mxu0 0.0
        %491 = vmatpush.msra.mxu0 0.0
        %492 = vmatpush.msra.mxu0 0.0
        %493 = vmatpush.msra.mxu0 0.0
        %494 = vmatpush.msra.mxu0 %v413
        %495 = vmatmul.f32.gmra.mxu0 %v439
        %v496 = vpop.f32.mrf.mxu0
        %v497 = vadd.f32 %v421, %v496
        %498 = vmatmul.f32.gmra.mxu0 %v442
        %v499 = vpop.f32.mrf.mxu0
        %v500 = vadd.f32 %v426, %v499
        %501 = vmatmul.f32.gmra.mxu0 %v445
        %v502 = vpop.f32.mrf.mxu0
        %v503 = vadd.f32 %v431, %v502
        %504 = vmatmul.f32.gmra.mxu0 %v448
        %v505 = vpop.f32.mrf.mxu0
        %v506 = vadd.f32 %v436, %v505
        %507 = vdwg.mxu0
        %v508 = vand.u32 2147483647, %v468
        %v509 = vand.u32 2147483647, %v497
        %v510 = vand.u32 2147483647, %v471
        %v511 = vand.u32 2147483647, %v500
        %v512 = vand.u32 2147483647, %v474
        %v513 = vand.u32 2147483647, %v503
        %v514 = vand.u32 2147483647, %v477
        %v515 = vand.u32 2147483647, %v506
        %v516 = vsub.f32 0.0, %v508
        %v517 = vsub.f32 0.0, %v509
        %v518 = vsub.f32 0.0, %v510
        %v519 = vsub.f32 0.0, %v511
        %v520 = vsub.f32 0.0, %v512
        %v521 = vsub.f32 0.0, %v513
        %v522 = vsub.f32 0.0, %v514
        %v523 = vsub.f32 0.0, %v515
        %v524 = vmul.f32 %v516, 1.442695
        %v525 = vpow.pop %v524
        %v526 = vmul.f32 %v517, 1.442695
        %v527 = vpow.pop %v526
        %v528 = vmul.f32 %v518, 1.442695
        %v529 = vpow.pop %v528
        %v530 = vmul.f32 %v519, 1.442695
        %v531 = vpow.pop %v530
        %v532 = vmul.f32 %v520, 1.442695
        %v533 = vpow.pop %v532
        %v534 = vmul.f32 %v521, 1.442695
        %v535 = vpow.pop %v534
        %v536 = vmul.f32 %v522, 1.442695
        %v537 = vpow.pop %v536
        %v538 = vmul.f32 %v523, 1.442695
        %v539 = vpow.pop %v538
        %vm540 = vcmp.ge.f32.partialorder %v468, 0.0
        %vm541 = vcmp.ge.f32.partialorder %v497, 0.0
        %vm542 = vcmp.ge.f32.partialorder %v471, 0.0
        %vm543 = vcmp.ge.f32.partialorder %v500, 0.0
        %vm544 = vcmp.ge.f32.partialorder %v474, 0.0
        %vm545 = vcmp.ge.f32.partialorder %v503, 0.0
        %vm546 = vcmp.ge.f32.partialorder %v477, 0.0
        %vm547 = vcmp.ge.f32.partialorder %v506, 0.0
        %v548 = vadd.f32 %v525, 1.0
        %v549 = vadd.f32 %v527, 1.0
        %v550 = vadd.f32 %v529, 1.0
        %v551 = vadd.f32 %v531, 1.0
        %v552 = vadd.f32 %v533, 1.0
        %v553 = vadd.f32 %v535, 1.0
        %v554 = vadd.f32 %v537, 1.0
        %v555 = vadd.f32 %v539, 1.0
        %v556 = vrcp.pop %v548
        %v557 = vmul.f32 %v548, %v556
        %v558 = vsub.f32 1.0, %v557
        %v559 = vmul.f32 %v556, %v558
        %v560 = vadd.f32 %v556, %v559
        %vm561 = vweird.f32 %v548
        %vm562 = vweird.f32 %v556
        %vm563 = vmor %vm561, %vm562
        %v564 = vsel %vm563, %v556, %v560
        %v565 = vand.u32 2147483647, %v548
        %vm566 = vcmp.eq.f32.partialorder %v565, 8.507059e+37
        %v567 = vand.u32 %v548, 2147483648
        %v568 = vor.u32 1.1754944e-38, %v567
        %v569 = vsel %vm566, %v568, %v564
        %v570 = vmul.f32 1.0, %v569
        %v571 = vrcp.pop %v549
        %v572 = vmul.f32 %v549, %v571
        %v573 = vsub.f32 1.0, %v572
        %v574 = vmul.f32 %v571, %v573
        %v575 = vadd.f32 %v571, %v574
        %vm576 = vweird.f32 %v549
        %vm577 = vweird.f32 %v571
        %vm578 = vmor %vm576, %vm577
        %v579 = vsel %vm578, %v571, %v575
        %v580 = vand.u32 2147483647, %v549
        %vm581 = vcmp.eq.f32.partialorder %v580, 8.507059e+37
        %v582 = vand.u32 %v549, 2147483648
        %v583 = vor.u32 1.1754944e-38, %v582
        %v584 = vsel %vm581, %v583, %v579
        %v585 = vmul.f32 1.0, %v584
        %v586 = vrcp.pop %v550
        %v587 = vmul.f32 %v550, %v586
        %v588 = vsub.f32 1.0, %v587
        %v589 = vmul.f32 %v586, %v588
        %v590 = vadd.f32 %v586, %v589
        %vm591 = vweird.f32 %v550
        %vm592 = vweird.f32 %v586
        %vm593 = vmor %vm591, %vm592
        %v594 = vsel %vm593, %v586, %v590
        %v595 = vand.u32 2147483647, %v550
        %vm596 = vcmp.eq.f32.partialorder %v595, 8.507059e+37
        %v597 = vand.u32 %v550, 2147483648
        %v598 = vor.u32 1.1754944e-38, %v597
        %v599 = vsel %vm596, %v598, %v594
        %v600 = vmul.f32 1.0, %v599
        %v601 = vrcp.pop %v551
        %v602 = vmul.f32 %v551, %v601
        %v603 = vsub.f32 1.0, %v602
        %v604 = vmul.f32 %v601, %v603
        %v605 = vadd.f32 %v601, %v604
        %vm606 = vweird.f32 %v551
        %vm607 = vweird.f32 %v601
        %vm608 = vmor %vm606, %vm607
        %v609 = vsel %vm608, %v601, %v605
        %v610 = vand.u32 2147483647, %v551
        %vm611 = vcmp.eq.f32.partialorder %v610, 8.507059e+37
        %v612 = vand.u32 %v551, 2147483648
        %v613 = vor.u32 1.1754944e-38, %v612
        %v614 = vsel %vm611, %v613, %v609
        %v615 = vmul.f32 1.0, %v614
        %v616 = vrcp.pop %v552
        %v617 = vmul.f32 %v552, %v616
        %v618 = vsub.f32 1.0, %v617
        %v619 = vmul.f32 %v616, %v618
        %v620 = vadd.f32 %v616, %v619
        %vm621 = vweird.f32 %v552
        %vm622 = vweird.f32 %v616
        %vm623 = vmor %vm621, %vm622
        %v624 = vsel %vm623, %v616, %v620
        %v625 = vand.u32 2147483647, %v552
        %vm626 = vcmp.eq.f32.partialorder %v625, 8.507059e+37
        %v627 = vand.u32 %v552, 2147483648
        %v628 = vor.u32 1.1754944e-38, %v627
        %v629 = vsel %vm626, %v628, %v624
        %v630 = vmul.f32 1.0, %v629
        %v631 = vrcp.pop %v553
        %v632 = vmul.f32 %v553, %v631
        %v633 = vsub.f32 1.0, %v632
        %v634 = vmul.f32 %v631, %v633
        %v635 = vadd.f32 %v631, %v634
        %vm636 = vweird.f32 %v553
        %vm637 = vweird.f32 %v631
        %vm638 = vmor %vm636, %vm637
        %v639 = vsel %vm638, %v631, %v635
        %v640 = vand.u32 2147483647, %v553
        %vm641 = vcmp.eq.f32.partialorder %v640, 8.507059e+37
        %v642 = vand.u32 %v553, 2147483648
        %v643 = vor.u32 1.1754944e-38, %v642
        %v644 = vsel %vm641, %v643, %v639
        %v645 = vmul.f32 1.0, %v644
        %v646 = vrcp.pop %v554
        %v647 = vmul.f32 %v554, %v646
        %v648 = vsub.f32 1.0, %v647
        %v649 = vmul.f32 %v646, %v648
        %v650 = vadd.f32 %v646, %v649
        %vm651 = vweird.f32 %v554
        %vm652 = vweird.f32 %v646
        %vm653 = vmor %vm651, %vm652
        %v654 = vsel %vm653, %v646, %v650
        %v655 = vand.u32 2147483647, %v554
        %vm656 = vcmp.eq.f32.partialorder %v655, 8.507059e+37
        %v657 = vand.u32 %v554, 2147483648
        %v658 = vor.u32 1.1754944e-38, %v657
        %v659 = vsel %vm656, %v658, %v654
        %v660 = vmul.f32 1.0, %v659
        %v661 = vrcp.pop %v555
        %v662 = vmul.f32 %v555, %v661
        %v663 = vsub.f32 1.0, %v662
        %v664 = vmul.f32 %v661, %v663
        %v665 = vadd.f32 %v661, %v664
        %vm666 = vweird.f32 %v555
        %vm667 = vweird.f32 %v661
        %vm668 = vmor %vm666, %vm667
        %v669 = vsel %vm668, %v661, %v665
        %v670 = vand.u32 2147483647, %v555
        %vm671 = vcmp.eq.f32.partialorder %v670, 8.507059e+37
        %v672 = vand.u32 %v555, 2147483648
        %v673 = vor.u32 1.1754944e-38, %v672
        %v674 = vsel %vm671, %v673, %v669
        %v675 = vmul.f32 1.0, %v674
        %v676 = vmul.f32 %v525, %v569
        %v677 = vmul.f32 %v527, %v584
        %v678 = vmul.f32 %v529, %v599
        %v679 = vmul.f32 %v531, %v614
        %v680 = vmul.f32 %v533, %v629
        %v681 = vmul.f32 %v535, %v644
        %v682 = vmul.f32 %v537, %v659
        %v683 = vmul.f32 %v539, %v674
        %v684 = vsel %vm540, %v570, %v676
        %v685 = vsel %vm541, %v585, %v677
        %v686 = vsel %vm542, %v600, %v678
        %v687 = vsel %vm543, %v615, %v679
        %v688 = vsel %vm544, %v630, %v680
        %v689 = vsel %vm545, %v645, %v681
        %v690 = vsel %vm546, %v660, %v682
        %v691 = vsel %vm547, %v675, %v683
        %v692 = vld [vmem:[%s301] sm:$0xff]
        %v693 = vld [vmem:[%s301 + $0x8] sm:$0xff]
        %v694 = vld [vmem:[%s301 + $0x10] sm:$0xff]
        %v695 = vld [vmem:[%s301 + $0x18] sm:$0xff]
        %v696 = vld [vmem:[%s301 + $0x20] sm:$0xff]
        %v697 = vld [vmem:[%s301 + $0x28] sm:$0xff]
        %v698 = vld [vmem:[%s301 + $0x30] sm:$0xff]
        %v699 = vld [vmem:[%s301 + $0x38] sm:$0xff]
        %v700 = vsub.f32 %v684, 1.0
        %v701 = vsub.f32 %v685, 1.0
        %v702 = vsub.f32 %v686, 1.0
        %v703 = vsub.f32 %v687, 1.0
        %v704 = vsub.f32 %v688, 1.0
        %v705 = vsub.f32 %v689, 1.0
        %v706 = vsub.f32 %v690, 1.0
        %v707 = vsub.f32 %v691, 1.0
        %v708 = vmul.f32 %v692, %v700
        %v709 = vmul.f32 %v693, %v701
        %v710 = vmul.f32 %v694, %v702
        %v711 = vmul.f32 %v695, %v703
        %v712 = vmul.f32 %v696, %v704
        %v713 = vmul.f32 %v697, %v705
        %v714 = vmul.f32 %v698, %v706
        %v715 = vmul.f32 %v699, %v707
        %716 = vst [vmem:[%s338] sm:$0xff] %v708
        %717 = vst [vmem:[%s338 + $0x8] sm:$0xff] %v709
        %718 = vst [vmem:[%s338 + $0x10] sm:$0xff] %v710
        %719 = vst [vmem:[%s338 + $0x18] sm:$0xff] %v711
        %720 = vst [vmem:[%s338 + $0x20] sm:$0xff] %v712
        %721 = vst [vmem:[%s338 + $0x28] sm:$0xff] %v713
        %722 = vst [vmem:[%s338 + $0x30] sm:$0xff] %v714
        %723 = vst [vmem:[%s338 + $0x38] sm:$0xff] %v715
        %s724 = sand.u32 %s188, 1
        %s725 = sand.u32 %s188, 1
        %s726 = smul.addr %s725, 64
        %s727 = scalar_lea.vmem [#allocation3], %s726
        // Predicated region
        $region72: #{ssam_forward.18} parent=66 // pred_check
          %p728 = pneg %p198
        $region73: #{ssam_forward.18} parent=66 // pred_check_branch
          %730 = sbr.rel (%p728) target = $region75
        $region74: #{ssam_forward.18} parent=66 // pred_region
          %s731 = smul.u32 2, %s18
          %s732 = smul.addr %s731, 8
          %s733 = scalar_lea.vmem %s7, %s732
          // Predicated region
          $region76: #{ssam_forward.18} parent=74 // pred_check
            _
          $region77: #{ssam_forward.18} parent=74 // pred_check_branch
            %735 = sbr.rel (0) target = $region79
          $region78: #{ssam_forward.18} parent=74 // pred_region
            // Predicated region
            $region80: #{ssam_forward.18} parent=78 // pred_check
              _
            $region81: #{ssam_forward.18} parent=78 // pred_check_branch
              %737 = sbr.rel (0) target = $region83
            $region82: #{ssam_forward.18} parent=78 // pred_region
              loop: start=0, step=1, limit=1
              $region84: #{ssam_forward.18} parent=82 // loop_pre_header
                _
              $region85: #{ssam_forward.18} parent=82 // loop_header
                %s739 = sphi 0, %s743
                %p740 = scmp.ge.s32.totalorder %s739, 1
                %s744 = sphi %s727, %s727
                %s745 = sphi %s733, %s733
              $region86: #{ssam_forward.18} parent=82 // loop_header_branch
                %742 = sbr.rel (%p740) target = $region90
              $region87: #{ssam_forward.18} parent=82 // loop_body
                %v746 = vld [vmem:[%s744] sm:$0xff]
                %747 = vst [vmem:[%s745] sm:$0xff] %v746
                %v748 = vld [vmem:[%s744 + $0x8] sm:$0xff]
                %749 = vst [vmem:[%s745 + $0x8] sm:$0xff] %v748
                %v750 = vld [vmem:[%s744 + $0x10] sm:$0xff]
                %751 = vst [vmem:[%s745 + $0x20] sm:$0xff] %v750
                %v752 = vld [vmem:[%s744 + $0x18] sm:$0xff]
                %753 = vst [vmem:[%s745 + $0x28] sm:$0xff] %v752
                %v754 = vld [vmem:[%s744 + $0x20] sm:$0xff]
                %755 = vst [vmem:[%s745 + $0x40] sm:$0xff] %v754
                %v756 = vld [vmem:[%s744 + $0x28] sm:$0xff]
                %757 = vst [vmem:[%s745 + $0x48] sm:$0xff] %v756
                %v758 = vld [vmem:[%s744 + $0x30] sm:$0xff]
                %759 = vst [vmem:[%s745 + $0x60] sm:$0xff] %v758
                %v760 = vld [vmem:[%s744 + $0x38] sm:$0xff]
                %761 = vst [vmem:[%s745 + $0x68] sm:$0xff] %v760
              $region88: #{ssam_forward.18} parent=82 // loop_footer
                %s743 = sadd.s32 1, %s739
              $region89: #{ssam_forward.18} parent=82 // loop_footer_branch
                %738 = sbr.rel target = $region85
              $region90: #{ssam_forward.18} parent=82 // loop_exit
                _
            $region83: #{ssam_forward.18} parent=78 // pred_fallthru
              _
            // Predicated region
            $region91: #{ssam_forward.18} parent=78 // pred_check
              _
            $region92: #{ssam_forward.18} parent=78 // pred_check_branch
              %763 = sbr.rel target = $region94
            $region93: #{ssam_forward.18} parent=78 // pred_region
              _
            $region94: #{ssam_forward.18} parent=78 // pred_fallthru
              _
          $region79: #{ssam_forward.18} parent=74 // pred_fallthru
            _
          %764 = vnop
        $region75: #{ssam_forward.18} parent=66 // pred_fallthru
          _
      $region67: #{ssam_forward.18} parent=5 // pred_fallthru
        _
      %p765 = scmp.le.s32.totalorder 2, %s13
      // Predicated region
      $region95: #{ssam_forward.18} parent=5 // pred_check
        %p766 = pneg %p765
      $region96: #{ssam_forward.18} parent=5 // pred_check_branch
        %768 = sbr.rel (%p766) target = $region98
      $region97: #{ssam_forward.18} parent=5 // pred_region
        %s769 = ssub.s32 %s13, 2
        // Predicated region
        $region99: #{ssam_forward.18} parent=97 // pred_check
          %p770 = pneg %p204
        $region100: #{ssam_forward.18} parent=97 // pred_check_branch
          %772 = sbr.rel (%p770) target = $region102
        $region101: #{ssam_forward.18} parent=97 // pred_region
          %s773 = sand.u32 %s189, 1
          %s774 = sand.u32 %s189, 1
          %s775 = smul.addr %s774, 64
          %s776 = scalar_lea.vmem [#allocation3], %s775
        $region102: #{ssam_forward.18} parent=97 // pred_fallthru
          _
      $region98: #{ssam_forward.18} parent=5 // pred_fallthru
        _
    $region6: #{ssam_forward.18} parent=1 // loop_footer
      %s17 = sadd.s32 1, %s13
    $region7: #{ssam_forward.18} parent=1 // loop_footer_branch
      %12 = sbr.rel target = $region3
    $region8: #{ssam_forward.18} parent=1 // loop_exit
      _

// kernel: ssam_forward.19
$region0: #{ssam_forward.19}
  #allocation0 [shape = 'u32[]', space=smem, size = 0x4, offset = 0x4, fixed_abs, tag = 'smem constant byte address 0x4 - core index']
  #allocation1 [shape = 'u32[72,128]{1,0:T(1,128)}', space=vmem, size = 0x9000, scoped, tag = 'internal scratch']
  %s0 = inlined_call_operand.vmem [shape: f32[32,512], index: 0, kind: input, shape index: {}]
  %s1 = inlined_call_operand.vmem [shape: f32[32,512], index: 1, kind: input, shape index: {}]
  %s2 = inlined_call_operand.vmem [shape: f32[9,32,512], index: 2, kind: input, shape index: {}]
  %s3 = inlined_call_operand.vmem [shape: f32[32,32], index: 3, kind: input, shape index: {}]
  %s4 = inlined_call_operand.vmem [shape: f32[32,1], index: 4, kind: input, shape index: {}]
  %s5 = inlined_call_operand.vmem [shape: f32[9,32,1], index: 5, kind: input, shape index: {}]
  %s6 = inlined_call_operand.vmem [shape: f32[32,1], index: 6, kind: input, shape index: {}]
  %s7 = inlined_call_operand.vmem [shape: f32[32,512], index: 7, kind: output, shape index: {}]
  %s8 = sld [smem:[#allocation0]]
  $region149: #{ssam_forward.19} parent=0
    _
  %s10 = ssub.s32 1, %s8
  %s11 = scalar_select 0, %s10, %s8
  $region1: #{ssam_forward.19} parent=0
    #allocation2 [shape = 'u8[65536]{0}', space=vmem, size = 0x10000, scoped, tag = 'input window, operand 0']
    #allocation3 [shape = 'u8[65536]{0}', space=vmem, size = 0x10000, scoped, tag = 'input window, operand 1']
    #allocation4 [shape = 'u8[589824]{0}', space=vmem, size = 0x90000, scoped, tag = 'input window, operand 2']
    #allocation5 [shape = 'u8[65536]{0}', space=vmem, size = 0x10000, scoped, tag = 'output window, operand 0']
    loop: start=0, step=1, limit=4
    $region2: #{ssam_forward.19} parent=1 // loop_pre_header
      _
    $region3: #{ssam_forward.19} parent=1 // loop_header
      %s13 = sphi 0, %s17
      %p14 = scmp.ge.s32.totalorder %s13, 4
      %s23 = sphi 0, %s25
      %s26 = sphi 0, %s23
      %s27 = sphi 0, %s26
      %s43 = sphi 0, %s27
      %s49 = sphi 0, %s51
      %s52 = sphi 0, %s49
      %s53 = sphi 0, %s52
      %s69 = sphi 0, %s53
      %s75 = sphi 0, %s77
      %s78 = sphi 0, %s75
      %s79 = sphi 0, %s78
      %s95 = sphi 0, %s79
      %s99 = sphi 0, %s99
      %s101 = sphi 0, %s99
      %s102 = sphi 0, %s101
      %s116 = sphi 0, %s102
      %s120 = sphi 0, %s120
      %s122 = sphi 0, %s120
      %s123 = sphi 0, %s122
      %s137 = sphi 0, %s123
      %s141 = sphi 0, %s141
      %s143 = sphi 0, %s141
      %s144 = sphi 0, %s143
      %s158 = sphi 0, %s144
      %s162 = sphi 0, %s162
      %s164 = sphi 0, %s162
      %s165 = sphi 0, %s164
      %s179 = sphi 0, %s165
      %s185 = sphi 0, %s187
      %s188 = sphi 0, %s185
      %s189 = sphi 0, %s188
      %s205 = sphi 0, %s189
    $region4: #{ssam_forward.19} parent=1 // loop_header_branch
      %16 = sbr.rel (%p14) target = $region8
    $region5: #{ssam_forward.19} parent=1 // loop_body
      %s18 = ssub.s32 %s13, 1
      %s19 = ssub.s32 %s13, 2
      %s20 = sadd.s32 %s13, 1
      %s21 = ssub.s32 %s13, %s20
      %p22 = scmp.eq.s32.totalorder %s21, 0
      %s24 = sadd.s32 %s23, 1
      %s25 = scalar_select %p22, %s23, %s24
      %p28 = pneg %p22
      %p29 = scmp.eq.s32.totalorder %s13, 1
      %p30 = por %p28, %p29
      %p31 = scmp.ne.s32.totalorder %s23, %s26
      %p32 = scmp.eq.s32.totalorder %s13, 0
      %p33 = por %p31, %p32
      %p34 = scmp.ne.s32.totalorder %s23, %s26
      %p35 = scmp.eq.s32.totalorder %s18, 1
      %p36 = por %p34, %p35
      %p37 = scmp.ne.s32.totalorder %s26, %s27
      %p38 = scmp.eq.s32.totalorder %s18, 0
      %p39 = por %p37, %p38
      %p40 = scmp.ne.s32.totalorder %s26, %s27
      %p41 = scmp.eq.s32.totalorder %s19, 1
      %p42 = por %p40, %p41
      %p44 = scmp.ne.s32.totalorder %s27, %s43
      %p45 = scmp.eq.s32.totalorder %s19, 0
      %p46 = por %p44, %p45
      %s47 = ssub.s32 %s13, %s20
      %p48 = scmp.eq.s32.totalorder %s47, 0
      %s50 = sadd.s32 %s49, 1
      %s51 = scalar_select %p48, %s49, %s50
      %p54 = pneg %p48
      %p55 = scmp.eq.s32.totalorder %s13, 1
      %p56 = por %p54, %p55
      %p57 = scmp.ne.s32.totalorder %s49, %s52
      %p58 = scmp.eq.s32.totalorder %s13, 0
      %p59 = por %p57, %p58
      %p60 = scmp.ne.s32.totalorder %s49, %s52
      %p61 = scmp.eq.s32.totalorder %s18, 1
      %p62 = por %p60, %p61
      %p63 = scmp.ne.s32.totalorder %s52, %s53
      %p64 = scmp.eq.s32.totalorder %s18, 0
      %p65 = por %p63, %p64
      %p66 = scmp.ne.s32.totalorder %s52, %s53
      %p67 = scmp.eq.s32.totalorder %s19, 1
      %p68 = por %p66, %p67
      %p70 = scmp.ne.s32.totalorder %s53, %s69
      %p71 = scmp.eq.s32.totalorder %s19, 0
      %p72 = por %p70, %p71
      %s73 = ssub.s32 %s13, %s20
      %p74 = scmp.eq.s32.totalorder %s73, 0
      %s76 = sadd.s32 %s75, 1
      %s77 = scalar_select %p74, %s75, %s76
      %p80 = pneg %p74
      %p81 = scmp.eq.s32.totalorder %s13, 1
      %p82 = por %p80, %p81
      %p83 = scmp.ne.s32.totalorder %s75, %s78
      %p84 = scmp.eq.s32.totalorder %s13, 0
      %p85 = por %p83, %p84
      %p86 = scmp.ne.s32.totalorder %s75, %s78
      %p87 = scmp.eq.s32.totalorder %s18, 1
      %p88 = por %p86, %p87
      %p89 = scmp.ne.s32.totalorder %s78, %s79
      %p90 = scmp.eq.s32.totalorder %s18, 0
      %p91 = por %p89, %p90
      %p92 = scmp.ne.s32.totalorder %s78, %s79
      %p93 = scmp.eq.s32.totalorder %s19, 1
      %p94 = por %p92, %p93
      %p96 = scmp.ne.s32.totalorder %s79, %s95
      %p97 = scmp.eq.s32.totalorder %s19, 0
      %p98 = por %p96, %p97
      %s100 = sadd.s32 %s99, 1
      %p103 = scmp.eq.s32.totalorder %s13, 1
      %p104 = scmp.ne.s32.totalorder %s99, %s101
      %p105 = scmp.eq.s32.totalorder %s13, 0
      %p106 = por %p104, %p105
      %p107 = scmp.ne.s32.totalorder %s99, %s101
      %p108 = scmp.eq.s32.totalorder %s18, 1
      %p109 = por %p107, %p108
      %p110 = scmp.ne.s32.totalorder %s101, %s102
      %p111 = scmp.eq.s32.totalorder %s18, 0
      %p112 = por %p110, %p111
      %p113 = scmp.ne.s32.totalorder %s101, %s102
      %p114 = scmp.eq.s32.totalorder %s19, 1
      %p115 = por %p113, %p114
      %p117 = scmp.ne.s32.totalorder %s102, %s116
      %p118 = scmp.eq.s32.totalorder %s19, 0
      %p119 = por %p117, %p118
      %s121 = sadd.s32 %s120, 1
      %p124 = scmp.eq.s32.totalorder %s13, 1
      %p125 = scmp.ne.s32.totalorder %s120, %s122
      %p126 = scmp.eq.s32.totalorder %s13, 0
      %p127 = por %p125, %p126
      %p128 = scmp.ne.s32.totalorder %s120, %s122
      %p129 = scmp.eq.s32.totalorder %s18, 1
      %p130 = por %p128, %p129
      %p131 = scmp.ne.s32.totalorder %s122, %s123
      %p132 = scmp.eq.s32.totalorder %s18, 0
      %p133 = por %p131, %p132
      %p134 = scmp.ne.s32.totalorder %s122, %s123
      %p135 = scmp.eq.s32.totalorder %s19, 1
      %p136 = por %p134, %p135
      %p138 = scmp.ne.s32.totalorder %s123, %s137
      %p139 = scmp.eq.s32.totalorder %s19, 0
      %p140 = por %p138, %p139
      %s142 = sadd.s32 %s141, 1
      %p145 = scmp.eq.s32.totalorder %s13, 1
      %p146 = scmp.ne.s32.totalorder %s141, %s143
      %p147 = scmp.eq.s32.totalorder %s13, 0
      %p148 = por %p146, %p147
      %p149 = scmp.ne.s32.totalorder %s141, %s143
      %p150 = scmp.eq.s32.totalorder %s18, 1
      %p151 = por %p149, %p150
      %p152 = scmp.ne.s32.totalorder %s143, %s144
      %p153 = scmp.eq.s32.totalorder %s18, 0
      %p154 = por %p152, %p153
      %p155 = scmp.ne.s32.totalorder %s143, %s144
      %p156 = scmp.eq.s32.totalorder %s19, 1
      %p157 = por %p155, %p156
      %p159 = scmp.ne.s32.totalorder %s144, %s158
      %p160 = scmp.eq.s32.totalorder %s19, 0
      %p161 = por %p159, %p160
      %s163 = sadd.s32 %s162, 1
      %p166 = scmp.eq.s32.totalorder %s13, 1
      %p167 = scmp.ne.s32.totalorder %s162, %s164
      %p168 = scmp.eq.s32.totalorder %s13, 0
      %p169 = por %p167, %p168
      %p170 = scmp.ne.s32.totalorder %s162, %s164
      %p171 = scmp.eq.s32.totalorder %s18, 1
      %p172 = por %p170, %p171
      %p173 = scmp.ne.s32.totalorder %s164, %s165
      %p174 = scmp.eq.s32.totalorder %s18, 0
      %p175 = por %p173, %p174
      %p176 = scmp.ne.s32.totalorder %s164, %s165
      %p177 = scmp.eq.s32.totalorder %s19, 1
      %p178 = por %p176, %p177
      %p180 = scmp.ne.s32.totalorder %s165, %s179
      %p181 = scmp.eq.s32.totalorder %s19, 0
      %p182 = por %p180, %p181
      %s183 = ssub.s32 %s13, %s20
      %p184 = scmp.eq.s32.totalorder %s183, 0
      %s186 = sadd.s32 %s185, 1
      %s187 = scalar_select %p184, %s185, %s186
      %p190 = pneg %p184
      %p191 = scmp.eq.s32.totalorder %s13, 1
      %p192 = por %p190, %p191
      %p193 = scmp.ne.s32.totalorder %s185, %s188
      %p194 = scmp.eq.s32.totalorder %s13, 0
      %p195 = por %p193, %p194
      %p196 = scmp.ne.s32.totalorder %s185, %s188
      %p197 = scmp.eq.s32.totalorder %s18, 1
      %p198 = por %p196, %p197
      %p199 = scmp.ne.s32.totalorder %s188, %s189
      %p200 = scmp.eq.s32.totalorder %s18, 0
      %p201 = por %p199, %p200
      %p202 = scmp.ne.s32.totalorder %s188, %s189
      %p203 = scmp.eq.s32.totalorder %s19, 1
      %p204 = por %p202, %p203
      %p206 = scmp.ne.s32.totalorder %s189, %s205
      %p207 = scmp.eq.s32.totalorder %s19, 0
      %p208 = por %p206, %p207
      %p209 = scmp.le.s32.totalorder 1, %s13
      %p210 = scmp.lt.s32.totalorder %s13, 3
      %p211 = pnand %p209, %p210
      %p212 = pneg %p211
      // Predicated region
      $region9: #{ssam_forward.19} parent=5 // pred_check
        _
      $region10: #{ssam_forward.19} parent=5 // pred_check_branch
        %214 = sbr.rel (%p211) target = $region12
      $region11: #{ssam_forward.19} parent=5 // pred_region
        %s215 = ssub.s32 %s13, 1
        // Predicated region
        $region13: #{ssam_forward.19} parent=11 // pred_check
          %p216 = pneg %p112
        $region14: #{ssam_forward.19} parent=11 // pred_check_branch
          %218 = sbr.rel (%p216) target = $region16
        $region15: #{ssam_forward.19} parent=11 // pred_region
          _
        $region16: #{ssam_forward.19} parent=11 // pred_fallthru
          _
        // Predicated region
        $region17: #{ssam_forward.19} parent=11 // pred_check
          %p219 = pneg %p133
        $region18: #{ssam_forward.19} parent=11 // pred_check_branch
          %221 = sbr.rel (%p219) target = $region20
        $region19: #{ssam_forward.19} parent=11 // pred_region
          _
        $region20: #{ssam_forward.19} parent=11 // pred_fallthru
          _
        // Predicated region
        $region21: #{ssam_forward.19} parent=11 // pred_check
          %p222 = pneg %p154
        $region22: #{ssam_forward.19} parent=11 // pred_check_branch
          %224 = sbr.rel (%p222) target = $region24
        $region23: #{ssam_forward.19} parent=11 // pred_region
          _
        $region24: #{ssam_forward.19} parent=11 // pred_fallthru
          _
        // Predicated region
        $region25: #{ssam_forward.19} parent=11 // pred_check
          %p225 = pneg %p175
        $region26: #{ssam_forward.19} parent=11 // pred_check_branch
          %227 = sbr.rel (%p225) target = $region28
        $region27: #{ssam_forward.19} parent=11 // pred_region
          _
        $region28: #{ssam_forward.19} parent=11 // pred_fallthru
          _
      $region12: #{ssam_forward.19} parent=5 // pred_fallthru
        _
      %p228 = scmp.lt.s32.totalorder %s13, 2
      // Predicated region
      $region29: #{ssam_forward.19} parent=5 // pred_check
        %p229 = pneg %p228
      $region30: #{ssam_forward.19} parent=5 // pred_check_branch
        %231 = sbr.rel (%p229) target = $region32
      $region31: #{ssam_forward.19} parent=5 // pred_region
        // Predicated region
        $region33: #{ssam_forward.19} parent=31 // pred_check
          %p232 = pneg %p33
        $region34: #{ssam_forward.19} parent=31 // pred_check_branch
          %234 = sbr.rel (%p232) target = $region36
        $region35: #{ssam_forward.19} parent=31 // pred_region
          %s235 = sand.u32 %s23, 1
          %s236 = sand.u32 %s23, 1
          %s237 = smul.addr %s236, 64
          %s238 = scalar_lea.vmem [#allocation2], %s237
          %s239 = smul.u32 2, %s13
          %s240 = smul.addr %s239, 8
          %s241 = scalar_lea.vmem %s0, %s240
          // Predicated region
          $region37: #{ssam_forward.19} parent=35 // pred_check
            _
          $region38: #{ssam_forward.19} parent=35 // pred_check_branch
            %243 = sbr.rel (0) target = $region40
          $region39: #{ssam_forward.19} parent=35 // pred_region
            // Predicated region
            $region41: #{ssam_forward.19} parent=39 // pred_check
              _
            $region42: #{ssam_forward.19} parent=39 // pred_check_branch
              %245 = sbr.rel (0) target = $region44
            $region43: #{ssam_forward.19} parent=39 // pred_region
              loop: start=0, step=1, limit=1
              $region45: #{ssam_forward.19} parent=43 // loop_pre_header
                _
              $region46: #{ssam_forward.19} parent=43 // loop_header
                %s247 = sphi 0, %s251
                %p248 = scmp.ge.s32.totalorder %s247, 1
                %s252 = sphi %s241, %s241
                %s253 = sphi %s238, %s238
              $region47: #{ssam_forward.19} parent=43 // loop_header_branch
                %250 = sbr.rel (%p248) target = $region51
              $region48: #{ssam_forward.19} parent=43 // loop_body
                %v254 = vld [vmem:[%s252] sm:$0xff]
                %255 = vst [vmem:[%s253] sm:$0xff] %v254
                %v256 = vld [vmem:[%s252 + $0x8] sm:$0xff]
                %257 = vst [vmem:[%s253 + $0x8] sm:$0xff] %v256
                %v258 = vld [vmem:[%s252 + $0x20] sm:$0xff]
                %259 = vst [vmem:[%s253 + $0x10] sm:$0xff] %v258
                %v260 = vld [vmem:[%s252 + $0x28] sm:$0xff]
                %261 = vst [vmem:[%s253 + $0x18] sm:$0xff] %v260
                %v262 = vld [vmem:[%s252 + $0x40] sm:$0xff]
                %263 = vst [vmem:[%s253 + $0x20] sm:$0xff] %v262
                %v264 = vld [vmem:[%s252 + $0x48] sm:$0xff]
                %265 = vst [vmem:[%s253 + $0x28] sm:$0xff] %v264
                %v266 = vld [vmem:[%s252 + $0x60] sm:$0xff]
                %267 = vst [vmem:[%s253 + $0x30] sm:$0xff] %v266
                %v268 = vld [vmem:[%s252 + $0x68] sm:$0xff]
                %269 = vst [vmem:[%s253 + $0x38] sm:$0xff] %v268
              $region49: #{ssam_forward.19} parent=43 // loop_footer
                %s251 = sadd.s32 1, %s247
              $region50: #{ssam_forward.19} parent=43 // loop_footer_branch
                %246 = sbr.rel target = $region46
              $region51: #{ssam_forward.19} parent=43 // loop_exit
                _
            $region44: #{ssam_forward.19} parent=39 // pred_fallthru
              _
            // Predicated region
            $region52: #{ssam_forward.19} parent=39 // pred_check
              _
            $region53: #{ssam_forward.19} parent=39 // pred_check_branch
              %271 = sbr.rel target = $region55
            $region54: #{ssam_forward.19} parent=39 // pred_region
              _
            $region55: #{ssam_forward.19} parent=39 // pred_fallthru
              _
          $region40: #{ssam_forward.19} parent=35 // pred_fallthru
            _
          %272 = vnop
        $region36: #{ssam_forward.19} parent=31 // pred_fallthru
          _
        // Predicated region
        $region56: #{ssam_forward.19} parent=31 // pred_check
          %p273 = pneg %p59
        $region57: #{ssam_forward.19} parent=31 // pred_check_branch
          %275 = sbr.rel (%p273) target = $region59
        $region58: #{ssam_forward.19} parent=31 // pred_region
          %s276 = sand.u32 %s49, 1
          %s277 = sand.u32 %s49, 1
          %s278 = smul.addr %s277, 64
          %s279 = scalar_lea.vmem [#allocation3], %s278
          %s280 = smul.u32 2, %s13
          %s281 = smul.addr %s280, 8
          %s282 = scalar_lea.vmem %s1, %s281
          // Predicated region
          $region60: #{ssam_forward.19} parent=58 // pred_check
            _
          $region61: #{ssam_forward.19} parent=58 // pred_check_branch
            %284 = sbr.rel (0) target = $region63
          $region62: #{ssam_forward.19} parent=58 // pred_region
            // Predicated region
            $region64: #{ssam_forward.19} parent=62 // pred_check
              _
            $region65: #{ssam_forward.19} parent=62 // pred_check_branch
              %286 = sbr.rel (0) target = $region67
            $region66: #{ssam_forward.19} parent=62 // pred_region
              loop: start=0, step=1, limit=1
              $region68: #{ssam_forward.19} parent=66 // loop_pre_header
                _
              $region69: #{ssam_forward.19} parent=66 // loop_header
                %s288 = sphi 0, %s292
                %p289 = scmp.ge.s32.totalorder %s288, 1
                %s293 = sphi %s282, %s282
                %s294 = sphi %s279, %s279
              $region70: #{ssam_forward.19} parent=66 // loop_header_branch
                %291 = sbr.rel (%p289) target = $region74
              $region71: #{ssam_forward.19} parent=66 // loop_body
                %v295 = vld [vmem:[%s293] sm:$0xff]
                %296 = vst [vmem:[%s294] sm:$0xff] %v295
                %v297 = vld [vmem:[%s293 + $0x8] sm:$0xff]
                %298 = vst [vmem:[%s294 + $0x8] sm:$0xff] %v297
                %v299 = vld [vmem:[%s293 + $0x20] sm:$0xff]
                %300 = vst [vmem:[%s294 + $0x10] sm:$0xff] %v299
                %v301 = vld [vmem:[%s293 + $0x28] sm:$0xff]
                %302 = vst [vmem:[%s294 + $0x18] sm:$0xff] %v301
                %v303 = vld [vmem:[%s293 + $0x40] sm:$0xff]
                %304 = vst [vmem:[%s294 + $0x20] sm:$0xff] %v303
                %v305 = vld [vmem:[%s293 + $0x48] sm:$0xff]
                %306 = vst [vmem:[%s294 + $0x28] sm:$0xff] %v305
                %v307 = vld [vmem:[%s293 + $0x60] sm:$0xff]
                %308 = vst [vmem:[%s294 + $0x30] sm:$0xff] %v307
                %v309 = vld [vmem:[%s293 + $0x68] sm:$0xff]
                %310 = vst [vmem:[%s294 + $0x38] sm:$0xff] %v309
              $region72: #{ssam_forward.19} parent=66 // loop_footer
                %s292 = sadd.s32 1, %s288
              $region73: #{ssam_forward.19} parent=66 // loop_footer_branch
                %287 = sbr.rel target = $region69
              $region74: #{ssam_forward.19} parent=66 // loop_exit
                _
            $region67: #{ssam_forward.19} parent=62 // pred_fallthru
              _
            // Predicated region
            $region75: #{ssam_forward.19} parent=62 // pred_check
              _
            $region76: #{ssam_forward.19} parent=62 // pred_check_branch
              %312 = sbr.rel target = $region78
            $region77: #{ssam_forward.19} parent=62 // pred_region
              _
            $region78: #{ssam_forward.19} parent=62 // pred_fallthru
              _
          $region63: #{ssam_forward.19} parent=58 // pred_fallthru
            _
          %313 = vnop
        $region59: #{ssam_forward.19} parent=31 // pred_fallthru
          _
        // Predicated region
        $region79: #{ssam_forward.19} parent=31 // pred_check
          %p314 = pneg %p85
        $region80: #{ssam_forward.19} parent=31 // pred_check_branch
          %316 = sbr.rel (%p314) target = $region82
        $region81: #{ssam_forward.19} parent=31 // pred_region
          %s317 = sand.u32 %s75, 1
          %s318 = sand.u32 %s75, 1
          %s319 = smul.addr %s318, 576
          %s320 = scalar_lea.vmem [#allocation4], %s319
          %s321 = smul.u32 2, %s13
          %s322 = smul.addr %s321, 8
          %s323 = scalar_lea.vmem %s2, %s322
          // Predicated region
          $region83: #{ssam_forward.19} parent=81 // pred_check
            _
          $region84: #{ssam_forward.19} parent=81 // pred_check_branch
            %325 = sbr.rel (0) target = $region86
          $region85: #{ssam_forward.19} parent=81 // pred_region
            // Predicated region
            $region87: #{ssam_forward.19} parent=85 // pred_check
              _
            $region88: #{ssam_forward.19} parent=85 // pred_check_branch
              %327 = sbr.rel (0) target = $region90
            $region89: #{ssam_forward.19} parent=85 // pred_region
              loop: start=0, step=1, limit=1
              $region91: #{ssam_forward.19} parent=89 // loop_pre_header
                _
              $region92: #{ssam_forward.19} parent=89 // loop_header
                %s329 = sphi 0, %s333
                %p330 = scmp.ge.s32.totalorder %s329, 1
                %s334 = sphi %s323, %s323
                %s335 = sphi %s320, %s320
              $region93: #{ssam_forward.19} parent=89 // loop_header_branch
                %332 = sbr.rel (%p330) target = $region97
              $region94: #{ssam_forward.19} parent=89 // loop_body
                %v336 = vld [vmem:[%s334] sm:$0xff]
                %337 = vst [vmem:[%s335] sm:$0xff] %v336
                %v338 = vld [vmem:[%s334 + $0x8] sm:$0xff]
                %339 = vst [vmem:[%s335 + $0x8] sm:$0xff] %v338
                %v340 = vld [vmem:[%s334 + $0x20] sm:$0xff]
                %341 = vst [vmem:[%s335 + $0x10] sm:$0xff] %v340
                %v342 = vld [vmem:[%s334 + $0x28] sm:$0xff]
                %343 = vst [vmem:[%s335 + $0x18] sm:$0xff] %v342
                %v344 = vld [vmem:[%s334 + $0x40] sm:$0xff]
                %345 = vst [vmem:[%s335 + $0x20] sm:$0xff] %v344
                %v346 = vld [vmem:[%s334 + $0x48] sm:$0xff]
                %347 = vst [vmem:[%s335 + $0x28] sm:$0xff] %v346
                %v348 = vld [vmem:[%s334 + $0x60] sm:$0xff]
                %349 = vst [vmem:[%s335 + $0x30] sm:$0xff] %v348
                %v350 = vld [vmem:[%s334 + $0x68] sm:$0xff]
                %351 = vst [vmem:[%s335 + $0x38] sm:$0xff] %v350
                %v352 = vld [vmem:[%s334 + $0x80] sm:$0xff]
                %353 = vst [vmem:[%s335 + $0x40] sm:$0xff] %v352
                %v354 = vld [vmem:[%s334 + $0x88] sm:$0xff]
                %355 = vst [vmem:[%s335 + $0x48] sm:$0xff] %v354
                %v356 = vld [vmem:[%s334 + $0xa0] sm:$0xff]
                %357 = vst [vmem:[%s335 + $0x50] sm:$0xff] %v356
                %v358 = vld [vmem:[%s334 + $0xa8] sm:$0xff]
                %359 = vst [vmem:[%s335 + $0x58] sm:$0xff] %v358
                %v360 = vld [vmem:[%s334 + $0xc0] sm:$0xff]
                %361 = vst [vmem:[%s335 + $0x60] sm:$0xff] %v360
                %v362 = vld [vmem:[%s334 + $0xc8] sm:$0xff]
                %363 = vst [vmem:[%s335 + $0x68] sm:$0xff] %v362
                %v364 = vld [vmem:[%s334 + $0xe0] sm:$0xff]
                %365 = vst [vmem:[%s335 + $0x70] sm:$0xff] %v364
                %v366 = vld [vmem:[%s334 + $0xe8] sm:$0xff]
                %367 = vst [vmem:[%s335 + $0x78] sm:$0xff] %v366
                %v368 = vld [vmem:[%s334 + $0x100] sm:$0xff]
                %369 = vst [vmem:[%s335 + $0x80] sm:$0xff] %v368
                %v370 = vld [vmem:[%s334 + $0x108] sm:$0xff]
                %371 = vst [vmem:[%s335 + $0x88] sm:$0xff] %v370
                %v372 = vld [vmem:[%s334 + $0x120] sm:$0xff]
                %373 = vst [vmem:[%s335 + $0x90] sm:$0xff] %v372
                %v374 = vld [vmem:[%s334 + $0x128] sm:$0xff]
                %375 = vst [vmem:[%s335 + $0x98] sm:$0xff] %v374
                %v376 = vld [vmem:[%s334 + $0x140] sm:$0xff]
                %377 = vst [vmem:[%s335 + $0xa0] sm:$0xff] %v376
                %v378 = vld [vmem:[%s334 + $0x148] sm:$0xff]
                %379 = vst [vmem:[%s335 + $0xa8] sm:$0xff] %v378
                %v380 = vld [vmem:[%s334 + $0x160] sm:$0xff]
                %381 = vst [vmem:[%s335 + $0xb0] sm:$0xff] %v380
                %v382 = vld [vmem:[%s334 + $0x168] sm:$0xff]
                %383 = vst [vmem:[%s335 + $0xb8] sm:$0xff] %v382
                %v384 = vld [vmem:[%s334 + $0x180] sm:$0xff]
                %385 = vst [vmem:[%s335 + $0xc0] sm:$0xff] %v384
                %v386 = vld [vmem:[%s334 + $0x188] sm:$0xff]
                %387 = vst [vmem:[%s335 + $0xc8] sm:$0xff] %v386
                %v388 = vld [vmem:[%s334 + $0x1a0] sm:$0xff]
                %389 = vst [vmem:[%s335 + $0xd0] sm:$0xff] %v388
                %v390 = vld [vmem:[%s334 + $0x1a8] sm:$0xff]
                %391 = vst [vmem:[%s335 + $0xd8] sm:$0xff] %v390
                %v392 = vld [vmem:[%s334 + $0x1c0] sm:$0xff]
                %393 = vst [vmem:[%s335 + $0xe0] sm:$0xff] %v392
                %v394 = vld [vmem:[%s334 + $0x1c8] sm:$0xff]
                %395 = vst [vmem:[%s335 + $0xe8] sm:$0xff] %v394
                %v396 = vld [vmem:[%s334 + $0x1e0] sm:$0xff]
                %397 = vst [vmem:[%s335 + $0xf0] sm:$0xff] %v396
                %v398 = vld [vmem:[%s334 + $0x1e8] sm:$0xff]
                %399 = vst [vmem:[%s335 + $0xf8] sm:$0xff] %v398
                %v400 = vld [vmem:[%s334 + $0x200] sm:$0xff]
                %401 = vst [vmem:[%s335 + $0x100] sm:$0xff] %v400
                %v402 = vld [vmem:[%s334 + $0x208] sm:$0xff]
                %403 = vst [vmem:[%s335 + $0x108] sm:$0xff] %v402
                %v404 = vld [vmem:[%s334 + $0x220] sm:$0xff]
                %405 = vst [vmem:[%s335 + $0x110] sm:$0xff] %v404
                %v406 = vld [vmem:[%s334 + $0x228] sm:$0xff]
                %407 = vst [vmem:[%s335 + $0x118] sm:$0xff] %v406
                %v408 = vld [vmem:[%s334 + $0x240] sm:$0xff]
                %409 = vst [vmem:[%s335 + $0x120] sm:$0xff] %v408
                %v410 = vld [vmem:[%s334 + $0x248] sm:$0xff]
                %411 = vst [vmem:[%s335 + $0x128] sm:$0xff] %v410
                %v412 = vld [vmem:[%s334 + $0x260] sm:$0xff]
                %413 = vst [vmem:[%s335 + $0x130] sm:$0xff] %v412
                %v414 = vld [vmem:[%s334 + $0x268] sm:$0xff]
                %415 = vst [vmem:[%s335 + $0x138] sm:$0xff] %v414
                %v416 = vld [vmem:[%s334 + $0x280] sm:$0xff]
                %417 = vst [vmem:[%s335 + $0x140] sm:$0xff] %v416
                %v418 = vld [vmem:[%s334 + $0x288] sm:$0xff]
                %419 = vst [vmem:[%s335 + $0x148] sm:$0xff] %v418
                %v420 = vld [vmem:[%s334 + $0x2a0] sm:$0xff]
                %421 = vst [vmem:[%s335 + $0x150] sm:$0xff] %v420
                %v422 = vld [vmem:[%s334 + $0x2a8] sm:$0xff]
                %423 = vst [vmem:[%s335 + $0x158] sm:$0xff] %v422
                %v424 = vld [vmem:[%s334 + $0x2c0] sm:$0xff]
                %425 = vst [vmem:[%s335 + $0x160] sm:$0xff] %v424
                %v426 = vld [vmem:[%s334 + $0x2c8] sm:$0xff]
                %427 = vst [vmem:[%s335 + $0x168] sm:$0xff] %v426
                %v428 = vld [vmem:[%s334 + $0x2e0] sm:$0xff]
                %429 = vst [vmem:[%s335 + $0x170] sm:$0xff] %v428
                %v430 = vld [vmem:[%s334 + $0x2e8] sm:$0xff]
                %431 = vst [vmem:[%s335 + $0x178] sm:$0xff] %v430
                %v432 = vld [vmem:[%s334 + $0x300] sm:$0xff]
                %433 = vst [vmem:[%s335 + $0x180] sm:$0xff] %v432
                %v434 = vld [vmem:[%s334 + $0x308] sm:$0xff]
                %435 = vst [vmem:[%s335 + $0x188] sm:$0xff] %v434
                %v436 = vld [vmem:[%s334 + $0x320] sm:$0xff]
                %437 = vst [vmem:[%s335 + $0x190] sm:$0xff] %v436
                %v438 = vld [vmem:[%s334 + $0x328] sm:$0xff]
                %439 = vst [vmem:[%s335 + $0x198] sm:$0xff] %v438
                %v440 = vld [vmem:[%s334 + $0x340] sm:$0xff]
                %441 = vst [vmem:[%s335 + $0x1a0] sm:$0xff] %v440
                %v442 = vld [vmem:[%s334 + $0x348] sm:$0xff]
                %443 = vst [vmem:[%s335 + $0x1a8] sm:$0xff] %v442
                %v444 = vld [vmem:[%s334 + $0x360] sm:$0xff]
                %445 = vst [vmem:[%s335 + $0x1b0] sm:$0xff] %v444
                %v446 = vld [vmem:[%s334 + $0x368] sm:$0xff]
                %447 = vst [vmem:[%s335 + $0x1b8] sm:$0xff] %v446
                %v448 = vld [vmem:[%s334 + $0x380] sm:$0xff]
                %449 = vst [vmem:[%s335 + $0x1c0] sm:$0xff] %v448
                %v450 = vld [vmem:[%s334 + $0x388] sm:$0xff]
                %451 = vst [vmem:[%s335 + $0x1c8] sm:$0xff] %v450
                %v452 = vld [vmem:[%s334 + $0x3a0] sm:$0xff]
                %453 = vst [vmem:[%s335 + $0x1d0] sm:$0xff] %v452
                %v454 = vld [vmem:[%s334 + $0x3a8] sm:$0xff]
                %455 = vst [vmem:[%s335 + $0x1d8] sm:$0xff] %v454
                %v456 = vld [vmem:[%s334 + $0x3c0] sm:$0xff]
                %457 = vst [vmem:[%s335 + $0x1e0] sm:$0xff] %v456
                %v458 = vld [vmem:[%s334 + $0x3c8] sm:$0xff]
                %459 = vst [vmem:[%s335 + $0x1e8] sm:$0xff] %v458
                %v460 = vld [vmem:[%s334 + $0x3e0] sm:$0xff]
                %461 = vst [vmem:[%s335 + $0x1f0] sm:$0xff] %v460
                %v462 = vld [vmem:[%s334 + $0x3e8] sm:$0xff]
                %463 = vst [vmem:[%s335 + $0x1f8] sm:$0xff] %v462
                %v464 = vld [vmem:[%s334 + $0x400] sm:$0xff]
                %465 = vst [vmem:[%s335 + $0x200] sm:$0xff] %v464
                %v466 = vld [vmem:[%s334 + $0x408] sm:$0xff]
                %467 = vst [vmem:[%s335 + $0x208] sm:$0xff] %v466
                %v468 = vld [vmem:[%s334 + $0x420] sm:$0xff]
                %469 = vst [vmem:[%s335 + $0x210] sm:$0xff] %v468
                %v470 = vld [vmem:[%s334 + $0x428] sm:$0xff]
                %471 = vst [vmem:[%s335 + $0x218] sm:$0xff] %v470
                %v472 = vld [vmem:[%s334 + $0x440] sm:$0xff]
                %473 = vst [vmem:[%s335 + $0x220] sm:$0xff] %v472
                %v474 = vld [vmem:[%s334 + $0x448] sm:$0xff]
                %475 = vst [vmem:[%s335 + $0x228] sm:$0xff] %v474
                %v476 = vld [vmem:[%s334 + $0x460] sm:$0xff]
                %477 = vst [vmem:[%s335 + $0x230] sm:$0xff] %v476
                %v478 = vld [vmem:[%s334 + $0x468] sm:$0xff]
                %479 = vst [vmem:[%s335 + $0x238] sm:$0xff] %v478
              $region95: #{ssam_forward.19} parent=89 // loop_footer
                %s333 = sadd.s32 1, %s329
              $region96: #{ssam_forward.19} parent=89 // loop_footer_branch
                %328 = sbr.rel target = $region92
              $region97: #{ssam_forward.19} parent=89 // loop_exit
                _
            $region90: #{ssam_forward.19} parent=85 // pred_fallthru
              _
            // Predicated region
            $region98: #{ssam_forward.19} parent=85 // pred_check
              _
            $region99: #{ssam_forward.19} parent=85 // pred_check_branch
              %481 = sbr.rel target = $region101
            $region100: #{ssam_forward.19} parent=85 // pred_region
              _
            $region101: #{ssam_forward.19} parent=85 // pred_fallthru
              _
          $region86: #{ssam_forward.19} parent=81 // pred_fallthru
            _
          %482 = vnop
        $region82: #{ssam_forward.19} parent=31 // pred_fallthru
          _
      $region32: #{ssam_forward.19} parent=5 // pred_fallthru
        _
      %p483 = scmp.le.s32.totalorder 1, %s13
      %p484 = scmp.lt.s32.totalorder %s13, 3
      %p485 = pnand %p483, %p484
      %p486 = pneg %p485
      // Predicated region
      $region102: #{ssam_forward.19} parent=5 // pred_check
        _
      $region103: #{ssam_forward.19} parent=5 // pred_check_branch
        %488 = sbr.rel (%p485) target = $region105
      $region104: #{ssam_forward.19} parent=5 // pred_region
        %s489 = ssub.s32 %s13, 1
        %s490 = sand.u32 %s26, 1
        %s491 = sand.u32 %s26, 1
        %s492 = smul.addr %s491, 64
        %s493 = scalar_lea.vmem [#allocation2], %s492
        // Predicated region
        $region106: #{ssam_forward.19} parent=104 // pred_check
          %p494 = pneg %p39
        $region107: #{ssam_forward.19} parent=104 // pred_check_branch
          %496 = sbr.rel (%p494) target = $region109
        $region108: #{ssam_forward.19} parent=104 // pred_region
          _
        $region109: #{ssam_forward.19} parent=104 // pred_fallthru
          _
        %s497 = sand.u32 %s52, 1
        %s498 = sand.u32 %s52, 1
        %s499 = smul.addr %s498, 64
        %s500 = scalar_lea.vmem [#allocation3], %s499
        // Predicated region
        $region110: #{ssam_forward.19} parent=104 // pred_check
          %p501 = pneg %p65
        $region111: #{ssam_forward.19} parent=104 // pred_check_branch
          %503 = sbr.rel (%p501) target = $region113
        $region112: #{ssam_forward.19} parent=104 // pred_region
          _
        $region113: #{ssam_forward.19} parent=104 // pred_fallthru
          _
        %s504 = sand.u32 %s78, 1
        %s505 = sand.u32 %s78, 1
        %s506 = smul.addr %s505, 576
        %s507 = scalar_lea.vmem [#allocation4], %s506
        // Predicated region
        $region114: #{ssam_forward.19} parent=104 // pred_check
          %p508 = pneg %p91
        $region115: #{ssam_forward.19} parent=104 // pred_check_branch
          %510 = sbr.rel (%p508) target = $region117
        $region116: #{ssam_forward.19} parent=104 // pred_region
          _
        $region117: #{ssam_forward.19} parent=104 // pred_fallthru
          _
        %s511 = sand.u32 %s26, 1
        %s512 = sand.u32 %s26, 1
        %s513 = smul.addr %s512, 64
        %s514 = scalar_lea.vmem [#allocation2], %s513
        %p515 = pneg %p39
        %p516 = pneg %p36
        %s517 = sand.u32 %s52, 1
        %s518 = sand.u32 %s52, 1
        %s519 = smul.addr %s518, 64
        %s520 = scalar_lea.vmem [#allocation3], %s519
        %p521 = pneg %p65
        %p522 = pneg %p62
        %s523 = sand.u32 %s78, 1
        %s524 = sand.u32 %s78, 1
        %s525 = smul.addr %s524, 576
        %s526 = scalar_lea.vmem [#allocation4], %s525
        %p527 = pneg %p91
        %p528 = pneg %p88
        %p529 = pneg %p112
        %p530 = pneg %p109
        %p531 = pneg %p133
        %p532 = pneg %p130
        %p533 = pneg %p154
        %p534 = pneg %p151
        %p535 = pneg %p175
        %p536 = pneg %p172
        %p537 = pneg %p201
        %p538 = pneg %p198
        %s539 = sand.u32 %s188, 1
        %s540 = sand.u32 %s188, 1
        %s541 = smul.addr %s540, 64
        %s542 = scalar_lea.vmem [#allocation5], %s541
        %s543 = smul.u32 2, %s18
        %s544 = smul.u32 2, %s18
        %s545 = smul.u32 2, %s18
        %s546 = smul.u32 2, %s18
        %v547 = vld [vmem:[%s3] sm:$0xff]
        %v548 = vld [vmem:[%s3 + $0x8] sm:$0xff]
        %v549 = vld [vmem:[%s3 + $0x10] sm:$0xff]
        %v550 = vld [vmem:[%s3 + $0x18] sm:$0xff]
        %v551 = vld [vmem:[%s500] sm:$0xff]
        %v552 = vld [vmem:[%s500 + $0x8] sm:$0xff]
        %v553 = vld [vmem:[%s500 + $0x10] sm:$0xff]
        %v554 = vld [vmem:[%s500 + $0x18] sm:$0xff]
        %v555 = vld [vmem:[%s500 + $0x20] sm:$0xff]
        %v556 = vld [vmem:[%s500 + $0x28] sm:$0xff]
        %v557 = vld [vmem:[%s500 + $0x30] sm:$0xff]
        %v558 = vld [vmem:[%s500 + $0x38] sm:$0xff]
        %v559 = vld [vmem:[%s4] sm:$0xff]
        %v560 = vld [vmem:[%s4 + $0x8] sm:$0xff]
        %v561 = vld [vmem:[%s4 + $0x10] sm:$0xff]
        %v562 = vld [vmem:[%s4 + $0x18] sm:$0xff]
        %564 = vset.pattern.permute.xlu0 0
        %565 = vperm.xlu0 %564, %v559
        %v566 = vpop.permute.xlu0 %565
        %569 = vset.pattern.permute.xlu0 0
        %570 = vperm.xlu0 %569, %v560
        %v571 = vpop.permute.xlu0 %570
        %574 = vset.pattern.permute.xlu0 0
        %575 = vperm.xlu0 %574, %v561
        %v576 = vpop.permute.xlu0 %575
        %579 = vset.pattern.permute.xlu0 0
        %580 = vperm.xlu0 %579, %v562
        %v581 = vpop.permute.xlu0 %580
        %vm583 = vcmask 261120
        %v585 = vsel %vm583, %v547, 0
        %v588 = vsel %vm583, %v548, 0
        %v591 = vsel %vm583, %v549, 0
        %v594 = vsel %vm583, %v550, 0
        %596 = vmatpush.msra.mxu0 0.0
        %597 = vmatpush.msra.mxu0 0.0
        %598 = vmatpush.msra.mxu0 0.0
        %599 = vmatpush.msra.mxu0 0.0
        %600 = vmatpush.msra.mxu0 0.0
        %601 = vmatpush.msra.mxu0 0.0
        %602 = vmatpush.msra.mxu0 0.0
        %603 = vmatpush.msra.mxu0 0.0
        %604 = vmatpush.msra.mxu0 0.0
        %605 = vmatpush.msra.mxu0 0.0
        %606 = vmatpush.msra.mxu0 0.0
        %607 = vmatpush.msra.mxu0 0.0
        %608 = vmatpush.msra.mxu0 %v557
        %609 = vmatpush.msra.mxu0 %v555
        %610 = vmatpush.msra.mxu0 %v553
        %611 = vmatpush.msra.mxu0 %v551
        %612 = vmatmul.f32.gmra.mxu0 %v585
        %v613 = vpop.f32.mrf.mxu0
        %v614 = vadd.f32 %v566, %v613
        %615 = vmatmul.f32.gmra.mxu0 %v588
        %v616 = vpop.f32.mrf.mxu0
        %v617 = vadd.f32 %v571, %v616
        %618 = vmatmul.f32.gmra.mxu0 %v591
        %v619 = vpop.f32.mrf.mxu0
        %v620 = vadd.f32 %v576, %v619
        %621 = vmatmul.f32.gmra.mxu0 %v594
        %v622 = vpop.f32.mrf.mxu0
        %v623 = vadd.f32 %v581, %v622
        %624 = vdwg.mxu0
        %625 = vmatpush.msra.mxu0 0.0
        %626 = vmatpush.msra.mxu0 0.0
        %627 = vmatpush.msra.mxu0 0.0
        %628 = vmatpush.msra.mxu0 0.0
        %629 = vmatpush.msra.mxu0 0.0
        %630 = vmatpush.msra.mxu0 0.0
        %631 = vmatpush.msra.mxu0 0.0
        %632 = vmatpush.msra.mxu0 0.0
        %633 = vmatpush.msra.mxu0 0.0
        %634 = vmatpush.msra.mxu0 0.0
        %635 = vmatpush.msra.mxu0 0.0
        %636 = vmatpush.msra.mxu0 0.0
        %637 = vmatpush.msra.mxu0 %v558
        %638 = vmatpush.msra.mxu0 %v556
        %639 = vmatpush.msra.mxu0 %v554
        %640 = vmatpush.msra.mxu0 %v552
        %641 = vmatmul.f32.gmra.mxu0 %v585
        %v642 = vpop.f32.mrf.mxu0
        %v643 = vadd.f32 %v566, %v642
        %644 = vmatmul.f32.gmra.mxu0 %v588
        %v645 = vpop.f32.mrf.mxu0
        %v646 = vadd.f32 %v571, %v645
        %647 = vmatmul.f32.gmra.mxu0 %v591
        %v648 = vpop.f32.mrf.mxu0
        %v649 = vadd.f32 %v576, %v648
        %650 = vmatmul.f32.gmra.mxu0 %v594
        %v651 = vpop.f32.mrf.mxu0
        %v652 = vadd.f32 %v581, %v651
        %653 = vdwg.mxu0
        %v654 = vld [vmem:[%s507] sm:$0xff]
        %v655 = vld [vmem:[%s507 + $0x8] sm:$0xff]
        %v656 = vld [vmem:[%s507 + $0x10] sm:$0xff]
        %v657 = vld [vmem:[%s507 + $0x18] sm:$0xff]
        %v658 = vld [vmem:[%s507 + $0x20] sm:$0xff]
        %v659 = vld [vmem:[%s507 + $0x28] sm:$0xff]
        %v660 = vld [vmem:[%s507 + $0x30] sm:$0xff]
        %v661 = vld [vmem:[%s507 + $0x38] sm:$0xff]
        %v662 = vld [vmem:[%s507 + $0x40] sm:$0xff]
        %v663 = vld [vmem:[%s507 + $0x48] sm:$0xff]
        %v664 = vld [vmem:[%s507 + $0x50] sm:$0xff]
        %v665 = vld [vmem:[%s507 + $0x58] sm:$0xff]
        %v666 = vld [vmem:[%s507 + $0x60] sm:$0xff]
        %v667 = vld [vmem:[%s507 + $0x68] sm:$0xff]
        %v668 = vld [vmem:[%s507 + $0x70] sm:$0xff]
        %v669 = vld [vmem:[%s507 + $0x78] sm:$0xff]
        %v670 = vld [vmem:[%s507 + $0x80] sm:$0xff]
        %v671 = vld [vmem:[%s507 + $0x88] sm:$0xff]
        %v672 = vld [vmem:[%s507 + $0x90] sm:$0xff]
        %v673 = vld [vmem:[%s507 + $0x98] sm:$0xff]
        %v674 = vld [vmem:[%s507 + $0xa0] sm:$0xff]
        %v675 = vld [vmem:[%s507 + $0xa8] sm:$0xff]
        %v676 = vld [vmem:[%s507 + $0xb0] sm:$0xff]
        %v677 = vld [vmem:[%s507 + $0xb8] sm:$0xff]
        %v678 = vld [vmem:[%s507 + $0xc0] sm:$0xff]
        %v679 = vld [vmem:[%s507 + $0xc8] sm:$0xff]
        %v680 = vld [vmem:[%s507 + $0xd0] sm:$0xff]
        %v681 = vld [vmem:[%s507 + $0xd8] sm:$0xff]
        %v682 = vld [vmem:[%s507 + $0xe0] sm:$0xff]
        %v683 = vld [vmem:[%s507 + $0xe8] sm:$0xff]
        %v684 = vld [vmem:[%s507 + $0xf0] sm:$0xff]
        %v685 = vld [vmem:[%s507 + $0xf8] sm:$0xff]
        %v686 = vld [vmem:[%s507 + $0x100] sm:$0xff]
        %v687 = vld [vmem:[%s507 + $0x108] sm:$0xff]
        %v688 = vld [vmem:[%s507 + $0x110] sm:$0xff]
        %v689 = vld [vmem:[%s507 + $0x118] sm:$0xff]
        %v690 = vld [vmem:[%s507 + $0x120] sm:$0xff]
        %v691 = vld [vmem:[%s507 + $0x128] sm:$0xff]
        %v692 = vld [vmem:[%s507 + $0x130] sm:$0xff]
        %v693 = vld [vmem:[%s507 + $0x138] sm:$0xff]
        %v694 = vld [vmem:[%s507 + $0x140] sm:$0xff]
        %v695 = vld [vmem:[%s507 + $0x148] sm:$0xff]
        %v696 = vld [vmem:[%s507 + $0x150] sm:$0xff]
        %v697 = vld [vmem:[%s507 + $0x158] sm:$0xff]
        %v698 = vld [vmem:[%s507 + $0x160] sm:$0xff]
        %v699 = vld [vmem:[%s507 + $0x168] sm:$0xff]
        %v700 = vld [vmem:[%s507 + $0x170] sm:$0xff]
        %v701 = vld [vmem:[%s507 + $0x178] sm:$0xff]
        %v702 = vld [vmem:[%s507 + $0x180] sm:$0xff]
        %v703 = vld [vmem:[%s507 + $0x188] sm:$0xff]
        %v704 = vld [vmem:[%s507 + $0x190] sm:$0xff]
        %v705 = vld [vmem:[%s507 + $0x198] sm:$0xff]
        %v706 = vld [vmem:[%s507 + $0x1a0] sm:$0xff]
        %v707 = vld [vmem:[%s507 + $0x1a8] sm:$0xff]
        %v708 = vld [vmem:[%s507 + $0x1b0] sm:$0xff]
        %v709 = vld [vmem:[%s507 + $0x1b8] sm:$0xff]
        %v710 = vld [vmem:[%s507 + $0x1c0] sm:$0xff]
        %v711 = vld [vmem:[%s507 + $0x1c8] sm:$0xff]
        %v712 = vld [vmem:[%s507 + $0x1d0] sm:$0xff]
        %v713 = vld [vmem:[%s507 + $0x1d8] sm:$0xff]
        %v714 = vld [vmem:[%s507 + $0x1e0] sm:$0xff]
        %v715 = vld [vmem:[%s507 + $0x1e8] sm:$0xff]
        %v716 = vld [vmem:[%s507 + $0x1f0] sm:$0xff]
        %v717 = vld [vmem:[%s507 + $0x1f8] sm:$0xff]
        %v718 = vld [vmem:[%s507 + $0x200] sm:$0xff]
        %v719 = vld [vmem:[%s507 + $0x208] sm:$0xff]
        %v720 = vld [vmem:[%s507 + $0x210] sm:$0xff]
        %v721 = vld [vmem:[%s507 + $0x218] sm:$0xff]
        %v722 = vld [vmem:[%s507 + $0x220] sm:$0xff]
        %v723 = vld [vmem:[%s507 + $0x228] sm:$0xff]
        %v724 = vld [vmem:[%s507 + $0x230] sm:$0xff]
        %v725 = vld [vmem:[%s507 + $0x238] sm:$0xff]
        %v726 = vld [vmem:[%s5] sm:$0xff]
        %v727 = vld [vmem:[%s5 + $0x8] sm:$0xff]
        %v728 = vld [vmem:[%s5 + $0x10] sm:$0xff]
        %v729 = vld [vmem:[%s5 + $0x18] sm:$0xff]
        %v730 = vld [vmem:[%s5 + $0x20] sm:$0xff]
        %v731 = vld [vmem:[%s5 + $0x28] sm:$0xff]
        %v732 = vld [vmem:[%s5 + $0x30] sm:$0xff]
        %v733 = vld [vmem:[%s5 + $0x38] sm:$0xff]
        %v734 = vld [vmem:[%s5 + $0x40] sm:$0xff]
        %v735 = vld [vmem:[%s5 + $0x48] sm:$0xff]
        %v736 = vld [vmem:[%s5 + $0x50] sm:$0xff]
        %v737 = vld [vmem:[%s5 + $0x58] sm:$0xff]
        %v738 = vld [vmem:[%s5 + $0x60] sm:$0xff]
        %v739 = vld [vmem:[%s5 + $0x68] sm:$0xff]
        %v740 = vld [vmem:[%s5 + $0x70] sm:$0xff]
        %v741 = vld [vmem:[%s5 + $0x78] sm:$0xff]
        %v742 = vld [vmem:[%s5 + $0x80] sm:$0xff]
        %v743 = vld [vmem:[%s5 + $0x88] sm:$0xff]
        %v744 = vld [vmem:[%s5 + $0x90] sm:$0xff]
        %v745 = vld [vmem:[%s5 + $0x98] sm:$0xff]
        %v746 = vld [vmem:[%s5 + $0xa0] sm:$0xff]
        %v747 = vld [vmem:[%s5 + $0xa8] sm:$0xff]
        %v748 = vld [vmem:[%s5 + $0xb0] sm:$0xff]
        %v749 = vld [vmem:[%s5 + $0xb8] sm:$0xff]
        %v750 = vld [vmem:[%s5 + $0xc0] sm:$0xff]
        %v751 = vld [vmem:[%s5 + $0xc8] sm:$0xff]
        %v752 = vld [vmem:[%s5 + $0xd0] sm:$0xff]
        %v753 = vld [vmem:[%s5 + $0xd8] sm:$0xff]
        %v754 = vld [vmem:[%s5 + $0xe0] sm:$0xff]
        %v755 = vld [vmem:[%s5 + $0xe8] sm:$0xff]
        %v756 = vld [vmem:[%s5 + $0xf0] sm:$0xff]
        %v757 = vld [vmem:[%s5 + $0xf8] sm:$0xff]
        %v758 = vld [vmem:[%s5 + $0x100] sm:$0xff]
        %v759 = vld [vmem:[%s5 + $0x108] sm:$0xff]
        %v760 = vld [vmem:[%s5 + $0x110] sm:$0xff]
        %v761 = vld [vmem:[%s5 + $0x118] sm:$0xff]
        %763 = vset.pattern.permute.xlu0 0
        %764 = vperm.xlu0 %763, %v726
        %v765 = vpop.permute.xlu0 %764
        %768 = vset.pattern.permute.xlu0 0
        %769 = vperm.xlu0 %768, %v727
        %v770 = vpop.permute.xlu0 %769
        %773 = vset.pattern.permute.xlu0 0
        %774 = vperm.xlu0 %773, %v728
        %v775 = vpop.permute.xlu0 %774
        %778 = vset.pattern.permute.xlu0 0
        %779 = vperm.xlu0 %778, %v729
        %v780 = vpop.permute.xlu0 %779
        %783 = vset.pattern.permute.xlu0 0
        %784 = vperm.xlu0 %783, %v730
        %v785 = vpop.permute.xlu0 %784
        %788 = vset.pattern.permute.xlu0 0
        %789 = vperm.xlu0 %788, %v731
        %v790 = vpop.permute.xlu0 %789
        %793 = vset.pattern.permute.xlu0 0
        %794 = vperm.xlu0 %793, %v732
        %v795 = vpop.permute.xlu0 %794
        %798 = vset.pattern.permute.xlu0 0
        %799 = vperm.xlu0 %798, %v733
        %v800 = vpop.permute.xlu0 %799
        %803 = vset.pattern.permute.xlu0 0
        %804 = vperm.xlu0 %803, %v734
        %v805 = vpop.permute.xlu0 %804
        %808 = vset.pattern.permute.xlu0 0
        %809 = vperm.xlu0 %808, %v735
        %v810 = vpop.permute.xlu0 %809
        %813 = vset.pattern.permute.xlu0 0
        %814 = vperm.xlu0 %813, %v736
        %v815 = vpop.permute.xlu0 %814
        %818 = vset.pattern.permute.xlu0 0
        %819 = vperm.xlu0 %818, %v737
        %v820 = vpop.permute.xlu0 %819
        %823 = vset.pattern.permute.xlu0 0
        %824 = vperm.xlu0 %823, %v738
        %v825 = vpop.permute.xlu0 %824
        %828 = vset.pattern.permute.xlu0 0
        %829 = vperm.xlu0 %828, %v739
        %v830 = vpop.permute.xlu0 %829
        %833 = vset.pattern.permute.xlu0 0
        %834 = vperm.xlu0 %833, %v740
        %v835 = vpop.permute.xlu0 %834
        %838 = vset.pattern.permute.xlu0 0
        %839 = vperm.xlu0 %838, %v741
        %v840 = vpop.permute.xlu0 %839
        %843 = vset.pattern.permute.xlu0 0
        %844 = vperm.xlu0 %843, %v742
        %v845 = vpop.permute.xlu0 %844
        %848 = vset.pattern.permute.xlu0 0
        %849 = vperm.xlu0 %848, %v743
        %v850 = vpop.permute.xlu0 %849
        %853 = vset.pattern.permute.xlu0 0
        %854 = vperm.xlu0 %853, %v744
        %v855 = vpop.permute.xlu0 %854
        %858 = vset.pattern.permute.xlu0 0
        %859 = vperm.xlu0 %858, %v745
        %v860 = vpop.permute.xlu0 %859
        %863 = vset.pattern.permute.xlu0 0
        %864 = vperm.xlu0 %863, %v746
        %v865 = vpop.permute.xlu0 %864
        %868 = vset.pattern.permute.xlu0 0
        %869 = vperm.xlu0 %868, %v747
        %v870 = vpop.permute.xlu0 %869
        %873 = vset.pattern.permute.xlu0 0
        %874 = vperm.xlu0 %873, %v748
        %v875 = vpop.permute.xlu0 %874
        %878 = vset.pattern.permute.xlu0 0
        %879 = vperm.xlu0 %878, %v749
        %v880 = vpop.permute.xlu0 %879
        %883 = vset.pattern.permute.xlu0 0
        %884 = vperm.xlu0 %883, %v750
        %v885 = vpop.permute.xlu0 %884
        %888 = vset.pattern.permute.xlu0 0
        %889 = vperm.xlu0 %888, %v751
        %v890 = vpop.permute.xlu0 %889
        %893 = vset.pattern.permute.xlu0 0
        %894 = vperm.xlu0 %893, %v752
        %v895 = vpop.permute.xlu0 %894
        %898 = vset.pattern.permute.xlu0 0
        %899 = vperm.xlu0 %898, %v753
        %v900 = vpop.permute.xlu0 %899
        %903 = vset.pattern.permute.xlu0 0
        %904 = vperm.xlu0 %903, %v754
        %v905 = vpop.permute.xlu0 %904
        %908 = vset.pattern.permute.xlu0 0
        %909 = vperm.xlu0 %908, %v755
        %v910 = vpop.permute.xlu0 %909
        %913 = vset.pattern.permute.xlu0 0
        %914 = vperm.xlu0 %913, %v756
        %v915 = vpop.permute.xlu0 %914
        %918 = vset.pattern.permute.xlu0 0
        %919 = vperm.xlu0 %918, %v757
        %v920 = vpop.permute.xlu0 %919
        %923 = vset.pattern.permute.xlu0 0
        %924 = vperm.xlu0 %923, %v758
        %v925 = vpop.permute.xlu0 %924
        %928 = vset.pattern.permute.xlu0 0
        %929 = vperm.xlu0 %928, %v759
        %v930 = vpop.permute.xlu0 %929
        %933 = vset.pattern.permute.xlu0 0
        %934 = vperm.xlu0 %933, %v760
        %v935 = vpop.permute.xlu0 %934
        %938 = vset.pattern.permute.xlu0 0
        %939 = vperm.xlu0 %938, %v761
        %v940 = vpop.permute.xlu0 %939
        %v942 = vmul.f32 %v654, %v765
        %v943 = vmul.f32 %v655, %v765
        %v944 = vmul.f32 %v656, %v770
        %v945 = vmul.f32 %v657, %v770
        %v946 = vmul.f32 %v658, %v775
        %v947 = vmul.f32 %v659, %v775
        %v948 = vmul.f32 %v660, %v780
        %v949 = vmul.f32 %v661, %v780
        %v950 = vmul.f32 %v662, %v785
        %v951 = vmul.f32 %v663, %v785
        %v952 = vmul.f32 %v664, %v790
        %v953 = vmul.f32 %v665, %v790
        %v954 = vmul.f32 %v666, %v795
        %v955 = vmul.f32 %v667, %v795
        %v956 = vmul.f32 %v668, %v800
        %v957 = vmul.f32 %v669, %v800
        %v958 = vmul.f32 %v670, %v805
        %v959 = vmul.f32 %v671, %v805
        %v960 = vmul.f32 %v672, %v810
        %v961 = vmul.f32 %v673, %v810
        %v962 = vmul.f32 %v674, %v815
        %v963 = vmul.f32 %v675, %v815
        %v964 = vmul.f32 %v676, %v820
        %v965 = vmul.f32 %v677, %v820
        %v966 = vmul.f32 %v678, %v825
        %v967 = vmul.f32 %v679, %v825
        %v968 = vmul.f32 %v680, %v830
        %v969 = vmul.f32 %v681, %v830
        %v970 = vmul.f32 %v682, %v835
        %v971 = vmul.f32 %v683, %v835
        %v972 = vmul.f32 %v684, %v840
        %v973 = vmul.f32 %v685, %v840
        %v974 = vmul.f32 %v686, %v845
        %v975 = vmul.f32 %v687, %v845
        %v976 = vmul.f32 %v688, %v850
        %v977 = vmul.f32 %v689, %v850
        %v978 = vmul.f32 %v690, %v855
        %v979 = vmul.f32 %v691, %v855
        %v980 = vmul.f32 %v692, %v860
        %v981 = vmul.f32 %v693, %v860
        %v982 = vmul.f32 %v694, %v865
        %v983 = vmul.f32 %v695, %v865
        %v984 = vmul.f32 %v696, %v870
        %v985 = vmul.f32 %v697, %v870
        %v986 = vmul.f32 %v698, %v875
        %v987 = vmul.f32 %v699, %v875
        %v988 = vmul.f32 %v700, %v880
        %v989 = vmul.f32 %v701, %v880
        %v990 = vmul.f32 %v702, %v885
        %v991 = vmul.f32 %v703, %v885
        %v992 = vmul.f32 %v704, %v890
        %v993 = vmul.f32 %v705, %v890
        %v994 = vmul.f32 %v706, %v895
        %v995 = vmul.f32 %v707, %v895
        %v996 = vmul.f32 %v708, %v900
        %v997 = vmul.f32 %v709, %v900
        %v998 = vmul.f32 %v710, %v905
        %v999 = vmul.f32 %v711, %v905
        %v1000 = vmul.f32 %v712, %v910
        %v1001 = vmul.f32 %v713, %v910
        %v1002 = vmul.f32 %v714, %v915
        %v1003 = vmul.f32 %v715, %v915
        %v1004 = vmul.f32 %v716, %v920
        %v1005 = vmul.f32 %v717, %v920
        %v1006 = vmul.f32 %v718, %v925
        %v1007 = vmul.f32 %v719, %v925
        %v1008 = vmul.f32 %v720, %v930
        %v1009 = vmul.f32 %v721, %v930
        %v1010 = vmul.f32 %v722, %v935
        %v1011 = vmul.f32 %v723, %v935
        %v1012 = vmul.f32 %v724, %v940
        %v1013 = vmul.f32 %v725, %v940
        %v1014 = vadd.f32 %v942, %v950
        %v1015 = vadd.f32 %v1014, %v958
        %v1016 = vadd.f32 %v1015, %v966
        %v1017 = vadd.f32 %v1016, %v974
        %v1018 = vadd.f32 %v1017, %v982
        %v1019 = vadd.f32 %v1018, %v990
        %v1020 = vadd.f32 %v1019, %v998
        %v1021 = vadd.f32 %v1020, %v1006
        %v1022 = vadd.f32 %v943, %v951
        %v1023 = vadd.f32 %v1022, %v959
        %v1024 = vadd.f32 %v1023, %v967
        %v1025 = vadd.f32 %v1024, %v975
        %v1026 = vadd.f32 %v1025, %v983
        %v1027 = vadd.f32 %v1026, %v991
        %v1028 = vadd.f32 %v1027, %v999
        %v1029 = vadd.f32 %v1028, %v1007
        %v1030 = vadd.f32 %v944, %v952
        %v1031 = vadd.f32 %v1030, %v960
        %v1032 = vadd.f32 %v1031, %v968
        %v1033 = vadd.f32 %v1032, %v976
        %v1034 = vadd.f32 %v1033, %v984
        %v1035 = vadd.f32 %v1034, %v992
        %v1036 = vadd.f32 %v1035, %v1000
        %v1037 = vadd.f32 %v1036, %v1008
        %v1038 = vadd.f32 %v945, %v953
        %v1039 = vadd.f32 %v1038, %v961
        %v1040 = vadd.f32 %v1039, %v969
        %v1041 = vadd.f32 %v1040, %v977
        %v1042 = vadd.f32 %v1041, %v985
        %v1043 = vadd.f32 %v1042, %v993
        %v1044 = vadd.f32 %v1043, %v1001
        %v1045 = vadd.f32 %v1044, %v1009
        %v1046 = vadd.f32 %v946, %v954
        %v1047 = vadd.f32 %v1046, %v962
        %v1048 = vadd.f32 %v1047, %v970
        %v1049 = vadd.f32 %v1048, %v978
        %v1050 = vadd.f32 %v1049, %v986
        %v1051 = vadd.f32 %v1050, %v994
        %v1052 = vadd.f32 %v1051, %v1002
        %v1053 = vadd.f32 %v1052, %v1010
        %v1054 = vadd.f32 %v947, %v955
        %v1055 = vadd.f32 %v1054, %v963
        %v1056 = vadd.f32 %v1055, %v971
        %v1057 = vadd.f32 %v1056, %v979
        %v1058 = vadd.f32 %v1057, %v987
        %v1059 = vadd.f32 %v1058, %v995
        %v1060 = vadd.f32 %v1059, %v1003
        %v1061 = vadd.f32 %v1060, %v1011
        %v1062 = vadd.f32 %v948, %v956
        %v1063 = vadd.f32 %v1062, %v964
        %v1064 = vadd.f32 %v1063, %v972
        %v1065 = vadd.f32 %v1064, %v980
        %v1066 = vadd.f32 %v1065, %v988
        %v1067 = vadd.f32 %v1066, %v996
        %v1068 = vadd.f32 %v1067, %v1004
        %v1069 = vadd.f32 %v1068, %v1012
        %v1070 = vadd.f32 %v949, %v957
        %v1071 = vadd.f32 %v1070, %v965
        %v1072 = vadd.f32 %v1071, %v973
        %v1073 = vadd.f32 %v1072, %v981
        %v1074 = vadd.f32 %v1073, %v989
        %v1075 = vadd.f32 %v1074, %v997
        %v1076 = vadd.f32 %v1075, %v1005
        %v1077 = vadd.f32 %v1076, %v1013
        %v1078 = vld [vmem:[%s6] sm:$0xff]
        %v1079 = vld [vmem:[%s6 + $0x8] sm:$0xff]
        %v1080 = vld [vmem:[%s6 + $0x10] sm:$0xff]
        %v1081 = vld [vmem:[%s6 + $0x18] sm:$0xff]
        %1083 = vset.pattern.permute.xlu0 0
        %1084 = vperm.xlu0 %1083, %v1078
        %v1085 = vpop.permute.xlu0 %1084
        %1088 = vset.pattern.permute.xlu0 0
        %1089 = vperm.xlu0 %1088, %v1079
        %v1090 = vpop.permute.xlu0 %1089
        %1093 = vset.pattern.permute.xlu0 0
        %1094 = vperm.xlu0 %1093, %v1080
        %v1095 = vpop.permute.xlu0 %1094
        %1098 = vset.pattern.permute.xlu0 0
        %1099 = vperm.xlu0 %1098, %v1081
        %v1100 = vpop.permute.xlu0 %1099
        %v1102 = vadd.f32 %v1021, %v1085
        %v1103 = vadd.f32 %v1029, %v1085
        %v1104 = vadd.f32 %v1037, %v1090
        %v1105 = vadd.f32 %v1045, %v1090
        %v1106 = vadd.f32 %v1053, %v1095
        %v1107 = vadd.f32 %v1061, %v1095
        %v1108 = vadd.f32 %v1069, %v1100
        %v1109 = vadd.f32 %v1077, %v1100
        %v1110 = vld [vmem:[%s493] sm:$0xff]
        %v1111 = vld [vmem:[%s493 + $0x8] sm:$0xff]
        %v1112 = vld [vmem:[%s493 + $0x10] sm:$0xff]
        %v1113 = vld [vmem:[%s493 + $0x18] sm:$0xff]
        %v1114 = vld [vmem:[%s493 + $0x20] sm:$0xff]
        %v1115 = vld [vmem:[%s493 + $0x28] sm:$0xff]
        %v1116 = vld [vmem:[%s493 + $0x30] sm:$0xff]
        %v1117 = vld [vmem:[%s493 + $0x38] sm:$0xff]
        %v1118 = vadd.f32 %v1110, %v614
        %v1119 = vadd.f32 %v1111, %v643
        %v1120 = vadd.f32 %v1112, %v617
        %v1121 = vadd.f32 %v1113, %v646
        %v1122 = vadd.f32 %v1114, %v620
        %v1123 = vadd.f32 %v1115, %v649
        %v1124 = vadd.f32 %v1116, %v623
        %v1125 = vadd.f32 %v1117, %v652
        %v1126 = vadd.f32 %v1118, %v1102
        %v1127 = vadd.f32 %v1119, %v1103
        %v1128 = vadd.f32 %v1120, %v1104
        %v1129 = vadd.f32 %v1121, %v1105
        %v1130 = vadd.f32 %v1122, %v1106
        %v1131 = vadd.f32 %v1123, %v1107
        %v1132 = vadd.f32 %v1124, %v1108
        %v1133 = vadd.f32 %v1125, %v1109
        %1134 = vst [vmem:[%s542] sm:$0xff] %v1126
        %1135 = vst [vmem:[%s542 + $0x8] sm:$0xff] %v1127
        %1136 = vst [vmem:[%s542 + $0x10] sm:$0xff] %v1128
        %1137 = vst [vmem:[%s542 + $0x18] sm:$0xff] %v1129
        %1138 = vst [vmem:[%s542 + $0x20] sm:$0xff] %v1130
        %1139 = vst [vmem:[%s542 + $0x28] sm:$0xff] %v1131
        %1140 = vst [vmem:[%s542 + $0x30] sm:$0xff] %v1132
        %1141 = vst [vmem:[%s542 + $0x38] sm:$0xff] %v1133
        %s1142 = sand.u32 %s188, 1
        %s1143 = sand.u32 %s188, 1
        %s1144 = smul.addr %s1143, 64
        %s1145 = scalar_lea.vmem [#allocation5], %s1144
        // Predicated region
        $region118: #{ssam_forward.19} parent=104 // pred_check
          %p1146 = pneg %p198
        $region119: #{ssam_forward.19} parent=104 // pred_check_branch
          %1148 = sbr.rel (%p1146) target = $region121
        $region120: #{ssam_forward.19} parent=104 // pred_region
          %s1149 = smul.u32 2, %s18
          %s1150 = smul.addr %s1149, 8
          %s1151 = scalar_lea.vmem %s7, %s1150
          // Predicated region
          $region122: #{ssam_forward.19} parent=120 // pred_check
            _
          $region123: #{ssam_forward.19} parent=120 // pred_check_branch
            %1153 = sbr.rel (0) target = $region125
          $region124: #{ssam_forward.19} parent=120 // pred_region
            // Predicated region
            $region126: #{ssam_forward.19} parent=124 // pred_check
              _
            $region127: #{ssam_forward.19} parent=124 // pred_check_branch
              %1155 = sbr.rel (0) target = $region129
            $region128: #{ssam_forward.19} parent=124 // pred_region
              loop: start=0, step=1, limit=1
              $region130: #{ssam_forward.19} parent=128 // loop_pre_header
                _
              $region131: #{ssam_forward.19} parent=128 // loop_header
                %s1157 = sphi 0, %s1161
                %p1158 = scmp.ge.s32.totalorder %s1157, 1
                %s1162 = sphi %s1145, %s1145
                %s1163 = sphi %s1151, %s1151
              $region132: #{ssam_forward.19} parent=128 // loop_header_branch
                %1160 = sbr.rel (%p1158) target = $region136
              $region133: #{ssam_forward.19} parent=128 // loop_body
                %v1164 = vld [vmem:[%s1162] sm:$0xff]
                %1165 = vst [vmem:[%s1163] sm:$0xff] %v1164
                %v1166 = vld [vmem:[%s1162 + $0x8] sm:$0xff]
                %1167 = vst [vmem:[%s1163 + $0x8] sm:$0xff] %v1166
                %v1168 = vld [vmem:[%s1162 + $0x10] sm:$0xff]
                %1169 = vst [vmem:[%s1163 + $0x20] sm:$0xff] %v1168
                %v1170 = vld [vmem:[%s1162 + $0x18] sm:$0xff]
                %1171 = vst [vmem:[%s1163 + $0x28] sm:$0xff] %v1170
                %v1172 = vld [vmem:[%s1162 + $0x20] sm:$0xff]
                %1173 = vst [vmem:[%s1163 + $0x40] sm:$0xff] %v1172
                %v1174 = vld [vmem:[%s1162 + $0x28] sm:$0xff]
                %1175 = vst [vmem:[%s1163 + $0x48] sm:$0xff] %v1174
                %v1176 = vld [vmem:[%s1162 + $0x30] sm:$0xff]
                %1177 = vst [vmem:[%s1163 + $0x60] sm:$0xff] %v1176
                %v1178 = vld [vmem:[%s1162 + $0x38] sm:$0xff]
                %1179 = vst [vmem:[%s1163 + $0x68] sm:$0xff] %v1178
              $region134: #{ssam_forward.19} parent=128 // loop_footer
                %s1161 = sadd.s32 1, %s1157
              $region135: #{ssam_forward.19} parent=128 // loop_footer_branch
                %1156 = sbr.rel target = $region131
              $region136: #{ssam_forward.19} parent=128 // loop_exit
                _
            $region129: #{ssam_forward.19} parent=124 // pred_fallthru
              _
            // Predicated region
            $region137: #{ssam_forward.19} parent=124 // pred_check
              _
            $region138: #{ssam_forward.19} parent=124 // pred_check_branch
              %1181 = sbr.rel target = $region140
            $region139: #{ssam_forward.19} parent=124 // pred_region
              _
            $region140: #{ssam_forward.19} parent=124 // pred_fallthru
              _
          $region125: #{ssam_forward.19} parent=120 // pred_fallthru
            _
          %1182 = vnop
        $region121: #{ssam_forward.19} parent=104 // pred_fallthru
          _
      $region105: #{ssam_forward.19} parent=5 // pred_fallthru
        _
      %p1183 = scmp.le.s32.totalorder 2, %s13
      // Predicated region
      $region141: #{ssam_forward.19} parent=5 // pred_check
        %p1184 = pneg %p1183
      $region142: #{ssam_forward.19} parent=5 // pred_check_branch
        %1186 = sbr.rel (%p1184) target = $region144
      $region143: #{ssam_forward.19} parent=5 // pred_region
        %s1187 = ssub.s32 %s13, 2
        // Predicated region
        $region145: #{ssam_forward.19} parent=143 // pred_check
          %p1188 = pneg %p204
        $region146: #{ssam_forward.19} parent=143 // pred_check_branch
          %1190 = sbr.rel (%p1188) target = $region148
        $region147: #{ssam_forward.19} parent=143 // pred_region
          %s1191 = sand.u32 %s189, 1
          %s1192 = sand.u32 %s189, 1
          %s1193 = smul.addr %s1192, 64
          %s1194 = scalar_lea.vmem [#allocation5], %s1193
        $region148: #{ssam_forward.19} parent=143 // pred_fallthru
          _
      $region144: #{ssam_forward.19} parent=5 // pred_fallthru
        _
    $region6: #{ssam_forward.19} parent=1 // loop_footer
      %s17 = sadd.s32 1, %s13
    $region7: #{ssam_forward.19} parent=1 // loop_footer_branch
      %12 = sbr.rel target = $region3
    $region8: #{ssam_forward.19} parent=1 // loop_exit
      _

</llo_original>
